<compile_context>
chip_gen: v6e
topology: v6e:2x2x1
jax: 0.10.0
libtpu: 0.0.40
codegen_flags: <defaults>
</compile_context>

<pallas_src>
import functools
import math

import jax
import jax.numpy as jnp
from jax.experimental import pallas as pl
from jax.experimental.pallas import tpu as pltpu

EPS = 1e-5
INF = 1e9
NUM_HEADS_PAIR = 4


# ----------------------------------------------------------------------------
# Helpers
# ----------------------------------------------------------------------------

@functools.lru_cache(maxsize=None)
def _vmem_limit_bytes():
    cap = 128 * 1024 * 1024
    try:
        info = pltpu.get_tpu_info()
        cap = int(getattr(info, "vmem_capacity_bytes", cap) or cap)
    except Exception:
        pass
    # v5e/v6e (128 MiB physical) -> 64 MiB scoped; v7x (64 MiB per TC) -> 32 MiB.
    return int(max(32 * 1024 * 1024, min(96 * 1024 * 1024, cap // 2)))


def _cp(sems):
    return pltpu.CompilerParams(
        dimension_semantics=sems,
        vmem_limit_bytes=_vmem_limit_bytes(),
    )


def _pick_row_tile(m, target=1024, align=128):
    """Largest `align`-aligned divisor of m <= target (whole m if m <= target)."""
    if m <= target:
        return m
    t = (target // align) * align
    while t >= align:
        if m % t == 0:
            return t
        t -= align
    t = target - target % 8
    while t >= 8:
        if m % t == 0:
            return t
        t -= 8
    return m  # TODO(synk): pad m for awkward sizes instead of whole-array fallback.


def _pick_rows(n, target=8):
    """Row-chunk size: divides n and is a multiple of 8 (or the whole n)."""
    if n <= target:
        return n
    if n % target == 0 and target % 8 == 0:
        return target
    return n


def _pick_kv_tile(n):
    for t in (256, 128):
        if n % t == 0:
            return t
    return n


def _ln(x, g, b, eps):
    mu = jnp.mean(x, axis=-1, keepdims=True)
    xc = x - mu
    var = jnp.mean(xc * xc, axis=-1, keepdims=True)
    return xc * jax.lax.rsqrt(var + eps) * g + b


# ----------------------------------------------------------------------------
# Pallas kernels
# ----------------------------------------------------------------------------

def _tri_mul_in_kernel(z_ref, mask_ref, g_ref, b_ref, w_ref,
                       a_ref, b_out_ref, gate_ref, *, eps, c_h):
    # Fused LN(z) -> single wide matmul -> gated/masked a, b (written channel-major)
    # + output gate, row-tiled over the flattened pair rows.
    x = z_ref[...].astype(jnp.float32)
    ln = _ln(x, g_ref[...], b_ref[...], eps).astype(jnp.bfloat16)
    y = jnp.dot(ln, w_ref[...], preferred_element_type=jnp.float32)
    msk = mask_ref[...]                                            # [TR, 1]
    pa = y[:, 0 * c_h:1 * c_h]
    pb = y[:, 1 * c_h:2 * c_h]
    ga = jax.nn.sigmoid(y[:, 2 * c_h:3 * c_h])
    gb = jax.nn.sigmoid(y[:, 3 * c_h:4 * c_h])
    go = jax.nn.sigmoid(y[:, 4 * c_h:])
    # Channel-major write (in-kernel 2-D transpose, XLU) -> no XLA transpose later.
    a_ref[...] = (pa * ga * msk).astype(jnp.bfloat16).T           # [c_h, TR]
    b_out_ref[...] = (pb * gb * msk).astype(jnp.bfloat16).T       # [c_h, TR]
    gate_ref[...] = go.astype(jnp.bfloat16)


def _tri_mul_kernel(a_ref, b_ref, o_ref):
    # o[c, i, j] = sum_k a[c, i, k] * b[c, j, k] -- lane-dense MXU matmul per channel.
    # The RHS block index is constant over the i axis, so it is fetched once / channel.
    o_ref[0] = jax.lax.dot_general(
        a_ref[0], b_ref[0], (((1,), (1,)), ((), ())),
        preferred_element_type=jnp.float32,
    ).astype(o_ref.dtype)


def _tri_mul_out_kernel(x_ref, gate_ref, z_ref, g_ref, b_ref, wo_ref, o_ref,
                        *, eps, rows):
    # Fused LN_out(x) @ Wo * gate + residual; x is read channel-major [c_h, rows, n]
    # and transposed per row in-kernel (2-D XLU transpose).
    for r in range(rows):                                          # static unroll
        xr = x_ref[:, r, :].T.astype(jnp.float32)                  # [n, c_h]
        ln = _ln(xr, g_ref[...], b_ref[...], eps).astype(jnp.bfloat16)
        y = jnp.dot(ln, wo_ref[...], preferred_element_type=jnp.float32)
        o_ref[r] = z_ref[r] + y * gate_ref[r]


def _attn_proj_kernel(z_ref, g_ref, b_ref, w_ref,
                      q_ref, k_ref, v_ref, gate_ref, bias_ref, *, eps, h, d):
    # Fused LN(z) -> single wide matmul -> per-head Q/K/V/gate ([h, TR, d]) + pair bias
    # ([h, TR]); 1/sqrt(d) is already folded into Wq.
    x = z_ref[...].astype(jnp.float32)
    ln = _ln(x, g_ref[...], b_ref[...], eps).astype(jnp.bfloat16)
    y = jnp.dot(ln, w_ref[...], preferred_element_type=jnp.float32)
    hd = h * d
    for hh in range(h):                                            # static unroll
        q_ref[hh] = y[:, 0 * hd + hh * d:0 * hd + (hh + 1) * d].astype(jnp.bfloat16)
        k_ref[hh] = y[:, 1 * hd + hh * d:1 * hd + (hh + 1) * d].astype(jnp.bfloat16)
        v_ref[hh] = y[:, 2 * hd + hh * d:2 * hd + (hh + 1) * d].astype(jnp.bfloat16)
        gate_ref[hh] = jax.nn.sigmoid(
            y[:, 3 * hd + hh * d:3 * hd + (hh + 1) * d]).astype(jnp.bfloat16)
    bias_ref[...] = y[:, 4 * hd:].T.astype(jnp.bfloat16)           # [h, TR]


def _flash_attn_kernel(q_ref, k_ref, v_ref, bias_ref, mbias_ref, g_ref, o_ref,
                       m_scr, l_scr, acc_scr):
    # Flash (online softmax) over kv tiles; `bi` query rows of one head per step, so
    # the (1, n, tkv) pair-bias slab is reused bi times from VMEM.
    kt = pl.program_id(2)

    @pl.when(kt == 0)
    def _():
        m_scr[...] = jnp.full(m_scr.shape, -1e30, jnp.float32)
        l_scr[...] = jnp.zeros(l_scr.shape, jnp.float32)
        acc_scr[...] = jnp.zeros(acc_scr.shape, jnp.float32)

    q = q_ref[0]                                                   # [bi, n, d] bf16
    k = k_ref[0]                                                   # [bi, tkv, d] bf16
    s = jax.lax.dot_general(q, k, (((2,), (2,)), ((0,), (0,))),
                            preferred_element_type=jnp.float32)    # [bi, n, tkv]
    s = s + bias_ref[...].astype(jnp.float32) + mbias_ref[...][:, None, :]

    m_prev = m_scr[...]
    m_new = jnp.maximum(m_prev, jnp.max(s, axis=-1, keepdims=True))
    alpha = jnp.exp(m_prev - m_new)
    p = jnp.exp(s - m_new)
    l_scr[...] = alpha * l_scr[...] + jnp.sum(p, axis=-1, keepdims=True)
    acc_scr[...] = alpha * acc_scr[...] + jax.lax.dot_general(
        p.astype(jnp.bfloat16), v_ref[0], (((2,), (1,)), ((0,), (0,))),
        preferred_element_type=jnp.float32)
    m_scr[...] = m_new

    @pl.when(kt == pl.num_programs(2) - 1)
    def _():
        inv_l = pl.reciprocal(l_scr[...], approx=True)
        o_ref[0] = (acc_scr[...] * inv_l *
                    g_ref[0].astype(jnp.float32)).astype(o_ref.dtype)


def _attn_out_kernel(o_ref, z_ref, wo_ref, out_ref, *, h):
    # Fused per-head output projection (sum_h o_h @ Wo_h) + residual.
    acc = jnp.dot(o_ref[0], wo_ref[0], preferred_element_type=jnp.float32)
    for hh in range(1, h):
        acc += jnp.dot(o_ref[hh], wo_ref[hh], preferred_element_type=jnp.float32)
    out_ref[...] = z_ref[...] + acc


def _transition_kernel(x_ref, g_ref, b_ref, wab_ref, wo_ref, o_ref, *, eps, ch):
    # Fused SwiGLU transition: LN -> single wide matmul -> silu(a)*b -> Wo + residual.
    x = x_ref[...].astype(jnp.float32)
    ln = _ln(x, g_ref[...], b_ref[...], eps).astype(jnp.bfloat16)
    y = jnp.dot(ln, wab_ref[...], preferred_element_type=jnp.float32)
    a = y[:, :ch]
    b2 = y[:, ch:]
    hidden = (a * jax.nn.sigmoid(a)) * b2
    o_ref[...] = x + jnp.dot(hidden.astype(jnp.bfloat16), wo_ref[...],
                             preferred_element_type=jnp.float32)


# ----------------------------------------------------------------------------
# Sub-module wrappers (each returns z + delta, residual fused in-kernel)
# ----------------------------------------------------------------------------

def triangle_update(z, mask, p, transpose):
    # TODO(synk): remaining XLA swapaxes for the transposed (col) variants could be
    # folded into column-indexed BlockSpecs at the cost of strided DMAs.
    if transpose:
        z = jnp.swapaxes(z, 0, 1)
        mask = jnp.swapaxes(mask, 0, 1)
    n, _, c_z = z.shape
    c_h = p["Wp"].shape[1] // 2
    m = n * n
    bf = jnp.bfloat16
    z_flat = z.reshape(m, c_z)
    mask_flat = mask.reshape(m, 1)

    wpa, wpb = jnp.split(p["Wp"], 2, axis=1)
    wpga, wpgb = jnp.split(p["Wpg"], 2, axis=1)
    w_in = jnp.concatenate([wpa, wpb, wpga, wpgb, p["Wgo"]], axis=1).astype(bf)

    tr = _pick_row_tile(m)
    row = lambda r: (r, 0)
    rep = lambda r: (0, 0)
    cm = lambda r: (0, r)

    a_cm, b_cm, gate = pl.pallas_call(
        functools.partial(_tri_mul_in_kernel, eps=EPS, c_h=c_h),
        grid=(m // tr,),
        in_specs=[
            pl.BlockSpec((tr, c_z), row),
            pl.BlockSpec((tr, 1), row),
            pl.BlockSpec((1, c_z), rep),
            pl.BlockSpec((1, c_z), rep),
            pl.BlockSpec((c_z, 4 * c_h + c_z), rep),
        ],
        out_specs=[
            pl.BlockSpec((c_h, tr), cm),
            pl.BlockSpec((c_h, tr), cm),
            pl.BlockSpec((tr, c_z), row),
        ],
        out_shape=[
            jax.ShapeDtypeStruct((c_h, m), bf),
            jax.ShapeDtypeStruct((c_h, m), bf),
            jax.ShapeDtypeStruct((m, c_z), bf),
        ],
        compiler_params=_cp(("parallel",)),
    )(z_flat, mask_flat, p["ln_in_g"].reshape(1, -1), p["ln_in_b"].reshape(1, -1), w_in)

    # Channel-major triangle multiplication (free reshapes only).
    a_cm = a_cm.reshape(c_h, n, n)
    b_cm = b_cm.reshape(c_h, n, n)
    ti = _pick_row_tile(n, 256, align=8)
    x_cm = pl.pallas_call(
        _tri_mul_kernel,
        grid=(c_h, n // ti),
        in_specs=[
            pl.BlockSpec((1, ti, n), lambda c, i: (c, i, 0)),
            pl.BlockSpec((1, n, n), lambda c, i: (c, 0, 0)),
        ],
        out_specs=pl.BlockSpec((1, ti, n), lambda c, i: (c, i, 0)),
        out_shape=jax.ShapeDtypeStruct((c_h, n, n), bf),
        compiler_params=_cp(("parallel", "parallel")),
    )(a_cm, b_cm)

    rows = _pick_rows(n)
    gate3 = gate.reshape(n, n, c_z)
    out = pl.pallas_call(
        functools.partial(_tri_mul_out_kernel, eps=EPS, rows=rows),
        grid=(n // rows,),
        in_specs=[
            pl.BlockSpec((c_h, rows, n), lambda r: (0, r, 0)),
            pl.BlockSpec((rows, n, c_z), lambda r: (r, 0, 0)),
            pl.BlockSpec((rows, n, c_z), lambda r: (r, 0, 0)),
            pl.BlockSpec((1, c_h), lambda r: (0, 0)),
            pl.BlockSpec((1, c_h), lambda r: (0, 0)),
            pl.BlockSpec((c_h, c_z), lambda r: (0, 0)),
        ],
        out_specs=pl.BlockSpec((rows, n, c_z), lambda r: (r, 0, 0)),
        out_shape=jax.ShapeDtypeStruct((n, n, c_z), jnp.float32),
        compiler_params=_cp(("parallel",)),
    )(x_cm, gate3, z, p["ln_out_g"].reshape(1, -1), p["ln_out_b"].reshape(1, -1),
      p["Wo"].astype(bf))

    if transpose:
        out = jnp.swapaxes(out, 0, 1)
    return out


def triangle_attention(z, mask, p, transpose):
    if transpose:
        z = jnp.swapaxes(z, 0, 1)
        mask = jnp.swapaxes(mask, 0, 1)
    n, _, c_z = z.shape
    h = NUM_HEADS_PAIR
    d = p["Wq"].shape[1] // h
    hd = h * d
    m = n * n
    bf = jnp.bfloat16
    z_flat = z.reshape(m, c_z)
    scale = 1.0 / math.sqrt(d)

    # Fused LN + all projections; 1/sqrt(d) folded into Wq.
    w_cat = jnp.concatenate(
        [p["Wq"] * scale, p["Wk"], p["Wv"], p["Wg"], p["Wb"]], axis=1).astype(bf)

    tr = _pick_row_tile(m)
    row = lambda r: (r, 0)
    rep = lambda r: (0, 0)
    hm = lambda r: (0, r, 0)

    q, k, v, gate, bias = pl.pallas_call(
        functools.partial(_attn_proj_kernel, eps=EPS, h=h, d=d),
        grid=(m // tr,),
        in_specs=[
            pl.BlockSpec((tr, c_z), row),
            pl.BlockSpec((1, c_z), rep),
            pl.BlockSpec((1, c_z), rep),
            pl.BlockSpec((c_z, 4 * hd + h), rep),
        ],
        out_specs=[
            pl.BlockSpec((h, tr, d), hm),
            pl.BlockSpec((h, tr, d), hm),
            pl.BlockSpec((h, tr, d), hm),
            pl.BlockSpec((h, tr, d), hm),
            pl.BlockSpec((h, tr), lambda r: (0, r)),
        ],
        out_shape=[
            jax.ShapeDtypeStruct((h, m, d), bf),
            jax.ShapeDtypeStruct((h, m, d), bf),
            jax.ShapeDtypeStruct((h, m, d), bf),
            jax.ShapeDtypeStruct((h, m, d), bf),
            jax.ShapeDtypeStruct((h, m), bf),
        ],
        compiler_params=_cp(("parallel",)),
    )(z_flat, p["ln_g"].reshape(1, -1), p["ln_b"].reshape(1, -1), w_cat)

    # Flash attention over (head, q-row chunk, kv tile); only free reshapes here.
    q4 = q.reshape(h, n, n, d)
    k4 = k.reshape(h, n, n, d)
    v4 = v.reshape(h, n, n, d)
    g4 = gate.reshape(h, n, n, d)
    bias3 = bias.reshape(h, n, n)                   # bias[h, j, k] shared by all rows i
    mask_bias = INF * (mask - 1.0)                  # [n, n] f32, keyed by (row i, key k)

    bi = _pick_rows(n)
    tkv = _pick_kv_tile(n)
    o = pl.pallas_call(
        _flash_attn_kernel,
        grid=(h, n // bi, n // tkv),
        in_specs=[
            pl.BlockSpec((1, bi, n, d), lambda hh, rc, t: (hh, rc, 0, 0)),    # q
            pl.BlockSpec((1, bi, tkv, d), lambda hh, rc, t: (hh, rc, t, 0)),  # k
            pl.BlockSpec((1, bi, tkv, d), lambda hh, rc, t: (hh, rc, t, 0)),  # v
            pl.BlockSpec((1, n, tkv), lambda hh, rc, t: (hh, 0, t)),          # pair bias
            pl.BlockSpec((bi, tkv), lambda hh, rc, t: (rc, t)),               # mask bias
            pl.BlockSpec((1, bi, n, d), lambda hh, rc, t: (hh, rc, 0, 0)),    # out gate
        ],
        out_specs=pl.BlockSpec((1, bi, n, d), lambda hh, rc, t: (hh, rc, 0, 0)),
        out_shape=jax.ShapeDtypeStruct((h, n, n, d), bf),
        scratch_shapes=[
            pltpu.VMEM((bi, n, 1), jnp.float32),
            pltpu.VMEM((bi, n, 1), jnp.float32),
            pltpu.VMEM((bi, n, d), jnp.float32),
        ],
        compiler_params=_cp(("parallel", "parallel", "arbitrary")),
    )(q4, k4, v4, bias3, mask_bias, g4)

    # Fused output projection + residual (no transposes; per-head accumulation).
    o2 = o.reshape(h, m, d)
    wo = p["Wo"].reshape(h, d, c_z).astype(bf)
    tr2 = _pick_row_tile(m, align=8)
    out = pl.pallas_call(
        functools.partial(_attn_out_kernel, h=h),
        grid=(m // tr2,),
        in_specs=[
            pl.BlockSpec((h, tr2, d), lambda r: (0, r, 0)),
            pl.BlockSpec((tr2, c_z), lambda r: (r, 0)),
            pl.BlockSpec((h, d, c_z), lambda r: (0, 0, 0)),
        ],
        out_specs=pl.BlockSpec((tr2, c_z), lambda r: (r, 0)),
        out_shape=jax.ShapeDtypeStruct((m, c_z), jnp.float32),
        compiler_params=_cp(("parallel",)),
    )(o2, z_flat, wo)

    out = out.reshape(n, n, c_z)
    if transpose:
        out = jnp.swapaxes(out, 0, 1)
    return out


def transition(z, p):
    n1, n2, c = z.shape
    m = n1 * n2
    x2 = z.reshape(m, c)
    ch = p["Wa"].shape[1]
    bf = jnp.bfloat16
    wab = jnp.concatenate([p["Wa"], p["Wb"]], axis=1).astype(bf)
    tr = _pick_row_tile(m, 1024, align=8)
    row = lambda r: (r, 0)
    rep = lambda r: (0, 0)
    out = pl.pallas_call(
        functools.partial(_transition_kernel, eps=EPS, ch=ch),
        grid=(m // tr,),
        in_specs=[
            pl.BlockSpec((tr, c), row),
            pl.BlockSpec((1, c), rep),
            pl.BlockSpec((1, c), rep),
            pl.BlockSpec((c, 2 * ch), rep),
            pl.BlockSpec((ch, c), rep),
        ],
        out_specs=pl.BlockSpec((tr, c), row),
        out_shape=jax.ShapeDtypeStruct((m, c), jnp.float32),
        compiler_params=_cp(("parallel",)),
    )(x2, p["ln_g"].reshape(1, -1), p["ln_b"].reshape(1, -1), wab, p["Wo"].astype(bf))
    return out.reshape(n1, n2, c)


# ----------------------------------------------------------------------------
# TriangleBlock forward (residuals are fused inside each stage's last kernel)
# ----------------------------------------------------------------------------

def triangle_block(z, z_mask, params):
    z = triangle_update(z, z_mask, params["tri_row_update"], transpose=False)
    z = triangle_update(z, z_mask, params["tri_col_update"], transpose=True)
    z = triangle_attention(z, z_mask, params["tri_row_attn"], transpose=False)
    z = triangle_attention(z, z_mask, params["tri_col_attn"], transpose=True)
    z = transition(z, params["pair_transition"])
    return z


# ----------------------------------------------------------------------------
# Deterministic parameter initialization
# ----------------------------------------------------------------------------

def init_params(key, c_z):
    keys = iter(jax.random.split(key, 32))

    def w(*shape, scale=0.1):
        return scale * jax.random.normal(next(keys), shape, jnp.float32)

    def tri_update_params():
        return dict(
            ln_in_g=jnp.ones((c_z,), jnp.float32), ln_in_b=jnp.zeros((c_z,), jnp.float32),
            ln_out_g=jnp.ones((c_z,), jnp.float32), ln_out_b=jnp.zeros((c_z,), jnp.float32),
            Wp=w(c_z, 2 * c_z), Wpg=w(c_z, 2 * c_z),
            Wo=w(c_z, c_z), Wgo=w(c_z, c_z),
        )

    def tri_attn_params():
        hd = c_z  # NUM_HEADS_PAIR * (c_z // NUM_HEADS_PAIR)
        return dict(
            ln_g=jnp.ones((c_z,), jnp.float32), ln_b=jnp.zeros((c_z,), jnp.float32),
            Wq=w(c_z, hd), Wk=w(c_z, hd), Wv=w(c_z, hd),
            Wb=w(c_z, NUM_HEADS_PAIR), Wg=w(c_z, hd), Wo=w(hd, c_z),
        )

    def transition_params(c):
        return dict(
            ln_g=jnp.ones((c,), jnp.float32), ln_b=jnp.zeros((c,), jnp.float32),
            Wa=w(c, 4 * c), Wb=w(c, 4 * c), Wo=w(4 * c, c),
        )

    return dict(
        tri_row_update=tri_update_params(),
        tri_col_update=tri_update_params(),
        tri_row_attn=tri_attn_params(),
        tri_col_attn=tri_attn_params(),
        pair_transition=transition_params(c_z),
    )


# ----------------------------------------------------------------------------

if __name__ == "__main__":
    n, c_z = 8, 16
    key = jax.random.PRNGKey(0)
    kz, km, kp = jax.random.split(key, 3)

    z = jax.random.normal(kz, (n, n, c_z), jnp.float32)
    z_mask = (jax.random.uniform(km, (n, n)) > 0.2).astype(jnp.float32)
    params = init_params(kp, c_z)

    fwd = jax.jit(triangle_block)
    z_out = fwd(z, z_mask, params)
    jax.block_until_ready(z_out)

    assert z_out.shape == (n, n, c_z)
    assert bool(jnp.all(jnp.isfinite(z_out)))
    print("KERNEL_OK")
</pallas_src>

<mosaic_0001>
module attributes {stable_mosaic.version = 11 : i64} {
  func.func @_tri_mul_kernel(%arg0: i32, %arg1: i32, %arg2: memref<1x8x8xbf16, #tpu.memory_space<vmem>>, %arg3: memref<1x8x8xbf16, #tpu.memory_space<vmem>>, %arg4: memref<1x8x8xbf16, #tpu.memory_space<vmem>>) attributes {dimension_semantics = [#tpu.dimension_semantics<parallel>, #tpu.dimension_semantics<parallel>], iteration_bounds = array<i64: 16, 1>, scalar_prefetch = 0 : i64, scratch_operands = 0 : i64, tpu.core_type = #tpu.core_type<tc>, window_params = [{transform_indices = @transform_0, window_bounds = array<i64: 1, 8, 8>}, {transform_indices = @transform_1, window_bounds = array<i64: 1, 8, 8>}, {transform_indices = @transform_2, window_bounds = array<i64: 1, 8, 8>}]} {
    %c0 = arith.constant 0 : index
    %c0_0 = arith.constant 0 : index
    %c0_1 = arith.constant 0 : index
    %0 = vector.load %arg2[%c0, %c0_0, %c0_1] : memref<1x8x8xbf16, #tpu.memory_space<vmem>>, vector<1x8x8xbf16>
    %1 = vector.shape_cast %0 : vector<1x8x8xbf16> to vector<8x8xbf16>
    %c0_2 = arith.constant 0 : index
    %c0_3 = arith.constant 0 : index
    %c0_4 = arith.constant 0 : index
    %2 = vector.load %arg3[%c0_2, %c0_3, %c0_4] : memref<1x8x8xbf16, #tpu.memory_space<vmem>>, vector<1x8x8xbf16>
    %3 = vector.shape_cast %2 : vector<1x8x8xbf16> to vector<8x8xbf16>
    %cst = arith.constant dense<0.000000e+00> : vector<8x8xf32>
    %4 = tpu.matmul %1, %3, %cst {dimension_numbers = #tpu.dot_dimension_numbers<[1], [1], [0], [0], [0, 0, 1, 0], [], []>} : vector<8x8xbf16>, vector<8x8xbf16>, vector<8x8xf32> -> vector<8x8xf32>
    %5 = arith.truncf %4 : vector<8x8xf32> to vector<8x8xbf16>
    %c0_5 = arith.constant 0 : index
    %c0_6 = arith.constant 0 : index
    %c0_7 = arith.constant 0 : index
    %6 = vector.load %arg4[%c0_5, %c0_6, %c0_7] : memref<1x8x8xbf16, #tpu.memory_space<vmem>>, vector<1x8x8xbf16>
    %7 = vector.shape_cast %6 : vector<1x8x8xbf16> to vector<8x8xbf16>
    %8 = vector.shape_cast %5 : vector<8x8xbf16> to vector<1x8x8xbf16>
    tpu.vector_store %arg4[%c0_5, %c0_6, %c0_7], %8 {strides = array<i32>} : memref<1x8x8xbf16, #tpu.memory_space<vmem>>, vector<1x8x8xbf16>,
    return
  }
  func.func @transform_0(%arg0: i32, %arg1: i32) -> (i32, i32, i32) {
    %c0_i32 = arith.constant 0 : i32
    %c0_i32_0 = arith.constant 0 : i32
    return %arg0, %arg1, %c0_i32 : i32, i32, i32
  }
  func.func @transform_1(%arg0: i32, %arg1: i32) -> (i32, i32, i32) {
    %c0_i32 = arith.constant 0 : i32
    %c0_i32_0 = arith.constant 0 : i32
    %c0_i32_1 = arith.constant 0 : i32
    return %arg0, %c0_i32, %c0_i32_0 : i32, i32, i32
  }
  func.func @transform_2(%arg0: i32, %arg1: i32) -> (i32, i32, i32) {
    %c0_i32 = arith.constant 0 : i32
    %c0_i32_0 = arith.constant 0 : i32
    return %arg0, %arg1, %c0_i32 : i32, i32, i32
  }
}

module attributes {stable_mosaic.version = 11 : i64} {
  func.func @_tri_mul_in_kernel(%arg0: i32, %arg1: memref<64x16xf32, #tpu.memory_space<vmem>>, %arg2: memref<64x1xf32, #tpu.memory_space<vmem>>, %arg3: memref<1x16xf32, #tpu.memory_space<vmem>>, %arg4: memref<1x16xf32, #tpu.memory_space<vmem>>, %arg5: memref<16x80xbf16, #tpu.memory_space<vmem>>, %arg6: memref<16x64xbf16, #tpu.memory_space<vmem>>, %arg7: memref<16x64xbf16, #tpu.memory_space<vmem>>, %arg8: memref<64x16xbf16, #tpu.memory_space<vmem>>) attributes {dimension_semantics = [#tpu.dimension_semantics<parallel>], iteration_bounds = array<i64: 1>, scalar_prefetch = 0 : i64, scratch_operands = 0 : i64, tpu.core_type = #tpu.core_type<tc>, window_params = [{transform_indices = @transform_0, window_bounds = array<i64: 64, 16>}, {transform_indices = @transform_1, window_bounds = array<i64: 64, 1>}, {pipeline_mode = #tpu.pipeline_mode<synchronous>, transform_indices = @transform_2, window_bounds = array<i64: 1, 16>}, {pipeline_mode = #tpu.pipeline_mode<synchronous>, transform_indices = @transform_3, window_bounds = array<i64: 1, 16>}, {pipeline_mode = #tpu.pipeline_mode<synchronous>, transform_indices = @transform_4, window_bounds = array<i64: 16, 80>}, {transform_indices = @transform_5, window_bounds = array<i64: 16, 64>}, {transform_indices = @transform_6, window_bounds = array<i64: 16, 64>}, {transform_indices = @transform_7, window_bounds = array<i64: 64, 16>}]} {
    %c0 = arith.constant 0 : index
    %c0_0 = arith.constant 0 : index
    %0 = vector.load %arg1[%c0, %c0_0] : memref<64x16xf32, #tpu.memory_space<vmem>>, vector<64x16xf32>
    %c0_1 = arith.constant 0 : index
    %c0_2 = arith.constant 0 : index
    %1 = vector.load %arg3[%c0_1, %c0_2] : memref<1x16xf32, #tpu.memory_space<vmem>>, vector<1x16xf32>
    %c0_3 = arith.constant 0 : index
    %c0_4 = arith.constant 0 : index
    %2 = vector.load %arg4[%c0_3, %c0_4] : memref<1x16xf32, #tpu.memory_space<vmem>>, vector<1x16xf32>
    %cst = arith.constant dense<0.000000e+00> : vector<64xf32>
    %3 = vector.multi_reduction <add>, %0, %cst [1] : vector<64x16xf32> to vector<64xf32>
    %4 = vector.shape_cast %3 : vector<64xf32> to vector<64x1xf32>
    %cst_5 = arith.constant 1.600000e+01 : f32
    %5 = vector.broadcast %cst_5 : f32 to vector<64x1xf32>
    %6 = arith.divf %4, %5 : vector<64x1xf32>
    %7 = vector.broadcast %6 : vector<64x1xf32> to vector<64x16xf32>
    %8 = arith.subf %0, %7 : vector<64x16xf32>
    %9 = arith.mulf %8, %8 : vector<64x16xf32>
    %cst_6 = arith.constant dense<0.000000e+00> : vector<64xf32>
    %10 = vector.multi_reduction <add>, %9, %cst_6 [1] : vector<64x16xf32> to vector<64xf32>
    %11 = vector.shape_cast %10 : vector<64xf32> to vector<64x1xf32>
    %cst_7 = arith.constant 1.600000e+01 : f32
    %12 = vector.broadcast %cst_7 : f32 to vector<64x1xf32>
    %13 = arith.divf %11, %12 : vector<64x1xf32>
    %cst_8 = arith.constant 9.99999974E-6 : f32
    %14 = vector.broadcast %cst_8 : f32 to vector<64x1xf32>
    %15 = arith.addf %13, %14 : vector<64x1xf32>
    %16 = math.rsqrt %15 : vector<64x1xf32>
    %17 = vector.broadcast %16 : vector<64x1xf32> to vector<64x16xf32>
    %18 = arith.mulf %8, %17 : vector<64x16xf32>
    %19 = vector.broadcast %1 : vector<1x16xf32> to vector<64x16xf32>
    %20 = arith.mulf %18, %19 : vector<64x16xf32>
    %21 = vector.broadcast %2 : vector<1x16xf32> to vector<64x16xf32>
    %22 = arith.addf %20, %21 : vector<64x16xf32>
    %23 = arith.truncf %22 : vector<64x16xf32> to vector<64x16xbf16>
    %c0_9 = arith.constant 0 : index
    %c0_10 = arith.constant 0 : index
    %24 = vector.load %arg5[%c0_9, %c0_10] : memref<16x80xbf16, #tpu.memory_space<vmem>>, vector<16x80xbf16>
    %cst_11 = arith.constant dense<0.000000e+00> : vector<64x80xf32>
    %25 = tpu.matmul %23, %24, %cst_11 {dimension_numbers = #tpu.dot_dimension_numbers<[1], [0], [0], [1], [0, 0, 1, 1], [], []>} : vector<64x16xbf16>, vector<16x80xbf16>, vector<64x80xf32> -> vector<64x80xf32>
    %c0_12 = arith.constant 0 : index
    %c0_13 = arith.constant 0 : index
    %26 = vector.load %arg2[%c0_12, %c0_13] : memref<64x1xf32, #tpu.memory_space<vmem>>, vector<64x1xf32>
    %27 = vector.extract_strided_slice %25 {offsets = [0, 0], sizes = [64, 16], strides = [1, 1]} : vector<64x80xf32> to vector<64x16xf32>
    %28 = vector.extract_strided_slice %25 {offsets = [0, 16], sizes = [64, 16], strides = [1, 1]} : vector<64x80xf32> to vector<64x16xf32>
    %29 = vector.extract_strided_slice %25 {offsets = [0, 32], sizes = [64, 16], strides = [1, 1]} : vector<64x80xf32> to vector<64x16xf32>
    %30 = arith.negf %29 : vector<64x16xf32>
    %31 = math.exp %30 : vector<64x16xf32>
    %cst_14 = arith.constant 1.000000e+00 : f32
    %32 = vector.broadcast %cst_14 : f32 to vector<64x16xf32>
    %33 = arith.addf %32, %31 : vector<64x16xf32>
    %34 = arith.divf %32, %33 : vector<64x16xf32>
    %35 = vector.extract_strided_slice %25 {offsets = [0, 48], sizes = [64, 16], strides = [1, 1]} : vector<64x80xf32> to vector<64x16xf32>
    %36 = arith.negf %35 : vector<64x16xf32>
    %37 = math.exp %36 : vector<64x16xf32>
    %cst_15 = arith.constant 1.000000e+00 : f32
    %38 = vector.broadcast %cst_15 : f32 to vector<64x16xf32>
    %39 = arith.addf %38, %37 : vector<64x16xf32>
    %40 = arith.divf %38, %39 : vector<64x16xf32>
    %41 = vector.extract_strided_slice %25 {offsets = [0, 64], sizes = [64, 16], strides = [1, 1]} : vector<64x80xf32> to vector<64x16xf32>
    %42 = arith.negf %41 : vector<64x16xf32>
    %43 = math.exp %42 : vector<64x16xf32>
    %cst_16 = arith.constant 1.000000e+00 : f32
    %44 = vector.broadcast %cst_16 : f32 to vector<64x16xf32>
    %45 = arith.addf %44, %43 : vector<64x16xf32>
    %46 = arith.divf %44, %45 : vector<64x16xf32>
    %47 = arith.mulf %27, %34 : vector<64x16xf32>
    %48 = vector.broadcast %26 : vector<64x1xf32> to vector<64x16xf32>
    %49 = arith.mulf %47, %48 : vector<64x16xf32>
    %50 = arith.truncf %49 : vector<64x16xf32> to vector<64x16xbf16>
    %51 = tpu.transpose %50, [1, 0] : vector<64x16xbf16> -> vector<16x64xbf16>
    %c0_17 = arith.constant 0 : index
    %c0_18 = arith.constant 0 : index
    %52 = vector.load %arg6[%c0_17, %c0_18] : memref<16x64xbf16, #tpu.memory_space<vmem>>, vector<16x64xbf16>
    tpu.vector_store %arg6[%c0_17, %c0_18], %51 {strides = array<i32>} : memref<16x64xbf16, #tpu.memory_space<vmem>>, vector<16x64xbf16>,
    %53 = arith.mulf %28, %40 : vector<64x16xf32>
    %54 = vector.broadcast %26 : vector<64x1xf32> to vector<64x16xf32>
    %55 = arith.mulf %53, %54 : vector<64x16xf32>
    %56 = arith.truncf %55 : vector<64x16xf32> to vector<64x16xbf16>
    %57 = tpu.transpose %56, [1, 0] : vector<64x16xbf16> -> vector<16x64xbf16>
    %c0_19 = arith.constant 0 : index
    %c0_20 = arith.constant 0 : index
    %58 = vector.load %arg7[%c0_19, %c0_20] : memref<16x64xbf16, #tpu.memory_space<vmem>>, vector<16x64xbf16>
    tpu.vector_store %arg7[%c0_19, %c0_20], %57 {strides = array<i32>} : memref<16x64xbf16, #tpu.memory_space<vmem>>, vector<16x64xbf16>,
    %59 = arith.truncf %46 : vector<64x16xf32> to vector<64x16xbf16>
    %c0_21 = arith.constant 0 : index
    %c0_22 = arith.constant 0 : index
    %60 = vector.load %arg8[%c0_21, %c0_22] : memref<64x16xbf16, #tpu.memory_space<vmem>>, vector<64x16xbf16>
    tpu.vector_store %arg8[%c0_21, %c0_22], %59 {strides = array<i32>} : memref<64x16xbf16, #tpu.memory_space<vmem>>, vector<64x16xbf16>,
    return
  }
  func.func @transform_0(%arg0: i32) -> (i32, i32) {
    %c0_i32 = arith.constant 0 : i32
    %c0_i32_0 = arith.constant 0 : i32
    return %arg0, %c0_i32 : i32, i32
  }
  func.func @transform_1(%arg0: i32) -> (i32, i32) {
    %c0_i32 = arith.constant 0 : i32
    %c0_i32_0 = arith.constant 0 : i32
    return %arg0, %c0_i32 : i32, i32
  }
  func.func @transform_2(%arg0: i32) -> (i32, i32) {
    %c0_i32 = arith.constant 0 : i32
    %c0_i32_0 = arith.constant 0 : i32
    %c0_i32_1 = arith.constant 0 : i32
    return %c0_i32, %c0_i32_0 : i32, i32
  }
  func.func @transform_3(%arg0: i32) -> (i32, i32) {
    %c0_i32 = arith.constant 0 : i32
    %c0_i32_0 = arith.constant 0 : i32
    %c0_i32_1 = arith.constant 0 : i32
    return %c0_i32, %c0_i32_0 : i32, i32
  }
  func.func @transform_4(%arg0: i32) -> (i32, i32) {
    %c0_i32 = arith.constant 0 : i32
    %c0_i32_0 = arith.constant 0 : i32
    %c0_i32_1 = arith.constant 0 : i32
    return %c0_i32, %c0_i32_0 : i32, i32
  }
  func.func @transform_5(%arg0: i32) -> (i32, i32) {
    %c0_i32 = arith.constant 0 : i32
    %c0_i32_0 = arith.constant 0 : i32
    return %c0_i32, %arg0 : i32, i32
  }
  func.func @transform_6(%arg0: i32) -> (i32, i32) {
    %c0_i32 = arith.constant 0 : i32
    %c0_i32_0 = arith.constant 0 : i32
    return %c0_i32, %arg0 : i32, i32
  }
  func.func @transform_7(%arg0: i32) -> (i32, i32) {
    %c0_i32 = arith.constant 0 : i32
    %c0_i32_0 = arith.constant 0 : i32
    return %arg0, %c0_i32 : i32, i32
  }
}

module attributes {stable_mosaic.version = 11 : i64} {
  func.func @_tri_mul_out_kernel(%arg0: i32, %arg1: memref<16x8x8xbf16, #tpu.memory_space<vmem>>, %arg2: memref<8x8x16xbf16, #tpu.memory_space<vmem>>, %arg3: memref<8x8x16xf32, #tpu.memory_space<vmem>>, %arg4: memref<1x16xf32, #tpu.memory_space<vmem>>, %arg5: memref<1x16xf32, #tpu.memory_space<vmem>>, %arg6: memref<16x16xbf16, #tpu.memory_space<vmem>>, %arg7: memref<8x8x16xf32, #tpu.memory_space<vmem>>) attributes {dimension_semantics = [#tpu.dimension_semantics<parallel>], iteration_bounds = array<i64: 1>, scalar_prefetch = 0 : i64, scratch_operands = 0 : i64, tpu.core_type = #tpu.core_type<tc>, window_params = [{transform_indices = @transform_0, window_bounds = array<i64: 16, 8, 8>}, {transform_indices = @transform_1, window_bounds = array<i64: 8, 8, 16>}, {transform_indices = @transform_2, window_bounds = array<i64: 8, 8, 16>}, {pipeline_mode = #tpu.pipeline_mode<synchronous>, transform_indices = @transform_3, window_bounds = array<i64: 1, 16>}, {pipeline_mode = #tpu.pipeline_mode<synchronous>, transform_indices = @transform_4, window_bounds = array<i64: 1, 16>}, {pipeline_mode = #tpu.pipeline_mode<synchronous>, transform_indices = @transform_5, window_bounds = array<i64: 16, 16>}, {transform_indices = @transform_6, window_bounds = array<i64: 8, 8, 16>}]} {
    %c0 = arith.constant 0 : index
    %c0_0 = arith.constant 0 : index
    %c0_1 = arith.constant 0 : index
    %0 = vector.load %arg1[%c0, %c0_0, %c0_1] : memref<16x8x8xbf16, #tpu.memory_space<vmem>>, vector<16x1x8xbf16>
    %1 = vector.shape_cast %0 : vector<16x1x8xbf16> to vector<16x8xbf16>
    %2 = tpu.transpose %1, [1, 0] : vector<16x8xbf16> -> vector<8x16xbf16>
    %3 = arith.extf %2 : vector<8x16xbf16> to vector<8x16xf32>
    %c0_2 = arith.constant 0 : index
    %c0_3 = arith.constant 0 : index
    %4 = vector.load %arg4[%c0_2, %c0_3] : memref<1x16xf32, #tpu.memory_space<vmem>>, vector<1x16xf32>
    %c0_4 = arith.constant 0 : index
    %c0_5 = arith.constant 0 : index
    %5 = vector.load %arg5[%c0_4, %c0_5] : memref<1x16xf32, #tpu.memory_space<vmem>>, vector<1x16xf32>
    %cst = arith.constant dense<0.000000e+00> : vector<8xf32>
    %6 = vector.multi_reduction <add>, %3, %cst [1] : vector<8x16xf32> to vector<8xf32>
    %7 = vector.shape_cast %6 : vector<8xf32> to vector<8x1xf32>
    %cst_6 = arith.constant 1.600000e+01 : f32
    %8 = vector.broadcast %cst_6 : f32 to vector<8x1xf32>
    %9 = arith.divf %7, %8 : vector<8x1xf32>
    %10 = vector.broadcast %9 : vector<8x1xf32> to vector<8x16xf32>
    %11 = arith.subf %3, %10 : vector<8x16xf32>
    %12 = arith.mulf %11, %11 : vector<8x16xf32>
    %cst_7 = arith.constant dense<0.000000e+00> : vector<8xf32>
    %13 = vector.multi_reduction <add>, %12, %cst_7 [1] : vector<8x16xf32> to vector<8xf32>
    %14 = vector.shape_cast %13 : vector<8xf32> to vector<8x1xf32>
    %cst_8 = arith.constant 1.600000e+01 : f32
    %15 = vector.broadcast %cst_8 : f32 to vector<8x1xf32>
    %16 = arith.divf %14, %15 : vector<8x1xf32>
    %cst_9 = arith.constant 9.99999974E-6 : f32
    %17 = vector.broadcast %cst_9 : f32 to vector<8x1xf32>
    %18 = arith.addf %16, %17 : vector<8x1xf32>
    %19 = math.rsqrt %18 : vector<8x1xf32>
    %20 = vector.broadcast %19 : vector<8x1xf32> to vector<8x16xf32>
    %21 = arith.mulf %11, %20 : vector<8x16xf32>
    %22 = vector.broadcast %4 : vector<1x16xf32> to vector<8x16xf32>
    %23 = arith.mulf %21, %22 : vector<8x16xf32>
    %24 = vector.broadcast %5 : vector<1x16xf32> to vector<8x16xf32>
    %25 = arith.addf %23, %24 : vector<8x16xf32>
    %26 = arith.truncf %25 : vector<8x16xf32> to vector<8x16xbf16>
    %c0_10 = arith.constant 0 : index
    %c0_11 = arith.constant 0 : index
    %27 = vector.load %arg6[%c0_10, %c0_11] : memref<16x16xbf16, #tpu.memory_space<vmem>>, vector<16x16xbf16>
    %cst_12 = arith.constant dense<0.000000e+00> : vector<8x16xf32>
    %28 = tpu.matmul %26, %27, %cst_12 {dimension_numbers = #tpu.dot_dimension_numbers<[1], [0], [0], [1], [0, 0, 1, 1], [], []>} : vector<8x16xbf16>, vector<16x16xbf16>, vector<8x16xf32> -> vector<8x16xf32>
    %c0_13 = arith.constant 0 : index
    %c0_14 = arith.constant 0 : index
    %c0_15 = arith.constant 0 : index
    %29 = vector.load %arg3[%c0_13, %c0_14, %c0_15] : memref<8x8x16xf32, #tpu.memory_space<vmem>>, vector<1x8x16xf32>
    %30 = vector.shape_cast %29 : vector<1x8x16xf32> to vector<8x16xf32>
    %c0_16 = arith.constant 0 : index
    %c0_17 = arith.constant 0 : index
    %c0_18 = arith.constant 0 : index
    %31 = vector.load %arg2[%c0_16, %c0_17, %c0_18] : memref<8x8x16xbf16, #tpu.memory_space<vmem>>, vector<1x8x16xbf16>
    %32 = vector.shape_cast %31 : vector<1x8x16xbf16> to vector<8x16xbf16>
    %33 = arith.extf %32 : vector<8x16xbf16> to vector<8x16xf32>
    %34 = arith.mulf %28, %33 : vector<8x16xf32>
    %35 = arith.addf %30, %34 : vector<8x16xf32>
    %c0_19 = arith.constant 0 : index
    %c0_20 = arith.constant 0 : index
    %c0_21 = arith.constant 0 : index
    %36 = vector.load %arg7[%c0_19, %c0_20, %c0_21] : memref<8x8x16xf32, #tpu.memory_space<vmem>>, vector<1x8x16xf32>
    %37 = vector.shape_cast %36 : vector<1x8x16xf32> to vector<8x16xf32>
    %38 = vector.shape_cast %35 : vector<8x16xf32> to vector<1x8x16xf32>
    tpu.vector_store %arg7[%c0_19, %c0_20, %c0_21], %38 {strides = array<i32>} : memref<8x8x16xf32, #tpu.memory_space<vmem>>, vector<1x8x16xf32>,
    %c0_22 = arith.constant 0 : index
    %c1 = arith.constant 1 : index
    %c0_23 = arith.constant 0 : index
    %39 = vector.load %arg1[%c0_22, %c1, %c0_23] : memref<16x8x8xbf16, #tpu.memory_space<vmem>>, vector<16x1x8xbf16>
    %40 = vector.shape_cast %39 : vector<16x1x8xbf16> to vector<16x8xbf16>
    %41 = tpu.transpose %40, [1, 0] : vector<16x8xbf16> -> vector<8x16xbf16>
    %42 = arith.extf %41 : vector<8x16xbf16> to vector<8x16xf32>
    %c0_24 = arith.constant 0 : index
    %c0_25 = arith.constant 0 : index
    %43 = vector.load %arg4[%c0_24, %c0_25] : memref<1x16xf32, #tpu.memory_space<vmem>>, vector<1x16xf32>
    %c0_26 = arith.constant 0 : index
    %c0_27 = arith.constant 0 : index
    %44 = vector.load %arg5[%c0_26, %c0_27] : memref<1x16xf32, #tpu.memory_space<vmem>>, vector<1x16xf32>
    %cst_28 = arith.constant dense<0.000000e+00> : vector<8xf32>
    %45 = vector.multi_reduction <add>, %42, %cst_28 [1] : vector<8x16xf32> to vector<8xf32>
    %46 = vector.shape_cast %45 : vector<8xf32> to vector<8x1xf32>
    %cst_29 = arith.constant 1.600000e+01 : f32
    %47 = vector.broadcast %cst_29 : f32 to vector<8x1xf32>
    %48 = arith.divf %46, %47 : vector<8x1xf32>
    %49 = vector.broadcast %48 : vector<8x1xf32> to vector<8x16xf32>
    %50 = arith.subf %42, %49 : vector<8x16xf32>
    %51 = arith.mulf %50, %50 : vector<8x16xf32>
    %cst_30 = arith.constant dense<0.000000e+00> : vector<8xf32>
    %52 = vector.multi_reduction <add>, %51, %cst_30 [1] : vector<8x16xf32> to vector<8xf32>
    %53 = vector.shape_cast %52 : vector<8xf32> to vector<8x1xf32>
    %cst_31 = arith.constant 1.600000e+01 : f32
    %54 = vector.broadcast %cst_31 : f32 to vector<8x1xf32>
    %55 = arith.divf %53, %54 : vector<8x1xf32>
    %cst_32 = arith.constant 9.99999974E-6 : f32
    %56 = vector.broadcast %cst_32 : f32 to vector<8x1xf32>
    %57 = arith.addf %55, %56 : vector<8x1xf32>
    %58 = math.rsqrt %57 : vector<8x1xf32>
    %59 = vector.broadcast %58 : vector<8x1xf32> to vector<8x16xf32>
    %60 = arith.mulf %50, %59 : vector<8x16xf32>
    %61 = vector.broadcast %43 : vector<1x16xf32> to vector<8x16xf32>
    %62 = arith.mulf %60, %61 : vector<8x16xf32>
    %63 = vector.broadcast %44 : vector<1x16xf32> to vector<8x16xf32>
    %64 = arith.addf %62, %63 : vector<8x16xf32>
    %65 = arith.truncf %64 : vector<8x16xf32> to vector<8x16xbf16>
    %c0_33 = arith.constant 0 : index
    %c0_34 = arith.constant 0 : index
    %66 = vector.load %arg6[%c0_33, %c0_34] : memref<16x16xbf16, #tpu.memory_space<vmem>>, vector<16x16xbf16>
    %cst_35 = arith.constant dense<0.000000e+00> : vector<8x16xf32>
    %67 = tpu.matmul %65, %66, %cst_35 {dimension_numbers = #tpu.dot_dimension_numbers<[1], [0], [0], [1], [0, 0, 1, 1], [], []>} : vector<8x16xbf16>, vector<16x16xbf16>, vector<8x16xf32> -> vector<8x16xf32>
    %c1_36 = arith.constant 1 : index
    %c0_37 = arith.constant 0 : index
    %c0_38 = arith.constant 0 : index
    %68 = vector.load %arg3[%c1_36, %c0_37, %c0_38] : memref<8x8x16xf32, #tpu.memory_space<vmem>>, vector<1x8x16xf32>
    %69 = vector.shape_cast %68 : vector<1x8x16xf32> to vector<8x16xf32>
    %c1_39 = arith.constant 1 : index
    %c0_40 = arith.constant 0 : index
    %c0_41 = arith.constant 0 : index
    %70 = vector.load %arg2[%c1_39, %c0_40, %c0_41] : memref<8x8x16xbf16, #tpu.memory_space<vmem>>, vector<1x8x16xbf16>
    %71 = vector.shape_cast %70 : vector<1x8x16xbf16> to vector<8x16xbf16>
    %72 = arith.extf %71 : vector<8x16xbf16> to vector<8x16xf32>
    %73 = arith.mulf %67, %72 : vector<8x16xf32>
    %74 = arith.addf %69, %73 : vector<8x16xf32>
    %c1_42 = arith.constant 1 : index
    %c0_43 = arith.constant 0 : index
    %c0_44 = arith.constant 0 : index
    %75 = vector.load %arg7[%c1_42, %c0_43, %c0_44] : memref<8x8x16xf32, #tpu.memory_space<vmem>>, vector<1x8x16xf32>
    %76 = vector.shape_cast %75 : vector<1x8x16xf32> to vector<8x16xf32>
    %77 = vector.shape_cast %74 : vector<8x16xf32> to vector<1x8x16xf32>
    tpu.vector_store %arg7[%c1_42, %c0_43, %c0_44], %77 {strides = array<i32>} : memref<8x8x16xf32, #tpu.memory_space<vmem>>, vector<1x8x16xf32>,
    %c0_45 = arith.constant 0 : index
    %c2 = arith.constant 2 : index
    %c0_46 = arith.constant 0 : index
    %78 = vector.load %arg1[%c0_45, %c2, %c0_46] : memref<16x8x8xbf16, #tpu.memory_space<vmem>>, vector<16x1x8xbf16>
    %79 = vector.shape_cast %78 : vector<16x1x8xbf16> to vector<16x8xbf16>
    %80 = tpu.transpose %79, [1, 0] : vector<16x8xbf16> -> vector<8x16xbf16>
    %81 = arith.extf %80 : vector<8x16xbf16> to vector<8x16xf32>
    %c0_47 = arith.constant 0 : index
    %c0_48 = arith.constant 0 : index
    %82 = vector.load %arg4[%c0_47, %c0_48] : memref<1x16xf32, #tpu.memory_space<vmem>>, vector<1x16xf32>
    %c0_49 = arith.constant 0 : index
    %c0_50 = arith.constant 0 : index
    %83 = vector.load %arg5[%c0_49, %c0_50] : memref<1x16xf32, #tpu.memory_space<vmem>>, vector<1x16xf32>
    %cst_51 = arith.constant dense<0.000000e+00> : vector<8xf32>
    %84 = vector.multi_reduction <add>, %81, %cst_51 [1] : vector<8x16xf32> to vector<8xf32>
    %85 = vector.shape_cast %84 : vector<8xf32> to vector<8x1xf32>
    %cst_52 = arith.constant 1.600000e+01 : f32
    %86 = vector.broadcast %cst_52 : f32 to vector<8x1xf32>
    %87 = arith.divf %85, %86 : vector<8x1xf32>
    %88 = vector.broadcast %87 : vector<8x1xf32> to vector<8x16xf32>
    %89 = arith.subf %81, %88 : vector<8x16xf32>
    %90 = arith.mulf %89, %89 : vector<8x16xf32>
    %cst_53 = arith.constant dense<0.000000e+00> : vector<8xf32>
    %91 = vector.multi_reduction <add>, %90, %cst_53 [1] : vector<8x16xf32> to vector<8xf32>
    %92 = vector.shape_cast %91 : vector<8xf32> to vector<8x1xf32>
    %cst_54 = arith.constant 1.600000e+01 : f32
    %93 = vector.broadcast %cst_54 : f32 to vector<8x1xf32>
    %94 = arith.divf %92, %93 : vector<8x1xf32>
    %cst_55 = arith.constant 9.99999974E-6 : f32
    %95 = vector.broadcast %cst_55 : f32 to vector<8x1xf32>
    %96 = arith.addf %94, %95 : vector<8x1xf32>
    %97 = math.rsqrt %96 : vector<8x1xf32>
    %98 = vector.broadcast %97 : vector<8x1xf32> to vector<8x16xf32>
    %99 = arith.mulf %89, %98 : vector<8x16xf32>
    %100 = vector.broadcast %82 : vector<1x16xf32> to vector<8x16xf32>
    %101 = arith.mulf %99, %100 : vector<8x16xf32>
    %102 = vector.broadcast %83 : vector<1x16xf32> to vector<8x16xf32>
    %103 = arith.addf %101, %102 : vector<8x16xf32>
    %104 = arith.truncf %103 : vector<8x16xf32> to vector<8x16xbf16>
    %c0_56 = arith.constant 0 : index
    %c0_57 = arith.constant 0 : index
    %105 = vector.load %arg6[%c0_56, %c0_57] : memref<16x16xbf16, #tpu.memory_space<vmem>>, vector<16x16xbf16>
    %cst_58 = arith.constant dense<0.000000e+00> : vector<8x16xf32>
    %106 = tpu.matmul %104, %105, %cst_58 {dimension_numbers = #tpu.dot_dimension_numbers<[1], [0], [0], [1], [0, 0, 1, 1], [], []>} : vector<8x16xbf16>, vector<16x16xbf16>, vector<8x16xf32> -> vector<8x16xf32>
    %c2_59 = arith.constant 2 : index
    %c0_60 = arith.constant 0 : index
    %c0_61 = arith.constant 0 : index
    %107 = vector.load %arg3[%c2_59, %c0_60, %c0_61] : memref<8x8x16xf32, #tpu.memory_space<vmem>>, vector<1x8x16xf32>
    %108 = vector.shape_cast %107 : vector<1x8x16xf32> to vector<8x16xf32>
    %c2_62 = arith.constant 2 : index
    %c0_63 = arith.constant 0 : index
    %c0_64 = arith.constant 0 : index
    %109 = vector.load %arg2[%c2_62, %c0_63, %c0_64] : memref<8x8x16xbf16, #tpu.memory_space<vmem>>, vector<1x8x16xbf16>
    %110 = vector.shape_cast %109 : vector<1x8x16xbf16> to vector<8x16xbf16>
    %111 = arith.extf %110 : vector<8x16xbf16> to vector<8x16xf32>
    %112 = arith.mulf %106, %111 : vector<8x16xf32>
    %113 = arith.addf %108, %112 : vector<8x16xf32>
    %c2_65 = arith.constant 2 : index
    %c0_66 = arith.constant 0 : index
    %c0_67 = arith.constant 0 : index
    %114 = vector.load %arg7[%c2_65, %c0_66, %c0_67] : memref<8x8x16xf32, #tpu.memory_space<vmem>>, vector<1x8x16xf32>
    %115 = vector.shape_cast %114 : vector<1x8x16xf32> to vector<8x16xf32>
    %116 = vector.shape_cast %113 : vector<8x16xf32> to vector<1x8x16xf32>
    tpu.vector_store %arg7[%c2_65, %c0_66, %c0_67], %116 {strides = array<i32>} : memref<8x8x16xf32, #tpu.memory_space<vmem>>, vector<1x8x16xf32>,
    %c0_68 = arith.constant 0 : index
    %c3 = arith.constant 3 : index
    %c0_69 = arith.constant 0 : index
    %117 = vector.load %arg1[%c0_68, %c3, %c0_69] : memref<16x8x8xbf16, #tpu.memory_space<vmem>>, vector<16x1x8xbf16>
    %118 = vector.shape_cast %117 : vector<16x1x8xbf16> to vector<16x8xbf16>
    %119 = tpu.transpose %118, [1, 0] : vector<16x8xbf16> -> vector<8x16xbf16>
    %120 = arith.extf %119 : vector<8x16xbf16> to vector<8x16xf32>
    %c0_70 = arith.constant 0 : index
    %c0_71 = arith.constant 0 : index
    %121 = vector.load %arg4[%c0_70, %c0_71] : memref<1x16xf32, #tpu.memory_space<vmem>>, vector<1x16xf32>
    %c0_72 = arith.constant 0 : index
    %c0_73 = arith.constant 0 : index
    %122 = vector.load %arg5[%c0_72, %c0_73] : memref<1x16xf32, #tpu.memory_space<vmem>>, vector<1x16xf32>
    %cst_74 = arith.constant dense<0.000000e+00> : vector<8xf32>
    %123 = vector.multi_reduction <add>, %120, %cst_74 [1] : vector<8x16xf32> to vector<8xf32>
    %124 = vector.shape_cast %123 : vector<8xf32> to vector<8x1xf32>
    %cst_75 = arith.constant 1.600000e+01 : f32
    %125 = vector.broadcast %cst_75 : f32 to vector<8x1xf32>
    %126 = arith.divf %124, %125 : vector<8x1xf32>
    %127 = vector.broadcast %126 : vector<8x1xf32> to vector<8x16xf32>
    %128 = arith.subf %120, %127 : vector<8x16xf32>
    %129 = arith.mulf %128, %128 : vector<8x16xf32>
    %cst_76 = arith.constant dense<0.000000e+00> : vector<8xf32>
    %130 = vector.multi_reduction <add>, %129, %cst_76 [1] : vector<8x16xf32> to vector<8xf32>
    %131 = vector.shape_cast %130 : vector<8xf32> to vector<8x1xf32>
    %cst_77 = arith.constant 1.600000e+01 : f32
    %132 = vector.broadcast %cst_77 : f32 to vector<8x1xf32>
    %133 = arith.divf %131, %132 : vector<8x1xf32>
    %cst_78 = arith.constant 9.99999974E-6 : f32
    %134 = vector.broadcast %cst_78 : f32 to vector<8x1xf32>
    %135 = arith.addf %133, %134 : vector<8x1xf32>
    %136 = math.rsqrt %135 : vector<8x1xf32>
    %137 = vector.broadcast %136 : vector<8x1xf32> to vector<8x16xf32>
    %138 = arith.mulf %128, %137 : vector<8x16xf32>
    %139 = vector.broadcast %121 : vector<1x16xf32> to vector<8x16xf32>
    %140 = arith.mulf %138, %139 : vector<8x16xf32>
    %141 = vector.broadcast %122 : vector<1x16xf32> to vector<8x16xf32>
    %142 = arith.addf %140, %141 : vector<8x16xf32>
    %143 = arith.truncf %142 : vector<8x16xf32> to vector<8x16xbf16>
    %c0_79 = arith.constant 0 : index
    %c0_80 = arith.constant 0 : index
    %144 = vector.load %arg6[%c0_79, %c0_80] : memref<16x16xbf16, #tpu.memory_space<vmem>>, vector<16x16xbf16>
    %cst_81 = arith.constant dense<0.000000e+00> : vector<8x16xf32>
    %145 = tpu.matmul %143, %144, %cst_81 {dimension_numbers = #tpu.dot_dimension_numbers<[1], [0], [0], [1], [0, 0, 1, 1], [], []>} : vector<8x16xbf16>, vector<16x16xbf16>, vector<8x16xf32> -> vector<8x16xf32>
    %c3_82 = arith.constant 3 : index
    %c0_83 = arith.constant 0 : index
    %c0_84 = arith.constant 0 : index
    %146 = vector.load %arg3[%c3_82, %c0_83, %c0_84] : memref<8x8x16xf32, #tpu.memory_space<vmem>>, vector<1x8x16xf32>
    %147 = vector.shape_cast %146 : vector<1x8x16xf32> to vector<8x16xf32>
    %c3_85 = arith.constant 3 : index
    %c0_86 = arith.constant 0 : index
    %c0_87 = arith.constant 0 : index
    %148 = vector.load %arg2[%c3_85, %c0_86, %c0_87] : memref<8x8x16xbf16, #tpu.memory_space<vmem>>, vector<1x8x16xbf16>
    %149 = vector.shape_cast %148 : vector<1x8x16xbf16> to vector<8x16xbf16>
    %150 = arith.extf %149 : vector<8x16xbf16> to vector<8x16xf32>
    %151 = arith.mulf %145, %150 : vector<8x16xf32>
    %152 = arith.addf %147, %151 : vector<8x16xf32>
    %c3_88 = arith.constant 3 : index
    %c0_89 = arith.constant 0 : index
    %c0_90 = arith.constant 0 : index
    %153 = vector.load %arg7[%c3_88, %c0_89, %c0_90] : memref<8x8x16xf32, #tpu.memory_space<vmem>>, vector<1x8x16xf32>
    %154 = vector.shape_cast %153 : vector<1x8x16xf32> to vector<8x16xf32>
    %155 = vector.shape_cast %152 : vector<8x16xf32> to vector<1x8x16xf32>
    tpu.vector_store %arg7[%c3_88, %c0_89, %c0_90], %155 {strides = array<i32>} : memref<8x8x16xf32, #tpu.memory_space<vmem>>, vector<1x8x16xf32>,
    %c0_91 = arith.constant 0 : index
    %c4 = arith.constant 4 : index
    %c0_92 = arith.constant 0 : index
    %156 = vector.load %arg1[%c0_91, %c4, %c0_92] : memref<16x8x8xbf16, #tpu.memory_space<vmem>>, vector<16x1x8xbf16>
    %157 = vector.shape_cast %156 : vector<16x1x8xbf16> to vector<16x8xbf16>
    %158 = tpu.transpose %157, [1, 0] : vector<16x8xbf16> -> vector<8x16xbf16>
    %159 = arith.extf %158 : vector<8x16xbf16> to vector<8x16xf32>
    %c0_93 = arith.constant 0 : index
    %c0_94 = arith.constant 0 : index
    %160 = vector.load %arg4[%c0_93, %c0_94] : memref<1x16xf32, #tpu.memory_space<vmem>>, vector<1x16xf32>
    %c0_95 = arith.constant 0 : index
    %c0_96 = arith.constant 0 : index
    %161 = vector.load %arg5[%c0_95, %c0_96] : memref<1x16xf32, #tpu.memory_space<vmem>>, vector<1x16xf32>
    %cst_97 = arith.constant dense<0.000000e+00> : vector<8xf32>
    %162 = vector.multi_reduction <add>, %159, %cst_97 [1] : vector<8x16xf32> to vector<8xf32>
    %163 = vector.shape_cast %162 : vector<8xf32> to vector<8x1xf32>
    %cst_98 = arith.constant 1.600000e+01 : f32
    %164 = vector.broadcast %cst_98 : f32 to vector<8x1xf32>
    %165 = arith.divf %163, %164 : vector<8x1xf32>
    %166 = vector.broadcast %165 : vector<8x1xf32> to vector<8x16xf32>
    %167 = arith.subf %159, %166 : vector<8x16xf32>
    %168 = arith.mulf %167, %167 : vector<8x16xf32>
    %cst_99 = arith.constant dense<0.000000e+00> : vector<8xf32>
    %169 = vector.multi_reduction <add>, %168, %cst_99 [1] : vector<8x16xf32> to vector<8xf32>
    %170 = vector.shape_cast %169 : vector<8xf32> to vector<8x1xf32>
    %cst_100 = arith.constant 1.600000e+01 : f32
    %171 = vector.broadcast %cst_100 : f32 to vector<8x1xf32>
    %172 = arith.divf %170, %171 : vector<8x1xf32>
    %cst_101 = arith.constant 9.99999974E-6 : f32
    %173 = vector.broadcast %cst_101 : f32 to vector<8x1xf32>
    %174 = arith.addf %172, %173 : vector<8x1xf32>
    %175 = math.rsqrt %174 : vector<8x1xf32>
    %176 = vector.broadcast %175 : vector<8x1xf32> to vector<8x16xf32>
    %177 = arith.mulf %167, %176 : vector<8x16xf32>
    %178 = vector.broadcast %160 : vector<1x16xf32> to vector<8x16xf32>
    %179 = arith.mulf %177, %178 : vector<8x16xf32>
    %180 = vector.broadcast %161 : vector<1x16xf32> to vector<8x16xf32>
    %181 = arith.addf %179, %180 : vector<8x16xf32>
    %182 = arith.truncf %181 : vector<8x16xf32> to vector<8x16xbf16>
    %c0_102 = arith.constant 0 : index
    %c0_103 = arith.constant 0 : index
    %183 = vector.load %arg6[%c0_102, %c0_103] : memref<16x16xbf16, #tpu.memory_space<vmem>>, vector<16x16xbf16>
    %cst_104 = arith.constant dense<0.000000e+00> : vector<8x16xf32>
    %184 = tpu.matmul %182, %183, %cst_104 {dimension_numbers = #tpu.dot_dimension_numbers<[1], [0], [0], [1], [0, 0, 1, 1], [], []>} : vector<8x16xbf16>, vector<16x16xbf16>, vector<8x16xf32> -> vector<8x16xf32>
    %c4_105 = arith.constant 4 : index
    %c0_106 = arith.constant 0 : index
    %c0_107 = arith.constant 0 : index
    %185 = vector.load %arg3[%c4_105, %c0_106, %c0_107] : memref<8x8x16xf32, #tpu.memory_space<vmem>>, vector<1x8x16xf32>
    %186 = vector.shape_cast %185 : vector<1x8x16xf32> to vector<8x16xf32>
    %c4_108 = arith.constant 4 : index
    %c0_109 = arith.constant 0 : index
    %c0_110 = arith.constant 0 : index
    %187 = vector.load %arg2[%c4_108, %c0_109, %c0_110] : memref<8x8x16xbf16, #tpu.memory_space<vmem>>, vector<1x8x16xbf16>
    %188 = vector.shape_cast %187 : vector<1x8x16xbf16> to vector<8x16xbf16>
    %189 = arith.extf %188 : vector<8x16xbf16> to vector<8x16xf32>
    %190 = arith.mulf %184, %189 : vector<8x16xf32>
    %191 = arith.addf %186, %190 : vector<8x16xf32>
    %c4_111 = arith.constant 4 : index
    %c0_112 = arith.constant 0 : index
    %c0_113 = arith.constant 0 : index
    %192 = vector.load %arg7[%c4_111, %c0_112, %c0_113] : memref<8x8x16xf32, #tpu.memory_space<vmem>>, vector<1x8x16xf32>
    %193 = vector.shape_cast %192 : vector<1x8x16xf32> to vector<8x16xf32>
    %194 = vector.shape_cast %191 : vector<8x16xf32> to vector<1x8x16xf32>
    tpu.vector_store %arg7[%c4_111, %c0_112, %c0_113], %194 {strides = array<i32>} : memref<8x8x16xf32, #tpu.memory_space<vmem>>, vector<1x8x16xf32>,
    %c0_114 = arith.constant 0 : index
    %c5 = arith.constant 5 : index
    %c0_115 = arith.constant 0 : index
    %195 = vector.load %arg1[%c0_114, %c5, %c0_115] : memref<16x8x8xbf16, #tpu.memory_space<vmem>>, vector<16x1x8xbf16>
    %196 = vector.shape_cast %195 : vector<16x1x8xbf16> to vector<16x8xbf16>
    %197 = tpu.transpose %196, [1, 0] : vector<16x8xbf16> -> vector<8x16xbf16>
    %198 = arith.extf %197 : vector<8x16xbf16> to vector<8x16xf32>
    %c0_116 = arith.constant 0 : index
    %c0_117 = arith.constant 0 : index
    %199 = vector.load %arg4[%c0_116, %c0_117] : memref<1x16xf32, #tpu.memory_space<vmem>>, vector<1x16xf32>
    %c0_118 = arith.constant 0 : index
    %c0_119 = arith.constant 0 : index
    %200 = vector.load %arg5[%c0_118, %c0_119] : memref<1x16xf32, #tpu.memory_space<vmem>>, vector<1x16xf32>
    %cst_120 = arith.constant dense<0.000000e+00> : vector<8xf32>
    %201 = vector.multi_reduction <add>, %198, %cst_120 [1] : vector<8x16xf32> to vector<8xf32>
    %202 = vector.shape_cast %201 : vector<8xf32> to vector<8x1xf32>
    %cst_121 = arith.constant 1.600000e+01 : f32
    %203 = vector.broadcast %cst_121 : f32 to vector<8x1xf32>
    %204 = arith.divf %202, %203 : vector<8x1xf32>
    %205 = vector.broadcast %204 : vector<8x1xf32> to vector<8x16xf32>
    %206 = arith.subf %198, %205 : vector<8x16xf32>
    %207 = arith.mulf %206, %206 : vector<8x16xf32>
    %cst_122 = arith.constant dense<0.000000e+00> : vector<8xf32>
    %208 = vector.multi_reduction <add>, %207, %cst_122 [1] : vector<8x16xf32> to vector<8xf32>
    %209 = vector.shape_cast %208 : vector<8xf32> to vector<8x1xf32>
    %cst_123 = arith.constant 1.600000e+01 : f32
    %210 = vector.broadcast %cst_123 : f32 to vector<8x1xf32>
    %211 = arith.divf %209, %210 : vector<8x1xf32>
    %cst_124 = arith.constant 9.99999974E-6 : f32
    %212 = vector.broadcast %cst_124 : f32 to vector<8x1xf32>
    %213 = arith.addf %211, %212 : vector<8x1xf32>
    %214 = math.rsqrt %213 : vector<8x1xf32>
    %215 = vector.broadcast %214 : vector<8x1xf32> to vector<8x16xf32>
    %216 = arith.mulf %206, %215 : vector<8x16xf32>
    %217 = vector.broadcast %199 : vector<1x16xf32> to vector<8x16xf32>
    %218 = arith.mulf %216, %217 : vector<8x16xf32>
    %219 = vector.broadcast %200 : vector<1x16xf32> to vector<8x16xf32>
    %220 = arith.addf %218, %219 : vector<8x16xf32>
    %221 = arith.truncf %220 : vector<8x16xf32> to vector<8x16xbf16>
    %c0_125 = arith.constant 0 : index
    %c0_126 = arith.constant 0 : index
    %222 = vector.load %arg6[%c0_125, %c0_126] : memref<16x16xbf16, #tpu.memory_space<vmem>>, vector<16x16xbf16>
    %cst_127 = arith.constant dense<0.000000e+00> : vector<8x16xf32>
    %223 = tpu.matmul %221, %222, %cst_127 {dimension_numbers = #tpu.dot_dimension_numbers<[1], [0], [0], [1], [0, 0, 1, 1], [], []>} : vector<8x16xbf16>, vector<16x16xbf16>, vector<8x16xf32> -> vector<8x16xf32>
    %c5_128 = arith.constant 5 : index
    %c0_129 = arith.constant 0 : index
    %c0_130 = arith.constant 0 : index
    %224 = vector.load %arg3[%c5_128, %c0_129, %c0_130] : memref<8x8x16xf32, #tpu.memory_space<vmem>>, vector<1x8x16xf32>
    %225 = vector.shape_cast %224 : vector<1x8x16xf32> to vector<8x16xf32>
    %c5_131 = arith.constant 5 : index
    %c0_132 = arith.constant 0 : index
    %c0_133 = arith.constant 0 : index
    %226 = vector.load %arg2[%c5_131, %c0_132, %c0_133] : memref<8x8x16xbf16, #tpu.memory_space<vmem>>, vector<1x8x16xbf16>
    %227 = vector.shape_cast %226 : vector<1x8x16xbf16> to vector<8x16xbf16>
    %228 = arith.extf %227 : vector<8x16xbf16> to vector<8x16xf32>
    %229 = arith.mulf %223, %228 : vector<8x16xf32>
    %230 = arith.addf %225, %229 : vector<8x16xf32>
    %c5_134 = arith.constant 5 : index
    %c0_135 = arith.constant 0 : index
    %c0_136 = arith.constant 0 : index
    %231 = vector.load %arg7[%c5_134, %c0_135, %c0_136] : memref<8x8x16xf32, #tpu.memory_space<vmem>>, vector<1x8x16xf32>
    %232 = vector.shape_cast %231 : vector<1x8x16xf32> to vector<8x16xf32>
    %233 = vector.shape_cast %230 : vector<8x16xf32> to vector<1x8x16xf32>
    tpu.vector_store %arg7[%c5_134, %c0_135, %c0_136], %233 {strides = array<i32>} : memref<8x8x16xf32, #tpu.memory_space<vmem>>, vector<1x8x16xf32>,
    %c0_137 = arith.constant 0 : index
    %c6 = arith.constant 6 : index
    %c0_138 = arith.constant 0 : index
    %234 = vector.load %arg1[%c0_137, %c6, %c0_138] : memref<16x8x8xbf16, #tpu.memory_space<vmem>>, vector<16x1x8xbf16>
    %235 = vector.shape_cast %234 : vector<16x1x8xbf16> to vector<16x8xbf16>
    %236 = tpu.transpose %235, [1, 0] : vector<16x8xbf16> -> vector<8x16xbf16>
    %237 = arith.extf %236 : vector<8x16xbf16> to vector<8x16xf32>
    %c0_139 = arith.constant 0 : index
    %c0_140 = arith.constant 0 : index
    %238 = vector.load %arg4[%c0_139, %c0_140] : memref<1x16xf32, #tpu.memory_space<vmem>>, vector<1x16xf32>
    %c0_141 = arith.constant 0 : index
    %c0_142 = arith.constant 0 : index
    %239 = vector.load %arg5[%c0_141, %c0_142] : memref<1x16xf32, #tpu.memory_space<vmem>>, vector<1x16xf32>
    %cst_143 = arith.constant dense<0.000000e+00> : vector<8xf32>
    %240 = vector.multi_reduction <add>, %237, %cst_143 [1] : vector<8x16xf32> to vector<8xf32>
    %241 = vector.shape_cast %240 : vector<8xf32> to vector<8x1xf32>
    %cst_144 = arith.constant 1.600000e+01 : f32
    %242 = vector.broadcast %cst_144 : f32 to vector<8x1xf32>
    %243 = arith.divf %241, %242 : vector<8x1xf32>
    %244 = vector.broadcast %243 : vector<8x1xf32> to vector<8x16xf32>
    %245 = arith.subf %237, %244 : vector<8x16xf32>
    %246 = arith.mulf %245, %245 : vector<8x16xf32>
    %cst_145 = arith.constant dense<0.000000e+00> : vector<8xf32>
    %247 = vector.multi_reduction <add>, %246, %cst_145 [1] : vector<8x16xf32> to vector<8xf32>
    %248 = vector.shape_cast %247 : vector<8xf32> to vector<8x1xf32>
    %cst_146 = arith.constant 1.600000e+01 : f32
    %249 = vector.broadcast %cst_146 : f32 to vector<8x1xf32>
    %250 = arith.divf %248, %249 : vector<8x1xf32>
    %cst_147 = arith.constant 9.99999974E-6 : f32
    %251 = vector.broadcast %cst_147 : f32 to vector<8x1xf32>
    %252 = arith.addf %250, %251 : vector<8x1xf32>
    %253 = math.rsqrt %252 : vector<8x1xf32>
    %254 = vector.broadcast %253 : vector<8x1xf32> to vector<8x16xf32>
    %255 = arith.mulf %245, %254 : vector<8x16xf32>
    %256 = vector.broadcast %238 : vector<1x16xf32> to vector<8x16xf32>
    %257 = arith.mulf %255, %256 : vector<8x16xf32>
    %258 = vector.broadcast %239 : vector<1x16xf32> to vector<8x16xf32>
    %259 = arith.addf %257, %258 : vector<8x16xf32>
    %260 = arith.truncf %259 : vector<8x16xf32> to vector<8x16xbf16>
    %c0_148 = arith.constant 0 : index
    %c0_149 = arith.constant 0 : index
    %261 = vector.load %arg6[%c0_148, %c0_149] : memref<16x16xbf16, #tpu.memory_space<vmem>>, vector<16x16xbf16>
    %cst_150 = arith.constant dense<0.000000e+00> : vector<8x16xf32>
    %262 = tpu.matmul %260, %261, %cst_150 {dimension_numbers = #tpu.dot_dimension_numbers<[1], [0], [0], [1], [0, 0, 1, 1], [], []>} : vector<8x16xbf16>, vector<16x16xbf16>, vector<8x16xf32> -> vector<8x16xf32>
    %c6_151 = arith.constant 6 : index
    %c0_152 = arith.constant 0 : index
    %c0_153 = arith.constant 0 : index
    %263 = vector.load %arg3[%c6_151, %c0_152, %c0_153] : memref<8x8x16xf32, #tpu.memory_space<vmem>>, vector<1x8x16xf32>
    %264 = vector.shape_cast %263 : vector<1x8x16xf32> to vector<8x16xf32>
    %c6_154 = arith.constant 6 : index
    %c0_155 = arith.constant 0 : index
    %c0_156 = arith.constant 0 : index
    %265 = vector.load %arg2[%c6_154, %c0_155, %c0_156] : memref<8x8x16xbf16, #tpu.memory_space<vmem>>, vector<1x8x16xbf16>
    %266 = vector.shape_cast %265 : vector<1x8x16xbf16> to vector<8x16xbf16>
    %267 = arith.extf %266 : vector<8x16xbf16> to vector<8x16xf32>
    %268 = arith.mulf %262, %267 : vector<8x16xf32>
    %269 = arith.addf %264, %268 : vector<8x16xf32>
    %c6_157 = arith.constant 6 : index
    %c0_158 = arith.constant 0 : index
    %c0_159 = arith.constant 0 : index
    %270 = vector.load %arg7[%c6_157, %c0_158, %c0_159] : memref<8x8x16xf32, #tpu.memory_space<vmem>>, vector<1x8x16xf32>
    %271 = vector.shape_cast %270 : vector<1x8x16xf32> to vector<8x16xf32>
    %272 = vector.shape_cast %269 : vector<8x16xf32> to vector<1x8x16xf32>
    tpu.vector_store %arg7[%c6_157, %c0_158, %c0_159], %272 {strides = array<i32>} : memref<8x8x16xf32, #tpu.memory_space<vmem>>, vector<1x8x16xf32>,
    %c0_160 = arith.constant 0 : index
    %c7 = arith.constant 7 : index
    %c0_161 = arith.constant 0 : index
    %273 = vector.load %arg1[%c0_160, %c7, %c0_161] : memref<16x8x8xbf16, #tpu.memory_space<vmem>>, vector<16x1x8xbf16>
    %274 = vector.shape_cast %273 : vector<16x1x8xbf16> to vector<16x8xbf16>
    %275 = tpu.transpose %274, [1, 0] : vector<16x8xbf16> -> vector<8x16xbf16>
    %276 = arith.extf %275 : vector<8x16xbf16> to vector<8x16xf32>
    %c0_162 = arith.constant 0 : index
    %c0_163 = arith.constant 0 : index
    %277 = vector.load %arg4[%c0_162, %c0_163] : memref<1x16xf32, #tpu.memory_space<vmem>>, vector<1x16xf32>
    %c0_164 = arith.constant 0 : index
    %c0_165 = arith.constant 0 : index
    %278 = vector.load %arg5[%c0_164, %c0_165] : memref<1x16xf32, #tpu.memory_space<vmem>>, vector<1x16xf32>
    %cst_166 = arith.constant dense<0.000000e+00> : vector<8xf32>
    %279 = vector.multi_reduction <add>, %276, %cst_166 [1] : vector<8x16xf32> to vector<8xf32>
    %280 = vector.shape_cast %279 : vector<8xf32> to vector<8x1xf32>
    %cst_167 = arith.constant 1.600000e+01 : f32
    %281 = vector.broadcast %cst_167 : f32 to vector<8x1xf32>
    %282 = arith.divf %280, %281 : vector<8x1xf32>
    %283 = vector.broadcast %282 : vector<8x1xf32> to vector<8x16xf32>
    %284 = arith.subf %276, %283 : vector<8x16xf32>
    %285 = arith.mulf %284, %284 : vector<8x16xf32>
    %cst_168 = arith.constant dense<0.000000e+00> : vector<8xf32>
    %286 = vector.multi_reduction <add>, %285, %cst_168 [1] : vector<8x16xf32> to vector<8xf32>
    %287 = vector.shape_cast %286 : vector<8xf32> to vector<8x1xf32>
    %cst_169 = arith.constant 1.600000e+01 : f32
    %288 = vector.broadcast %cst_169 : f32 to vector<8x1xf32>
    %289 = arith.divf %287, %288 : vector<8x1xf32>
    %cst_170 = arith.constant 9.99999974E-6 : f32
    %290 = vector.broadcast %cst_170 : f32 to vector<8x1xf32>
    %291 = arith.addf %289, %290 : vector<8x1xf32>
    %292 = math.rsqrt %291 : vector<8x1xf32>
    %293 = vector.broadcast %292 : vector<8x1xf32> to vector<8x16xf32>
    %294 = arith.mulf %284, %293 : vector<8x16xf32>
    %295 = vector.broadcast %277 : vector<1x16xf32> to vector<8x16xf32>
    %296 = arith.mulf %294, %295 : vector<8x16xf32>
    %297 = vector.broadcast %278 : vector<1x16xf32> to vector<8x16xf32>
    %298 = arith.addf %296, %297 : vector<8x16xf32>
    %299 = arith.truncf %298 : vector<8x16xf32> to vector<8x16xbf16>
    %c0_171 = arith.constant 0 : index
    %c0_172 = arith.constant 0 : index
    %300 = vector.load %arg6[%c0_171, %c0_172] : memref<16x16xbf16, #tpu.memory_space<vmem>>, vector<16x16xbf16>
    %cst_173 = arith.constant dense<0.000000e+00> : vector<8x16xf32>
    %301 = tpu.matmul %299, %300, %cst_173 {dimension_numbers = #tpu.dot_dimension_numbers<[1], [0], [0], [1], [0, 0, 1, 1], [], []>} : vector<8x16xbf16>, vector<16x16xbf16>, vector<8x16xf32> -> vector<8x16xf32>
    %c7_174 = arith.constant 7 : index
    %c0_175 = arith.constant 0 : index
    %c0_176 = arith.constant 0 : index
    %302 = vector.load %arg3[%c7_174, %c0_175, %c0_176] : memref<8x8x16xf32, #tpu.memory_space<vmem>>, vector<1x8x16xf32>
    %303 = vector.shape_cast %302 : vector<1x8x16xf32> to vector<8x16xf32>
    %c7_177 = arith.constant 7 : index
    %c0_178 = arith.constant 0 : index
    %c0_179 = arith.constant 0 : index
    %304 = vector.load %arg2[%c7_177, %c0_178, %c0_179] : memref<8x8x16xbf16, #tpu.memory_space<vmem>>, vector<1x8x16xbf16>
    %305 = vector.shape_cast %304 : vector<1x8x16xbf16> to vector<8x16xbf16>
    %306 = arith.extf %305 : vector<8x16xbf16> to vector<8x16xf32>
    %307 = arith.mulf %301, %306 : vector<8x16xf32>
    %308 = arith.addf %303, %307 : vector<8x16xf32>
    %c7_180 = arith.constant 7 : index
    %c0_181 = arith.constant 0 : index
    %c0_182 = arith.constant 0 : index
    %309 = vector.load %arg7[%c7_180, %c0_181, %c0_182] : memref<8x8x16xf32, #tpu.memory_space<vmem>>, vector<1x8x16xf32>
    %310 = vector.shape_cast %309 : vector<1x8x16xf32> to vector<8x16xf32>
    %311 = vector.shape_cast %308 : vector<8x16xf32> to vector<1x8x16xf32>
    tpu.vector_store %arg7[%c7_180, %c0_181, %c0_182], %311 {strides = array<i32>} : memref<8x8x16xf32, #tpu.memory_space<vmem>>, vector<1x8x16xf32>,
    return
  }
  func.func @transform_0(%arg0: i32) -> (i32, i32, i32) {
    %c0_i32 = arith.constant 0 : i32
    %c0_i32_0 = arith.constant 0 : i32
    %c0_i32_1 = arith.constant 0 : i32
    return %c0_i32, %arg0, %c0_i32_0 : i32, i32, i32
  }
  func.func @transform_1(%arg0: i32) -> (i32, i32, i32) {
    %c0_i32 = arith.constant 0 : i32
    %c0_i32_0 = arith.constant 0 : i32
    %c0_i32_1 = arith.constant 0 : i32
    return %arg0, %c0_i32, %c0_i32_0 : i32, i32, i32
  }
  func.func @transform_2(%arg0: i32) -> (i32, i32, i32) {
    %c0_i32 = arith.constant 0 : i32
    %c0_i32_0 = arith.constant 0 : i32
    %c0_i32_1 = arith.constant 0 : i32
    return %arg0, %c0_i32, %c0_i32_0 : i32, i32, i32
  }
  func.func @transform_3(%arg0: i32) -> (i32, i32) {
    %c0_i32 = arith.constant 0 : i32
    %c0_i32_0 = arith.constant 0 : i32
    %c0_i32_1 = arith.constant 0 : i32
    return %c0_i32, %c0_i32_0 : i32, i32
  }
  func.func @transform_4(%arg0: i32) -> (i32, i32) {
    %c0_i32 = arith.constant 0 : i32
    %c0_i32_0 = arith.constant 0 : i32
    %c0_i32_1 = arith.constant 0 : i32
    return %c0_i32, %c0_i32_0 : i32, i32
  }
  func.func @transform_5(%arg0: i32) -> (i32, i32) {
    %c0_i32 = arith.constant 0 : i32
    %c0_i32_0 = arith.constant 0 : i32
    %c0_i32_1 = arith.constant 0 : i32
    return %c0_i32, %c0_i32_0 : i32, i32
  }
  func.func @transform_6(%arg0: i32) -> (i32, i32, i32) {
    %c0_i32 = arith.constant 0 : i32
    %c0_i32_0 = arith.constant 0 : i32
    %c0_i32_1 = arith.constant 0 : i32
    return %arg0, %c0_i32, %c0_i32_0 : i32, i32, i32
  }
}

module attributes {stable_mosaic.version = 11 : i64} {
  func.func @_attn_proj_kernel(%arg0: i32, %arg1: memref<64x16xf32, #tpu.memory_space<vmem>>, %arg2: memref<1x16xf32, #tpu.memory_space<vmem>>, %arg3: memref<1x16xf32, #tpu.memory_space<vmem>>, %arg4: memref<16x68xbf16, #tpu.memory_space<vmem>>, %arg5: memref<4x64x4xbf16, #tpu.memory_space<vmem>>, %arg6: memref<4x64x4xbf16, #tpu.memory_space<vmem>>, %arg7: memref<4x64x4xbf16, #tpu.memory_space<vmem>>, %arg8: memref<4x64x4xbf16, #tpu.memory_space<vmem>>, %arg9: memref<4x64xbf16, #tpu.memory_space<vmem>>) attributes {dimension_semantics = [#tpu.dimension_semantics<parallel>], iteration_bounds = array<i64: 1>, scalar_prefetch = 0 : i64, scratch_operands = 0 : i64, tpu.core_type = #tpu.core_type<tc>, window_params = [{transform_indices = @transform_0, window_bounds = array<i64: 64, 16>}, {pipeline_mode = #tpu.pipeline_mode<synchronous>, transform_indices = @transform_1, window_bounds = array<i64: 1, 16>}, {pipeline_mode = #tpu.pipeline_mode<synchronous>, transform_indices = @transform_2, window_bounds = array<i64: 1, 16>}, {pipeline_mode = #tpu.pipeline_mode<synchronous>, transform_indices = @transform_3, window_bounds = array<i64: 16, 68>}, {transform_indices = @transform_4, window_bounds = array<i64: 4, 64, 4>}, {transform_indices = @transform_5, window_bounds = array<i64: 4, 64, 4>}, {transform_indices = @transform_6, window_bounds = array<i64: 4, 64, 4>}, {transform_indices = @transform_7, window_bounds = array<i64: 4, 64, 4>}, {transform_indices = @transform_8, window_bounds = array<i64: 4, 64>}]} {
    %c0 = arith.constant 0 : index
    %c0_0 = arith.constant 0 : index
    %0 = vector.load %arg1[%c0, %c0_0] : memref<64x16xf32, #tpu.memory_space<vmem>>, vector<64x16xf32>
    %c0_1 = arith.constant 0 : index
    %c0_2 = arith.constant 0 : index
    %1 = vector.load %arg2[%c0_1, %c0_2] : memref<1x16xf32, #tpu.memory_space<vmem>>, vector<1x16xf32>
    %c0_3 = arith.constant 0 : index
    %c0_4 = arith.constant 0 : index
    %2 = vector.load %arg3[%c0_3, %c0_4] : memref<1x16xf32, #tpu.memory_space<vmem>>, vector<1x16xf32>
    %cst = arith.constant dense<0.000000e+00> : vector<64xf32>
    %3 = vector.multi_reduction <add>, %0, %cst [1] : vector<64x16xf32> to vector<64xf32>
    %4 = vector.shape_cast %3 : vector<64xf32> to vector<64x1xf32>
    %cst_5 = arith.constant 1.600000e+01 : f32
    %5 = vector.broadcast %cst_5 : f32 to vector<64x1xf32>
    %6 = arith.divf %4, %5 : vector<64x1xf32>
    %7 = vector.broadcast %6 : vector<64x1xf32> to vector<64x16xf32>
    %8 = arith.subf %0, %7 : vector<64x16xf32>
    %9 = arith.mulf %8, %8 : vector<64x16xf32>
    %cst_6 = arith.constant dense<0.000000e+00> : vector<64xf32>
    %10 = vector.multi_reduction <add>, %9, %cst_6 [1] : vector<64x16xf32> to vector<64xf32>
    %11 = vector.shape_cast %10 : vector<64xf32> to vector<64x1xf32>
    %cst_7 = arith.constant 1.600000e+01 : f32
    %12 = vector.broadcast %cst_7 : f32 to vector<64x1xf32>
    %13 = arith.divf %11, %12 : vector<64x1xf32>
    %cst_8 = arith.constant 9.99999974E-6 : f32
    %14 = vector.broadcast %cst_8 : f32 to vector<64x1xf32>
    %15 = arith.addf %13, %14 : vector<64x1xf32>
    %16 = math.rsqrt %15 : vector<64x1xf32>
    %17 = vector.broadcast %16 : vector<64x1xf32> to vector<64x16xf32>
    %18 = arith.mulf %8, %17 : vector<64x16xf32>
    %19 = vector.broadcast %1 : vector<1x16xf32> to vector<64x16xf32>
    %20 = arith.mulf %18, %19 : vector<64x16xf32>
    %21 = vector.broadcast %2 : vector<1x16xf32> to vector<64x16xf32>
    %22 = arith.addf %20, %21 : vector<64x16xf32>
    %23 = arith.truncf %22 : vector<64x16xf32> to vector<64x16xbf16>
    %c0_9 = arith.constant 0 : index
    %c0_10 = arith.constant 0 : index
    %24 = vector.load %arg4[%c0_9, %c0_10] : memref<16x68xbf16, #tpu.memory_space<vmem>>, vector<16x68xbf16>
    %cst_11 = arith.constant dense<0.000000e+00> : vector<64x68xf32>
    %25 = tpu.matmul %23, %24, %cst_11 {dimension_numbers = #tpu.dot_dimension_numbers<[1], [0], [0], [1], [0, 0, 1, 1], [], []>} : vector<64x16xbf16>, vector<16x68xbf16>, vector<64x68xf32> -> vector<64x68xf32>
    %26 = vector.extract_strided_slice %25 {offsets = [0, 0], sizes = [64, 4], strides = [1, 1]} : vector<64x68xf32> to vector<64x4xf32>
    %27 = arith.truncf %26 : vector<64x4xf32> to vector<64x4xbf16>
    %c0_12 = arith.constant 0 : index
    %c0_13 = arith.constant 0 : index
    %c0_14 = arith.constant 0 : index
    %28 = vector.load %arg5[%c0_12, %c0_13, %c0_14] : memref<4x64x4xbf16, #tpu.memory_space<vmem>>, vector<1x64x4xbf16>
    %29 = vector.shape_cast %28 : vector<1x64x4xbf16> to vector<64x4xbf16>
    %30 = vector.shape_cast %27 : vector<64x4xbf16> to vector<1x64x4xbf16>
    tpu.vector_store %arg5[%c0_12, %c0_13, %c0_14], %30 {strides = array<i32>} : memref<4x64x4xbf16, #tpu.memory_space<vmem>>, vector<1x64x4xbf16>,
    %31 = vector.extract_strided_slice %25 {offsets = [0, 16], sizes = [64, 4], strides = [1, 1]} : vector<64x68xf32> to vector<64x4xf32>
    %32 = arith.truncf %31 : vector<64x4xf32> to vector<64x4xbf16>
    %c0_15 = arith.constant 0 : index
    %c0_16 = arith.constant 0 : index
    %c0_17 = arith.constant 0 : index
    %33 = vector.load %arg6[%c0_15, %c0_16, %c0_17] : memref<4x64x4xbf16, #tpu.memory_space<vmem>>, vector<1x64x4xbf16>
    %34 = vector.shape_cast %33 : vector<1x64x4xbf16> to vector<64x4xbf16>
    %35 = vector.shape_cast %32 : vector<64x4xbf16> to vector<1x64x4xbf16>
    tpu.vector_store %arg6[%c0_15, %c0_16, %c0_17], %35 {strides = array<i32>} : memref<4x64x4xbf16, #tpu.memory_space<vmem>>, vector<1x64x4xbf16>,
    %36 = vector.extract_strided_slice %25 {offsets = [0, 32], sizes = [64, 4], strides = [1, 1]} : vector<64x68xf32> to vector<64x4xf32>
    %37 = arith.truncf %36 : vector<64x4xf32> to vector<64x4xbf16>
    %c0_18 = arith.constant 0 : index
    %c0_19 = arith.constant 0 : index
    %c0_20 = arith.constant 0 : index
    %38 = vector.load %arg7[%c0_18, %c0_19, %c0_20] : memref<4x64x4xbf16, #tpu.memory_space<vmem>>, vector<1x64x4xbf16>
    %39 = vector.shape_cast %38 : vector<1x64x4xbf16> to vector<64x4xbf16>
    %40 = vector.shape_cast %37 : vector<64x4xbf16> to vector<1x64x4xbf16>
    tpu.vector_store %arg7[%c0_18, %c0_19, %c0_20], %40 {strides = array<i32>} : memref<4x64x4xbf16, #tpu.memory_space<vmem>>, vector<1x64x4xbf16>,
    %41 = vector.extract_strided_slice %25 {offsets = [0, 48], sizes = [64, 4], strides = [1, 1]} : vector<64x68xf32> to vector<64x4xf32>
    %42 = arith.negf %41 : vector<64x4xf32>
    %43 = math.exp %42 : vector<64x4xf32>
    %cst_21 = arith.constant 1.000000e+00 : f32
    %44 = vector.broadcast %cst_21 : f32 to vector<64x4xf32>
    %45 = arith.addf %44, %43 : vector<64x4xf32>
    %46 = arith.divf %44, %45 : vector<64x4xf32>
    %47 = arith.truncf %46 : vector<64x4xf32> to vector<64x4xbf16>
    %c0_22 = arith.constant 0 : index
    %c0_23 = arith.constant 0 : index
    %c0_24 = arith.constant 0 : index
    %48 = vector.load %arg8[%c0_22, %c0_23, %c0_24] : memref<4x64x4xbf16, #tpu.memory_space<vmem>>, vector<1x64x4xbf16>
    %49 = vector.shape_cast %48 : vector<1x64x4xbf16> to vector<64x4xbf16>
    %50 = vector.shape_cast %47 : vector<64x4xbf16> to vector<1x64x4xbf16>
    tpu.vector_store %arg8[%c0_22, %c0_23, %c0_24], %50 {strides = array<i32>} : memref<4x64x4xbf16, #tpu.memory_space<vmem>>, vector<1x64x4xbf16>,
    %51 = vector.extract_strided_slice %25 {offsets = [0, 4], sizes = [64, 4], strides = [1, 1]} : vector<64x68xf32> to vector<64x4xf32>
    %52 = arith.truncf %51 : vector<64x4xf32> to vector<64x4xbf16>
    %c1 = arith.constant 1 : index
    %c0_25 = arith.constant 0 : index
    %c0_26 = arith.constant 0 : index
    %53 = vector.load %arg5[%c1, %c0_25, %c0_26] : memref<4x64x4xbf16, #tpu.memory_space<vmem>>, vector<1x64x4xbf16>
    %54 = vector.shape_cast %53 : vector<1x64x4xbf16> to vector<64x4xbf16>
    %55 = vector.shape_cast %52 : vector<64x4xbf16> to vector<1x64x4xbf16>
    tpu.vector_store %arg5[%c1, %c0_25, %c0_26], %55 {strides = array<i32>} : memref<4x64x4xbf16, #tpu.memory_space<vmem>>, vector<1x64x4xbf16>,
    %56 = vector.extract_strided_slice %25 {offsets = [0, 20], sizes = [64, 4], strides = [1, 1]} : vector<64x68xf32> to vector<64x4xf32>
    %57 = arith.truncf %56 : vector<64x4xf32> to vector<64x4xbf16>
    %c1_27 = arith.constant 1 : index
    %c0_28 = arith.constant 0 : index
    %c0_29 = arith.constant 0 : index
    %58 = vector.load %arg6[%c1_27, %c0_28, %c0_29] : memref<4x64x4xbf16, #tpu.memory_space<vmem>>, vector<1x64x4xbf16>
    %59 = vector.shape_cast %58 : vector<1x64x4xbf16> to vector<64x4xbf16>
    %60 = vector.shape_cast %57 : vector<64x4xbf16> to vector<1x64x4xbf16>
    tpu.vector_store %arg6[%c1_27, %c0_28, %c0_29], %60 {strides = array<i32>} : memref<4x64x4xbf16, #tpu.memory_space<vmem>>, vector<1x64x4xbf16>,
    %61 = vector.extract_strided_slice %25 {offsets = [0, 36], sizes = [64, 4], strides = [1, 1]} : vector<64x68xf32> to vector<64x4xf32>
    %62 = arith.truncf %61 : vector<64x4xf32> to vector<64x4xbf16>
    %c1_30 = arith.constant 1 : index
    %c0_31 = arith.constant 0 : index
    %c0_32 = arith.constant 0 : index
    %63 = vector.load %arg7[%c1_30, %c0_31, %c0_32] : memref<4x64x4xbf16, #tpu.memory_space<vmem>>, vector<1x64x4xbf16>
    %64 = vector.shape_cast %63 : vector<1x64x4xbf16> to vector<64x4xbf16>
    %65 = vector.shape_cast %62 : vector<64x4xbf16> to vector<1x64x4xbf16>
    tpu.vector_store %arg7[%c1_30, %c0_31, %c0_32], %65 {strides = array<i32>} : memref<4x64x4xbf16, #tpu.memory_space<vmem>>, vector<1x64x4xbf16>,
    %66 = vector.extract_strided_slice %25 {offsets = [0, 52], sizes = [64, 4], strides = [1, 1]} : vector<64x68xf32> to vector<64x4xf32>
    %67 = arith.negf %66 : vector<64x4xf32>
    %68 = math.exp %67 : vector<64x4xf32>
    %cst_33 = arith.constant 1.000000e+00 : f32
    %69 = vector.broadcast %cst_33 : f32 to vector<64x4xf32>
    %70 = arith.addf %69, %68 : vector<64x4xf32>
    %71 = arith.divf %69, %70 : vector<64x4xf32>
    %72 = arith.truncf %71 : vector<64x4xf32> to vector<64x4xbf16>
    %c1_34 = arith.constant 1 : index
    %c0_35 = arith.constant 0 : index
    %c0_36 = arith.constant 0 : index
    %73 = vector.load %arg8[%c1_34, %c0_35, %c0_36] : memref<4x64x4xbf16, #tpu.memory_space<vmem>>, vector<1x64x4xbf16>
    %74 = vector.shape_cast %73 : vector<1x64x4xbf16> to vector<64x4xbf16>
    %75 = vector.shape_cast %72 : vector<64x4xbf16> to vector<1x64x4xbf16>
    tpu.vector_store %arg8[%c1_34, %c0_35, %c0_36], %75 {strides = array<i32>} : memref<4x64x4xbf16, #tpu.memory_space<vmem>>, vector<1x64x4xbf16>,
    %76 = vector.extract_strided_slice %25 {offsets = [0, 8], sizes = [64, 4], strides = [1, 1]} : vector<64x68xf32> to vector<64x4xf32>
    %77 = arith.truncf %76 : vector<64x4xf32> to vector<64x4xbf16>
    %c2 = arith.constant 2 : index
    %c0_37 = arith.constant 0 : index
    %c0_38 = arith.constant 0 : index
    %78 = vector.load %arg5[%c2, %c0_37, %c0_38] : memref<4x64x4xbf16, #tpu.memory_space<vmem>>, vector<1x64x4xbf16>
    %79 = vector.shape_cast %78 : vector<1x64x4xbf16> to vector<64x4xbf16>
    %80 = vector.shape_cast %77 : vector<64x4xbf16> to vector<1x64x4xbf16>
    tpu.vector_store %arg5[%c2, %c0_37, %c0_38], %80 {strides = array<i32>} : memref<4x64x4xbf16, #tpu.memory_space<vmem>>, vector<1x64x4xbf16>,
    %81 = vector.extract_strided_slice %25 {offsets = [0, 24], sizes = [64, 4], strides = [1, 1]} : vector<64x68xf32> to vector<64x4xf32>
    %82 = arith.truncf %81 : vector<64x4xf32> to vector<64x4xbf16>
    %c2_39 = arith.constant 2 : index
    %c0_40 = arith.constant 0 : index
    %c0_41 = arith.constant 0 : index
    %83 = vector.load %arg6[%c2_39, %c0_40, %c0_41] : memref<4x64x4xbf16, #tpu.memory_space<vmem>>, vector<1x64x4xbf16>
    %84 = vector.shape_cast %83 : vector<1x64x4xbf16> to vector<64x4xbf16>
    %85 = vector.shape_cast %82 : vector<64x4xbf16> to vector<1x64x4xbf16>
    tpu.vector_store %arg6[%c2_39, %c0_40, %c0_41], %85 {strides = array<i32>} : memref<4x64x4xbf16, #tpu.memory_space<vmem>>, vector<1x64x4xbf16>,
    %86 = vector.extract_strided_slice %25 {offsets = [0, 40], sizes = [64, 4], strides = [1, 1]} : vector<64x68xf32> to vector<64x4xf32>
    %87 = arith.truncf %86 : vector<64x4xf32> to vector<64x4xbf16>
    %c2_42 = arith.constant 2 : index
    %c0_43 = arith.constant 0 : index
    %c0_44 = arith.constant 0 : index
    %88 = vector.load %arg7[%c2_42, %c0_43, %c0_44] : memref<4x64x4xbf16, #tpu.memory_space<vmem>>, vector<1x64x4xbf16>
    %89 = vector.shape_cast %88 : vector<1x64x4xbf16> to vector<64x4xbf16>
    %90 = vector.shape_cast %87 : vector<64x4xbf16> to vector<1x64x4xbf16>
    tpu.vector_store %arg7[%c2_42, %c0_43, %c0_44], %90 {strides = array<i32>} : memref<4x64x4xbf16, #tpu.memory_space<vmem>>, vector<1x64x4xbf16>,
    %91 = vector.extract_strided_slice %25 {offsets = [0, 56], sizes = [64, 4], strides = [1, 1]} : vector<64x68xf32> to vector<64x4xf32>
    %92 = arith.negf %91 : vector<64x4xf32>
    %93 = math.exp %92 : vector<64x4xf32>
    %cst_45 = arith.constant 1.000000e+00 : f32
    %94 = vector.broadcast %cst_45 : f32 to vector<64x4xf32>
    %95 = arith.addf %94, %93 : vector<64x4xf32>
    %96 = arith.divf %94, %95 : vector<64x4xf32>
    %97 = arith.truncf %96 : vector<64x4xf32> to vector<64x4xbf16>
    %c2_46 = arith.constant 2 : index
    %c0_47 = arith.constant 0 : index
    %c0_48 = arith.constant 0 : index
    %98 = vector.load %arg8[%c2_46, %c0_47, %c0_48] : memref<4x64x4xbf16, #tpu.memory_space<vmem>>, vector<1x64x4xbf16>
    %99 = vector.shape_cast %98 : vector<1x64x4xbf16> to vector<64x4xbf16>
    %100 = vector.shape_cast %97 : vector<64x4xbf16> to vector<1x64x4xbf16>
    tpu.vector_store %arg8[%c2_46, %c0_47, %c0_48], %100 {strides = array<i32>} : memref<4x64x4xbf16, #tpu.memory_space<vmem>>, vector<1x64x4xbf16>,
    %101 = vector.extract_strided_slice %25 {offsets = [0, 12], sizes = [64, 4], strides = [1, 1]} : vector<64x68xf32> to vector<64x4xf32>
    %102 = arith.truncf %101 : vector<64x4xf32> to vector<64x4xbf16>
    %c3 = arith.constant 3 : index
    %c0_49 = arith.constant 0 : index
    %c0_50 = arith.constant 0 : index
    %103 = vector.load %arg5[%c3, %c0_49, %c0_50] : memref<4x64x4xbf16, #tpu.memory_space<vmem>>, vector<1x64x4xbf16>
    %104 = vector.shape_cast %103 : vector<1x64x4xbf16> to vector<64x4xbf16>
    %105 = vector.shape_cast %102 : vector<64x4xbf16> to vector<1x64x4xbf16>
    tpu.vector_store %arg5[%c3, %c0_49, %c0_50], %105 {strides = array<i32>} : memref<4x64x4xbf16, #tpu.memory_space<vmem>>, vector<1x64x4xbf16>,
    %106 = vector.extract_strided_slice %25 {offsets = [0, 28], sizes = [64, 4], strides = [1, 1]} : vector<64x68xf32> to vector<64x4xf32>
    %107 = arith.truncf %106 : vector<64x4xf32> to vector<64x4xbf16>
    %c3_51 = arith.constant 3 : index
    %c0_52 = arith.constant 0 : index
    %c0_53 = arith.constant 0 : index
    %108 = vector.load %arg6[%c3_51, %c0_52, %c0_53] : memref<4x64x4xbf16, #tpu.memory_space<vmem>>, vector<1x64x4xbf16>
    %109 = vector.shape_cast %108 : vector<1x64x4xbf16> to vector<64x4xbf16>
    %110 = vector.shape_cast %107 : vector<64x4xbf16> to vector<1x64x4xbf16>
    tpu.vector_store %arg6[%c3_51, %c0_52, %c0_53], %110 {strides = array<i32>} : memref<4x64x4xbf16, #tpu.memory_space<vmem>>, vector<1x64x4xbf16>,
    %111 = vector.extract_strided_slice %25 {offsets = [0, 44], sizes = [64, 4], strides = [1, 1]} : vector<64x68xf32> to vector<64x4xf32>
    %112 = arith.truncf %111 : vector<64x4xf32> to vector<64x4xbf16>
    %c3_54 = arith.constant 3 : index
    %c0_55 = arith.constant 0 : index
    %c0_56 = arith.constant 0 : index
    %113 = vector.load %arg7[%c3_54, %c0_55, %c0_56] : memref<4x64x4xbf16, #tpu.memory_space<vmem>>, vector<1x64x4xbf16>
    %114 = vector.shape_cast %113 : vector<1x64x4xbf16> to vector<64x4xbf16>
    %115 = vector.shape_cast %112 : vector<64x4xbf16> to vector<1x64x4xbf16>
    tpu.vector_store %arg7[%c3_54, %c0_55, %c0_56], %115 {strides = array<i32>} : memref<4x64x4xbf16, #tpu.memory_space<vmem>>, vector<1x64x4xbf16>,
    %116 = vector.extract_strided_slice %25 {offsets = [0, 60], sizes = [64, 4], strides = [1, 1]} : vector<64x68xf32> to vector<64x4xf32>
    %117 = arith.negf %116 : vector<64x4xf32>
    %118 = math.exp %117 : vector<64x4xf32>
    %cst_57 = arith.constant 1.000000e+00 : f32
    %119 = vector.broadcast %cst_57 : f32 to vector<64x4xf32>
    %120 = arith.addf %119, %118 : vector<64x4xf32>
    %121 = arith.divf %119, %120 : vector<64x4xf32>
    %122 = arith.truncf %121 : vector<64x4xf32> to vector<64x4xbf16>
    %c3_58 = arith.constant 3 : index
    %c0_59 = arith.constant 0 : index
    %c0_60 = arith.constant 0 : index
    %123 = vector.load %arg8[%c3_58, %c0_59, %c0_60] : memref<4x64x4xbf16, #tpu.memory_space<vmem>>, vector<1x64x4xbf16>
    %124 = vector.shape_cast %123 : vector<1x64x4xbf16> to vector<64x4xbf16>
    %125 = vector.shape_cast %122 : vector<64x4xbf16> to vector<1x64x4xbf16>
    tpu.vector_store %arg8[%c3_58, %c0_59, %c0_60], %125 {strides = array<i32>} : memref<4x64x4xbf16, #tpu.memory_space<vmem>>, vector<1x64x4xbf16>,
    %126 = vector.extract_strided_slice %25 {offsets = [0, 64], sizes = [64, 4], strides = [1, 1]} : vector<64x68xf32> to vector<64x4xf32>
    %127 = tpu.transpose %126, [1, 0] : vector<64x4xf32> -> vector<4x64xf32>
    %128 = arith.truncf %127 : vector<4x64xf32> to vector<4x64xbf16>
    %c0_61 = arith.constant 0 : index
    %c0_62 = arith.constant 0 : index
    %129 = vector.load %arg9[%c0_61, %c0_62] : memref<4x64xbf16, #tpu.memory_space<vmem>>, vector<4x64xbf16>
    tpu.vector_store %arg9[%c0_61, %c0_62], %128 {strides = array<i32>} : memref<4x64xbf16, #tpu.memory_space<vmem>>, vector<4x64xbf16>,
    return
  }
  func.func @transform_0(%arg0: i32) -> (i32, i32) {
    %c0_i32 = arith.constant 0 : i32
    %c0_i32_0 = arith.constant 0 : i32
    return %arg0, %c0_i32 : i32, i32
  }
  func.func @transform_1(%arg0: i32) -> (i32, i32) {
    %c0_i32 = arith.constant 0 : i32
    %c0_i32_0 = arith.constant 0 : i32
    %c0_i32_1 = arith.constant 0 : i32
    return %c0_i32, %c0_i32_0 : i32, i32
  }
  func.func @transform_2(%arg0: i32) -> (i32, i32) {
    %c0_i32 = arith.constant 0 : i32
    %c0_i32_0 = arith.constant 0 : i32
    %c0_i32_1 = arith.constant 0 : i32
    return %c0_i32, %c0_i32_0 : i32, i32
  }
  func.func @transform_3(%arg0: i32) -> (i32, i32) {
    %c0_i32 = arith.constant 0 : i32
    %c0_i32_0 = arith.constant 0 : i32
    %c0_i32_1 = arith.constant 0 : i32
    return %c0_i32, %c0_i32_0 : i32, i32
  }
  func.func @transform_4(%arg0: i32) -> (i32, i32, i32) {
    %c0_i32 = arith.constant 0 : i32
    %c0_i32_0 = arith.constant 0 : i32
    %c0_i32_1 = arith.constant 0 : i32
    return %c0_i32, %arg0, %c0_i32_0 : i32, i32, i32
  }
  func.func @transform_5(%arg0: i32) -> (i32, i32, i32) {
    %c0_i32 = arith.constant 0 : i32
    %c0_i32_0 = arith.constant 0 : i32
    %c0_i32_1 = arith.constant 0 : i32
    return %c0_i32, %arg0, %c0_i32_0 : i32, i32, i32
  }
  func.func @transform_6(%arg0: i32) -> (i32, i32, i32) {
    %c0_i32 = arith.constant 0 : i32
    %c0_i32_0 = arith.constant 0 : i32
    %c0_i32_1 = arith.constant 0 : i32
    return %c0_i32, %arg0, %c0_i32_0 : i32, i32, i32
  }
  func.func @transform_7(%arg0: i32) -> (i32, i32, i32) {
    %c0_i32 = arith.constant 0 : i32
    %c0_i32_0 = arith.constant 0 : i32
    %c0_i32_1 = arith.constant 0 : i32
    return %c0_i32, %arg0, %c0_i32_0 : i32, i32, i32
  }
  func.func @transform_8(%arg0: i32) -> (i32, i32) {
    %c0_i32 = arith.constant 0 : i32
    %c0_i32_0 = arith.constant 0 : i32
    return %c0_i32, %arg0 : i32, i32
  }
}

module attributes {stable_mosaic.version = 11 : i64} {
  func.func @_attn_out_kernel(%arg0: i32, %arg1: memref<4x64x4xbf16, #tpu.memory_space<vmem>>, %arg2: memref<64x16xf32, #tpu.memory_space<vmem>>, %arg3: memref<4x4x16xbf16, #tpu.memory_space<vmem>>, %arg4: memref<64x16xf32, #tpu.memory_space<vmem>>) attributes {dimension_semantics = [#tpu.dimension_semantics<parallel>], iteration_bounds = array<i64: 1>, scalar_prefetch = 0 : i64, scratch_operands = 0 : i64, tpu.core_type = #tpu.core_type<tc>, window_params = [{transform_indices = @transform_0, window_bounds = array<i64: 4, 64, 4>}, {transform_indices = @transform_1, window_bounds = array<i64: 64, 16>}, {pipeline_mode = #tpu.pipeline_mode<synchronous>, transform_indices = @transform_2, window_bounds = array<i64: 4, 4, 16>}, {transform_indices = @transform_3, window_bounds = array<i64: 64, 16>}]} {
    %c0 = arith.constant 0 : index
    %c0_0 = arith.constant 0 : index
    %c0_1 = arith.constant 0 : index
    %0 = vector.load %arg1[%c0, %c0_0, %c0_1] : memref<4x64x4xbf16, #tpu.memory_space<vmem>>, vector<1x64x4xbf16>
    %1 = vector.shape_cast %0 : vector<1x64x4xbf16> to vector<64x4xbf16>
    %c0_2 = arith.constant 0 : index
    %c0_3 = arith.constant 0 : index
    %c0_4 = arith.constant 0 : index
    %2 = vector.load %arg3[%c0_2, %c0_3, %c0_4] : memref<4x4x16xbf16, #tpu.memory_space<vmem>>, vector<1x4x16xbf16>
    %3 = vector.shape_cast %2 : vector<1x4x16xbf16> to vector<4x16xbf16>
    %cst = arith.constant dense<0.000000e+00> : vector<64x16xf32>
    %4 = tpu.matmul %1, %3, %cst {dimension_numbers = #tpu.dot_dimension_numbers<[1], [0], [0], [1], [0, 0, 1, 1], [], []>} : vector<64x4xbf16>, vector<4x16xbf16>, vector<64x16xf32> -> vector<64x16xf32>
    %c1 = arith.constant 1 : index
    %c0_5 = arith.constant 0 : index
    %c0_6 = arith.constant 0 : index
    %5 = vector.load %arg1[%c1, %c0_5, %c0_6] : memref<4x64x4xbf16, #tpu.memory_space<vmem>>, vector<1x64x4xbf16>
    %6 = vector.shape_cast %5 : vector<1x64x4xbf16> to vector<64x4xbf16>
    %c1_7 = arith.constant 1 : index
    %c0_8 = arith.constant 0 : index
    %c0_9 = arith.constant 0 : index
    %7 = vector.load %arg3[%c1_7, %c0_8, %c0_9] : memref<4x4x16xbf16, #tpu.memory_space<vmem>>, vector<1x4x16xbf16>
    %8 = vector.shape_cast %7 : vector<1x4x16xbf16> to vector<4x16xbf16>
    %cst_10 = arith.constant dense<0.000000e+00> : vector<64x16xf32>
    %9 = tpu.matmul %6, %8, %cst_10 {dimension_numbers = #tpu.dot_dimension_numbers<[1], [0], [0], [1], [0, 0, 1, 1], [], []>} : vector<64x4xbf16>, vector<4x16xbf16>, vector<64x16xf32> -> vector<64x16xf32>
    %10 = arith.addf %4, %9 : vector<64x16xf32>
    %c2 = arith.constant 2 : index
    %c0_11 = arith.constant 0 : index
    %c0_12 = arith.constant 0 : index
    %11 = vector.load %arg1[%c2, %c0_11, %c0_12] : memref<4x64x4xbf16, #tpu.memory_space<vmem>>, vector<1x64x4xbf16>
    %12 = vector.shape_cast %11 : vector<1x64x4xbf16> to vector<64x4xbf16>
    %c2_13 = arith.constant 2 : index
    %c0_14 = arith.constant 0 : index
    %c0_15 = arith.constant 0 : index
    %13 = vector.load %arg3[%c2_13, %c0_14, %c0_15] : memref<4x4x16xbf16, #tpu.memory_space<vmem>>, vector<1x4x16xbf16>
    %14 = vector.shape_cast %13 : vector<1x4x16xbf16> to vector<4x16xbf16>
    %cst_16 = arith.constant dense<0.000000e+00> : vector<64x16xf32>
    %15 = tpu.matmul %12, %14, %cst_16 {dimension_numbers = #tpu.dot_dimension_numbers<[1], [0], [0], [1], [0, 0, 1, 1], [], []>} : vector<64x4xbf16>, vector<4x16xbf16>, vector<64x16xf32> -> vector<64x16xf32>
    %16 = arith.addf %10, %15 : vector<64x16xf32>
    %c3 = arith.constant 3 : index
    %c0_17 = arith.constant 0 : index
    %c0_18 = arith.constant 0 : index
    %17 = vector.load %arg1[%c3, %c0_17, %c0_18] : memref<4x64x4xbf16, #tpu.memory_space<vmem>>, vector<1x64x4xbf16>
    %18 = vector.shape_cast %17 : vector<1x64x4xbf16> to vector<64x4xbf16>
    %c3_19 = arith.constant 3 : index
    %c0_20 = arith.constant 0 : index
    %c0_21 = arith.constant 0 : index
    %19 = vector.load %arg3[%c3_19, %c0_20, %c0_21] : memref<4x4x16xbf16, #tpu.memory_space<vmem>>, vector<1x4x16xbf16>
    %20 = vector.shape_cast %19 : vector<1x4x16xbf16> to vector<4x16xbf16>
    %cst_22 = arith.constant dense<0.000000e+00> : vector<64x16xf32>
    %21 = tpu.matmul %18, %20, %cst_22 {dimension_numbers = #tpu.dot_dimension_numbers<[1], [0], [0], [1], [0, 0, 1, 1], [], []>} : vector<64x4xbf16>, vector<4x16xbf16>, vector<64x16xf32> -> vector<64x16xf32>
    %22 = arith.addf %16, %21 : vector<64x16xf32>
    %c0_23 = arith.constant 0 : index
    %c0_24 = arith.constant 0 : index
    %23 = vector.load %arg2[%c0_23, %c0_24] : memref<64x16xf32, #tpu.memory_space<vmem>>, vector<64x16xf32>
    %24 = arith.addf %23, %22 : vector<64x16xf32>
    %c0_25 = arith.constant 0 : index
    %c0_26 = arith.constant 0 : index
    %25 = vector.load %arg4[%c0_25, %c0_26] : memref<64x16xf32, #tpu.memory_space<vmem>>, vector<64x16xf32>
    tpu.vector_store %arg4[%c0_25, %c0_26], %24 {strides = array<i32>} : memref<64x16xf32, #tpu.memory_space<vmem>>, vector<64x16xf32>,
    return
  }
  func.func @transform_0(%arg0: i32) -> (i32, i32, i32) {
    %c0_i32 = arith.constant 0 : i32
    %c0_i32_0 = arith.constant 0 : i32
    %c0_i32_1 = arith.constant 0 : i32
    return %c0_i32, %arg0, %c0_i32_0 : i32, i32, i32
  }
  func.func @transform_1(%arg0: i32) -> (i32, i32) {
    %c0_i32 = arith.constant 0 : i32
    %c0_i32_0 = arith.constant 0 : i32
    return %arg0, %c0_i32 : i32, i32
  }
  func.func @transform_2(%arg0: i32) -> (i32, i32, i32) {
    %c0_i32 = arith.constant 0 : i32
    %c0_i32_0 = arith.constant 0 : i32
    %c0_i32_1 = arith.constant 0 : i32
    %c0_i32_2 = arith.constant 0 : i32
    return %c0_i32, %c0_i32_0, %c0_i32_1 : i32, i32, i32
  }
  func.func @transform_3(%arg0: i32) -> (i32, i32) {
    %c0_i32 = arith.constant 0 : i32
    %c0_i32_0 = arith.constant 0 : i32
    return %arg0, %c0_i32 : i32, i32
  }
}

module attributes {stable_mosaic.version = 11 : i64} {
  func.func @_flash_attn_kernel(%arg0: i32, %arg1: i32, %arg2: i32, %arg3: memref<1x8x8x4xbf16, #tpu.memory_space<vmem>>, %arg4: memref<1x8x8x4xbf16, #tpu.memory_space<vmem>>, %arg5: memref<1x8x8x4xbf16, #tpu.memory_space<vmem>>, %arg6: memref<1x8x8xbf16, #tpu.memory_space<vmem>>, %arg7: memref<8x8xf32, #tpu.memory_space<vmem>>, %arg8: memref<1x8x8x4xbf16, #tpu.memory_space<vmem>>, %arg9: memref<1x8x8x4xbf16, #tpu.memory_space<vmem>>, %arg10: memref<8x8x1xf32, #tpu.memory_space<vmem>>, %arg11: memref<8x8x1xf32, #tpu.memory_space<vmem>>, %arg12: memref<8x8x4xf32, #tpu.memory_space<vmem>>) attributes {dimension_semantics = [#tpu.dimension_semantics<parallel>, #tpu.dimension_semantics<parallel>, #tpu.dimension_semantics<arbitrary>], iteration_bounds = array<i64: 4, 1, 1>, scalar_prefetch = 0 : i64, scratch_operands = 3 : i64, tpu.core_type = #tpu.core_type<tc>, window_params = [{transform_indices = @transform_0, window_bounds = array<i64: 1, 8, 8, 4>}, {transform_indices = @transform_1, window_bounds = array<i64: 1, 8, 8, 4>}, {transform_indices = @transform_2, window_bounds = array<i64: 1, 8, 8, 4>}, {transform_indices = @transform_3, window_bounds = array<i64: 1, 8, 8>}, {transform_indices = @transform_4, window_bounds = array<i64: 8, 8>}, {transform_indices = @transform_5, window_bounds = array<i64: 1, 8, 8, 4>}, {transform_indices = @transform_6, window_bounds = array<i64: 1, 8, 8, 4>}]} {
    %c0_i32 = arith.constant 0 : i32
    %0 = arith.cmpi eq, %arg2, %c0_i32 : i32
    %1 = arith.extui %0 : i1 to i32
    %c0_i32_0 = arith.constant 0 : i32
    %2 = arith.cmpi ne, %1, %c0_i32_0 : i32
    scf.if %2 {
      %cst_40 = arith.constant -1.000000e+30 : f32
      %44 = vector.broadcast %cst_40 : f32 to vector<8x8x1xf32>
      %c0_41 = arith.constant 0 : index
      %c0_42 = arith.constant 0 : index
      %c0_43 = arith.constant 0 : index
      %45 = vector.load %arg10[%c0_41, %c0_42, %c0_43] : memref<8x8x1xf32, #tpu.memory_space<vmem>>, vector<8x8x1xf32>
      tpu.vector_store %arg10[%c0_41, %c0_42, %c0_43], %44 {strides = array<i32>} : memref<8x8x1xf32, #tpu.memory_space<vmem>>, vector<8x8x1xf32>,
      %cst_44 = arith.constant 0.000000e+00 : f32
      %46 = vector.broadcast %cst_44 : f32 to vector<8x8x1xf32>
      %c0_45 = arith.constant 0 : index
      %c0_46 = arith.constant 0 : index
      %c0_47 = arith.constant 0 : index
      %47 = vector.load %arg11[%c0_45, %c0_46, %c0_47] : memref<8x8x1xf32, #tpu.memory_space<vmem>>, vector<8x8x1xf32>
      tpu.vector_store %arg11[%c0_45, %c0_46, %c0_47], %46 {strides = array<i32>} : memref<8x8x1xf32, #tpu.memory_space<vmem>>, vector<8x8x1xf32>,
      %cst_48 = arith.constant 0.000000e+00 : f32
      %48 = vector.broadcast %cst_48 : f32 to vector<8x8x4xf32>
      %c0_49 = arith.constant 0 : index
      %c0_50 = arith.constant 0 : index
      %c0_51 = arith.constant 0 : index
      %49 = vector.load %arg12[%c0_49, %c0_50, %c0_51] : memref<8x8x4xf32, #tpu.memory_space<vmem>>, vector<8x8x4xf32>
      tpu.vector_store %arg12[%c0_49, %c0_50, %c0_51], %48 {strides = array<i32>} : memref<8x8x4xf32, #tpu.memory_space<vmem>>, vector<8x8x4xf32>,
    } else {
    }
    %c0 = arith.constant 0 : index
    %c0_1 = arith.constant 0 : index
    %c0_2 = arith.constant 0 : index
    %c0_3 = arith.constant 0 : index
    %3 = vector.load %arg3[%c0, %c0_1, %c0_2, %c0_3] : memref<1x8x8x4xbf16, #tpu.memory_space<vmem>>, vector<1x8x8x4xbf16>
    %4 = vector.shape_cast %3 : vector<1x8x8x4xbf16> to vector<8x8x4xbf16>
    %c0_4 = arith.constant 0 : index
    %c0_5 = arith.constant 0 : index
    %c0_6 = arith.constant 0 : index
    %c0_7 = arith.constant 0 : index
    %5 = vector.load %arg4[%c0_4, %c0_5, %c0_6, %c0_7] : memref<1x8x8x4xbf16, #tpu.memory_space<vmem>>, vector<1x8x8x4xbf16>
    %6 = vector.shape_cast %5 : vector<1x8x8x4xbf16> to vector<8x8x4xbf16>
    %cst = arith.constant dense<0.000000e+00> : vector<8x8x8xf32>
    %7 = tpu.matmul %4, %6, %cst {dimension_numbers = #tpu.dot_dimension_numbers<[2], [2], [1], [1], [0, 0, 0, 1, 1, 1], [0], [0]>} : vector<8x8x4xbf16>, vector<8x8x4xbf16>, vector<8x8x8xf32> -> vector<8x8x8xf32>
    %c0_8 = arith.constant 0 : index
    %c0_9 = arith.constant 0 : index
    %c0_10 = arith.constant 0 : index
    %8 = vector.load %arg6[%c0_8, %c0_9, %c0_10] : memref<1x8x8xbf16, #tpu.memory_space<vmem>>, vector<1x8x8xbf16>
    %9 = arith.extf %8 : vector<1x8x8xbf16> to vector<1x8x8xf32>
    %10 = vector.broadcast %9 : vector<1x8x8xf32> to vector<8x8x8xf32>
    %11 = arith.addf %7, %10 : vector<8x8x8xf32>
    %c0_11 = arith.constant 0 : index
    %c0_12 = arith.constant 0 : index
    %12 = vector.load %arg7[%c0_11, %c0_12] : memref<8x8xf32, #tpu.memory_space<vmem>>, vector<8x8xf32>
    %13 = vector.shape_cast %12 : vector<8x8xf32> to vector<8x1x8xf32>
    %14 = vector.broadcast %13 : vector<8x1x8xf32> to vector<8x8x8xf32>
    %15 = arith.addf %11, %14 : vector<8x8x8xf32>
    %c0_13 = arith.constant 0 : index
    %c0_14 = arith.constant 0 : index
    %c0_15 = arith.constant 0 : index
    %16 = vector.load %arg10[%c0_13, %c0_14, %c0_15] : memref<8x8x1xf32, #tpu.memory_space<vmem>>, vector<8x8x1xf32>
    %cst_16 = arith.constant dense<0xFF800000> : vector<8x8xf32>
    %17 = vector.multi_reduction <maximumf>, %15, %cst_16 [2] : vector<8x8x8xf32> to vector<8x8xf32>
    %18 = vector.shape_cast %17 : vector<8x8xf32> to vector<8x8x1xf32>
    %19 = arith.maximumf %16, %18 : vector<8x8x1xf32>
    %20 = arith.subf %16, %19 : vector<8x8x1xf32>
    %21 = math.exp %20 : vector<8x8x1xf32>
    %22 = vector.broadcast %19 : vector<8x8x1xf32> to vector<8x8x8xf32>
    %23 = arith.subf %15, %22 : vector<8x8x8xf32>
    %24 = math.exp %23 : vector<8x8x8xf32>
    %c0_17 = arith.constant 0 : index
    %c0_18 = arith.constant 0 : index
    %c0_19 = arith.constant 0 : index
    %25 = vector.load %arg11[%c0_17, %c0_18, %c0_19] : memref<8x8x1xf32, #tpu.memory_space<vmem>>, vector<8x8x1xf32>
    %26 = arith.mulf %21, %25 : vector<8x8x1xf32>
    %cst_20 = arith.constant dense<0.000000e+00> : vector<8x8xf32>
    %27 = vector.multi_reduction <add>, %24, %cst_20 [2] : vector<8x8x8xf32> to vector<8x8xf32>
    %28 = vector.shape_cast %27 : vector<8x8xf32> to vector<8x8x1xf32>
    %29 = arith.addf %26, %28 : vector<8x8x1xf32>
    %c0_21 = arith.constant 0 : index
    %c0_22 = arith.constant 0 : index
    %c0_23 = arith.constant 0 : index
    %30 = vector.load %arg11[%c0_21, %c0_22, %c0_23] : memref<8x8x1xf32, #tpu.memory_space<vmem>>, vector<8x8x1xf32>
    tpu.vector_store %arg11[%c0_21, %c0_22, %c0_23], %29 {strides = array<i32>} : memref<8x8x1xf32, #tpu.memory_space<vmem>>, vector<8x8x1xf32>,
    %c0_24 = arith.constant 0 : index
    %c0_25 = arith.constant 0 : index
    %c0_26 = arith.constant 0 : index
    %31 = vector.load %arg12[%c0_24, %c0_25, %c0_26] : memref<8x8x4xf32, #tpu.memory_space<vmem>>, vector<8x8x4xf32>
    %32 = vector.broadcast %21 : vector<8x8x1xf32> to vector<8x8x4xf32>
    %33 = arith.mulf %32, %31 : vector<8x8x4xf32>
    %34 = arith.truncf %24 : vector<8x8x8xf32> to vector<8x8x8xbf16>
    %c0_27 = arith.constant 0 : index
    %c0_28 = arith.constant 0 : index
    %c0_29 = arith.constant 0 : index
    %c0_30 = arith.constant 0 : index
    %35 = vector.load %arg5[%c0_27, %c0_28, %c0_29, %c0_30] : memref<1x8x8x4xbf16, #tpu.memory_space<vmem>>, vector<1x8x8x4xbf16>
    %36 = vector.shape_cast %35 : vector<1x8x8x4xbf16> to vector<8x8x4xbf16>
    %cst_31 = arith.constant dense<0.000000e+00> : vector<8x8x4xf32>
    %37 = tpu.matmul %34, %36, %cst_31 {dimension_numbers = #tpu.dot_dimension_numbers<[2], [1], [1], [2], [0, 0, 0, 1, 1, 2], [0], [0]>} : vector<8x8x8xbf16>, vector<8x8x4xbf16>, vector<8x8x4xf32> -> vector<8x8x4xf32>
    %38 = arith.addf %33, %37 : vector<8x8x4xf32>
    %c0_32 = arith.constant 0 : index
    %c0_33 = arith.constant 0 : index
    %c0_34 = arith.constant 0 : index
    %39 = vector.load %arg12[%c0_32, %c0_33, %c0_34] : memref<8x8x4xf32, #tpu.memory_space<vmem>>, vector<8x8x4xf32>
    tpu.vector_store %arg12[%c0_32, %c0_33, %c0_34], %38 {strides = array<i32>} : memref<8x8x4xf32, #tpu.memory_space<vmem>>, vector<8x8x4xf32>,
    %c0_35 = arith.constant 0 : index
    %c0_36 = arith.constant 0 : index
    %c0_37 = arith.constant 0 : index
    %40 = vector.load %arg10[%c0_35, %c0_36, %c0_37] : memref<8x8x1xf32, #tpu.memory_space<vmem>>, vector<8x8x1xf32>
    tpu.vector_store %arg10[%c0_35, %c0_36, %c0_37], %19 {strides = array<i32>} : memref<8x8x1xf32, #tpu.memory_space<vmem>>, vector<8x8x1xf32>,
    %c0_i32_38 = arith.constant 0 : i32
    %41 = arith.cmpi eq, %arg2, %c0_i32_38 : i32
    %42 = arith.extui %41 : i1 to i32
    %c0_i32_39 = arith.constant 0 : i32
    %43 = arith.cmpi ne, %42, %c0_i32_39 : i32
    scf.if %43 {
      %c0_40 = arith.constant 0 : index
      %c0_41 = arith.constant 0 : index
      %c0_42 = arith.constant 0 : index
      %44 = vector.load %arg11[%c0_40, %c0_41, %c0_42] : memref<8x8x1xf32, #tpu.memory_space<vmem>>, vector<8x8x1xf32>
      %45 = tpu.reciprocal %44 {approx = true} : vector<8x8x1xf32> -> vector<8x8x1xf32>
      %c0_43 = arith.constant 0 : index
      %c0_44 = arith.constant 0 : index
      %c0_45 = arith.constant 0 : index
      %46 = vector.load %arg12[%c0_43, %c0_44, %c0_45] : memref<8x8x4xf32, #tpu.memory_space<vmem>>, vector<8x8x4xf32>
      %47 = vector.broadcast %45 : vector<8x8x1xf32> to vector<8x8x4xf32>
      %48 = arith.mulf %46, %47 : vector<8x8x4xf32>
      %c0_46 = arith.constant 0 : index
      %c0_47 = arith.constant 0 : index
      %c0_48 = arith.constant 0 : index
      %c0_49 = arith.constant 0 : index
      %49 = vector.load %arg8[%c0_46, %c0_47, %c0_48, %c0_49] : memref<1x8x8x4xbf16, #tpu.memory_space<vmem>>, vector<1x8x8x4xbf16>
      %50 = vector.shape_cast %49 : vector<1x8x8x4xbf16> to vector<8x8x4xbf16>
      %51 = arith.extf %50 : vector<8x8x4xbf16> to vector<8x8x4xf32>
      %52 = arith.mulf %48, %51 : vector<8x8x4xf32>
      %53 = arith.truncf %52 : vector<8x8x4xf32> to vector<8x8x4xbf16>
      %c0_50 = arith.constant 0 : index
      %c0_51 = arith.constant 0 : index
      %c0_52 = arith.constant 0 : index
      %c0_53 = arith.constant 0 : index
      %54 = vector.load %arg9[%c0_50, %c0_51, %c0_52, %c0_53] : memref<1x8x8x4xbf16, #tpu.memory_space<vmem>>, vector<1x8x8x4xbf16>
      %55 = vector.shape_cast %54 : vector<1x8x8x4xbf16> to vector<8x8x4xbf16>
      %56 = vector.shape_cast %53 : vector<8x8x4xbf16> to vector<1x8x8x4xbf16>
      tpu.vector_store %arg9[%c0_50, %c0_51, %c0_52, %c0_53], %56 {strides = array<i32>} : memref<1x8x8x4xbf16, #tpu.memory_space<vmem>>, vector<1x8x8x4xbf16>,
    } else {
    }
    return
  }
  func.func @transform_0(%arg0: i32, %arg1: i32, %arg2: i32) -> (i32, i32, i32, i32) {
    %c0_i32 = arith.constant 0 : i32
    %c0_i32_0 = arith.constant 0 : i32
    %c0_i32_1 = arith.constant 0 : i32
    return %arg0, %arg1, %c0_i32, %c0_i32_0 : i32, i32, i32, i32
  }
  func.func @transform_1(%arg0: i32, %arg1: i32, %arg2: i32) -> (i32, i32, i32, i32) {
    %c0_i32 = arith.constant 0 : i32
    %c0_i32_0 = arith.constant 0 : i32
    return %arg0, %arg1, %arg2, %c0_i32 : i32, i32, i32, i32
  }
  func.func @transform_2(%arg0: i32, %arg1: i32, %arg2: i32) -> (i32, i32, i32, i32) {
    %c0_i32 = arith.constant 0 : i32
    %c0_i32_0 = arith.constant 0 : i32
    return %arg0, %arg1, %arg2, %c0_i32 : i32, i32, i32, i32
  }
  func.func @transform_3(%arg0: i32, %arg1: i32, %arg2: i32) -> (i32, i32, i32) {
    %c0_i32 = arith.constant 0 : i32
    %c0_i32_0 = arith.constant 0 : i32
    return %arg0, %c0_i32, %arg2 : i32, i32, i32
  }
  func.func @transform_4(%arg0: i32, %arg1: i32, %arg2: i32) -> (i32, i32) {
    %c0_i32 = arith.constant 0 : i32
    return %arg1, %arg2 : i32, i32
  }
  func.func @transform_5(%arg0: i32, %arg1: i32, %arg2: i32) -> (i32, i32, i32, i32) {
    %c0_i32 = arith.constant 0 : i32
    %c0_i32_0 = arith.constant 0 : i32
    %c0_i32_1 = arith.constant 0 : i32
    return %arg0, %arg1, %c0_i32, %c0_i32_0 : i32, i32, i32, i32
  }
  func.func @transform_6(%arg0: i32, %arg1: i32, %arg2: i32) -> (i32, i32, i32, i32) {
    %c0_i32 = arith.constant 0 : i32
    %c0_i32_0 = arith.constant 0 : i32
    %c0_i32_1 = arith.constant 0 : i32
    return %arg0, %arg1, %c0_i32, %c0_i32_0 : i32, i32, i32, i32
  }
}

module attributes {stable_mosaic.version = 11 : i64} {
  func.func @_transition_kernel(%arg0: i32, %arg1: memref<64x16xf32, #tpu.memory_space<vmem>>, %arg2: memref<1x16xf32, #tpu.memory_space<vmem>>, %arg3: memref<1x16xf32, #tpu.memory_space<vmem>>, %arg4: memref<16x128xbf16, #tpu.memory_space<vmem>>, %arg5: memref<64x16xbf16, #tpu.memory_space<vmem>>, %arg6: memref<64x16xf32, #tpu.memory_space<vmem>>) attributes {dimension_semantics = [#tpu.dimension_semantics<parallel>], iteration_bounds = array<i64: 1>, scalar_prefetch = 0 : i64, scratch_operands = 0 : i64, tpu.core_type = #tpu.core_type<tc>, window_params = [{transform_indices = @transform_0, window_bounds = array<i64: 64, 16>}, {pipeline_mode = #tpu.pipeline_mode<synchronous>, transform_indices = @transform_1, window_bounds = array<i64: 1, 16>}, {pipeline_mode = #tpu.pipeline_mode<synchronous>, transform_indices = @transform_2, window_bounds = array<i64: 1, 16>}, {pipeline_mode = #tpu.pipeline_mode<synchronous>, transform_indices = @transform_3, window_bounds = array<i64: 16, 128>}, {pipeline_mode = #tpu.pipeline_mode<synchronous>, transform_indices = @transform_4, window_bounds = array<i64: 64, 16>}, {transform_indices = @transform_5, window_bounds = array<i64: 64, 16>}]} {
    %c0 = arith.constant 0 : index
    %c0_0 = arith.constant 0 : index
    %0 = vector.load %arg1[%c0, %c0_0] : memref<64x16xf32, #tpu.memory_space<vmem>>, vector<64x16xf32>
    %c0_1 = arith.constant 0 : index
    %c0_2 = arith.constant 0 : index
    %1 = vector.load %arg2[%c0_1, %c0_2] : memref<1x16xf32, #tpu.memory_space<vmem>>, vector<1x16xf32>
    %c0_3 = arith.constant 0 : index
    %c0_4 = arith.constant 0 : index
    %2 = vector.load %arg3[%c0_3, %c0_4] : memref<1x16xf32, #tpu.memory_space<vmem>>, vector<1x16xf32>
    %cst = arith.constant dense<0.000000e+00> : vector<64xf32>
    %3 = vector.multi_reduction <add>, %0, %cst [1] : vector<64x16xf32> to vector<64xf32>
    %4 = vector.shape_cast %3 : vector<64xf32> to vector<64x1xf32>
    %cst_5 = arith.constant 1.600000e+01 : f32
    %5 = vector.broadcast %cst_5 : f32 to vector<64x1xf32>
    %6 = arith.divf %4, %5 : vector<64x1xf32>
    %7 = vector.broadcast %6 : vector<64x1xf32> to vector<64x16xf32>
    %8 = arith.subf %0, %7 : vector<64x16xf32>
    %9 = arith.mulf %8, %8 : vector<64x16xf32>
    %cst_6 = arith.constant dense<0.000000e+00> : vector<64xf32>
    %10 = vector.multi_reduction <add>, %9, %cst_6 [1] : vector<64x16xf32> to vector<64xf32>
    %11 = vector.shape_cast %10 : vector<64xf32> to vector<64x1xf32>
    %cst_7 = arith.constant 1.600000e+01 : f32
    %12 = vector.broadcast %cst_7 : f32 to vector<64x1xf32>
    %13 = arith.divf %11, %12 : vector<64x1xf32>
    %cst_8 = arith.constant 9.99999974E-6 : f32
    %14 = vector.broadcast %cst_8 : f32 to vector<64x1xf32>
    %15 = arith.addf %13, %14 : vector<64x1xf32>
    %16 = math.rsqrt %15 : vector<64x1xf32>
    %17 = vector.broadcast %16 : vector<64x1xf32> to vector<64x16xf32>
    %18 = arith.mulf %8, %17 : vector<64x16xf32>
    %19 = vector.broadcast %1 : vector<1x16xf32> to vector<64x16xf32>
    %20 = arith.mulf %18, %19 : vector<64x16xf32>
    %21 = vector.broadcast %2 : vector<1x16xf32> to vector<64x16xf32>
    %22 = arith.addf %20, %21 : vector<64x16xf32>
    %23 = arith.truncf %22 : vector<64x16xf32> to vector<64x16xbf16>
    %c0_9 = arith.constant 0 : index
    %c0_10 = arith.constant 0 : index
    %24 = vector.load %arg4[%c0_9, %c0_10] : memref<16x128xbf16, #tpu.memory_space<vmem>>, vector<16x128xbf16>
    %cst_11 = arith.constant dense<0.000000e+00> : vector<64x128xf32>
    %25 = tpu.matmul %23, %24, %cst_11 {dimension_numbers = #tpu.dot_dimension_numbers<[1], [0], [0], [1], [0, 0, 1, 1], [], []>} : vector<64x16xbf16>, vector<16x128xbf16>, vector<64x128xf32> -> vector<64x128xf32>
    %26 = vector.extract_strided_slice %25 {offsets = [0, 0], sizes = [64, 64], strides = [1, 1]} : vector<64x128xf32> to vector<64x64xf32>
    %27 = vector.extract_strided_slice %25 {offsets = [0, 64], sizes = [64, 64], strides = [1, 1]} : vector<64x128xf32> to vector<64x64xf32>
    %28 = arith.negf %26 : vector<64x64xf32>
    %29 = math.exp %28 : vector<64x64xf32>
    %cst_12 = arith.constant 1.000000e+00 : f32
    %30 = vector.broadcast %cst_12 : f32 to vector<64x64xf32>
    %31 = arith.addf %30, %29 : vector<64x64xf32>
    %32 = arith.divf %30, %31 : vector<64x64xf32>
    %33 = arith.mulf %26, %32 : vector<64x64xf32>
    %34 = arith.mulf %33, %27 : vector<64x64xf32>
    %35 = arith.truncf %34 : vector<64x64xf32> to vector<64x64xbf16>
    %c0_13 = arith.constant 0 : index
    %c0_14 = arith.constant 0 : index
    %36 = vector.load %arg5[%c0_13, %c0_14] : memref<64x16xbf16, #tpu.memory_space<vmem>>, vector<64x16xbf16>
    %cst_15 = arith.constant dense<0.000000e+00> : vector<64x16xf32>
    %37 = tpu.matmul %35, %36, %cst_15 {dimension_numbers = #tpu.dot_dimension_numbers<[1], [0], [0], [1], [0, 0, 1, 1], [], []>} : vector<64x64xbf16>, vector<64x16xbf16>, vector<64x16xf32> -> vector<64x16xf32>
    %38 = arith.addf %0, %37 : vector<64x16xf32>
    %c0_16 = arith.constant 0 : index
    %c0_17 = arith.constant 0 : index
    %39 = vector.load %arg6[%c0_16, %c0_17] : memref<64x16xf32, #tpu.memory_space<vmem>>, vector<64x16xf32>
    tpu.vector_store %arg6[%c0_16, %c0_17], %38 {strides = array<i32>} : memref<64x16xf32, #tpu.memory_space<vmem>>, vector<64x16xf32>,
    return
  }
  func.func @transform_0(%arg0: i32) -> (i32, i32) {
    %c0_i32 = arith.constant 0 : i32
    %c0_i32_0 = arith.constant 0 : i32
    return %arg0, %c0_i32 : i32, i32
  }
  func.func @transform_1(%arg0: i32) -> (i32, i32) {
    %c0_i32 = arith.constant 0 : i32
    %c0_i32_0 = arith.constant 0 : i32
    %c0_i32_1 = arith.constant 0 : i32
    return %c0_i32, %c0_i32_0 : i32, i32
  }
  func.func @transform_2(%arg0: i32) -> (i32, i32) {
    %c0_i32 = arith.constant 0 : i32
    %c0_i32_0 = arith.constant 0 : i32
    %c0_i32_1 = arith.constant 0 : i32
    return %c0_i32, %c0_i32_0 : i32, i32
  }
  func.func @transform_3(%arg0: i32) -> (i32, i32) {
    %c0_i32 = arith.constant 0 : i32
    %c0_i32_0 = arith.constant 0 : i32
    %c0_i32_1 = arith.constant 0 : i32
    return %c0_i32, %c0_i32_0 : i32, i32
  }
  func.func @transform_4(%arg0: i32) -> (i32, i32) {
    %c0_i32 = arith.constant 0 : i32
    %c0_i32_0 = arith.constant 0 : i32
    %c0_i32_1 = arith.constant 0 : i32
    return %c0_i32, %c0_i32_0 : i32, i32
  }
  func.func @transform_5(%arg0: i32) -> (i32, i32) {
    %c0_i32 = arith.constant 0 : i32
    %c0_i32_0 = arith.constant 0 : i32
    return %arg0, %c0_i32 : i32, i32
  }
}

</mosaic_0001>

<llo_original>
// kernel: triangle_block.14
$region0: #{triangle_block.14}
  #allocation0 [shape = 'u32[]', space=smem, size = 0x4, offset = 0x4, fixed_abs, tag = 'smem constant byte address 0x4 - core index']
  #allocation1 [shape = 'u32[144,128]{1,0:T(1,128)}', space=vmem, size = 0x12000, scoped, tag = 'internal scratch']
  %s0 = inlined_call_operand.vmem [shape: bf16[16,8,8], index: 0, kind: input, shape index: {}]
  %s1 = inlined_call_operand.vmem [shape: bf16[16,8,8], index: 1, kind: input, shape index: {}]
  %s2 = inlined_call_operand.vmem [shape: bf16[16,8,8], index: 2, kind: output, shape index: {}]
  %s3 = sld [smem:[#allocation0]]
  $region41: #{triangle_block.14} parent=0
    _
  %s5 = ssub.s32 1, %s3
  %s6 = scalar_select 0, %s5, %s3
  loop: start=0, step=1, limit=18
  $region2: #{triangle_block.14} parent=0 // loop_pre_header
    _
  $region3: #{triangle_block.14} parent=0 // loop_header
    %s8 = sphi 0, %s12
    %p9 = scmp.ge.s32.totalorder %s8, 18
    %s15 = sphi 0, %s27
    %s16 = sphi 0, %s23
    %s17 = sphi 0, %s15
    %s18 = sphi 0, %s16
    %s19 = sphi 0, %s17
    %s20 = sphi 0, %s18
    %s32 = sphi 0, %s34
    %s35 = sphi 0, %s32
    %s36 = sphi 0, %s35
    %s52 = sphi 0, %s36
    %s58 = sphi 0, %s60
    %s61 = sphi 0, %s58
    %s62 = sphi 0, %s61
    %s78 = sphi 0, %s62
    %s86 = sphi 0, %s88
    %s89 = sphi 0, %s86
    %s90 = sphi 0, %s89
    %s106 = sphi 0, %s90
  $region4: #{triangle_block.14} parent=0 // loop_header_branch
    %11 = sbr.rel (%p9) target = $region8
  $region5: #{triangle_block.14} parent=0 // loop_body
    %s13 = ssub.s32 %s8, 1
    %s14 = ssub.s32 %s8, 2
    %s21 = sadd.s32 1, %s16
    %p22 = scmp.ge.s32.totalorder %s21, 1
    %s23 = scalar_select %p22, 0, %s21
    %s24 = sadd.s32 1, %s15
    %s25 = scalar_select %p22, %s24, %s15
    %p26 = scmp.ge.s32.totalorder %s25, 16
    %s27 = scalar_select %p26, 0, %s25
    %s28 = ssub.s32 %s15, %s27
    %s29 = ssub.s32 %s16, %s23
    %s30 = sor.u32 %s28, %s29
    %p31 = scmp.eq.s32.totalorder %s30, 0
    %s33 = sadd.s32 %s32, 1
    %s34 = scalar_select %p31, %s32, %s33
    %p37 = pneg %p31
    %p38 = scmp.eq.s32.totalorder %s8, 15
    %p39 = por %p37, %p38
    %p40 = scmp.ne.s32.totalorder %s32, %s35
    %p41 = scmp.eq.s32.totalorder %s8, 0
    %p42 = por %p40, %p41
    %p43 = scmp.ne.s32.totalorder %s32, %s35
    %p44 = scmp.eq.s32.totalorder %s13, 15
    %p45 = por %p43, %p44
    %p46 = scmp.ne.s32.totalorder %s35, %s36
    %p47 = scmp.eq.s32.totalorder %s13, 0
    %p48 = por %p46, %p47
    %p49 = scmp.ne.s32.totalorder %s35, %s36
    %p50 = scmp.eq.s32.totalorder %s14, 15
    %p51 = por %p49, %p50
    %p53 = scmp.ne.s32.totalorder %s36, %s52
    %p54 = scmp.eq.s32.totalorder %s14, 0
    %p55 = por %p53, %p54
    %s56 = ssub.s32 %s15, %s27
    %p57 = scmp.eq.s32.totalorder %s56, 0
    %s59 = sadd.s32 %s58, 1
    %s60 = scalar_select %p57, %s58, %s59
    %p63 = pneg %p57
    %p64 = scmp.eq.s32.totalorder %s8, 15
    %p65 = por %p63, %p64
    %p66 = scmp.ne.s32.totalorder %s58, %s61
    %p67 = scmp.eq.s32.totalorder %s8, 0
    %p68 = por %p66, %p67
    %p69 = scmp.ne.s32.totalorder %s58, %s61
    %p70 = scmp.eq.s32.totalorder %s13, 15
    %p71 = por %p69, %p70
    %p72 = scmp.ne.s32.totalorder %s61, %s62
    %p73 = scmp.eq.s32.totalorder %s13, 0
    %p74 = por %p72, %p73
    %p75 = scmp.ne.s32.totalorder %s61, %s62
    %p76 = scmp.eq.s32.totalorder %s14, 15
    %p77 = por %p75, %p76
    %p79 = scmp.ne.s32.totalorder %s62, %s78
    %p80 = scmp.eq.s32.totalorder %s14, 0
    %p81 = por %p79, %p80
    %s82 = ssub.s32 %s15, %s27
    %s83 = ssub.s32 %s16, %s23
    %s84 = sor.u32 %s82, %s83
    %p85 = scmp.eq.s32.totalorder %s84, 0
    %s87 = sadd.s32 %s86, 1
    %s88 = scalar_select %p85, %s86, %s87
    %p91 = pneg %p85
    %p92 = scmp.eq.s32.totalorder %s8, 15
    %p93 = por %p91, %p92
    %p94 = scmp.ne.s32.totalorder %s86, %s89
    %p95 = scmp.eq.s32.totalorder %s8, 0
    %p96 = por %p94, %p95
    %p97 = scmp.ne.s32.totalorder %s86, %s89
    %p98 = scmp.eq.s32.totalorder %s13, 15
    %p99 = por %p97, %p98
    %p100 = scmp.ne.s32.totalorder %s89, %s90
    %p101 = scmp.eq.s32.totalorder %s13, 0
    %p102 = por %p100, %p101
    %p103 = scmp.ne.s32.totalorder %s89, %s90
    %p104 = scmp.eq.s32.totalorder %s14, 15
    %p105 = por %p103, %p104
    %p107 = scmp.ne.s32.totalorder %s90, %s106
    %p108 = scmp.eq.s32.totalorder %s14, 0
    %p109 = por %p107, %p108
    %p110 = scmp.le.s32.totalorder 1, %s8
    %p111 = scmp.lt.s32.totalorder %s8, 17
    %p112 = pnand %p110, %p111
    %p113 = pneg %p112
    // Predicated region
    $region9: #{triangle_block.14} parent=5 // pred_check
      _
    $region10: #{triangle_block.14} parent=5 // pred_check_branch
      %115 = sbr.rel (%p112) target = $region12
    $region11: #{triangle_block.14} parent=5 // pred_region
      %s116 = ssub.s32 %s8, 1
    $region12: #{triangle_block.14} parent=5 // pred_fallthru
      _
    %p117 = scmp.lt.s32.totalorder %s8, 16
    // Predicated region
    $region13: #{triangle_block.14} parent=5 // pred_check
      %p118 = pneg %p117
    $region14: #{triangle_block.14} parent=5 // pred_check_branch
      %120 = sbr.rel (%p118) target = $region16
    $region15: #{triangle_block.14} parent=5 // pred_region
      // Predicated region
      $region17: #{triangle_block.14} parent=15 // pred_check
        %p121 = pneg %p42
      $region18: #{triangle_block.14} parent=15 // pred_check_branch
        %123 = sbr.rel (%p121) target = $region20
      $region19: #{triangle_block.14} parent=15 // pred_region
        %p124 = scmp.lt.s32.totalorder %s15, 15
        %s125 = scalar_select %p124, %s15, 15
        %p126 = scmp.lt.s32.totalorder %s16, 0
        %s127 = scalar_select %p126, %s16, 0
        %s128 = sadd.s32 %s127, %s125
        %s129 = smul.addr %s128, 4
        %s130 = scalar_lea.vmem %s0, %s129
      $region20: #{triangle_block.14} parent=15 // pred_fallthru
        _
      // Predicated region
      $region21: #{triangle_block.14} parent=15 // pred_check
        %p131 = pneg %p68
      $region22: #{triangle_block.14} parent=15 // pred_check_branch
        %133 = sbr.rel (%p131) target = $region24
      $region23: #{triangle_block.14} parent=15 // pred_region
        %p134 = scmp.lt.s32.totalorder %s15, 15
        %s135 = scalar_select %p134, %s15, 15
        %s136 = smul.addr %s135, 4
        %s137 = scalar_lea.vmem %s1, %s136
      $region24: #{triangle_block.14} parent=15 // pred_fallthru
        _
    $region16: #{triangle_block.14} parent=5 // pred_fallthru
      _
    %p138 = scmp.le.s32.totalorder 1, %s8
    %p139 = scmp.lt.s32.totalorder %s8, 17
    %p140 = pnand %p138, %p139
    %p141 = pneg %p140
    // Predicated region
    $region25: #{triangle_block.14} parent=5 // pred_check
      _
    $region26: #{triangle_block.14} parent=5 // pred_check_branch
      %143 = sbr.rel (%p140) target = $region28
    $region27: #{triangle_block.14} parent=5 // pred_region
      %s144 = ssub.s32 %s8, 1
      %p145 = scmp.lt.s32.totalorder %s17, 15
      %s146 = scalar_select %p145, %s17, 15
      %p147 = scmp.lt.s32.totalorder %s18, 0
      %s148 = scalar_select %p147, %s18, 0
      %s149 = sadd.s32 %s148, %s146
      %s150 = smul.addr %s149, 4
      %s151 = scalar_lea.vmem %s0, %s150
      %p152 = pneg %p48
      %p153 = pneg %p45
      %p154 = scmp.lt.s32.totalorder %s17, 15
      %s155 = scalar_select %p154, %s17, 15
      %s156 = smul.addr %s155, 4
      %s157 = scalar_lea.vmem %s1, %s156
      %p158 = pneg %p74
      %p159 = pneg %p71
      %p160 = pneg %p102
      %p161 = pneg %p99
      %p162 = scmp.lt.s32.totalorder %s17, 15
      %s163 = scalar_select %p162, %s17, 15
      %p164 = scmp.lt.s32.totalorder %s18, 0
      %s165 = scalar_select %p164, %s18, 0
      %s166 = sadd.s32 %s165, %s163
      %s167 = smul.addr %s166, 4
      %s168 = scalar_lea.vmem %s2, %s167
      %p169 = scmp.lt.s32.totalorder %s17, 15
      %s170 = scalar_select %p169, %s17, 15
      %p171 = scmp.lt.s32.totalorder %s18, 0
      %s172 = scalar_select %p171, %s18, 0
      %s173 = sadd.s32 %s172, %s170
      %s174 = smul.addr %s173, 4
      %s175 = scalar_lea.vmem %s0, %s174
      %p176 = scmp.lt.s32.totalorder %s17, 15
      %s177 = scalar_select %p176, %s17, 15
      %s178 = smul.addr %s177, 4
      %s179 = scalar_lea.vmem %s1, %s178
      %p180 = scmp.lt.s32.totalorder %s17, 15
      %s181 = scalar_select %p180, %s17, 15
      %p182 = scmp.lt.s32.totalorder %s18, 0
      %s183 = scalar_select %p182, %s18, 0
      %s184 = sadd.s32 %s183, %s181
      %s185 = smul.addr %s184, 4
      %s186 = scalar_lea.vmem %s2, %s185
      %v188 = vld [vmem:[%s175] sm:$0xf]
      %v189 = vld [vmem:[%s179] sm:$0xf]
      %vm190 = vcmask 64512
      %v192 = vsel %vm190, %v188, 0
      %v195 = vsel %vm190, %v189, 0
      %197 = vmatprep.subr.bf16.mxu0 0
      %198 = vmatpush1.bf16.xpose.msra.mxu0 0
      %199 = vmatprep.subr.bf16.mxu0 0
      %200 = vmatpush1.bf16.xpose.msra.mxu0 0
      %201 = vmatprep.subr.bf16.mxu0 0
      %202 = vmatpush1.bf16.xpose.msra.mxu0 0
      %203 = vmatprep.subr.bf16.mxu0 0
      %204 = vmatpush1.bf16.xpose.msra.mxu0 0
      %205 = vmatprep.subr.bf16.mxu0 0
      %206 = vmatpush1.bf16.xpose.msra.mxu0 0
      %207 = vmatprep.subr.bf16.mxu0 0
      %208 = vmatpush1.bf16.xpose.msra.mxu0 0
      %209 = vmatprep.subr.bf16.mxu0 0
      %210 = vmatpush1.bf16.xpose.msra.mxu0 0
      %211 = vmatprep.subr.bf16.mxu0 0
      %212 = vmatpush1.bf16.xpose.msra.mxu0 %v195
      %213 = vmatprep.subr.bf16.mxu0 0
      %214 = vmatpush2.bf16.xpose.msra.mxu0 0
      %215 = vmatprep.subr.bf16.mxu0 0
      %216 = vmatpush2.bf16.xpose.msra.mxu0 0
      %217 = vmatprep.subr.bf16.mxu0 0
      %218 = vmatpush2.bf16.xpose.msra.mxu0 0
      %219 = vmatprep.subr.bf16.mxu0 0
      %220 = vmatpush2.bf16.xpose.msra.mxu0 0
      %221 = vmatprep.subr.bf16.mxu0 0
      %222 = vmatpush2.bf16.xpose.msra.mxu0 0
      %223 = vmatprep.subr.bf16.mxu0 0
      %224 = vmatpush2.bf16.xpose.msra.mxu0 0
      %225 = vmatprep.subr.bf16.mxu0 0
      %226 = vmatpush2.bf16.xpose.msra.mxu0 0
      %227 = vmatprep.subr.bf16.mxu0 0
      %228 = vmatpush2.bf16.xpose.msra.mxu0 0
      %229 = vmatprep.mubr.bf16.mxu0 0
      %230 = vmatmul.mubr.bf16.gmra.mxu0 %v192
      %v231 = vpop.f32.mrf.mxu0
      %v232 = vadd.f32 0.0, %v231
      %v233 = vpop.f32.mrf.mxu0
      %v234 = vpop.f32.mrf.mxu0
      %v235 = vpop.f32.mrf.mxu0
      %236 = vdwg.mxu0
      %v237 = vpack.c.bf16 %v232, %v232
      %vm238 = vcmask 60416
      %239 = vst.msk [vmem:[%s186] sm:$0xf] %vm238, %v237
      %p240 = scmp.lt.s32.totalorder %s17, 15
      %s241 = scalar_select %p240, %s17, 15
      %p242 = scmp.lt.s32.totalorder %s18, 0
      %s243 = scalar_select %p242, %s18, 0
      %s244 = sadd.s32 %s243, %s241
      %s245 = smul.addr %s244, 4
      %s246 = scalar_lea.vmem %s2, %s245
      // Predicated region
      $region29: #{triangle_block.14} parent=27 // pred_check
        %p247 = pneg %p99
      $region30: #{triangle_block.14} parent=27 // pred_check_branch
        %249 = sbr.rel (%p247) target = $region32
      $region31: #{triangle_block.14} parent=27 // pred_region
        _
      $region32: #{triangle_block.14} parent=27 // pred_fallthru
        _
    $region28: #{triangle_block.14} parent=5 // pred_fallthru
      _
    %p250 = scmp.le.s32.totalorder 2, %s8
    // Predicated region
    $region33: #{triangle_block.14} parent=5 // pred_check
      %p251 = pneg %p250
    $region34: #{triangle_block.14} parent=5 // pred_check_branch
      %253 = sbr.rel (%p251) target = $region36
    $region35: #{triangle_block.14} parent=5 // pred_region
      %s254 = ssub.s32 %s8, 2
      // Predicated region
      $region37: #{triangle_block.14} parent=35 // pred_check
        %p255 = pneg %p105
      $region38: #{triangle_block.14} parent=35 // pred_check_branch
        %257 = sbr.rel (%p255) target = $region40
      $region39: #{triangle_block.14} parent=35 // pred_region
        %p258 = scmp.lt.s32.totalorder %s19, 15
        %s259 = scalar_select %p258, %s19, 15
        %p260 = scmp.lt.s32.totalorder %s20, 0
        %s261 = scalar_select %p260, %s20, 0
        %s262 = sadd.s32 %s261, %s259
        %s263 = smul.addr %s262, 4
        %s264 = scalar_lea.vmem %s2, %s263
      $region40: #{triangle_block.14} parent=35 // pred_fallthru
        _
    $region36: #{triangle_block.14} parent=5 // pred_fallthru
      _
  $region6: #{triangle_block.14} parent=0 // loop_footer
    %s12 = sadd.s32 1, %s8
  $region7: #{triangle_block.14} parent=0 // loop_footer_branch
    %7 = sbr.rel target = $region3
  $region8: #{triangle_block.14} parent=0 // loop_exit
    _

// kernel: triangle_block.13
$region0: #{triangle_block.13}
  #allocation0 [shape = 'u32[]', space=smem, size = 0x4, offset = 0x4, fixed_abs, tag = 'smem constant byte address 0x4 - core index']
  #allocation1 [shape = 'u32[144,128]{1,0:T(1,128)}', space=vmem, size = 0x12000, scoped, tag = 'internal scratch']
  %s0 = inlined_call_operand.vmem [shape: f32[64,16], index: 0, kind: input, shape index: {}]
  %s1 = inlined_call_operand.vmem [shape: f32[64,1], index: 1, kind: input, shape index: {}]
  %s2 = inlined_call_operand.vmem [shape: f32[1,16], index: 2, kind: input, shape index: {}]
  %s3 = inlined_call_operand.vmem [shape: f32[1,16], index: 3, kind: input, shape index: {}]
  %s4 = inlined_call_operand.vmem [shape: bf16[16,80], index: 4, kind: input, shape index: {}]
  %s5 = inlined_call_operand.vmem [shape: bf16[16,64], index: 5, kind: output, shape index: {0}]
  %s6 = inlined_call_operand.vmem [shape: bf16[16,64], index: 6, kind: output, shape index: {1}]
  %s7 = inlined_call_operand.vmem [shape: bf16[64,16], index: 7, kind: output, shape index: {2}]
  %8 = xla_tuple %s5, %s6, %s7
  %s9 = sld [smem:[#allocation0]]
  $region46: #{triangle_block.13} parent=0
    _
  %s11 = ssub.s32 1, %s9
  %s12 = scalar_select 0, %s11, %s9
  // Predicated region
  $region2: #{triangle_block.13} parent=0 // pred_check
    _
  $region3: #{triangle_block.13} parent=0 // pred_check_branch
    %14 = sbr.rel (0) target = $region5
  $region4: #{triangle_block.13} parent=0 // pred_region
    _
  $region5: #{triangle_block.13} parent=0 // pred_fallthru
    _
  // Predicated region
  $region6: #{triangle_block.13} parent=0 // pred_check
    _
  $region7: #{triangle_block.13} parent=0 // pred_check_branch
    %16 = sbr.rel (0) target = $region9
  $region8: #{triangle_block.13} parent=0 // pred_region
    _
  $region9: #{triangle_block.13} parent=0 // pred_fallthru
    _
  // Predicated region
  $region10: #{triangle_block.13} parent=0 // pred_check
    _
  $region11: #{triangle_block.13} parent=0 // pred_check_branch
    %18 = sbr.rel (0) target = $region13
  $region12: #{triangle_block.13} parent=0 // pred_region
    _
  $region13: #{triangle_block.13} parent=0 // pred_fallthru
    _
  // Predicated region
  $region14: #{triangle_block.13} parent=0 // pred_check
    _
  $region15: #{triangle_block.13} parent=0 // pred_check_branch
    %20 = sbr.rel (0) target = $region17
  $region16: #{triangle_block.13} parent=0 // pred_region
    _
  $region17: #{triangle_block.13} parent=0 // pred_fallthru
    _
  // Predicated region
  $region18: #{triangle_block.13} parent=0 // pred_check
    _
  $region19: #{triangle_block.13} parent=0 // pred_check_branch
    %22 = sbr.rel (0) target = $region21
  $region20: #{triangle_block.13} parent=0 // pred_region
    _
  $region21: #{triangle_block.13} parent=0 // pred_fallthru
    _
  %v24 = vld [vmem:[%s0] sm:$0xff]
  %v25 = vld [vmem:[%s0 + $0x8] sm:$0xff]
  %v26 = vld [vmem:[%s0 + $0x10] sm:$0xff]
  %v27 = vld [vmem:[%s0 + $0x18] sm:$0xff]
  %v28 = vld [vmem:[%s0 + $0x20] sm:$0xff]
  %v29 = vld [vmem:[%s0 + $0x28] sm:$0xff]
  %v30 = vld [vmem:[%s0 + $0x30] sm:$0xff]
  %v31 = vld [vmem:[%s0 + $0x38] sm:$0xff]
  %v32 = vld [vmem:[%s2] sm:$0x1]
  %v33 = vld [vmem:[%s3] sm:$0x1]
  %vm34 = vcmask 130048
  %v35 = vsel %vm34, %v24, 0.0
  %36 = vadd.xlane.f32.xlu0 %v35
  %v37 = vpop.xlane.xlu0 %36
  %v38 = vsel %vm34, %v25, 0.0
  %39 = vadd.xlane.f32.xlu0 %v38
  %v40 = vpop.xlane.xlu0 %39
  %v41 = vsel %vm34, %v26, 0.0
  %42 = vadd.xlane.f32.xlu0 %v41
  %v43 = vpop.xlane.xlu0 %42
  %v44 = vsel %vm34, %v27, 0.0
  %45 = vadd.xlane.f32.xlu0 %v44
  %v46 = vpop.xlane.xlu0 %45
  %v47 = vsel %vm34, %v28, 0.0
  %48 = vadd.xlane.f32.xlu0 %v47
  %v49 = vpop.xlane.xlu0 %48
  %v50 = vsel %vm34, %v29, 0.0
  %51 = vadd.xlane.f32.xlu0 %v50
  %v52 = vpop.xlane.xlu0 %51
  %v53 = vsel %vm34, %v30, 0.0
  %54 = vadd.xlane.f32.xlu0 %v53
  %v55 = vpop.xlane.xlu0 %54
  %v56 = vsel %vm34, %v31, 0.0
  %57 = vadd.xlane.f32.xlu0 %v56
  %v58 = vpop.xlane.xlu0 %57
  %v59 = vrcp.pop 16.0
  %v60 = vmul.f32 %v37, %v59
  %v61 = vmul.f32 %v40, %v59
  %v62 = vmul.f32 %v43, %v59
  %v63 = vmul.f32 %v46, %v59
  %v64 = vmul.f32 %v49, %v59
  %v65 = vmul.f32 %v52, %v59
  %v66 = vmul.f32 %v55, %v59
  %v67 = vmul.f32 %v58, %v59
  %v68 = vsub.f32 %v24, %v60
  %v69 = vsub.f32 %v25, %v61
  %v70 = vsub.f32 %v26, %v62
  %v71 = vsub.f32 %v27, %v63
  %v72 = vsub.f32 %v28, %v64
  %v73 = vsub.f32 %v29, %v65
  %v74 = vsub.f32 %v30, %v66
  %v75 = vsub.f32 %v31, %v67
  %v76 = vmul.f32 %v68, %v68
  %v77 = vmul.f32 %v69, %v69
  %v78 = vmul.f32 %v70, %v70
  %v79 = vmul.f32 %v71, %v71
  %v80 = vmul.f32 %v72, %v72
  %v81 = vmul.f32 %v73, %v73
  %v82 = vmul.f32 %v74, %v74
  %v83 = vmul.f32 %v75, %v75
  %v84 = vsel %vm34, %v76, 0.0
  %85 = vadd.xlane.f32.xlu0 %v84
  %v86 = vpop.xlane.xlu0 %85
  %v87 = vsel %vm34, %v77, 0.0
  %88 = vadd.xlane.f32.xlu0 %v87
  %v89 = vpop.xlane.xlu0 %88
  %v90 = vsel %vm34, %v78, 0.0
  %91 = vadd.xlane.f32.xlu0 %v90
  %v92 = vpop.xlane.xlu0 %91
  %v93 = vsel %vm34, %v79, 0.0
  %94 = vadd.xlane.f32.xlu0 %v93
  %v95 = vpop.xlane.xlu0 %94
  %v96 = vsel %vm34, %v80, 0.0
  %97 = vadd.xlane.f32.xlu0 %v96
  %v98 = vpop.xlane.xlu0 %97
  %v99 = vsel %vm34, %v81, 0.0
  %100 = vadd.xlane.f32.xlu0 %v99
  %v101 = vpop.xlane.xlu0 %100
  %v102 = vsel %vm34, %v82, 0.0
  %103 = vadd.xlane.f32.xlu0 %v102
  %v104 = vpop.xlane.xlu0 %103
  %v105 = vsel %vm34, %v83, 0.0
  %106 = vadd.xlane.f32.xlu0 %v105
  %v107 = vpop.xlane.xlu0 %106
  %v108 = vmul.f32 %v86, %v59
  %v109 = vmul.f32 %v89, %v59
  %v110 = vmul.f32 %v92, %v59
  %v111 = vmul.f32 %v95, %v59
  %v112 = vmul.f32 %v98, %v59
  %v113 = vmul.f32 %v101, %v59
  %v114 = vmul.f32 %v104, %v59
  %v115 = vmul.f32 %v107, %v59
  %v116 = vadd.f32 %v108, 1e-05
  %v117 = vadd.f32 %v109, 1e-05
  %v118 = vadd.f32 %v110, 1e-05
  %v119 = vadd.f32 %v111, 1e-05
  %v120 = vadd.f32 %v112, 1e-05
  %v121 = vadd.f32 %v113, 1e-05
  %v122 = vadd.f32 %v114, 1e-05
  %v123 = vadd.f32 %v115, 1e-05
  %v124 = vrsqrt.pop %v116
  %v125 = vrsqrt.pop %v117
  %v126 = vrsqrt.pop %v118
  %v127 = vrsqrt.pop %v119
  %v128 = vrsqrt.pop %v120
  %v129 = vrsqrt.pop %v121
  %v130 = vrsqrt.pop %v122
  %v131 = vrsqrt.pop %v123
  %v132 = vmul.f32 %v68, %v124
  %v133 = vmul.f32 %v69, %v125
  %v134 = vmul.f32 %v70, %v126
  %v135 = vmul.f32 %v71, %v127
  %v136 = vmul.f32 %v72, %v128
  %v137 = vmul.f32 %v73, %v129
  %v138 = vmul.f32 %v74, %v130
  %v139 = vmul.f32 %v75, %v131
  %v141 = vlaneseq
  %v142 = vshrl.u32 %v141, 7
  %v143 = vsub.s32 0, %v142
  %v144 = vrot.slane %v32, %v143
  %v146 = vmul.f32 %v132, %v144
  %v147 = vmul.f32 %v133, %v144
  %v148 = vmul.f32 %v134, %v144
  %v149 = vmul.f32 %v135, %v144
  %v150 = vmul.f32 %v136, %v144
  %v151 = vmul.f32 %v137, %v144
  %v152 = vmul.f32 %v138, %v144
  %v153 = vmul.f32 %v139, %v144
  %v155 = vlaneseq
  %v156 = vshrl.u32 %v155, 7
  %v157 = vsub.s32 0, %v156
  %v158 = vrot.slane %v33, %v157
  %v160 = vadd.f32 %v146, %v158
  %v161 = vadd.f32 %v147, %v158
  %v162 = vadd.f32 %v148, %v158
  %v163 = vadd.f32 %v149, %v158
  %v164 = vadd.f32 %v150, %v158
  %v165 = vadd.f32 %v151, %v158
  %v166 = vadd.f32 %v152, %v158
  %v167 = vadd.f32 %v153, %v158
  %v168 = vpack.c.bf16 %v161, %v160
  %v169 = vpack.c.bf16 %v163, %v162
  %v170 = vpack.c.bf16 %v165, %v164
  %v171 = vpack.c.bf16 %v167, %v166
  %v172 = vld [vmem:[%s4] sm:$0xf]
  %v173 = vld [vmem:[%s4 + $0x4] sm:$0xf]
  %v176 = vunpack.c.l.b16 %v172
  %v177 = vunpack.c.l.b16 %v173
  %v178 = vpack.c.b16 %v177, %v176
  %v181 = vsel %vm34, %v168, 0
  %v184 = vsel %vm34, %v169, 0
  %v187 = vsel %vm34, %v170, 0
  %v190 = vsel %vm34, %v171, 0
  %192 = vmatprep.subr.bf16.mxu0 0
  %193 = vmatpush1.bf16.msra.mxu0 0
  %194 = vmatprep.subr.bf16.mxu0 0
  %195 = vmatpush1.bf16.msra.mxu0 0
  %196 = vmatprep.subr.bf16.mxu0 0
  %197 = vmatpush1.bf16.msra.mxu0 0
  %198 = vmatprep.subr.bf16.mxu0 0
  %199 = vmatpush1.bf16.msra.mxu0 0
  %200 = vmatprep.subr.bf16.mxu0 0
  %201 = vmatpush1.bf16.msra.mxu0 0
  %202 = vmatprep.subr.bf16.mxu0 0
  %203 = vmatpush1.bf16.msra.mxu0 0
  %204 = vmatprep.subr.bf16.mxu0 0
  %205 = vmatpush1.bf16.msra.mxu0 0
  %206 = vmatprep.subr.bf16.mxu0 0
  %207 = vmatpush1.bf16.msra.mxu0 %v178
  %208 = vmatprep.subr.bf16.mxu0 0
  %209 = vmatpush2.bf16.msra.mxu0 0
  %210 = vmatprep.subr.bf16.mxu0 0
  %211 = vmatpush2.bf16.msra.mxu0 0
  %212 = vmatprep.subr.bf16.mxu0 0
  %213 = vmatpush2.bf16.msra.mxu0 0
  %214 = vmatprep.subr.bf16.mxu0 0
  %215 = vmatpush2.bf16.msra.mxu0 0
  %216 = vmatprep.subr.bf16.mxu0 0
  %217 = vmatpush2.bf16.msra.mxu0 0
  %218 = vmatprep.subr.bf16.mxu0 0
  %219 = vmatpush2.bf16.msra.mxu0 0
  %220 = vmatprep.subr.bf16.mxu0 0
  %221 = vmatpush2.bf16.msra.mxu0 0
  %222 = vmatprep.subr.bf16.mxu0 0
  %223 = vmatpush2.bf16.msra.mxu0 0
  %224 = vmatprep.mubr.bf16.mxu0 0
  %225 = vmatmul.mubr.bf16.gmra.mxu0 %v181
  %v226 = vpop.f32.mrf.mxu0
  %v227 = vadd.f32 0.0, %v226
  %v228 = vpop.f32.mrf.mxu0
  %v229 = vpop.f32.mrf.mxu0
  %v230 = vadd.f32 0.0, %v229
  %v231 = vpop.f32.mrf.mxu0
  %232 = vmatprep.mubr.bf16.mxu0 0
  %233 = vmatmul.mubr.bf16.gmra.mxu0 %v184
  %v234 = vpop.f32.mrf.mxu0
  %v235 = vadd.f32 0.0, %v234
  %v236 = vpop.f32.mrf.mxu0
  %v237 = vpop.f32.mrf.mxu0
  %v238 = vadd.f32 0.0, %v237
  %v239 = vpop.f32.mrf.mxu0
  %240 = vmatprep.mubr.bf16.mxu0 0
  %241 = vmatmul.mubr.bf16.gmra.mxu0 %v187
  %v242 = vpop.f32.mrf.mxu0
  %v243 = vadd.f32 0.0, %v242
  %v244 = vpop.f32.mrf.mxu0
  %v245 = vpop.f32.mrf.mxu0
  %v246 = vadd.f32 0.0, %v245
  %v247 = vpop.f32.mrf.mxu0
  %248 = vmatprep.mubr.bf16.mxu0 0
  %249 = vmatmul.mubr.bf16.gmra.mxu0 %v190
  %v250 = vpop.f32.mrf.mxu0
  %v251 = vadd.f32 0.0, %v250
  %v252 = vpop.f32.mrf.mxu0
  %v253 = vpop.f32.mrf.mxu0
  %v254 = vadd.f32 0.0, %v253
  %v255 = vpop.f32.mrf.mxu0
  %256 = vdwg.mxu0
  %v257 = vld [vmem:[%s1] sm:$0xff]
  %v258 = vld [vmem:[%s1 + $0x8] sm:$0xff]
  %v259 = vld [vmem:[%s1 + $0x10] sm:$0xff]
  %v260 = vld [vmem:[%s1 + $0x18] sm:$0xff]
  %v261 = vld [vmem:[%s1 + $0x20] sm:$0xff]
  %v262 = vld [vmem:[%s1 + $0x28] sm:$0xff]
  %v263 = vld [vmem:[%s1 + $0x30] sm:$0xff]
  %v264 = vld [vmem:[%s1 + $0x38] sm:$0xff]
  %v265 = vxor.u32 %v227, 2147483648
  %v266 = vxor.u32 %v230, 2147483648
  %v267 = vxor.u32 %v235, 2147483648
  %v268 = vxor.u32 %v238, 2147483648
  %v269 = vxor.u32 %v243, 2147483648
  %v270 = vxor.u32 %v246, 2147483648
  %v271 = vxor.u32 %v251, 2147483648
  %v272 = vxor.u32 %v254, 2147483648
  %v273 = vmul.f32 %v265, 1.442695
  %v274 = vpow.pop %v273
  %v275 = vmul.f32 %v266, 1.442695
  %v276 = vpow.pop %v275
  %v277 = vmul.f32 %v267, 1.442695
  %v278 = vpow.pop %v277
  %v279 = vmul.f32 %v268, 1.442695
  %v280 = vpow.pop %v279
  %v281 = vmul.f32 %v269, 1.442695
  %v282 = vpow.pop %v281
  %v283 = vmul.f32 %v270, 1.442695
  %v284 = vpow.pop %v283
  %v285 = vmul.f32 %v271, 1.442695
  %v286 = vpow.pop %v285
  %v287 = vmul.f32 %v272, 1.442695
  %v288 = vpow.pop %v287
  %v289 = vadd.f32 %v274, 1.0
  %v290 = vadd.f32 %v276, 1.0
  %v291 = vadd.f32 %v278, 1.0
  %v292 = vadd.f32 %v280, 1.0
  %v293 = vadd.f32 %v282, 1.0
  %v294 = vadd.f32 %v284, 1.0
  %v295 = vadd.f32 %v286, 1.0
  %v296 = vadd.f32 %v288, 1.0
  %v297 = vrcp.pop %v289
  %v298 = vmul.f32 1.0, %v297
  %v299 = vrcp.pop %v290
  %v300 = vmul.f32 1.0, %v299
  %v301 = vrcp.pop %v291
  %v302 = vmul.f32 1.0, %v301
  %v303 = vrcp.pop %v292
  %v304 = vmul.f32 1.0, %v303
  %v305 = vrcp.pop %v293
  %v306 = vmul.f32 1.0, %v305
  %v307 = vrcp.pop %v294
  %v308 = vmul.f32 1.0, %v307
  %v309 = vrcp.pop %v295
  %v310 = vmul.f32 1.0, %v309
  %v311 = vrcp.pop %v296
  %v312 = vmul.f32 1.0, %v311
  %321 = vrot.lane.b32.xlu0 %v298, 96
  %v322 = vpop.permute.xlu0 %321
  %323 = vrot.lane.b32.xlu0 %v300, 96
  %v324 = vpop.permute.xlu0 %323
  %325 = vrot.lane.b32.xlu0 %v302, 96
  %v326 = vpop.permute.xlu0 %325
  %327 = vrot.lane.b32.xlu0 %v304, 96
  %v328 = vpop.permute.xlu0 %327
  %329 = vrot.lane.b32.xlu0 %v306, 96
  %v330 = vpop.permute.xlu0 %329
  %331 = vrot.lane.b32.xlu0 %v308, 96
  %v332 = vpop.permute.xlu0 %331
  %333 = vrot.lane.b32.xlu0 %v310, 96
  %v334 = vpop.permute.xlu0 %333
  %335 = vrot.lane.b32.xlu0 %v312, 96
  %v336 = vpop.permute.xlu0 %335
  %v345 = vmul.f32 %v227, %v322
  %v346 = vmul.f32 %v230, %v324
  %v347 = vmul.f32 %v235, %v326
  %v348 = vmul.f32 %v238, %v328
  %v349 = vmul.f32 %v243, %v330
  %v350 = vmul.f32 %v246, %v332
  %v351 = vmul.f32 %v251, %v334
  %v352 = vmul.f32 %v254, %v336
  %354 = vset.pattern.permute.xlu0 0
  %355 = vperm.xlu0 %354, %v257
  %v356 = vpop.permute.xlu0 %355
  %359 = vset.pattern.permute.xlu0 0
  %360 = vperm.xlu0 %359, %v258
  %v361 = vpop.permute.xlu0 %360
  %364 = vset.pattern.permute.xlu0 0
  %365 = vperm.xlu0 %364, %v259
  %v366 = vpop.permute.xlu0 %365
  %369 = vset.pattern.permute.xlu0 0
  %370 = vperm.xlu0 %369, %v260
  %v371 = vpop.permute.xlu0 %370
  %374 = vset.pattern.permute.xlu0 0
  %375 = vperm.xlu0 %374, %v261
  %v376 = vpop.permute.xlu0 %375
  %379 = vset.pattern.permute.xlu0 0
  %380 = vperm.xlu0 %379, %v262
  %v381 = vpop.permute.xlu0 %380
  %384 = vset.pattern.permute.xlu0 0
  %385 = vperm.xlu0 %384, %v263
  %v386 = vpop.permute.xlu0 %385
  %389 = vset.pattern.permute.xlu0 0
  %390 = vperm.xlu0 %389, %v264
  %v391 = vpop.permute.xlu0 %390
  %v393 = vmul.f32 %v345, %v356
  %v394 = vmul.f32 %v346, %v361
  %v395 = vmul.f32 %v347, %v366
  %v396 = vmul.f32 %v348, %v371
  %v397 = vmul.f32 %v349, %v376
  %v398 = vmul.f32 %v350, %v381
  %v399 = vmul.f32 %v351, %v386
  %v400 = vmul.f32 %v352, %v391
  %v401 = vpack.c.bf16 %v394, %v393
  %v402 = vpack.c.bf16 %v396, %v395
  %v403 = vpack.c.bf16 %v398, %v397
  %v404 = vpack.c.bf16 %v400, %v399
  %405 = vxpose.xlu0.c.b16.start [1/8] %v401, 128
  %406 = vxpose.xlu0.c.b16.cont [2/8] %v402, 128
  %407 = vxpose.xlu0.c.b16.cont [3/8] %v403, 128
  %408 = vxpose.xlu0.c.b16.cont [4/8] %v404, 128
  %409 = vxpose.xlu0.c.b16.cont [5/8] 0, 128
  %410 = vxpose.xlu0.c.b16.cont [6/8] 0, 128
  %411 = vxpose.xlu0.c.b16.cont [7/8] 0, 128
  %412 = vxpose.xlu0.c.b16.end [8/8] 0, 128
  %v413 = vpop.trf.xlu0
  %v414 = vpop.trf.xlu0
  %v415 = vpop.trf.xlu0
  %v416 = vpop.trf.xlu0
  %v417 = vpop.trf.xlu0
  %v418 = vpop.trf.xlu0
  %v419 = vpop.trf.xlu0
  %v420 = vpop.trf.xlu0
  %v422 = vunpack.c.l.b16 %v413
  %v423 = vunpack.c.h.b16 %v413
  %v424 = vpack.c.b16 %v422, %v422
  %v425 = vpack.c.b16 %v423, %v423
  %vm428 = vcmask 519168
  %429 = vst.msk [vmem:[%s5] sm:$0xf] %vm428, %v424
  %430 = vst.msk [vmem:[%s5 + $0x4] sm:$0xf] %vm428, %v425
  %435 = vrot.lane.b32.xlu0 %v401, 112
  %v436 = vpop.permute.xlu0 %435
  %437 = vrot.lane.b32.xlu0 %v402, 112
  %v438 = vpop.permute.xlu0 %437
  %439 = vrot.lane.b32.xlu0 %v403, 112
  %v440 = vpop.permute.xlu0 %439
  %441 = vrot.lane.b32.xlu0 %v404, 112
  %v442 = vpop.permute.xlu0 %441
  %447 = vxpose.xlu0.c.b16.start [1/8] %v436, 128
  %448 = vxpose.xlu0.c.b16.cont [2/8] %v438, 128
  %449 = vxpose.xlu0.c.b16.cont [3/8] %v440, 128
  %450 = vxpose.xlu0.c.b16.cont [4/8] %v442, 128
  %451 = vxpose.xlu0.c.b16.cont [5/8] 0, 128
  %452 = vxpose.xlu0.c.b16.cont [6/8] 0, 128
  %453 = vxpose.xlu0.c.b16.cont [7/8] 0, 128
  %454 = vxpose.xlu0.c.b16.end [8/8] 0, 128
  %v455 = vpop.trf.xlu0
  %v456 = vpop.trf.xlu0
  %v457 = vpop.trf.xlu0
  %v458 = vpop.trf.xlu0
  %v459 = vpop.trf.xlu0
  %v460 = vpop.trf.xlu0
  %v461 = vpop.trf.xlu0
  %v462 = vpop.trf.xlu0
  %v464 = vunpack.c.l.b16 %v455
  %v465 = vunpack.c.h.b16 %v455
  %v466 = vpack.c.b16 %v464, %v464
  %v467 = vpack.c.b16 %v465, %v465
  %470 = vst.msk [vmem:[%s6] sm:$0xf] %vm428, %v466
  %471 = vst.msk [vmem:[%s6 + $0x4] sm:$0xf] %vm428, %v467
  %v472 = vpack.c.bf16 %v300, %v298
  %v473 = vpack.c.bf16 %v304, %v302
  %v474 = vpack.c.bf16 %v308, %v306
  %v475 = vpack.c.bf16 %v312, %v310
  %v480 = vunpack.c.l.b16 %v472
  %v481 = vunpack.c.h.b16 %v472
  %v482 = vunpack.c.l.b16 %v473
  %v483 = vunpack.c.h.b16 %v473
  %v484 = vunpack.c.l.b16 %v474
  %v485 = vunpack.c.h.b16 %v474
  %v486 = vunpack.c.l.b16 %v475
  %v487 = vunpack.c.h.b16 %v475
  %v488 = vpack.c.b16 %v480, %v480
  %v489 = vpack.c.b16 %v481, %v481
  %v490 = vpack.c.b16 %v482, %v482
  %v491 = vpack.c.b16 %v483, %v483
  %v492 = vpack.c.b16 %v484, %v484
  %v493 = vpack.c.b16 %v485, %v485
  %v494 = vpack.c.b16 %v486, %v486
  %v495 = vpack.c.b16 %v487, %v487
  %496 = vrot.lane.b32.xlu0 %v488, 64
  %v497 = vpop.permute.xlu0 %496
  %498 = vrot.lane.b32.xlu0 %v489, 64
  %v499 = vpop.permute.xlu0 %498
  %500 = vrot.lane.b32.xlu0 %v490, 64
  %v501 = vpop.permute.xlu0 %500
  %502 = vrot.lane.b32.xlu0 %v491, 64
  %v503 = vpop.permute.xlu0 %502
  %504 = vrot.lane.b32.xlu0 %v492, 64
  %v505 = vpop.permute.xlu0 %504
  %506 = vrot.lane.b32.xlu0 %v493, 64
  %v507 = vpop.permute.xlu0 %506
  %508 = vrot.lane.b32.xlu0 %v494, 64
  %v509 = vpop.permute.xlu0 %508
  %510 = vrot.lane.b32.xlu0 %v495, 64
  %v511 = vpop.permute.xlu0 %510
  %vm520 = vcmask 125952
  %521 = vst.msk [vmem:[%s7] sm:$0xf] %vm520, %v497
  %522 = vst.msk [vmem:[%s7 + $0x4] sm:$0xf] %vm520, %v499
  %523 = vst.msk [vmem:[%s7 + $0x8] sm:$0xf] %vm520, %v501
  %524 = vst.msk [vmem:[%s7 + $0xc] sm:$0xf] %vm520, %v503
  %525 = vst.msk [vmem:[%s7 + $0x10] sm:$0xf] %vm520, %v505
  %526 = vst.msk [vmem:[%s7 + $0x14] sm:$0xf] %vm520, %v507
  %527 = vst.msk [vmem:[%s7 + $0x18] sm:$0xf] %vm520, %v509
  %528 = vst.msk [vmem:[%s7 + $0x1c] sm:$0xf] %vm520, %v511
  // Predicated region
  $region22: #{triangle_block.13} parent=0 // pred_check
    _
  $region23: #{triangle_block.13} parent=0 // pred_check_branch
    %530 = sbr.rel (0) target = $region25
  $region24: #{triangle_block.13} parent=0 // pred_region
    _
  $region25: #{triangle_block.13} parent=0 // pred_fallthru
    _
  // Predicated region
  $region26: #{triangle_block.13} parent=0 // pred_check
    _
  $region27: #{triangle_block.13} parent=0 // pred_check_branch
    %532 = sbr.rel (0) target = $region29
  $region28: #{triangle_block.13} parent=0 // pred_region
    _
  $region29: #{triangle_block.13} parent=0 // pred_fallthru
    _
  // Predicated region
  $region30: #{triangle_block.13} parent=0 // pred_check
    _
  $region31: #{triangle_block.13} parent=0 // pred_check_branch
    %534 = sbr.rel (0) target = $region33
  $region32: #{triangle_block.13} parent=0 // pred_region
    _
  $region33: #{triangle_block.13} parent=0 // pred_fallthru
    _
  // Predicated region
  $region34: #{triangle_block.13} parent=0 // pred_check
    _
  $region35: #{triangle_block.13} parent=0 // pred_check_branch
    %536 = sbr.rel (0) target = $region37
  $region36: #{triangle_block.13} parent=0 // pred_region
    _
  $region37: #{triangle_block.13} parent=0 // pred_fallthru
    _
  // Predicated region
  $region38: #{triangle_block.13} parent=0 // pred_check
    _
  $region39: #{triangle_block.13} parent=0 // pred_check_branch
    %538 = sbr.rel (0) target = $region41
  $region40: #{triangle_block.13} parent=0 // pred_region
    _
  $region41: #{triangle_block.13} parent=0 // pred_fallthru
    _
  // Predicated region
  $region42: #{triangle_block.13} parent=0 // pred_check
    _
  $region43: #{triangle_block.13} parent=0 // pred_check_branch
    %540 = sbr.rel (0) target = $region45
  $region44: #{triangle_block.13} parent=0 // pred_region
    _
  $region45: #{triangle_block.13} parent=0 // pred_fallthru
    _

// kernel: triangle_block.21
$region0: #{triangle_block.21}
  #allocation0 [shape = 'u32[]', space=smem, size = 0x4, offset = 0x4, fixed_abs, tag = 'smem constant byte address 0x4 - core index']
  #allocation1 [shape = 'u32[144,128]{1,0:T(1,128)}', space=vmem, size = 0x12000, scoped, tag = 'internal scratch']
  %s0 = inlined_call_operand.vmem [shape: bf16[4,64,4], index: 0, kind: input, shape index: {}]
  %s1 = inlined_call_operand.vmem [shape: f32[64,16], index: 1, kind: input, shape index: {}]
  %s2 = inlined_call_operand.vmem [shape: bf16[4,4,16], index: 2, kind: input, shape index: {}]
  %s3 = inlined_call_operand.vmem [shape: f32[64,16], index: 3, kind: output, shape index: {}]
  %s4 = sld [smem:[#allocation0]]
  $region22: #{triangle_block.21} parent=0
    _
  %s6 = ssub.s32 1, %s4
  %s7 = scalar_select 0, %s6, %s4
  // Predicated region
  $region2: #{triangle_block.21} parent=0 // pred_check
    _
  $region3: #{triangle_block.21} parent=0 // pred_check_branch
    %9 = sbr.rel (0) target = $region5
  $region4: #{triangle_block.21} parent=0 // pred_region
    _
  $region5: #{triangle_block.21} parent=0 // pred_fallthru
    _
  // Predicated region
  $region6: #{triangle_block.21} parent=0 // pred_check
    _
  $region7: #{triangle_block.21} parent=0 // pred_check_branch
    %11 = sbr.rel (0) target = $region9
  $region8: #{triangle_block.21} parent=0 // pred_region
    _
  $region9: #{triangle_block.21} parent=0 // pred_fallthru
    _
  // Predicated region
  $region10: #{triangle_block.21} parent=0 // pred_check
    _
  $region11: #{triangle_block.21} parent=0 // pred_check_branch
    %13 = sbr.rel (0) target = $region13
  $region12: #{triangle_block.21} parent=0 // pred_region
    _
  $region13: #{triangle_block.21} parent=0 // pred_fallthru
    _
  %v15 = vld [vmem:[%s0] sm:$0xf]
  %v16 = vld [vmem:[%s0 + $0x4] sm:$0xf]
  %v17 = vld [vmem:[%s0 + $0x8] sm:$0xf]
  %v18 = vld [vmem:[%s0 + $0xc] sm:$0xf]
  %v19 = vld [vmem:[%s0 + $0x10] sm:$0xf]
  %v20 = vld [vmem:[%s0 + $0x14] sm:$0xf]
  %v21 = vld [vmem:[%s0 + $0x18] sm:$0xf]
  %v22 = vld [vmem:[%s0 + $0x1c] sm:$0xf]
  %v23 = vld [vmem:[%s2] sm:$0x3]
  %s24 = scalar_lea.vmem %s0, 32
  %v25 = vld [vmem:[%s24] sm:$0xf]
  %v26 = vld [vmem:[%s24 + $0x4] sm:$0xf]
  %v27 = vld [vmem:[%s24 + $0x8] sm:$0xf]
  %v28 = vld [vmem:[%s24 + $0xc] sm:$0xf]
  %v29 = vld [vmem:[%s24 + $0x10] sm:$0xf]
  %v30 = vld [vmem:[%s24 + $0x14] sm:$0xf]
  %v31 = vld [vmem:[%s24 + $0x18] sm:$0xf]
  %v32 = vld [vmem:[%s24 + $0x1c] sm:$0xf]
  %s33 = scalar_lea.vmem %s2, 2
  %v34 = vld [vmem:[%s33] sm:$0x3]
  %v43 = vunpack.c.l.b16 %v25
  %v44 = vunpack.c.l.b16 %v26
  %v45 = vunpack.c.l.b16 %v27
  %v46 = vunpack.c.l.b16 %v28
  %v47 = vunpack.c.l.b16 %v29
  %v48 = vunpack.c.l.b16 %v30
  %v49 = vunpack.c.l.b16 %v31
  %v50 = vunpack.c.l.b16 %v32
  %v51 = vpack.c.b16 %v44, %v43
  %v52 = vpack.c.b16 %v46, %v45
  %v53 = vpack.c.b16 %v48, %v47
  %v54 = vpack.c.b16 %v50, %v49
  %vm55 = vcmask 31744
  %v57 = vsel %vm55, %v51, 0
  %v60 = vsel %vm55, %v52, 0
  %v63 = vsel %vm55, %v53, 0
  %v66 = vsel %vm55, %v54, 0
  %vm68 = vcmask 1041408
  %v70 = vsel %vm68, %v34, 0
  %72 = vmatprep.subr.bf16.mxu0 0
  %73 = vmatpush1.bf16.msra.mxu0 0
  %74 = vmatprep.subr.bf16.mxu0 0
  %75 = vmatpush1.bf16.msra.mxu0 0
  %76 = vmatprep.subr.bf16.mxu0 0
  %77 = vmatpush1.bf16.msra.mxu0 0
  %78 = vmatprep.subr.bf16.mxu0 0
  %79 = vmatpush1.bf16.msra.mxu0 0
  %80 = vmatprep.subr.bf16.mxu0 0
  %81 = vmatpush1.bf16.msra.mxu0 0
  %82 = vmatprep.subr.bf16.mxu0 0
  %83 = vmatpush1.bf16.msra.mxu0 0
  %84 = vmatprep.subr.bf16.mxu0 0
  %85 = vmatpush1.bf16.msra.mxu0 0
  %86 = vmatprep.subr.bf16.mxu0 0
  %87 = vmatpush1.bf16.msra.mxu0 %v70
  %88 = vmatprep.subr.bf16.mxu0 0
  %89 = vmatpush2.bf16.msra.mxu0 0
  %90 = vmatprep.subr.bf16.mxu0 0
  %91 = vmatpush2.bf16.msra.mxu0 0
  %92 = vmatprep.subr.bf16.mxu0 0
  %93 = vmatpush2.bf16.msra.mxu0 0
  %94 = vmatprep.subr.bf16.mxu0 0
  %95 = vmatpush2.bf16.msra.mxu0 0
  %96 = vmatprep.subr.bf16.mxu0 0
  %97 = vmatpush2.bf16.msra.mxu0 0
  %98 = vmatprep.subr.bf16.mxu0 0
  %99 = vmatpush2.bf16.msra.mxu0 0
  %100 = vmatprep.subr.bf16.mxu0 0
  %101 = vmatpush2.bf16.msra.mxu0 0
  %102 = vmatprep.subr.bf16.mxu0 0
  %103 = vmatpush2.bf16.msra.mxu0 0
  %104 = vmatprep.mubr.bf16.mxu0 0
  %105 = vmatmul.mubr.bf16.gmra.mxu0 %v57
  %v106 = vpop.f32.mrf.mxu0
  %v107 = vadd.f32 0.0, %v106
  %v108 = vpop.f32.mrf.mxu0
  %v109 = vpop.f32.mrf.mxu0
  %v110 = vadd.f32 0.0, %v109
  %v111 = vpop.f32.mrf.mxu0
  %112 = vmatprep.mubr.bf16.mxu0 0
  %113 = vmatmul.mubr.bf16.gmra.mxu0 %v60
  %v114 = vpop.f32.mrf.mxu0
  %v115 = vadd.f32 0.0, %v114
  %v116 = vpop.f32.mrf.mxu0
  %v117 = vpop.f32.mrf.mxu0
  %v118 = vadd.f32 0.0, %v117
  %v119 = vpop.f32.mrf.mxu0
  %120 = vmatprep.mubr.bf16.mxu0 0
  %121 = vmatmul.mubr.bf16.gmra.mxu0 %v63
  %v122 = vpop.f32.mrf.mxu0
  %v123 = vadd.f32 0.0, %v122
  %v124 = vpop.f32.mrf.mxu0
  %v125 = vpop.f32.mrf.mxu0
  %v126 = vadd.f32 0.0, %v125
  %v127 = vpop.f32.mrf.mxu0
  %128 = vmatprep.mubr.bf16.mxu0 0
  %129 = vmatmul.mubr.bf16.gmra.mxu0 %v66
  %v130 = vpop.f32.mrf.mxu0
  %v131 = vadd.f32 0.0, %v130
  %v132 = vpop.f32.mrf.mxu0
  %v133 = vpop.f32.mrf.mxu0
  %v134 = vadd.f32 0.0, %v133
  %v135 = vpop.f32.mrf.mxu0
  %136 = vdwg.mxu0
  %v145 = vunpack.c.l.b16 %v15
  %v146 = vunpack.c.l.b16 %v16
  %v147 = vunpack.c.l.b16 %v17
  %v148 = vunpack.c.l.b16 %v18
  %v149 = vunpack.c.l.b16 %v19
  %v150 = vunpack.c.l.b16 %v20
  %v151 = vunpack.c.l.b16 %v21
  %v152 = vunpack.c.l.b16 %v22
  %v153 = vpack.c.b16 %v146, %v145
  %v154 = vpack.c.b16 %v148, %v147
  %v155 = vpack.c.b16 %v150, %v149
  %v156 = vpack.c.b16 %v152, %v151
  %v158 = vsel %vm55, %v153, 0
  %v161 = vsel %vm55, %v154, 0
  %v164 = vsel %vm55, %v155, 0
  %v167 = vsel %vm55, %v156, 0
  %v170 = vsel %vm68, %v23, 0
  %172 = vmatprep.subr.bf16.mxu0 0
  %173 = vmatpush1.bf16.msra.mxu0 0
  %174 = vmatprep.subr.bf16.mxu0 0
  %175 = vmatpush1.bf16.msra.mxu0 0
  %176 = vmatprep.subr.bf16.mxu0 0
  %177 = vmatpush1.bf16.msra.mxu0 0
  %178 = vmatprep.subr.bf16.mxu0 0
  %179 = vmatpush1.bf16.msra.mxu0 0
  %180 = vmatprep.subr.bf16.mxu0 0
  %181 = vmatpush1.bf16.msra.mxu0 0
  %182 = vmatprep.subr.bf16.mxu0 0
  %183 = vmatpush1.bf16.msra.mxu0 0
  %184 = vmatprep.subr.bf16.mxu0 0
  %185 = vmatpush1.bf16.msra.mxu0 0
  %186 = vmatprep.subr.bf16.mxu0 0
  %187 = vmatpush1.bf16.msra.mxu0 %v170
  %188 = vmatprep.subr.bf16.mxu0 0
  %189 = vmatpush2.bf16.msra.mxu0 0
  %190 = vmatprep.subr.bf16.mxu0 0
  %191 = vmatpush2.bf16.msra.mxu0 0
  %192 = vmatprep.subr.bf16.mxu0 0
  %193 = vmatpush2.bf16.msra.mxu0 0
  %194 = vmatprep.subr.bf16.mxu0 0
  %195 = vmatpush2.bf16.msra.mxu0 0
  %196 = vmatprep.subr.bf16.mxu0 0
  %197 = vmatpush2.bf16.msra.mxu0 0
  %198 = vmatprep.subr.bf16.mxu0 0
  %199 = vmatpush2.bf16.msra.mxu0 0
  %200 = vmatprep.subr.bf16.mxu0 0
  %201 = vmatpush2.bf16.msra.mxu0 0
  %202 = vmatprep.subr.bf16.mxu0 0
  %203 = vmatpush2.bf16.msra.mxu0 0
  %204 = vmatprep.mubr.bf16.mxu0 0
  %205 = vmatmul.mubr.bf16.gmra.mxu0 %v158
  %v206 = vpop.f32.mrf.mxu0
  %v207 = vadd.f32 %v107, %v206
  %v208 = vpop.f32.mrf.mxu0
  %v209 = vpop.f32.mrf.mxu0
  %v210 = vadd.f32 %v110, %v209
  %v211 = vpop.f32.mrf.mxu0
  %212 = vmatprep.mubr.bf16.mxu0 0
  %213 = vmatmul.mubr.bf16.gmra.mxu0 %v161
  %v214 = vpop.f32.mrf.mxu0
  %v215 = vadd.f32 %v115, %v214
  %v216 = vpop.f32.mrf.mxu0
  %v217 = vpop.f32.mrf.mxu0
  %v218 = vadd.f32 %v118, %v217
  %v219 = vpop.f32.mrf.mxu0
  %220 = vmatprep.mubr.bf16.mxu0 0
  %221 = vmatmul.mubr.bf16.gmra.mxu0 %v164
  %v222 = vpop.f32.mrf.mxu0
  %v223 = vadd.f32 %v123, %v222
  %v224 = vpop.f32.mrf.mxu0
  %v225 = vpop.f32.mrf.mxu0
  %v226 = vadd.f32 %v126, %v225
  %v227 = vpop.f32.mrf.mxu0
  %228 = vmatprep.mubr.bf16.mxu0 0
  %229 = vmatmul.mubr.bf16.gmra.mxu0 %v167
  %v230 = vpop.f32.mrf.mxu0
  %v231 = vadd.f32 %v131, %v230
  %v232 = vpop.f32.mrf.mxu0
  %v233 = vpop.f32.mrf.mxu0
  %v234 = vadd.f32 %v134, %v233
  %v235 = vpop.f32.mrf.mxu0
  %236 = vdwg.mxu0
  %s237 = scalar_lea.vmem %s0, 64
  %v238 = vld [vmem:[%s237] sm:$0xf]
  %v239 = vld [vmem:[%s237 + $0x4] sm:$0xf]
  %v240 = vld [vmem:[%s237 + $0x8] sm:$0xf]
  %v241 = vld [vmem:[%s237 + $0xc] sm:$0xf]
  %v242 = vld [vmem:[%s237 + $0x10] sm:$0xf]
  %v243 = vld [vmem:[%s237 + $0x14] sm:$0xf]
  %v244 = vld [vmem:[%s237 + $0x18] sm:$0xf]
  %v245 = vld [vmem:[%s237 + $0x1c] sm:$0xf]
  %s246 = scalar_lea.vmem %s2, 4
  %v247 = vld [vmem:[%s246] sm:$0x3]
  %v256 = vunpack.c.l.b16 %v238
  %v257 = vunpack.c.l.b16 %v239
  %v258 = vunpack.c.l.b16 %v240
  %v259 = vunpack.c.l.b16 %v241
  %v260 = vunpack.c.l.b16 %v242
  %v261 = vunpack.c.l.b16 %v243
  %v262 = vunpack.c.l.b16 %v244
  %v263 = vunpack.c.l.b16 %v245
  %v264 = vpack.c.b16 %v257, %v256
  %v265 = vpack.c.b16 %v259, %v258
  %v266 = vpack.c.b16 %v261, %v260
  %v267 = vpack.c.b16 %v263, %v262
  %v269 = vsel %vm55, %v264, 0
  %v272 = vsel %vm55, %v265, 0
  %v275 = vsel %vm55, %v266, 0
  %v278 = vsel %vm55, %v267, 0
  %v281 = vsel %vm68, %v247, 0
  %283 = vmatprep.subr.bf16.mxu0 0
  %284 = vmatpush1.bf16.msra.mxu0 0
  %285 = vmatprep.subr.bf16.mxu0 0
  %286 = vmatpush1.bf16.msra.mxu0 0
  %287 = vmatprep.subr.bf16.mxu0 0
  %288 = vmatpush1.bf16.msra.mxu0 0
  %289 = vmatprep.subr.bf16.mxu0 0
  %290 = vmatpush1.bf16.msra.mxu0 0
  %291 = vmatprep.subr.bf16.mxu0 0
  %292 = vmatpush1.bf16.msra.mxu0 0
  %293 = vmatprep.subr.bf16.mxu0 0
  %294 = vmatpush1.bf16.msra.mxu0 0
  %295 = vmatprep.subr.bf16.mxu0 0
  %296 = vmatpush1.bf16.msra.mxu0 0
  %297 = vmatprep.subr.bf16.mxu0 0
  %298 = vmatpush1.bf16.msra.mxu0 %v281
  %299 = vmatprep.subr.bf16.mxu0 0
  %300 = vmatpush2.bf16.msra.mxu0 0
  %301 = vmatprep.subr.bf16.mxu0 0
  %302 = vmatpush2.bf16.msra.mxu0 0
  %303 = vmatprep.subr.bf16.mxu0 0
  %304 = vmatpush2.bf16.msra.mxu0 0
  %305 = vmatprep.subr.bf16.mxu0 0
  %306 = vmatpush2.bf16.msra.mxu0 0
  %307 = vmatprep.subr.bf16.mxu0 0
  %308 = vmatpush2.bf16.msra.mxu0 0
  %309 = vmatprep.subr.bf16.mxu0 0
  %310 = vmatpush2.bf16.msra.mxu0 0
  %311 = vmatprep.subr.bf16.mxu0 0
  %312 = vmatpush2.bf16.msra.mxu0 0
  %313 = vmatprep.subr.bf16.mxu0 0
  %314 = vmatpush2.bf16.msra.mxu0 0
  %315 = vmatprep.mubr.bf16.mxu0 0
  %316 = vmatmul.mubr.bf16.gmra.mxu0 %v269
  %v317 = vpop.f32.mrf.mxu0
  %v318 = vadd.f32 0.0, %v317
  %v319 = vpop.f32.mrf.mxu0
  %v320 = vpop.f32.mrf.mxu0
  %v321 = vadd.f32 0.0, %v320
  %v322 = vpop.f32.mrf.mxu0
  %323 = vmatprep.mubr.bf16.mxu0 0
  %324 = vmatmul.mubr.bf16.gmra.mxu0 %v272
  %v325 = vpop.f32.mrf.mxu0
  %v326 = vadd.f32 0.0, %v325
  %v327 = vpop.f32.mrf.mxu0
  %v328 = vpop.f32.mrf.mxu0
  %v329 = vadd.f32 0.0, %v328
  %v330 = vpop.f32.mrf.mxu0
  %331 = vmatprep.mubr.bf16.mxu0 0
  %332 = vmatmul.mubr.bf16.gmra.mxu0 %v275
  %v333 = vpop.f32.mrf.mxu0
  %v334 = vadd.f32 0.0, %v333
  %v335 = vpop.f32.mrf.mxu0
  %v336 = vpop.f32.mrf.mxu0
  %v337 = vadd.f32 0.0, %v336
  %v338 = vpop.f32.mrf.mxu0
  %339 = vmatprep.mubr.bf16.mxu0 0
  %340 = vmatmul.mubr.bf16.gmra.mxu0 %v278
  %v341 = vpop.f32.mrf.mxu0
  %v342 = vadd.f32 0.0, %v341
  %v343 = vpop.f32.mrf.mxu0
  %v344 = vpop.f32.mrf.mxu0
  %v345 = vadd.f32 0.0, %v344
  %v346 = vpop.f32.mrf.mxu0
  %347 = vdwg.mxu0
  %v348 = vadd.f32 %v207, %v318
  %v349 = vadd.f32 %v210, %v321
  %v350 = vadd.f32 %v215, %v326
  %v351 = vadd.f32 %v218, %v329
  %v352 = vadd.f32 %v223, %v334
  %v353 = vadd.f32 %v226, %v337
  %v354 = vadd.f32 %v231, %v342
  %v355 = vadd.f32 %v234, %v345
  %s356 = scalar_lea.vmem %s0, 96
  %v357 = vld [vmem:[%s356] sm:$0xf]
  %v358 = vld [vmem:[%s356 + $0x4] sm:$0xf]
  %v359 = vld [vmem:[%s356 + $0x8] sm:$0xf]
  %v360 = vld [vmem:[%s356 + $0xc] sm:$0xf]
  %v361 = vld [vmem:[%s356 + $0x10] sm:$0xf]
  %v362 = vld [vmem:[%s356 + $0x14] sm:$0xf]
  %v363 = vld [vmem:[%s356 + $0x18] sm:$0xf]
  %v364 = vld [vmem:[%s356 + $0x1c] sm:$0xf]
  %s365 = scalar_lea.vmem %s2, 6
  %v366 = vld [vmem:[%s365] sm:$0x3]
  %v375 = vunpack.c.l.b16 %v357
  %v376 = vunpack.c.l.b16 %v358
  %v377 = vunpack.c.l.b16 %v359
  %v378 = vunpack.c.l.b16 %v360
  %v379 = vunpack.c.l.b16 %v361
  %v380 = vunpack.c.l.b16 %v362
  %v381 = vunpack.c.l.b16 %v363
  %v382 = vunpack.c.l.b16 %v364
  %v383 = vpack.c.b16 %v376, %v375
  %v384 = vpack.c.b16 %v378, %v377
  %v385 = vpack.c.b16 %v380, %v379
  %v386 = vpack.c.b16 %v382, %v381
  %v388 = vsel %vm55, %v383, 0
  %v391 = vsel %vm55, %v384, 0
  %v394 = vsel %vm55, %v385, 0
  %v397 = vsel %vm55, %v386, 0
  %v400 = vsel %vm68, %v366, 0
  %402 = vmatprep.subr.bf16.mxu0 0
  %403 = vmatpush1.bf16.msra.mxu0 0
  %404 = vmatprep.subr.bf16.mxu0 0
  %405 = vmatpush1.bf16.msra.mxu0 0
  %406 = vmatprep.subr.bf16.mxu0 0
  %407 = vmatpush1.bf16.msra.mxu0 0
  %408 = vmatprep.subr.bf16.mxu0 0
  %409 = vmatpush1.bf16.msra.mxu0 0
  %410 = vmatprep.subr.bf16.mxu0 0
  %411 = vmatpush1.bf16.msra.mxu0 0
  %412 = vmatprep.subr.bf16.mxu0 0
  %413 = vmatpush1.bf16.msra.mxu0 0
  %414 = vmatprep.subr.bf16.mxu0 0
  %415 = vmatpush1.bf16.msra.mxu0 0
  %416 = vmatprep.subr.bf16.mxu0 0
  %417 = vmatpush1.bf16.msra.mxu0 %v400
  %418 = vmatprep.subr.bf16.mxu0 0
  %419 = vmatpush2.bf16.msra.mxu0 0
  %420 = vmatprep.subr.bf16.mxu0 0
  %421 = vmatpush2.bf16.msra.mxu0 0
  %422 = vmatprep.subr.bf16.mxu0 0
  %423 = vmatpush2.bf16.msra.mxu0 0
  %424 = vmatprep.subr.bf16.mxu0 0
  %425 = vmatpush2.bf16.msra.mxu0 0
  %426 = vmatprep.subr.bf16.mxu0 0
  %427 = vmatpush2.bf16.msra.mxu0 0
  %428 = vmatprep.subr.bf16.mxu0 0
  %429 = vmatpush2.bf16.msra.mxu0 0
  %430 = vmatprep.subr.bf16.mxu0 0
  %431 = vmatpush2.bf16.msra.mxu0 0
  %432 = vmatprep.subr.bf16.mxu0 0
  %433 = vmatpush2.bf16.msra.mxu0 0
  %434 = vmatprep.mubr.bf16.mxu0 0
  %435 = vmatmul.mubr.bf16.gmra.mxu0 %v388
  %v436 = vpop.f32.mrf.mxu0
  %v437 = vadd.f32 0.0, %v436
  %v438 = vpop.f32.mrf.mxu0
  %v439 = vpop.f32.mrf.mxu0
  %v440 = vadd.f32 0.0, %v439
  %v441 = vpop.f32.mrf.mxu0
  %442 = vmatprep.mubr.bf16.mxu0 0
  %443 = vmatmul.mubr.bf16.gmra.mxu0 %v391
  %v444 = vpop.f32.mrf.mxu0
  %v445 = vadd.f32 0.0, %v444
  %v446 = vpop.f32.mrf.mxu0
  %v447 = vpop.f32.mrf.mxu0
  %v448 = vadd.f32 0.0, %v447
  %v449 = vpop.f32.mrf.mxu0
  %450 = vmatprep.mubr.bf16.mxu0 0
  %451 = vmatmul.mubr.bf16.gmra.mxu0 %v394
  %v452 = vpop.f32.mrf.mxu0
  %v453 = vadd.f32 0.0, %v452
  %v454 = vpop.f32.mrf.mxu0
  %v455 = vpop.f32.mrf.mxu0
  %v456 = vadd.f32 0.0, %v455
  %v457 = vpop.f32.mrf.mxu0
  %458 = vmatprep.mubr.bf16.mxu0 0
  %459 = vmatmul.mubr.bf16.gmra.mxu0 %v397
  %v460 = vpop.f32.mrf.mxu0
  %v461 = vadd.f32 0.0, %v460
  %v462 = vpop.f32.mrf.mxu0
  %v463 = vpop.f32.mrf.mxu0
  %v464 = vadd.f32 0.0, %v463
  %v465 = vpop.f32.mrf.mxu0
  %466 = vdwg.mxu0
  %v467 = vadd.f32 %v348, %v437
  %v468 = vadd.f32 %v349, %v440
  %v469 = vadd.f32 %v350, %v445
  %v470 = vadd.f32 %v351, %v448
  %v471 = vadd.f32 %v352, %v453
  %v472 = vadd.f32 %v353, %v456
  %v473 = vadd.f32 %v354, %v461
  %v474 = vadd.f32 %v355, %v464
  %v475 = vld [vmem:[%s1] sm:$0xff]
  %v476 = vld [vmem:[%s1 + $0x8] sm:$0xff]
  %v477 = vld [vmem:[%s1 + $0x10] sm:$0xff]
  %v478 = vld [vmem:[%s1 + $0x18] sm:$0xff]
  %v479 = vld [vmem:[%s1 + $0x20] sm:$0xff]
  %v480 = vld [vmem:[%s1 + $0x28] sm:$0xff]
  %v481 = vld [vmem:[%s1 + $0x30] sm:$0xff]
  %v482 = vld [vmem:[%s1 + $0x38] sm:$0xff]
  %v483 = vadd.f32 %v475, %v467
  %v484 = vadd.f32 %v476, %v468
  %v485 = vadd.f32 %v477, %v469
  %v486 = vadd.f32 %v478, %v470
  %v487 = vadd.f32 %v479, %v471
  %v488 = vadd.f32 %v480, %v472
  %v489 = vadd.f32 %v481, %v473
  %v490 = vadd.f32 %v482, %v474
  %vm491 = vcmask 130048
  %492 = vst.msk [vmem:[%s3] sm:$0xff] %vm491, %v483
  %493 = vst.msk [vmem:[%s3 + $0x8] sm:$0xff] %vm491, %v484
  %494 = vst.msk [vmem:[%s3 + $0x10] sm:$0xff] %vm491, %v485
  %495 = vst.msk [vmem:[%s3 + $0x18] sm:$0xff] %vm491, %v486
  %496 = vst.msk [vmem:[%s3 + $0x20] sm:$0xff] %vm491, %v487
  %497 = vst.msk [vmem:[%s3 + $0x28] sm:$0xff] %vm491, %v488
  %498 = vst.msk [vmem:[%s3 + $0x30] sm:$0xff] %vm491, %v489
  %499 = vst.msk [vmem:[%s3 + $0x38] sm:$0xff] %vm491, %v490
  // Predicated region
  $region14: #{triangle_block.21} parent=0 // pred_check
    _
  $region15: #{triangle_block.21} parent=0 // pred_check_branch
    %501 = sbr.rel (0) target = $region17
  $region16: #{triangle_block.21} parent=0 // pred_region
    _
  $region17: #{triangle_block.21} parent=0 // pred_fallthru
    _
  // Predicated region
  $region18: #{triangle_block.21} parent=0 // pred_check
    _
  $region19: #{triangle_block.21} parent=0 // pred_check_branch
    %503 = sbr.rel (0) target = $region21
  $region20: #{triangle_block.21} parent=0 // pred_region
    _
  $region21: #{triangle_block.21} parent=0 // pred_fallthru
    _

// kernel: triangle_block.15
$region0: #{triangle_block.15}
  #allocation0 [shape = 'u32[]', space=smem, size = 0x4, offset = 0x4, fixed_abs, tag = 'smem constant byte address 0x4 - core index']
  #allocation1 [shape = 'u32[144,128]{1,0:T(1,128)}', space=vmem, size = 0x12000, scoped, tag = 'internal scratch']
  %s0 = inlined_call_operand.vmem [shape: bf16[16,8,8], index: 0, kind: input, shape index: {}]
  %s1 = inlined_call_operand.vmem [shape: bf16[8,8,16], index: 1, kind: input, shape index: {}]
  %s2 = inlined_call_operand.vmem [shape: f32[8,8,16], index: 2, kind: input, shape index: {}]
  %s3 = inlined_call_operand.vmem [shape: f32[1,16], index: 3, kind: input, shape index: {}]
  %s4 = inlined_call_operand.vmem [shape: f32[1,16], index: 4, kind: input, shape index: {}]
  %s5 = inlined_call_operand.vmem [shape: bf16[16,16], index: 5, kind: input, shape index: {}]
  %s6 = inlined_call_operand.vmem [shape: f32[8,8,16], index: 6, kind: output, shape index: {}]
  %s7 = sld [smem:[#allocation0]]
  $region34: #{triangle_block.15} parent=0
    _
  %s9 = ssub.s32 1, %s7
  %s10 = scalar_select 0, %s9, %s7
  // Predicated region
  $region2: #{triangle_block.15} parent=0 // pred_check
    _
  $region3: #{triangle_block.15} parent=0 // pred_check_branch
    %12 = sbr.rel (0) target = $region5
  $region4: #{triangle_block.15} parent=0 // pred_region
    _
  $region5: #{triangle_block.15} parent=0 // pred_fallthru
    _
  // Predicated region
  $region6: #{triangle_block.15} parent=0 // pred_check
    _
  $region7: #{triangle_block.15} parent=0 // pred_check_branch
    %14 = sbr.rel (0) target = $region9
  $region8: #{triangle_block.15} parent=0 // pred_region
    _
  $region9: #{triangle_block.15} parent=0 // pred_fallthru
    _
  // Predicated region
  $region10: #{triangle_block.15} parent=0 // pred_check
    _
  $region11: #{triangle_block.15} parent=0 // pred_check_branch
    %16 = sbr.rel (0) target = $region13
  $region12: #{triangle_block.15} parent=0 // pred_region
    _
  $region13: #{triangle_block.15} parent=0 // pred_fallthru
    _
  // Predicated region
  $region14: #{triangle_block.15} parent=0 // pred_check
    _
  $region15: #{triangle_block.15} parent=0 // pred_check_branch
    %18 = sbr.rel (0) target = $region17
  $region16: #{triangle_block.15} parent=0 // pred_region
    _
  $region17: #{triangle_block.15} parent=0 // pred_fallthru
    _
  // Predicated region
  $region18: #{triangle_block.15} parent=0 // pred_check
    _
  $region19: #{triangle_block.15} parent=0 // pred_check_branch
    %20 = sbr.rel (0) target = $region21
  $region20: #{triangle_block.15} parent=0 // pred_region
    _
  $region21: #{triangle_block.15} parent=0 // pred_fallthru
    _
  // Predicated region
  $region22: #{triangle_block.15} parent=0 // pred_check
    _
  $region23: #{triangle_block.15} parent=0 // pred_check_branch
    %22 = sbr.rel (0) target = $region25
  $region24: #{triangle_block.15} parent=0 // pred_region
    _
  $region25: #{triangle_block.15} parent=0 // pred_fallthru
    _
  %v24 = vld [vmem:[%s0] sm:$0x1]
  %v25 = vld [vmem:[%s0 + $0x4] sm:$0x1]
  %v26 = vld [vmem:[%s0 + $0x8] sm:$0x1]
  %v27 = vld [vmem:[%s0 + $0xc] sm:$0x1]
  %v28 = vld [vmem:[%s0 + $0x10] sm:$0x1]
  %v29 = vld [vmem:[%s0 + $0x14] sm:$0x1]
  %v30 = vld [vmem:[%s0 + $0x18] sm:$0x1]
  %v31 = vld [vmem:[%s0 + $0x1c] sm:$0x1]
  %v32 = vld [vmem:[%s0 + $0x20] sm:$0x1]
  %v33 = vld [vmem:[%s0 + $0x24] sm:$0x1]
  %v34 = vld [vmem:[%s0 + $0x28] sm:$0x1]
  %v35 = vld [vmem:[%s0 + $0x2c] sm:$0x1]
  %v36 = vld [vmem:[%s0 + $0x30] sm:$0x1]
  %v37 = vld [vmem:[%s0 + $0x34] sm:$0x1]
  %v38 = vld [vmem:[%s0 + $0x38] sm:$0x1]
  %v39 = vld [vmem:[%s0 + $0x3c] sm:$0x1]
  %v56 = vunpack.c.l.b16 %v24
  %v57 = vunpack.c.l.b16 %v25
  %v58 = vunpack.c.l.b16 %v26
  %v59 = vunpack.c.l.b16 %v27
  %v60 = vunpack.c.l.b16 %v28
  %v61 = vunpack.c.l.b16 %v29
  %v62 = vunpack.c.l.b16 %v30
  %v63 = vunpack.c.l.b16 %v31
  %v64 = vunpack.c.l.b16 %v32
  %v65 = vunpack.c.l.b16 %v33
  %v66 = vunpack.c.l.b16 %v34
  %v67 = vunpack.c.l.b16 %v35
  %v68 = vunpack.c.l.b16 %v36
  %v69 = vunpack.c.l.b16 %v37
  %v70 = vunpack.c.l.b16 %v38
  %v71 = vunpack.c.l.b16 %v39
  %v72 = vpack.c.b16 %v56, %v56
  %v73 = vpack.c.b16 %v57, %v57
  %v74 = vpack.c.b16 %v58, %v58
  %v75 = vpack.c.b16 %v59, %v59
  %v76 = vpack.c.b16 %v60, %v60
  %v77 = vpack.c.b16 %v61, %v61
  %v78 = vpack.c.b16 %v62, %v62
  %v79 = vpack.c.b16 %v63, %v63
  %v80 = vpack.c.b16 %v64, %v64
  %v81 = vpack.c.b16 %v65, %v65
  %v82 = vpack.c.b16 %v66, %v66
  %v83 = vpack.c.b16 %v67, %v67
  %v84 = vpack.c.b16 %v68, %v68
  %v85 = vpack.c.b16 %v69, %v69
  %v86 = vpack.c.b16 %v70, %v70
  %v87 = vpack.c.b16 %v71, %v71
  %v88 = vunpack.c.l.b16 %v72
  %v89 = vunpack.c.l.b16 %v73
  %v90 = vunpack.c.l.b16 %v74
  %v91 = vunpack.c.l.b16 %v75
  %v92 = vunpack.c.l.b16 %v76
  %v93 = vunpack.c.l.b16 %v77
  %v94 = vunpack.c.l.b16 %v78
  %v95 = vunpack.c.l.b16 %v79
  %v96 = vunpack.c.l.b16 %v80
  %v97 = vunpack.c.l.b16 %v81
  %v98 = vunpack.c.l.b16 %v82
  %v99 = vunpack.c.l.b16 %v83
  %v100 = vunpack.c.l.b16 %v84
  %v101 = vunpack.c.l.b16 %v85
  %v102 = vunpack.c.l.b16 %v86
  %v103 = vunpack.c.l.b16 %v87
  %v104 = vrot.slane %v89, 7
  %vm105 = vcmask 1041409
  %v106 = vsel %vm105, %v104, %v88
  %v107 = vrot.slane %v90, 6
  %vm108 = vcmask 1042434
  %v109 = vsel %vm108, %v107, %v106
  %v110 = vrot.slane %v91, 5
  %vm111 = vcmask 1043459
  %v112 = vsel %vm111, %v110, %v109
  %v113 = vrot.slane %v92, 4
  %vm114 = vcmask 1044484
  %v115 = vsel %vm114, %v113, %v112
  %v116 = vrot.slane %v93, 3
  %vm117 = vcmask 1045509
  %v118 = vsel %vm117, %v116, %v115
  %v119 = vrot.slane %v94, 2
  %vm120 = vcmask 1046534
  %v121 = vsel %vm120, %v119, %v118
  %v122 = vrot.slane %v95, 1
  %vm123 = vcmask 1047559
  %v124 = vsel %vm123, %v122, %v121
  %v125 = vrot.slane %v97, 7
  %v126 = vsel %vm105, %v125, %v96
  %v127 = vrot.slane %v98, 6
  %v128 = vsel %vm108, %v127, %v126
  %v129 = vrot.slane %v99, 5
  %v130 = vsel %vm111, %v129, %v128
  %v131 = vrot.slane %v100, 4
  %v132 = vsel %vm114, %v131, %v130
  %v133 = vrot.slane %v101, 3
  %v134 = vsel %vm117, %v133, %v132
  %v135 = vrot.slane %v102, 2
  %v136 = vsel %vm120, %v135, %v134
  %v137 = vrot.slane %v103, 1
  %v138 = vsel %vm123, %v137, %v136
  %v139 = vpack.c.b16 %v138, %v124
  %141 = vxpose.xlu0.c.b16.start [1/8] %v139, 128
  %142 = vxpose.xlu0.c.b16.cont [2/8] 0, 128
  %143 = vxpose.xlu0.c.b16.cont [3/8] 0, 128
  %144 = vxpose.xlu0.c.b16.cont [4/8] 0, 128
  %145 = vxpose.xlu0.c.b16.cont [5/8] 0, 128
  %146 = vxpose.xlu0.c.b16.cont [6/8] 0, 128
  %147 = vxpose.xlu0.c.b16.cont [7/8] 0, 128
  %148 = vxpose.xlu0.c.b16.end [8/8] 0, 128
  %v149 = vpop.trf.xlu0
  %v150 = vpop.trf.xlu0
  %v151 = vpop.trf.xlu0
  %v152 = vpop.trf.xlu0
  %v153 = vpop.trf.xlu0
  %v154 = vpop.trf.xlu0
  %v155 = vpop.trf.xlu0
  %v156 = vpop.trf.xlu0
  %v157 = vunpack.c.l.bf16 %v149
  %v158 = vld [vmem:[%s3] sm:$0x1]
  %v159 = vld [vmem:[%s4] sm:$0x1]
  %vm160 = vcmask 130048
  %v161 = vsel %vm160, %v157, 0.0
  %162 = vadd.xlane.f32.xlu0 %v161
  %v163 = vpop.xlane.xlu0 %162
  %v164 = vrcp.pop 16.0
  %v165 = vmul.f32 %v163, %v164
  %v166 = vsub.f32 %v157, %v165
  %v167 = vmul.f32 %v166, %v166
  %v168 = vsel %vm160, %v167, 0.0
  %169 = vadd.xlane.f32.xlu0 %v168
  %v170 = vpop.xlane.xlu0 %169
  %v171 = vmul.f32 %v170, %v164
  %v172 = vadd.f32 %v171, 1e-05
  %v173 = vrsqrt.pop %v172
  %v174 = vmul.f32 %v166, %v173
  %v176 = vlaneseq
  %v177 = vshrl.u32 %v176, 7
  %v178 = vsub.s32 0, %v177
  %v179 = vrot.slane %v158, %v178
  %v181 = vmul.f32 %v174, %v179
  %v183 = vlaneseq
  %v184 = vshrl.u32 %v183, 7
  %v185 = vsub.s32 0, %v184
  %v186 = vrot.slane %v159, %v185
  %v188 = vadd.f32 %v181, %v186
  %v189 = vpack.c.bf16 %v188, %v188
  %v190 = vld [vmem:[%s5] sm:$0xf]
  %v191 = vld [vmem:[%s5 + $0x4] sm:$0xf]
  %v194 = vunpack.c.l.b16 %v190
  %v195 = vunpack.c.l.b16 %v191
  %v196 = vpack.c.b16 %v195, %v194
  %v199 = vsel %vm160, %v189, 0
  %201 = vmatprep.subr.bf16.mxu0 0
  %202 = vmatpush1.bf16.msra.mxu0 0
  %203 = vmatprep.subr.bf16.mxu0 0
  %204 = vmatpush1.bf16.msra.mxu0 0
  %205 = vmatprep.subr.bf16.mxu0 0
  %206 = vmatpush1.bf16.msra.mxu0 0
  %207 = vmatprep.subr.bf16.mxu0 0
  %208 = vmatpush1.bf16.msra.mxu0 0
  %209 = vmatprep.subr.bf16.mxu0 0
  %210 = vmatpush1.bf16.msra.mxu0 0
  %211 = vmatprep.subr.bf16.mxu0 0
  %212 = vmatpush1.bf16.msra.mxu0 0
  %213 = vmatprep.subr.bf16.mxu0 0
  %214 = vmatpush1.bf16.msra.mxu0 0
  %215 = vmatprep.subr.bf16.mxu0 0
  %216 = vmatpush1.bf16.msra.mxu0 %v196
  %217 = vmatprep.subr.bf16.mxu0 0
  %218 = vmatpush2.bf16.msra.mxu0 0
  %219 = vmatprep.subr.bf16.mxu0 0
  %220 = vmatpush2.bf16.msra.mxu0 0
  %221 = vmatprep.subr.bf16.mxu0 0
  %222 = vmatpush2.bf16.msra.mxu0 0
  %223 = vmatprep.subr.bf16.mxu0 0
  %224 = vmatpush2.bf16.msra.mxu0 0
  %225 = vmatprep.subr.bf16.mxu0 0
  %226 = vmatpush2.bf16.msra.mxu0 0
  %227 = vmatprep.subr.bf16.mxu0 0
  %228 = vmatpush2.bf16.msra.mxu0 0
  %229 = vmatprep.subr.bf16.mxu0 0
  %230 = vmatpush2.bf16.msra.mxu0 0
  %231 = vmatprep.subr.bf16.mxu0 0
  %232 = vmatpush2.bf16.msra.mxu0 0
  %233 = vmatprep.mubr.bf16.mxu0 0
  %234 = vmatmul.mubr.bf16.gmra.mxu0 %v199
  %v235 = vpop.f32.mrf.mxu0
  %v236 = vadd.f32 0.0, %v235
  %v237 = vpop.f32.mrf.mxu0
  %v238 = vpop.f32.mrf.mxu0
  %v239 = vpop.f32.mrf.mxu0
  %240 = vdwg.mxu0
  %v241 = vld [vmem:[%s2] sm:$0xff]
  %v242 = vld [vmem:[%s1] sm:$0xf]
  %v243 = vunpack.c.l.bf16 %v242
  %v244 = vmul.f32 %v236, %v243
  %v245 = vadd.f32 %v241, %v244
  %246 = vst.msk [vmem:[%s6] sm:$0xff] %vm160, %v245
  %v247 = vld [vmem:[%s0] sm:$0x1]
  %v248 = vld [vmem:[%s0 + $0x4] sm:$0x1]
  %v249 = vld [vmem:[%s0 + $0x8] sm:$0x1]
  %v250 = vld [vmem:[%s0 + $0xc] sm:$0x1]
  %v251 = vld [vmem:[%s0 + $0x10] sm:$0x1]
  %v252 = vld [vmem:[%s0 + $0x14] sm:$0x1]
  %v253 = vld [vmem:[%s0 + $0x18] sm:$0x1]
  %v254 = vld [vmem:[%s0 + $0x1c] sm:$0x1]
  %v255 = vld [vmem:[%s0 + $0x20] sm:$0x1]
  %v256 = vld [vmem:[%s0 + $0x24] sm:$0x1]
  %v257 = vld [vmem:[%s0 + $0x28] sm:$0x1]
  %v258 = vld [vmem:[%s0 + $0x2c] sm:$0x1]
  %v259 = vld [vmem:[%s0 + $0x30] sm:$0x1]
  %v260 = vld [vmem:[%s0 + $0x34] sm:$0x1]
  %v261 = vld [vmem:[%s0 + $0x38] sm:$0x1]
  %v262 = vld [vmem:[%s0 + $0x3c] sm:$0x1]
  %v279 = vunpack.c.l.b16 %v247
  %v280 = vunpack.c.l.b16 %v248
  %v281 = vunpack.c.l.b16 %v249
  %v282 = vunpack.c.l.b16 %v250
  %v283 = vunpack.c.l.b16 %v251
  %v284 = vunpack.c.l.b16 %v252
  %v285 = vunpack.c.l.b16 %v253
  %v286 = vunpack.c.l.b16 %v254
  %v287 = vunpack.c.l.b16 %v255
  %v288 = vunpack.c.l.b16 %v256
  %v289 = vunpack.c.l.b16 %v257
  %v290 = vunpack.c.l.b16 %v258
  %v291 = vunpack.c.l.b16 %v259
  %v292 = vunpack.c.l.b16 %v260
  %v293 = vunpack.c.l.b16 %v261
  %v294 = vunpack.c.l.b16 %v262
  %v295 = vpack.c.b16 %v279, %v279
  %v296 = vpack.c.b16 %v280, %v280
  %v297 = vpack.c.b16 %v281, %v281
  %v298 = vpack.c.b16 %v282, %v282
  %v299 = vpack.c.b16 %v283, %v283
  %v300 = vpack.c.b16 %v284, %v284
  %v301 = vpack.c.b16 %v285, %v285
  %v302 = vpack.c.b16 %v286, %v286
  %v303 = vpack.c.b16 %v287, %v287
  %v304 = vpack.c.b16 %v288, %v288
  %v305 = vpack.c.b16 %v289, %v289
  %v306 = vpack.c.b16 %v290, %v290
  %v307 = vpack.c.b16 %v291, %v291
  %v308 = vpack.c.b16 %v292, %v292
  %v309 = vpack.c.b16 %v293, %v293
  %v310 = vpack.c.b16 %v294, %v294
  %v311 = vunpack.c.l.b16 %v295
  %v312 = vunpack.c.l.b16 %v296
  %v313 = vunpack.c.l.b16 %v297
  %v314 = vunpack.c.l.b16 %v298
  %v315 = vunpack.c.l.b16 %v299
  %v316 = vunpack.c.l.b16 %v300
  %v317 = vunpack.c.l.b16 %v301
  %v318 = vunpack.c.l.b16 %v302
  %v319 = vunpack.c.l.b16 %v303
  %v320 = vunpack.c.l.b16 %v304
  %v321 = vunpack.c.l.b16 %v305
  %v322 = vunpack.c.l.b16 %v306
  %v323 = vunpack.c.l.b16 %v307
  %v324 = vunpack.c.l.b16 %v308
  %v325 = vunpack.c.l.b16 %v309
  %v326 = vunpack.c.l.b16 %v310
  %v327 = vrot.slane %v311, 1
  %v328 = vsel %vm105, %v312, %v327
  %v329 = vrot.slane %v313, 7
  %v330 = vsel %vm108, %v329, %v328
  %v331 = vrot.slane %v314, 6
  %v332 = vsel %vm111, %v331, %v330
  %v333 = vrot.slane %v315, 5
  %v334 = vsel %vm114, %v333, %v332
  %v335 = vrot.slane %v316, 4
  %v336 = vsel %vm117, %v335, %v334
  %v337 = vrot.slane %v317, 3
  %v338 = vsel %vm120, %v337, %v336
  %v339 = vrot.slane %v318, 2
  %v340 = vsel %vm123, %v339, %v338
  %v341 = vrot.slane %v319, 1
  %v342 = vsel %vm105, %v320, %v341
  %v343 = vrot.slane %v321, 7
  %v344 = vsel %vm108, %v343, %v342
  %v345 = vrot.slane %v322, 6
  %v346 = vsel %vm111, %v345, %v344
  %v347 = vrot.slane %v323, 5
  %v348 = vsel %vm114, %v347, %v346
  %v349 = vrot.slane %v324, 4
  %v350 = vsel %vm117, %v349, %v348
  %v351 = vrot.slane %v325, 3
  %v352 = vsel %vm120, %v351, %v350
  %v353 = vrot.slane %v326, 2
  %v354 = vsel %vm123, %v353, %v352
  %v355 = vpack.c.b16 %v354, %v340
  %357 = vxpose.xlu0.c.b16.start [1/8] %v355, 128
  %358 = vxpose.xlu0.c.b16.cont [2/8] 0, 128
  %359 = vxpose.xlu0.c.b16.cont [3/8] 0, 128
  %360 = vxpose.xlu0.c.b16.cont [4/8] 0, 128
  %361 = vxpose.xlu0.c.b16.cont [5/8] 0, 128
  %362 = vxpose.xlu0.c.b16.cont [6/8] 0, 128
  %363 = vxpose.xlu0.c.b16.cont [7/8] 0, 128
  %364 = vxpose.xlu0.c.b16.end [8/8] 0, 128
  %v365 = vpop.trf.xlu0
  %v366 = vpop.trf.xlu0
  %v367 = vpop.trf.xlu0
  %v368 = vpop.trf.xlu0
  %v369 = vpop.trf.xlu0
  %v370 = vpop.trf.xlu0
  %v371 = vpop.trf.xlu0
  %v372 = vpop.trf.xlu0
  %v373 = vunpack.c.l.bf16 %v365
  %v374 = vld [vmem:[%s3] sm:$0x1]
  %v375 = vld [vmem:[%s4] sm:$0x1]
  %v376 = vsel %vm160, %v373, 0.0
  %377 = vadd.xlane.f32.xlu0 %v376
  %v378 = vpop.xlane.xlu0 %377
  %v379 = vmul.f32 %v378, %v164
  %v380 = vsub.f32 %v373, %v379
  %v381 = vmul.f32 %v380, %v380
  %v382 = vsel %vm160, %v381, 0.0
  %383 = vadd.xlane.f32.xlu0 %v382
  %v384 = vpop.xlane.xlu0 %383
  %v385 = vmul.f32 %v384, %v164
  %v386 = vadd.f32 %v385, 1e-05
  %v387 = vrsqrt.pop %v386
  %v388 = vmul.f32 %v380, %v387
  %v390 = vlaneseq
  %v391 = vshrl.u32 %v390, 7
  %v392 = vsub.s32 0, %v391
  %v393 = vrot.slane %v374, %v392
  %v395 = vmul.f32 %v388, %v393
  %v397 = vlaneseq
  %v398 = vshrl.u32 %v397, 7
  %v399 = vsub.s32 0, %v398
  %v400 = vrot.slane %v375, %v399
  %v402 = vadd.f32 %v395, %v400
  %v403 = vpack.c.bf16 %v402, %v402
  %v404 = vld [vmem:[%s5] sm:$0xf]
  %v405 = vld [vmem:[%s5 + $0x4] sm:$0xf]
  %v408 = vunpack.c.l.b16 %v404
  %v409 = vunpack.c.l.b16 %v405
  %v410 = vpack.c.b16 %v409, %v408
  %v413 = vsel %vm160, %v403, 0
  %415 = vmatprep.subr.bf16.mxu0 0
  %416 = vmatpush1.bf16.msra.mxu0 0
  %417 = vmatprep.subr.bf16.mxu0 0
  %418 = vmatpush1.bf16.msra.mxu0 0
  %419 = vmatprep.subr.bf16.mxu0 0
  %420 = vmatpush1.bf16.msra.mxu0 0
  %421 = vmatprep.subr.bf16.mxu0 0
  %422 = vmatpush1.bf16.msra.mxu0 0
  %423 = vmatprep.subr.bf16.mxu0 0
  %424 = vmatpush1.bf16.msra.mxu0 0
  %425 = vmatprep.subr.bf16.mxu0 0
  %426 = vmatpush1.bf16.msra.mxu0 0
  %427 = vmatprep.subr.bf16.mxu0 0
  %428 = vmatpush1.bf16.msra.mxu0 0
  %429 = vmatprep.subr.bf16.mxu0 0
  %430 = vmatpush1.bf16.msra.mxu0 %v410
  %431 = vmatprep.subr.bf16.mxu0 0
  %432 = vmatpush2.bf16.msra.mxu0 0
  %433 = vmatprep.subr.bf16.mxu0 0
  %434 = vmatpush2.bf16.msra.mxu0 0
  %435 = vmatprep.subr.bf16.mxu0 0
  %436 = vmatpush2.bf16.msra.mxu0 0
  %437 = vmatprep.subr.bf16.mxu0 0
  %438 = vmatpush2.bf16.msra.mxu0 0
  %439 = vmatprep.subr.bf16.mxu0 0
  %440 = vmatpush2.bf16.msra.mxu0 0
  %441 = vmatprep.subr.bf16.mxu0 0
  %442 = vmatpush2.bf16.msra.mxu0 0
  %443 = vmatprep.subr.bf16.mxu0 0
  %444 = vmatpush2.bf16.msra.mxu0 0
  %445 = vmatprep.subr.bf16.mxu0 0
  %446 = vmatpush2.bf16.msra.mxu0 0
  %447 = vmatprep.mubr.bf16.mxu0 0
  %448 = vmatmul.mubr.bf16.gmra.mxu0 %v413
  %v449 = vpop.f32.mrf.mxu0
  %v450 = vadd.f32 0.0, %v449
  %v451 = vpop.f32.mrf.mxu0
  %v452 = vpop.f32.mrf.mxu0
  %v453 = vpop.f32.mrf.mxu0
  %454 = vdwg.mxu0
  %s455 = scalar_lea.vmem %s2, 8
  %v456 = vld [vmem:[%s455] sm:$0xff]
  %s457 = scalar_lea.vmem %s1, 4
  %v458 = vld [vmem:[%s457] sm:$0xf]
  %v459 = vunpack.c.l.bf16 %v458
  %v460 = vmul.f32 %v450, %v459
  %v461 = vadd.f32 %v456, %v460
  %s462 = scalar_lea.vmem %s6, 8
  %463 = vst.msk [vmem:[%s462] sm:$0xff] %vm160, %v461
  %v464 = vld [vmem:[%s0] sm:$0x2]
  %v465 = vld [vmem:[%s0 + $0x4] sm:$0x2]
  %v466 = vld [vmem:[%s0 + $0x8] sm:$0x2]
  %v467 = vld [vmem:[%s0 + $0xc] sm:$0x2]
  %v468 = vld [vmem:[%s0 + $0x10] sm:$0x2]
  %v469 = vld [vmem:[%s0 + $0x14] sm:$0x2]
  %v470 = vld [vmem:[%s0 + $0x18] sm:$0x2]
  %v471 = vld [vmem:[%s0 + $0x1c] sm:$0x2]
  %v472 = vld [vmem:[%s0 + $0x20] sm:$0x2]
  %v473 = vld [vmem:[%s0 + $0x24] sm:$0x2]
  %v474 = vld [vmem:[%s0 + $0x28] sm:$0x2]
  %v475 = vld [vmem:[%s0 + $0x2c] sm:$0x2]
  %v476 = vld [vmem:[%s0 + $0x30] sm:$0x2]
  %v477 = vld [vmem:[%s0 + $0x34] sm:$0x2]
  %v478 = vld [vmem:[%s0 + $0x38] sm:$0x2]
  %v479 = vld [vmem:[%s0 + $0x3c] sm:$0x2]
  %v496 = vunpack.c.l.b16 %v464
  %v497 = vunpack.c.l.b16 %v465
  %v498 = vunpack.c.l.b16 %v466
  %v499 = vunpack.c.l.b16 %v467
  %v500 = vunpack.c.l.b16 %v468
  %v501 = vunpack.c.l.b16 %v469
  %v502 = vunpack.c.l.b16 %v470
  %v503 = vunpack.c.l.b16 %v471
  %v504 = vunpack.c.l.b16 %v472
  %v505 = vunpack.c.l.b16 %v473
  %v506 = vunpack.c.l.b16 %v474
  %v507 = vunpack.c.l.b16 %v475
  %v508 = vunpack.c.l.b16 %v476
  %v509 = vunpack.c.l.b16 %v477
  %v510 = vunpack.c.l.b16 %v478
  %v511 = vunpack.c.l.b16 %v479
  %v512 = vpack.c.b16 %v496, %v496
  %v513 = vpack.c.b16 %v497, %v497
  %v514 = vpack.c.b16 %v498, %v498
  %v515 = vpack.c.b16 %v499, %v499
  %v516 = vpack.c.b16 %v500, %v500
  %v517 = vpack.c.b16 %v501, %v501
  %v518 = vpack.c.b16 %v502, %v502
  %v519 = vpack.c.b16 %v503, %v503
  %v520 = vpack.c.b16 %v504, %v504
  %v521 = vpack.c.b16 %v505, %v505
  %v522 = vpack.c.b16 %v506, %v506
  %v523 = vpack.c.b16 %v507, %v507
  %v524 = vpack.c.b16 %v508, %v508
  %v525 = vpack.c.b16 %v509, %v509
  %v526 = vpack.c.b16 %v510, %v510
  %v527 = vpack.c.b16 %v511, %v511
  %v528 = vunpack.c.l.b16 %v512
  %v529 = vunpack.c.l.b16 %v513
  %v530 = vunpack.c.l.b16 %v514
  %v531 = vunpack.c.l.b16 %v515
  %v532 = vunpack.c.l.b16 %v516
  %v533 = vunpack.c.l.b16 %v517
  %v534 = vunpack.c.l.b16 %v518
  %v535 = vunpack.c.l.b16 %v519
  %v536 = vunpack.c.l.b16 %v520
  %v537 = vunpack.c.l.b16 %v521
  %v538 = vunpack.c.l.b16 %v522
  %v539 = vunpack.c.l.b16 %v523
  %v540 = vunpack.c.l.b16 %v524
  %v541 = vunpack.c.l.b16 %v525
  %v542 = vunpack.c.l.b16 %v526
  %v543 = vunpack.c.l.b16 %v527
  %v544 = vrot.slane %v528, 2
  %v545 = vrot.slane %v529, 1
  %v546 = vsel %vm105, %v545, %v544
  %v547 = vsel %vm108, %v530, %v546
  %v548 = vrot.slane %v531, 7
  %v549 = vsel %vm111, %v548, %v547
  %v550 = vrot.slane %v532, 6
  %v551 = vsel %vm114, %v550, %v549
  %v552 = vrot.slane %v533, 5
  %v553 = vsel %vm117, %v552, %v551
  %v554 = vrot.slane %v534, 4
  %v555 = vsel %vm120, %v554, %v553
  %v556 = vrot.slane %v535, 3
  %v557 = vsel %vm123, %v556, %v555
  %v558 = vrot.slane %v536, 2
  %v559 = vrot.slane %v537, 1
  %v560 = vsel %vm105, %v559, %v558
  %v561 = vsel %vm108, %v538, %v560
  %v562 = vrot.slane %v539, 7
  %v563 = vsel %vm111, %v562, %v561
  %v564 = vrot.slane %v540, 6
  %v565 = vsel %vm114, %v564, %v563
  %v566 = vrot.slane %v541, 5
  %v567 = vsel %vm117, %v566, %v565
  %v568 = vrot.slane %v542, 4
  %v569 = vsel %vm120, %v568, %v567
  %v570 = vrot.slane %v543, 3
  %v571 = vsel %vm123, %v570, %v569
  %v572 = vpack.c.b16 %v571, %v557
  %574 = vxpose.xlu0.c.b16.start [1/8] %v572, 128
  %575 = vxpose.xlu0.c.b16.cont [2/8] 0, 128
  %576 = vxpose.xlu0.c.b16.cont [3/8] 0, 128
  %577 = vxpose.xlu0.c.b16.cont [4/8] 0, 128
  %578 = vxpose.xlu0.c.b16.cont [5/8] 0, 128
  %579 = vxpose.xlu0.c.b16.cont [6/8] 0, 128
  %580 = vxpose.xlu0.c.b16.cont [7/8] 0, 128
  %581 = vxpose.xlu0.c.b16.end [8/8] 0, 128
  %v582 = vpop.trf.xlu0
  %v583 = vpop.trf.xlu0
  %v584 = vpop.trf.xlu0
  %v585 = vpop.trf.xlu0
  %v586 = vpop.trf.xlu0
  %v587 = vpop.trf.xlu0
  %v588 = vpop.trf.xlu0
  %v589 = vpop.trf.xlu0
  %v590 = vunpack.c.l.bf16 %v582
  %v591 = vld [vmem:[%s3] sm:$0x1]
  %v592 = vld [vmem:[%s4] sm:$0x1]
  %v593 = vsel %vm160, %v590, 0.0
  %594 = vadd.xlane.f32.xlu0 %v593
  %v595 = vpop.xlane.xlu0 %594
  %v596 = vmul.f32 %v595, %v164
  %v597 = vsub.f32 %v590, %v596
  %v598 = vmul.f32 %v597, %v597
  %v599 = vsel %vm160, %v598, 0.0
  %600 = vadd.xlane.f32.xlu0 %v599
  %v601 = vpop.xlane.xlu0 %600
  %v602 = vmul.f32 %v601, %v164
  %v603 = vadd.f32 %v602, 1e-05
  %v604 = vrsqrt.pop %v603
  %v605 = vmul.f32 %v597, %v604
  %v607 = vlaneseq
  %v608 = vshrl.u32 %v607, 7
  %v609 = vsub.s32 0, %v608
  %v610 = vrot.slane %v591, %v609
  %v612 = vmul.f32 %v605, %v610
  %v614 = vlaneseq
  %v615 = vshrl.u32 %v614, 7
  %v616 = vsub.s32 0, %v615
  %v617 = vrot.slane %v592, %v616
  %v619 = vadd.f32 %v612, %v617
  %v620 = vpack.c.bf16 %v619, %v619
  %v621 = vld [vmem:[%s5] sm:$0xf]
  %v622 = vld [vmem:[%s5 + $0x4] sm:$0xf]
  %v625 = vunpack.c.l.b16 %v621
  %v626 = vunpack.c.l.b16 %v622
  %v627 = vpack.c.b16 %v626, %v625
  %v630 = vsel %vm160, %v620, 0
  %632 = vmatprep.subr.bf16.mxu0 0
  %633 = vmatpush1.bf16.msra.mxu0 0
  %634 = vmatprep.subr.bf16.mxu0 0
  %635 = vmatpush1.bf16.msra.mxu0 0
  %636 = vmatprep.subr.bf16.mxu0 0
  %637 = vmatpush1.bf16.msra.mxu0 0
  %638 = vmatprep.subr.bf16.mxu0 0
  %639 = vmatpush1.bf16.msra.mxu0 0
  %640 = vmatprep.subr.bf16.mxu0 0
  %641 = vmatpush1.bf16.msra.mxu0 0
  %642 = vmatprep.subr.bf16.mxu0 0
  %643 = vmatpush1.bf16.msra.mxu0 0
  %644 = vmatprep.subr.bf16.mxu0 0
  %645 = vmatpush1.bf16.msra.mxu0 0
  %646 = vmatprep.subr.bf16.mxu0 0
  %647 = vmatpush1.bf16.msra.mxu0 %v627
  %648 = vmatprep.subr.bf16.mxu0 0
  %649 = vmatpush2.bf16.msra.mxu0 0
  %650 = vmatprep.subr.bf16.mxu0 0
  %651 = vmatpush2.bf16.msra.mxu0 0
  %652 = vmatprep.subr.bf16.mxu0 0
  %653 = vmatpush2.bf16.msra.mxu0 0
  %654 = vmatprep.subr.bf16.mxu0 0
  %655 = vmatpush2.bf16.msra.mxu0 0
  %656 = vmatprep.subr.bf16.mxu0 0
  %657 = vmatpush2.bf16.msra.mxu0 0
  %658 = vmatprep.subr.bf16.mxu0 0
  %659 = vmatpush2.bf16.msra.mxu0 0
  %660 = vmatprep.subr.bf16.mxu0 0
  %661 = vmatpush2.bf16.msra.mxu0 0
  %662 = vmatprep.subr.bf16.mxu0 0
  %663 = vmatpush2.bf16.msra.mxu0 0
  %664 = vmatprep.mubr.bf16.mxu0 0
  %665 = vmatmul.mubr.bf16.gmra.mxu0 %v630
  %v666 = vpop.f32.mrf.mxu0
  %v667 = vadd.f32 0.0, %v666
  %v668 = vpop.f32.mrf.mxu0
  %v669 = vpop.f32.mrf.mxu0
  %v670 = vpop.f32.mrf.mxu0
  %671 = vdwg.mxu0
  %s672 = scalar_lea.vmem %s2, 16
  %v673 = vld [vmem:[%s672] sm:$0xff]
  %s674 = scalar_lea.vmem %s1, 8
  %v675 = vld [vmem:[%s674] sm:$0xf]
  %v676 = vunpack.c.l.bf16 %v675
  %v677 = vmul.f32 %v667, %v676
  %v678 = vadd.f32 %v673, %v677
  %s679 = scalar_lea.vmem %s6, 16
  %680 = vst.msk [vmem:[%s679] sm:$0xff] %vm160, %v678
  %v681 = vld [vmem:[%s0] sm:$0x2]
  %v682 = vld [vmem:[%s0 + $0x4] sm:$0x2]
  %v683 = vld [vmem:[%s0 + $0x8] sm:$0x2]
  %v684 = vld [vmem:[%s0 + $0xc] sm:$0x2]
  %v685 = vld [vmem:[%s0 + $0x10] sm:$0x2]
  %v686 = vld [vmem:[%s0 + $0x14] sm:$0x2]
  %v687 = vld [vmem:[%s0 + $0x18] sm:$0x2]
  %v688 = vld [vmem:[%s0 + $0x1c] sm:$0x2]
  %v689 = vld [vmem:[%s0 + $0x20] sm:$0x2]
  %v690 = vld [vmem:[%s0 + $0x24] sm:$0x2]
  %v691 = vld [vmem:[%s0 + $0x28] sm:$0x2]
  %v692 = vld [vmem:[%s0 + $0x2c] sm:$0x2]
  %v693 = vld [vmem:[%s0 + $0x30] sm:$0x2]
  %v694 = vld [vmem:[%s0 + $0x34] sm:$0x2]
  %v695 = vld [vmem:[%s0 + $0x38] sm:$0x2]
  %v696 = vld [vmem:[%s0 + $0x3c] sm:$0x2]
  %v713 = vunpack.c.l.b16 %v681
  %v714 = vunpack.c.l.b16 %v682
  %v715 = vunpack.c.l.b16 %v683
  %v716 = vunpack.c.l.b16 %v684
  %v717 = vunpack.c.l.b16 %v685
  %v718 = vunpack.c.l.b16 %v686
  %v719 = vunpack.c.l.b16 %v687
  %v720 = vunpack.c.l.b16 %v688
  %v721 = vunpack.c.l.b16 %v689
  %v722 = vunpack.c.l.b16 %v690
  %v723 = vunpack.c.l.b16 %v691
  %v724 = vunpack.c.l.b16 %v692
  %v725 = vunpack.c.l.b16 %v693
  %v726 = vunpack.c.l.b16 %v694
  %v727 = vunpack.c.l.b16 %v695
  %v728 = vunpack.c.l.b16 %v696
  %v729 = vpack.c.b16 %v713, %v713
  %v730 = vpack.c.b16 %v714, %v714
  %v731 = vpack.c.b16 %v715, %v715
  %v732 = vpack.c.b16 %v716, %v716
  %v733 = vpack.c.b16 %v717, %v717
  %v734 = vpack.c.b16 %v718, %v718
  %v735 = vpack.c.b16 %v719, %v719
  %v736 = vpack.c.b16 %v720, %v720
  %v737 = vpack.c.b16 %v721, %v721
  %v738 = vpack.c.b16 %v722, %v722
  %v739 = vpack.c.b16 %v723, %v723
  %v740 = vpack.c.b16 %v724, %v724
  %v741 = vpack.c.b16 %v725, %v725
  %v742 = vpack.c.b16 %v726, %v726
  %v743 = vpack.c.b16 %v727, %v727
  %v744 = vpack.c.b16 %v728, %v728
  %v745 = vunpack.c.l.b16 %v729
  %v746 = vunpack.c.l.b16 %v730
  %v747 = vunpack.c.l.b16 %v731
  %v748 = vunpack.c.l.b16 %v732
  %v749 = vunpack.c.l.b16 %v733
  %v750 = vunpack.c.l.b16 %v734
  %v751 = vunpack.c.l.b16 %v735
  %v752 = vunpack.c.l.b16 %v736
  %v753 = vunpack.c.l.b16 %v737
  %v754 = vunpack.c.l.b16 %v738
  %v755 = vunpack.c.l.b16 %v739
  %v756 = vunpack.c.l.b16 %v740
  %v757 = vunpack.c.l.b16 %v741
  %v758 = vunpack.c.l.b16 %v742
  %v759 = vunpack.c.l.b16 %v743
  %v760 = vunpack.c.l.b16 %v744
  %v761 = vrot.slane %v745, 3
  %v762 = vrot.slane %v746, 2
  %v763 = vsel %vm105, %v762, %v761
  %v764 = vrot.slane %v747, 1
  %v765 = vsel %vm108, %v764, %v763
  %v766 = vsel %vm111, %v748, %v765
  %v767 = vrot.slane %v749, 7
  %v768 = vsel %vm114, %v767, %v766
  %v769 = vrot.slane %v750, 6
  %v770 = vsel %vm117, %v769, %v768
  %v771 = vrot.slane %v751, 5
  %v772 = vsel %vm120, %v771, %v770
  %v773 = vrot.slane %v752, 4
  %v774 = vsel %vm123, %v773, %v772
  %v775 = vrot.slane %v753, 3
  %v776 = vrot.slane %v754, 2
  %v777 = vsel %vm105, %v776, %v775
  %v778 = vrot.slane %v755, 1
  %v779 = vsel %vm108, %v778, %v777
  %v780 = vsel %vm111, %v756, %v779
  %v781 = vrot.slane %v757, 7
  %v782 = vsel %vm114, %v781, %v780
  %v783 = vrot.slane %v758, 6
  %v784 = vsel %vm117, %v783, %v782
  %v785 = vrot.slane %v759, 5
  %v786 = vsel %vm120, %v785, %v784
  %v787 = vrot.slane %v760, 4
  %v788 = vsel %vm123, %v787, %v786
  %v789 = vpack.c.b16 %v788, %v774
  %791 = vxpose.xlu0.c.b16.start [1/8] %v789, 128
  %792 = vxpose.xlu0.c.b16.cont [2/8] 0, 128
  %793 = vxpose.xlu0.c.b16.cont [3/8] 0, 128
  %794 = vxpose.xlu0.c.b16.cont [4/8] 0, 128
  %795 = vxpose.xlu0.c.b16.cont [5/8] 0, 128
  %796 = vxpose.xlu0.c.b16.cont [6/8] 0, 128
  %797 = vxpose.xlu0.c.b16.cont [7/8] 0, 128
  %798 = vxpose.xlu0.c.b16.end [8/8] 0, 128
  %v799 = vpop.trf.xlu0
  %v800 = vpop.trf.xlu0
  %v801 = vpop.trf.xlu0
  %v802 = vpop.trf.xlu0
  %v803 = vpop.trf.xlu0
  %v804 = vpop.trf.xlu0
  %v805 = vpop.trf.xlu0
  %v806 = vpop.trf.xlu0
  %v807 = vunpack.c.l.bf16 %v799
  %v808 = vld [vmem:[%s3] sm:$0x1]
  %v809 = vld [vmem:[%s4] sm:$0x1]
  %v810 = vsel %vm160, %v807, 0.0
  %811 = vadd.xlane.f32.xlu0 %v810
  %v812 = vpop.xlane.xlu0 %811
  %v813 = vmul.f32 %v812, %v164
  %v814 = vsub.f32 %v807, %v813
  %v815 = vmul.f32 %v814, %v814
  %v816 = vsel %vm160, %v815, 0.0
  %817 = vadd.xlane.f32.xlu0 %v816
  %v818 = vpop.xlane.xlu0 %817
  %v819 = vmul.f32 %v818, %v164
  %v820 = vadd.f32 %v819, 1e-05
  %v821 = vrsqrt.pop %v820
  %v822 = vmul.f32 %v814, %v821
  %v824 = vlaneseq
  %v825 = vshrl.u32 %v824, 7
  %v826 = vsub.s32 0, %v825
  %v827 = vrot.slane %v808, %v826
  %v829 = vmul.f32 %v822, %v827
  %v831 = vlaneseq
  %v832 = vshrl.u32 %v831, 7
  %v833 = vsub.s32 0, %v832
  %v834 = vrot.slane %v809, %v833
  %v836 = vadd.f32 %v829, %v834
  %v837 = vpack.c.bf16 %v836, %v836
  %v838 = vld [vmem:[%s5] sm:$0xf]
  %v839 = vld [vmem:[%s5 + $0x4] sm:$0xf]
  %v842 = vunpack.c.l.b16 %v838
  %v843 = vunpack.c.l.b16 %v839
  %v844 = vpack.c.b16 %v843, %v842
  %v847 = vsel %vm160, %v837, 0
  %849 = vmatprep.subr.bf16.mxu0 0
  %850 = vmatpush1.bf16.msra.mxu0 0
  %851 = vmatprep.subr.bf16.mxu0 0
  %852 = vmatpush1.bf16.msra.mxu0 0
  %853 = vmatprep.subr.bf16.mxu0 0
  %854 = vmatpush1.bf16.msra.mxu0 0
  %855 = vmatprep.subr.bf16.mxu0 0
  %856 = vmatpush1.bf16.msra.mxu0 0
  %857 = vmatprep.subr.bf16.mxu0 0
  %858 = vmatpush1.bf16.msra.mxu0 0
  %859 = vmatprep.subr.bf16.mxu0 0
  %860 = vmatpush1.bf16.msra.mxu0 0
  %861 = vmatprep.subr.bf16.mxu0 0
  %862 = vmatpush1.bf16.msra.mxu0 0
  %863 = vmatprep.subr.bf16.mxu0 0
  %864 = vmatpush1.bf16.msra.mxu0 %v844
  %865 = vmatprep.subr.bf16.mxu0 0
  %866 = vmatpush2.bf16.msra.mxu0 0
  %867 = vmatprep.subr.bf16.mxu0 0
  %868 = vmatpush2.bf16.msra.mxu0 0
  %869 = vmatprep.subr.bf16.mxu0 0
  %870 = vmatpush2.bf16.msra.mxu0 0
  %871 = vmatprep.subr.bf16.mxu0 0
  %872 = vmatpush2.bf16.msra.mxu0 0
  %873 = vmatprep.subr.bf16.mxu0 0
  %874 = vmatpush2.bf16.msra.mxu0 0
  %875 = vmatprep.subr.bf16.mxu0 0
  %876 = vmatpush2.bf16.msra.mxu0 0
  %877 = vmatprep.subr.bf16.mxu0 0
  %878 = vmatpush2.bf16.msra.mxu0 0
  %879 = vmatprep.subr.bf16.mxu0 0
  %880 = vmatpush2.bf16.msra.mxu0 0
  %881 = vmatprep.mubr.bf16.mxu0 0
  %882 = vmatmul.mubr.bf16.gmra.mxu0 %v847
  %v883 = vpop.f32.mrf.mxu0
  %v884 = vadd.f32 0.0, %v883
  %v885 = vpop.f32.mrf.mxu0
  %v886 = vpop.f32.mrf.mxu0
  %v887 = vpop.f32.mrf.mxu0
  %888 = vdwg.mxu0
  %s889 = scalar_lea.vmem %s2, 24
  %v890 = vld [vmem:[%s889] sm:$0xff]
  %s891 = scalar_lea.vmem %s1, 12
  %v892 = vld [vmem:[%s891] sm:$0xf]
  %v893 = vunpack.c.l.bf16 %v892
  %v894 = vmul.f32 %v884, %v893
  %v895 = vadd.f32 %v890, %v894
  %s896 = scalar_lea.vmem %s6, 24
  %897 = vst.msk [vmem:[%s896] sm:$0xff] %vm160, %v895
  %v898 = vld [vmem:[%s0] sm:$0x4]
  %v899 = vld [vmem:[%s0 + $0x4] sm:$0x4]
  %v900 = vld [vmem:[%s0 + $0x8] sm:$0x4]
  %v901 = vld [vmem:[%s0 + $0xc] sm:$0x4]
  %v902 = vld [vmem:[%s0 + $0x10] sm:$0x4]
  %v903 = vld [vmem:[%s0 + $0x14] sm:$0x4]
  %v904 = vld [vmem:[%s0 + $0x18] sm:$0x4]
  %v905 = vld [vmem:[%s0 + $0x1c] sm:$0x4]
  %v906 = vld [vmem:[%s0 + $0x20] sm:$0x4]
  %v907 = vld [vmem:[%s0 + $0x24] sm:$0x4]
  %v908 = vld [vmem:[%s0 + $0x28] sm:$0x4]
  %v909 = vld [vmem:[%s0 + $0x2c] sm:$0x4]
  %v910 = vld [vmem:[%s0 + $0x30] sm:$0x4]
  %v911 = vld [vmem:[%s0 + $0x34] sm:$0x4]
  %v912 = vld [vmem:[%s0 + $0x38] sm:$0x4]
  %v913 = vld [vmem:[%s0 + $0x3c] sm:$0x4]
  %v930 = vunpack.c.l.b16 %v898
  %v931 = vunpack.c.l.b16 %v899
  %v932 = vunpack.c.l.b16 %v900
  %v933 = vunpack.c.l.b16 %v901
  %v934 = vunpack.c.l.b16 %v902
  %v935 = vunpack.c.l.b16 %v903
  %v936 = vunpack.c.l.b16 %v904
  %v937 = vunpack.c.l.b16 %v905
  %v938 = vunpack.c.l.b16 %v906
  %v939 = vunpack.c.l.b16 %v907
  %v940 = vunpack.c.l.b16 %v908
  %v941 = vunpack.c.l.b16 %v909
  %v942 = vunpack.c.l.b16 %v910
  %v943 = vunpack.c.l.b16 %v911
  %v944 = vunpack.c.l.b16 %v912
  %v945 = vunpack.c.l.b16 %v913
  %v946 = vpack.c.b16 %v930, %v930
  %v947 = vpack.c.b16 %v931, %v931
  %v948 = vpack.c.b16 %v932, %v932
  %v949 = vpack.c.b16 %v933, %v933
  %v950 = vpack.c.b16 %v934, %v934
  %v951 = vpack.c.b16 %v935, %v935
  %v952 = vpack.c.b16 %v936, %v936
  %v953 = vpack.c.b16 %v937, %v937
  %v954 = vpack.c.b16 %v938, %v938
  %v955 = vpack.c.b16 %v939, %v939
  %v956 = vpack.c.b16 %v940, %v940
  %v957 = vpack.c.b16 %v941, %v941
  %v958 = vpack.c.b16 %v942, %v942
  %v959 = vpack.c.b16 %v943, %v943
  %v960 = vpack.c.b16 %v944, %v944
  %v961 = vpack.c.b16 %v945, %v945
  %v962 = vunpack.c.l.b16 %v946
  %v963 = vunpack.c.l.b16 %v947
  %v964 = vunpack.c.l.b16 %v948
  %v965 = vunpack.c.l.b16 %v949
  %v966 = vunpack.c.l.b16 %v950
  %v967 = vunpack.c.l.b16 %v951
  %v968 = vunpack.c.l.b16 %v952
  %v969 = vunpack.c.l.b16 %v953
  %v970 = vunpack.c.l.b16 %v954
  %v971 = vunpack.c.l.b16 %v955
  %v972 = vunpack.c.l.b16 %v956
  %v973 = vunpack.c.l.b16 %v957
  %v974 = vunpack.c.l.b16 %v958
  %v975 = vunpack.c.l.b16 %v959
  %v976 = vunpack.c.l.b16 %v960
  %v977 = vunpack.c.l.b16 %v961
  %v978 = vrot.slane %v962, 4
  %v979 = vrot.slane %v963, 3
  %v980 = vsel %vm105, %v979, %v978
  %v981 = vrot.slane %v964, 2
  %v982 = vsel %vm108, %v981, %v980
  %v983 = vrot.slane %v965, 1
  %v984 = vsel %vm111, %v983, %v982
  %v985 = vsel %vm114, %v966, %v984
  %v986 = vrot.slane %v967, 7
  %v987 = vsel %vm117, %v986, %v985
  %v988 = vrot.slane %v968, 6
  %v989 = vsel %vm120, %v988, %v987
  %v990 = vrot.slane %v969, 5
  %v991 = vsel %vm123, %v990, %v989
  %v992 = vrot.slane %v970, 4
  %v993 = vrot.slane %v971, 3
  %v994 = vsel %vm105, %v993, %v992
  %v995 = vrot.slane %v972, 2
  %v996 = vsel %vm108, %v995, %v994
  %v997 = vrot.slane %v973, 1
  %v998 = vsel %vm111, %v997, %v996
  %v999 = vsel %vm114, %v974, %v998
  %v1000 = vrot.slane %v975, 7
  %v1001 = vsel %vm117, %v1000, %v999
  %v1002 = vrot.slane %v976, 6
  %v1003 = vsel %vm120, %v1002, %v1001
  %v1004 = vrot.slane %v977, 5
  %v1005 = vsel %vm123, %v1004, %v1003
  %v1006 = vpack.c.b16 %v1005, %v991
  %1008 = vxpose.xlu0.c.b16.start [1/8] %v1006, 128
  %1009 = vxpose.xlu0.c.b16.cont [2/8] 0, 128
  %1010 = vxpose.xlu0.c.b16.cont [3/8] 0, 128
  %1011 = vxpose.xlu0.c.b16.cont [4/8] 0, 128
  %1012 = vxpose.xlu0.c.b16.cont [5/8] 0, 128
  %1013 = vxpose.xlu0.c.b16.cont [6/8] 0, 128
  %1014 = vxpose.xlu0.c.b16.cont [7/8] 0, 128
  %1015 = vxpose.xlu0.c.b16.end [8/8] 0, 128
  %v1016 = vpop.trf.xlu0
  %v1017 = vpop.trf.xlu0
  %v1018 = vpop.trf.xlu0
  %v1019 = vpop.trf.xlu0
  %v1020 = vpop.trf.xlu0
  %v1021 = vpop.trf.xlu0
  %v1022 = vpop.trf.xlu0
  %v1023 = vpop.trf.xlu0
  %v1024 = vunpack.c.l.bf16 %v1016
  %v1025 = vld [vmem:[%s3] sm:$0x1]
  %v1026 = vld [vmem:[%s4] sm:$0x1]
  %v1027 = vsel %vm160, %v1024, 0.0
  %1028 = vadd.xlane.f32.xlu0 %v1027
  %v1029 = vpop.xlane.xlu0 %1028
  %v1030 = vmul.f32 %v1029, %v164
  %v1031 = vsub.f32 %v1024, %v1030
  %v1032 = vmul.f32 %v1031, %v1031
  %v1033 = vsel %vm160, %v1032, 0.0
  %1034 = vadd.xlane.f32.xlu0 %v1033
  %v1035 = vpop.xlane.xlu0 %1034
  %v1036 = vmul.f32 %v1035, %v164
  %v1037 = vadd.f32 %v1036, 1e-05
  %v1038 = vrsqrt.pop %v1037
  %v1039 = vmul.f32 %v1031, %v1038
  %v1041 = vlaneseq
  %v1042 = vshrl.u32 %v1041, 7
  %v1043 = vsub.s32 0, %v1042
  %v1044 = vrot.slane %v1025, %v1043
  %v1046 = vmul.f32 %v1039, %v1044
  %v1048 = vlaneseq
  %v1049 = vshrl.u32 %v1048, 7
  %v1050 = vsub.s32 0, %v1049
  %v1051 = vrot.slane %v1026, %v1050
  %v1053 = vadd.f32 %v1046, %v1051
  %v1054 = vpack.c.bf16 %v1053, %v1053
  %v1055 = vld [vmem:[%s5] sm:$0xf]
  %v1056 = vld [vmem:[%s5 + $0x4] sm:$0xf]
  %v1059 = vunpack.c.l.b16 %v1055
  %v1060 = vunpack.c.l.b16 %v1056
  %v1061 = vpack.c.b16 %v1060, %v1059
  %v1064 = vsel %vm160, %v1054, 0
  %1066 = vmatprep.subr.bf16.mxu0 0
  %1067 = vmatpush1.bf16.msra.mxu0 0
  %1068 = vmatprep.subr.bf16.mxu0 0
  %1069 = vmatpush1.bf16.msra.mxu0 0
  %1070 = vmatprep.subr.bf16.mxu0 0
  %1071 = vmatpush1.bf16.msra.mxu0 0
  %1072 = vmatprep.subr.bf16.mxu0 0
  %1073 = vmatpush1.bf16.msra.mxu0 0
  %1074 = vmatprep.subr.bf16.mxu0 0
  %1075 = vmatpush1.bf16.msra.mxu0 0
  %1076 = vmatprep.subr.bf16.mxu0 0
  %1077 = vmatpush1.bf16.msra.mxu0 0
  %1078 = vmatprep.subr.bf16.mxu0 0
  %1079 = vmatpush1.bf16.msra.mxu0 0
  %1080 = vmatprep.subr.bf16.mxu0 0
  %1081 = vmatpush1.bf16.msra.mxu0 %v1061
  %1082 = vmatprep.subr.bf16.mxu0 0
  %1083 = vmatpush2.bf16.msra.mxu0 0
  %1084 = vmatprep.subr.bf16.mxu0 0
  %1085 = vmatpush2.bf16.msra.mxu0 0
  %1086 = vmatprep.subr.bf16.mxu0 0
  %1087 = vmatpush2.bf16.msra.mxu0 0
  %1088 = vmatprep.subr.bf16.mxu0 0
  %1089 = vmatpush2.bf16.msra.mxu0 0
  %1090 = vmatprep.subr.bf16.mxu0 0
  %1091 = vmatpush2.bf16.msra.mxu0 0
  %1092 = vmatprep.subr.bf16.mxu0 0
  %1093 = vmatpush2.bf16.msra.mxu0 0
  %1094 = vmatprep.subr.bf16.mxu0 0
  %1095 = vmatpush2.bf16.msra.mxu0 0
  %1096 = vmatprep.subr.bf16.mxu0 0
  %1097 = vmatpush2.bf16.msra.mxu0 0
  %1098 = vmatprep.mubr.bf16.mxu0 0
  %1099 = vmatmul.mubr.bf16.gmra.mxu0 %v1064
  %v1100 = vpop.f32.mrf.mxu0
  %v1101 = vadd.f32 0.0, %v1100
  %v1102 = vpop.f32.mrf.mxu0
  %v1103 = vpop.f32.mrf.mxu0
  %v1104 = vpop.f32.mrf.mxu0
  %1105 = vdwg.mxu0
  %s1106 = scalar_lea.vmem %s2, 32
  %v1107 = vld [vmem:[%s1106] sm:$0xff]
  %s1108 = scalar_lea.vmem %s1, 16
  %v1109 = vld [vmem:[%s1108] sm:$0xf]
  %v1110 = vunpack.c.l.bf16 %v1109
  %v1111 = vmul.f32 %v1101, %v1110
  %v1112 = vadd.f32 %v1107, %v1111
  %s1113 = scalar_lea.vmem %s6, 32
  %1114 = vst.msk [vmem:[%s1113] sm:$0xff] %vm160, %v1112
  %v1115 = vld [vmem:[%s0] sm:$0x4]
  %v1116 = vld [vmem:[%s0 + $0x4] sm:$0x4]
  %v1117 = vld [vmem:[%s0 + $0x8] sm:$0x4]
  %v1118 = vld [vmem:[%s0 + $0xc] sm:$0x4]
  %v1119 = vld [vmem:[%s0 + $0x10] sm:$0x4]
  %v1120 = vld [vmem:[%s0 + $0x14] sm:$0x4]
  %v1121 = vld [vmem:[%s0 + $0x18] sm:$0x4]
  %v1122 = vld [vmem:[%s0 + $0x1c] sm:$0x4]
  %v1123 = vld [vmem:[%s0 + $0x20] sm:$0x4]
  %v1124 = vld [vmem:[%s0 + $0x24] sm:$0x4]
  %v1125 = vld [vmem:[%s0 + $0x28] sm:$0x4]
  %v1126 = vld [vmem:[%s0 + $0x2c] sm:$0x4]
  %v1127 = vld [vmem:[%s0 + $0x30] sm:$0x4]
  %v1128 = vld [vmem:[%s0 + $0x34] sm:$0x4]
  %v1129 = vld [vmem:[%s0 + $0x38] sm:$0x4]
  %v1130 = vld [vmem:[%s0 + $0x3c] sm:$0x4]
  %v1147 = vunpack.c.l.b16 %v1115
  %v1148 = vunpack.c.l.b16 %v1116
  %v1149 = vunpack.c.l.b16 %v1117
  %v1150 = vunpack.c.l.b16 %v1118
  %v1151 = vunpack.c.l.b16 %v1119
  %v1152 = vunpack.c.l.b16 %v1120
  %v1153 = vunpack.c.l.b16 %v1121
  %v1154 = vunpack.c.l.b16 %v1122
  %v1155 = vunpack.c.l.b16 %v1123
  %v1156 = vunpack.c.l.b16 %v1124
  %v1157 = vunpack.c.l.b16 %v1125
  %v1158 = vunpack.c.l.b16 %v1126
  %v1159 = vunpack.c.l.b16 %v1127
  %v1160 = vunpack.c.l.b16 %v1128
  %v1161 = vunpack.c.l.b16 %v1129
  %v1162 = vunpack.c.l.b16 %v1130
  %v1163 = vpack.c.b16 %v1147, %v1147
  %v1164 = vpack.c.b16 %v1148, %v1148
  %v1165 = vpack.c.b16 %v1149, %v1149
  %v1166 = vpack.c.b16 %v1150, %v1150
  %v1167 = vpack.c.b16 %v1151, %v1151
  %v1168 = vpack.c.b16 %v1152, %v1152
  %v1169 = vpack.c.b16 %v1153, %v1153
  %v1170 = vpack.c.b16 %v1154, %v1154
  %v1171 = vpack.c.b16 %v1155, %v1155
  %v1172 = vpack.c.b16 %v1156, %v1156
  %v1173 = vpack.c.b16 %v1157, %v1157
  %v1174 = vpack.c.b16 %v1158, %v1158
  %v1175 = vpack.c.b16 %v1159, %v1159
  %v1176 = vpack.c.b16 %v1160, %v1160
  %v1177 = vpack.c.b16 %v1161, %v1161
  %v1178 = vpack.c.b16 %v1162, %v1162
  %v1179 = vunpack.c.l.b16 %v1163
  %v1180 = vunpack.c.l.b16 %v1164
  %v1181 = vunpack.c.l.b16 %v1165
  %v1182 = vunpack.c.l.b16 %v1166
  %v1183 = vunpack.c.l.b16 %v1167
  %v1184 = vunpack.c.l.b16 %v1168
  %v1185 = vunpack.c.l.b16 %v1169
  %v1186 = vunpack.c.l.b16 %v1170
  %v1187 = vunpack.c.l.b16 %v1171
  %v1188 = vunpack.c.l.b16 %v1172
  %v1189 = vunpack.c.l.b16 %v1173
  %v1190 = vunpack.c.l.b16 %v1174
  %v1191 = vunpack.c.l.b16 %v1175
  %v1192 = vunpack.c.l.b16 %v1176
  %v1193 = vunpack.c.l.b16 %v1177
  %v1194 = vunpack.c.l.b16 %v1178
  %v1195 = vrot.slane %v1179, 5
  %v1196 = vrot.slane %v1180, 4
  %v1197 = vsel %vm105, %v1196, %v1195
  %v1198 = vrot.slane %v1181, 3
  %v1199 = vsel %vm108, %v1198, %v1197
  %v1200 = vrot.slane %v1182, 2
  %v1201 = vsel %vm111, %v1200, %v1199
  %v1202 = vrot.slane %v1183, 1
  %v1203 = vsel %vm114, %v1202, %v1201
  %v1204 = vsel %vm117, %v1184, %v1203
  %v1205 = vrot.slane %v1185, 7
  %v1206 = vsel %vm120, %v1205, %v1204
  %v1207 = vrot.slane %v1186, 6
  %v1208 = vsel %vm123, %v1207, %v1206
  %v1209 = vrot.slane %v1187, 5
  %v1210 = vrot.slane %v1188, 4
  %v1211 = vsel %vm105, %v1210, %v1209
  %v1212 = vrot.slane %v1189, 3
  %v1213 = vsel %vm108, %v1212, %v1211
  %v1214 = vrot.slane %v1190, 2
  %v1215 = vsel %vm111, %v1214, %v1213
  %v1216 = vrot.slane %v1191, 1
  %v1217 = vsel %vm114, %v1216, %v1215
  %v1218 = vsel %vm117, %v1192, %v1217
  %v1219 = vrot.slane %v1193, 7
  %v1220 = vsel %vm120, %v1219, %v1218
  %v1221 = vrot.slane %v1194, 6
  %v1222 = vsel %vm123, %v1221, %v1220
  %v1223 = vpack.c.b16 %v1222, %v1208
  %1225 = vxpose.xlu0.c.b16.start [1/8] %v1223, 128
  %1226 = vxpose.xlu0.c.b16.cont [2/8] 0, 128
  %1227 = vxpose.xlu0.c.b16.cont [3/8] 0, 128
  %1228 = vxpose.xlu0.c.b16.cont [4/8] 0, 128
  %1229 = vxpose.xlu0.c.b16.cont [5/8] 0, 128
  %1230 = vxpose.xlu0.c.b16.cont [6/8] 0, 128
  %1231 = vxpose.xlu0.c.b16.cont [7/8] 0, 128
  %1232 = vxpose.xlu0.c.b16.end [8/8] 0, 128
  %v1233 = vpop.trf.xlu0
  %v1234 = vpop.trf.xlu0
  %v1235 = vpop.trf.xlu0
  %v1236 = vpop.trf.xlu0
  %v1237 = vpop.trf.xlu0
  %v1238 = vpop.trf.xlu0
  %v1239 = vpop.trf.xlu0
  %v1240 = vpop.trf.xlu0
  %v1241 = vunpack.c.l.bf16 %v1233
  %v1242 = vld [vmem:[%s3] sm:$0x1]
  %v1243 = vld [vmem:[%s4] sm:$0x1]
  %v1244 = vsel %vm160, %v1241, 0.0
  %1245 = vadd.xlane.f32.xlu0 %v1244
  %v1246 = vpop.xlane.xlu0 %1245
  %v1247 = vmul.f32 %v1246, %v164
  %v1248 = vsub.f32 %v1241, %v1247
  %v1249 = vmul.f32 %v1248, %v1248
  %v1250 = vsel %vm160, %v1249, 0.0
  %1251 = vadd.xlane.f32.xlu0 %v1250
  %v1252 = vpop.xlane.xlu0 %1251
  %v1253 = vmul.f32 %v1252, %v164
  %v1254 = vadd.f32 %v1253, 1e-05
  %v1255 = vrsqrt.pop %v1254
  %v1256 = vmul.f32 %v1248, %v1255
  %v1258 = vlaneseq
  %v1259 = vshrl.u32 %v1258, 7
  %v1260 = vsub.s32 0, %v1259
  %v1261 = vrot.slane %v1242, %v1260
  %v1263 = vmul.f32 %v1256, %v1261
  %v1265 = vlaneseq
  %v1266 = vshrl.u32 %v1265, 7
  %v1267 = vsub.s32 0, %v1266
  %v1268 = vrot.slane %v1243, %v1267
  %v1270 = vadd.f32 %v1263, %v1268
  %v1271 = vpack.c.bf16 %v1270, %v1270
  %v1272 = vld [vmem:[%s5] sm:$0xf]
  %v1273 = vld [vmem:[%s5 + $0x4] sm:$0xf]
  %v1276 = vunpack.c.l.b16 %v1272
  %v1277 = vunpack.c.l.b16 %v1273
  %v1278 = vpack.c.b16 %v1277, %v1276
  %v1281 = vsel %vm160, %v1271, 0
  %1283 = vmatprep.subr.bf16.mxu0 0
  %1284 = vmatpush1.bf16.msra.mxu0 0
  %1285 = vmatprep.subr.bf16.mxu0 0
  %1286 = vmatpush1.bf16.msra.mxu0 0
  %1287 = vmatprep.subr.bf16.mxu0 0
  %1288 = vmatpush1.bf16.msra.mxu0 0
  %1289 = vmatprep.subr.bf16.mxu0 0
  %1290 = vmatpush1.bf16.msra.mxu0 0
  %1291 = vmatprep.subr.bf16.mxu0 0
  %1292 = vmatpush1.bf16.msra.mxu0 0
  %1293 = vmatprep.subr.bf16.mxu0 0
  %1294 = vmatpush1.bf16.msra.mxu0 0
  %1295 = vmatprep.subr.bf16.mxu0 0
  %1296 = vmatpush1.bf16.msra.mxu0 0
  %1297 = vmatprep.subr.bf16.mxu0 0
  %1298 = vmatpush1.bf16.msra.mxu0 %v1278
  %1299 = vmatprep.subr.bf16.mxu0 0
  %1300 = vmatpush2.bf16.msra.mxu0 0
  %1301 = vmatprep.subr.bf16.mxu0 0
  %1302 = vmatpush2.bf16.msra.mxu0 0
  %1303 = vmatprep.subr.bf16.mxu0 0
  %1304 = vmatpush2.bf16.msra.mxu0 0
  %1305 = vmatprep.subr.bf16.mxu0 0
  %1306 = vmatpush2.bf16.msra.mxu0 0
  %1307 = vmatprep.subr.bf16.mxu0 0
  %1308 = vmatpush2.bf16.msra.mxu0 0
  %1309 = vmatprep.subr.bf16.mxu0 0
  %1310 = vmatpush2.bf16.msra.mxu0 0
  %1311 = vmatprep.subr.bf16.mxu0 0
  %1312 = vmatpush2.bf16.msra.mxu0 0
  %1313 = vmatprep.subr.bf16.mxu0 0
  %1314 = vmatpush2.bf16.msra.mxu0 0
  %1315 = vmatprep.mubr.bf16.mxu0 0
  %1316 = vmatmul.mubr.bf16.gmra.mxu0 %v1281
  %v1317 = vpop.f32.mrf.mxu0
  %v1318 = vadd.f32 0.0, %v1317
  %v1319 = vpop.f32.mrf.mxu0
  %v1320 = vpop.f32.mrf.mxu0
  %v1321 = vpop.f32.mrf.mxu0
  %1322 = vdwg.mxu0
  %s1323 = scalar_lea.vmem %s2, 40
  %v1324 = vld [vmem:[%s1323] sm:$0xff]
  %s1325 = scalar_lea.vmem %s1, 20
  %v1326 = vld [vmem:[%s1325] sm:$0xf]
  %v1327 = vunpack.c.l.bf16 %v1326
  %v1328 = vmul.f32 %v1318, %v1327
  %v1329 = vadd.f32 %v1324, %v1328
  %s1330 = scalar_lea.vmem %s6, 40
  %1331 = vst.msk [vmem:[%s1330] sm:$0xff] %vm160, %v1329
  %v1332 = vld [vmem:[%s0] sm:$0x8]
  %v1333 = vld [vmem:[%s0 + $0x4] sm:$0x8]
  %v1334 = vld [vmem:[%s0 + $0x8] sm:$0x8]
  %v1335 = vld [vmem:[%s0 + $0xc] sm:$0x8]
  %v1336 = vld [vmem:[%s0 + $0x10] sm:$0x8]
  %v1337 = vld [vmem:[%s0 + $0x14] sm:$0x8]
  %v1338 = vld [vmem:[%s0 + $0x18] sm:$0x8]
  %v1339 = vld [vmem:[%s0 + $0x1c] sm:$0x8]
  %v1340 = vld [vmem:[%s0 + $0x20] sm:$0x8]
  %v1341 = vld [vmem:[%s0 + $0x24] sm:$0x8]
  %v1342 = vld [vmem:[%s0 + $0x28] sm:$0x8]
  %v1343 = vld [vmem:[%s0 + $0x2c] sm:$0x8]
  %v1344 = vld [vmem:[%s0 + $0x30] sm:$0x8]
  %v1345 = vld [vmem:[%s0 + $0x34] sm:$0x8]
  %v1346 = vld [vmem:[%s0 + $0x38] sm:$0x8]
  %v1347 = vld [vmem:[%s0 + $0x3c] sm:$0x8]
  %v1364 = vunpack.c.l.b16 %v1332
  %v1365 = vunpack.c.l.b16 %v1333
  %v1366 = vunpack.c.l.b16 %v1334
  %v1367 = vunpack.c.l.b16 %v1335
  %v1368 = vunpack.c.l.b16 %v1336
  %v1369 = vunpack.c.l.b16 %v1337
  %v1370 = vunpack.c.l.b16 %v1338
  %v1371 = vunpack.c.l.b16 %v1339
  %v1372 = vunpack.c.l.b16 %v1340
  %v1373 = vunpack.c.l.b16 %v1341
  %v1374 = vunpack.c.l.b16 %v1342
  %v1375 = vunpack.c.l.b16 %v1343
  %v1376 = vunpack.c.l.b16 %v1344
  %v1377 = vunpack.c.l.b16 %v1345
  %v1378 = vunpack.c.l.b16 %v1346
  %v1379 = vunpack.c.l.b16 %v1347
  %v1380 = vpack.c.b16 %v1364, %v1364
  %v1381 = vpack.c.b16 %v1365, %v1365
  %v1382 = vpack.c.b16 %v1366, %v1366
  %v1383 = vpack.c.b16 %v1367, %v1367
  %v1384 = vpack.c.b16 %v1368, %v1368
  %v1385 = vpack.c.b16 %v1369, %v1369
  %v1386 = vpack.c.b16 %v1370, %v1370
  %v1387 = vpack.c.b16 %v1371, %v1371
  %v1388 = vpack.c.b16 %v1372, %v1372
  %v1389 = vpack.c.b16 %v1373, %v1373
  %v1390 = vpack.c.b16 %v1374, %v1374
  %v1391 = vpack.c.b16 %v1375, %v1375
  %v1392 = vpack.c.b16 %v1376, %v1376
  %v1393 = vpack.c.b16 %v1377, %v1377
  %v1394 = vpack.c.b16 %v1378, %v1378
  %v1395 = vpack.c.b16 %v1379, %v1379
  %v1396 = vunpack.c.l.b16 %v1380
  %v1397 = vunpack.c.l.b16 %v1381
  %v1398 = vunpack.c.l.b16 %v1382
  %v1399 = vunpack.c.l.b16 %v1383
  %v1400 = vunpack.c.l.b16 %v1384
  %v1401 = vunpack.c.l.b16 %v1385
  %v1402 = vunpack.c.l.b16 %v1386
  %v1403 = vunpack.c.l.b16 %v1387
  %v1404 = vunpack.c.l.b16 %v1388
  %v1405 = vunpack.c.l.b16 %v1389
  %v1406 = vunpack.c.l.b16 %v1390
  %v1407 = vunpack.c.l.b16 %v1391
  %v1408 = vunpack.c.l.b16 %v1392
  %v1409 = vunpack.c.l.b16 %v1393
  %v1410 = vunpack.c.l.b16 %v1394
  %v1411 = vunpack.c.l.b16 %v1395
  %v1412 = vrot.slane %v1396, 6
  %v1413 = vrot.slane %v1397, 5
  %v1414 = vsel %vm105, %v1413, %v1412
  %v1415 = vrot.slane %v1398, 4
  %v1416 = vsel %vm108, %v1415, %v1414
  %v1417 = vrot.slane %v1399, 3
  %v1418 = vsel %vm111, %v1417, %v1416
  %v1419 = vrot.slane %v1400, 2
  %v1420 = vsel %vm114, %v1419, %v1418
  %v1421 = vrot.slane %v1401, 1
  %v1422 = vsel %vm117, %v1421, %v1420
  %v1423 = vsel %vm120, %v1402, %v1422
  %v1424 = vrot.slane %v1403, 7
  %v1425 = vsel %vm123, %v1424, %v1423
  %v1426 = vrot.slane %v1404, 6
  %v1427 = vrot.slane %v1405, 5
  %v1428 = vsel %vm105, %v1427, %v1426
  %v1429 = vrot.slane %v1406, 4
  %v1430 = vsel %vm108, %v1429, %v1428
  %v1431 = vrot.slane %v1407, 3
  %v1432 = vsel %vm111, %v1431, %v1430
  %v1433 = vrot.slane %v1408, 2
  %v1434 = vsel %vm114, %v1433, %v1432
  %v1435 = vrot.slane %v1409, 1
  %v1436 = vsel %vm117, %v1435, %v1434
  %v1437 = vsel %vm120, %v1410, %v1436
  %v1438 = vrot.slane %v1411, 7
  %v1439 = vsel %vm123, %v1438, %v1437
  %v1440 = vpack.c.b16 %v1439, %v1425
  %1442 = vxpose.xlu0.c.b16.start [1/8] %v1440, 128
  %1443 = vxpose.xlu0.c.b16.cont [2/8] 0, 128
  %1444 = vxpose.xlu0.c.b16.cont [3/8] 0, 128
  %1445 = vxpose.xlu0.c.b16.cont [4/8] 0, 128
  %1446 = vxpose.xlu0.c.b16.cont [5/8] 0, 128
  %1447 = vxpose.xlu0.c.b16.cont [6/8] 0, 128
  %1448 = vxpose.xlu0.c.b16.cont [7/8] 0, 128
  %1449 = vxpose.xlu0.c.b16.end [8/8] 0, 128
  %v1450 = vpop.trf.xlu0
  %v1451 = vpop.trf.xlu0
  %v1452 = vpop.trf.xlu0
  %v1453 = vpop.trf.xlu0
  %v1454 = vpop.trf.xlu0
  %v1455 = vpop.trf.xlu0
  %v1456 = vpop.trf.xlu0
  %v1457 = vpop.trf.xlu0
  %v1458 = vunpack.c.l.bf16 %v1450
  %v1459 = vld [vmem:[%s3] sm:$0x1]
  %v1460 = vld [vmem:[%s4] sm:$0x1]
  %v1461 = vsel %vm160, %v1458, 0.0
  %1462 = vadd.xlane.f32.xlu0 %v1461
  %v1463 = vpop.xlane.xlu0 %1462
  %v1464 = vmul.f32 %v1463, %v164
  %v1465 = vsub.f32 %v1458, %v1464
  %v1466 = vmul.f32 %v1465, %v1465
  %v1467 = vsel %vm160, %v1466, 0.0
  %1468 = vadd.xlane.f32.xlu0 %v1467
  %v1469 = vpop.xlane.xlu0 %1468
  %v1470 = vmul.f32 %v1469, %v164
  %v1471 = vadd.f32 %v1470, 1e-05
  %v1472 = vrsqrt.pop %v1471
  %v1473 = vmul.f32 %v1465, %v1472
  %v1475 = vlaneseq
  %v1476 = vshrl.u32 %v1475, 7
  %v1477 = vsub.s32 0, %v1476
  %v1478 = vrot.slane %v1459, %v1477
  %v1480 = vmul.f32 %v1473, %v1478
  %v1482 = vlaneseq
  %v1483 = vshrl.u32 %v1482, 7
  %v1484 = vsub.s32 0, %v1483
  %v1485 = vrot.slane %v1460, %v1484
  %v1487 = vadd.f32 %v1480, %v1485
  %v1488 = vpack.c.bf16 %v1487, %v1487
  %v1489 = vld [vmem:[%s5] sm:$0xf]
  %v1490 = vld [vmem:[%s5 + $0x4] sm:$0xf]
  %v1493 = vunpack.c.l.b16 %v1489
  %v1494 = vunpack.c.l.b16 %v1490
  %v1495 = vpack.c.b16 %v1494, %v1493
  %v1498 = vsel %vm160, %v1488, 0
  %1500 = vmatprep.subr.bf16.mxu0 0
  %1501 = vmatpush1.bf16.msra.mxu0 0
  %1502 = vmatprep.subr.bf16.mxu0 0
  %1503 = vmatpush1.bf16.msra.mxu0 0
  %1504 = vmatprep.subr.bf16.mxu0 0
  %1505 = vmatpush1.bf16.msra.mxu0 0
  %1506 = vmatprep.subr.bf16.mxu0 0
  %1507 = vmatpush1.bf16.msra.mxu0 0
  %1508 = vmatprep.subr.bf16.mxu0 0
  %1509 = vmatpush1.bf16.msra.mxu0 0
  %1510 = vmatprep.subr.bf16.mxu0 0
  %1511 = vmatpush1.bf16.msra.mxu0 0
  %1512 = vmatprep.subr.bf16.mxu0 0
  %1513 = vmatpush1.bf16.msra.mxu0 0
  %1514 = vmatprep.subr.bf16.mxu0 0
  %1515 = vmatpush1.bf16.msra.mxu0 %v1495
  %1516 = vmatprep.subr.bf16.mxu0 0
  %1517 = vmatpush2.bf16.msra.mxu0 0
  %1518 = vmatprep.subr.bf16.mxu0 0
  %1519 = vmatpush2.bf16.msra.mxu0 0
  %1520 = vmatprep.subr.bf16.mxu0 0
  %1521 = vmatpush2.bf16.msra.mxu0 0
  %1522 = vmatprep.subr.bf16.mxu0 0
  %1523 = vmatpush2.bf16.msra.mxu0 0
  %1524 = vmatprep.subr.bf16.mxu0 0
  %1525 = vmatpush2.bf16.msra.mxu0 0
  %1526 = vmatprep.subr.bf16.mxu0 0
  %1527 = vmatpush2.bf16.msra.mxu0 0
  %1528 = vmatprep.subr.bf16.mxu0 0
  %1529 = vmatpush2.bf16.msra.mxu0 0
  %1530 = vmatprep.subr.bf16.mxu0 0
  %1531 = vmatpush2.bf16.msra.mxu0 0
  %1532 = vmatprep.mubr.bf16.mxu0 0
  %1533 = vmatmul.mubr.bf16.gmra.mxu0 %v1498
  %v1534 = vpop.f32.mrf.mxu0
  %v1535 = vadd.f32 0.0, %v1534
  %v1536 = vpop.f32.mrf.mxu0
  %v1537 = vpop.f32.mrf.mxu0
  %v1538 = vpop.f32.mrf.mxu0
  %1539 = vdwg.mxu0
  %s1540 = scalar_lea.vmem %s2, 48
  %v1541 = vld [vmem:[%s1540] sm:$0xff]
  %s1542 = scalar_lea.vmem %s1, 24
  %v1543 = vld [vmem:[%s1542] sm:$0xf]
  %v1544 = vunpack.c.l.bf16 %v1543
  %v1545 = vmul.f32 %v1535, %v1544
  %v1546 = vadd.f32 %v1541, %v1545
  %s1547 = scalar_lea.vmem %s6, 48
  %1548 = vst.msk [vmem:[%s1547] sm:$0xff] %vm160, %v1546
  %v1549 = vld [vmem:[%s0] sm:$0x8]
  %v1550 = vld [vmem:[%s0 + $0x4] sm:$0x8]
  %v1551 = vld [vmem:[%s0 + $0x8] sm:$0x8]
  %v1552 = vld [vmem:[%s0 + $0xc] sm:$0x8]
  %v1553 = vld [vmem:[%s0 + $0x10] sm:$0x8]
  %v1554 = vld [vmem:[%s0 + $0x14] sm:$0x8]
  %v1555 = vld [vmem:[%s0 + $0x18] sm:$0x8]
  %v1556 = vld [vmem:[%s0 + $0x1c] sm:$0x8]
  %v1557 = vld [vmem:[%s0 + $0x20] sm:$0x8]
  %v1558 = vld [vmem:[%s0 + $0x24] sm:$0x8]
  %v1559 = vld [vmem:[%s0 + $0x28] sm:$0x8]
  %v1560 = vld [vmem:[%s0 + $0x2c] sm:$0x8]
  %v1561 = vld [vmem:[%s0 + $0x30] sm:$0x8]
  %v1562 = vld [vmem:[%s0 + $0x34] sm:$0x8]
  %v1563 = vld [vmem:[%s0 + $0x38] sm:$0x8]
  %v1564 = vld [vmem:[%s0 + $0x3c] sm:$0x8]
  %v1581 = vunpack.c.l.b16 %v1549
  %v1582 = vunpack.c.l.b16 %v1550
  %v1583 = vunpack.c.l.b16 %v1551
  %v1584 = vunpack.c.l.b16 %v1552
  %v1585 = vunpack.c.l.b16 %v1553
  %v1586 = vunpack.c.l.b16 %v1554
  %v1587 = vunpack.c.l.b16 %v1555
  %v1588 = vunpack.c.l.b16 %v1556
  %v1589 = vunpack.c.l.b16 %v1557
  %v1590 = vunpack.c.l.b16 %v1558
  %v1591 = vunpack.c.l.b16 %v1559
  %v1592 = vunpack.c.l.b16 %v1560
  %v1593 = vunpack.c.l.b16 %v1561
  %v1594 = vunpack.c.l.b16 %v1562
  %v1595 = vunpack.c.l.b16 %v1563
  %v1596 = vunpack.c.l.b16 %v1564
  %v1597 = vpack.c.b16 %v1581, %v1581
  %v1598 = vpack.c.b16 %v1582, %v1582
  %v1599 = vpack.c.b16 %v1583, %v1583
  %v1600 = vpack.c.b16 %v1584, %v1584
  %v1601 = vpack.c.b16 %v1585, %v1585
  %v1602 = vpack.c.b16 %v1586, %v1586
  %v1603 = vpack.c.b16 %v1587, %v1587
  %v1604 = vpack.c.b16 %v1588, %v1588
  %v1605 = vpack.c.b16 %v1589, %v1589
  %v1606 = vpack.c.b16 %v1590, %v1590
  %v1607 = vpack.c.b16 %v1591, %v1591
  %v1608 = vpack.c.b16 %v1592, %v1592
  %v1609 = vpack.c.b16 %v1593, %v1593
  %v1610 = vpack.c.b16 %v1594, %v1594
  %v1611 = vpack.c.b16 %v1595, %v1595
  %v1612 = vpack.c.b16 %v1596, %v1596
  %v1613 = vunpack.c.l.b16 %v1597
  %v1614 = vunpack.c.l.b16 %v1598
  %v1615 = vunpack.c.l.b16 %v1599
  %v1616 = vunpack.c.l.b16 %v1600
  %v1617 = vunpack.c.l.b16 %v1601
  %v1618 = vunpack.c.l.b16 %v1602
  %v1619 = vunpack.c.l.b16 %v1603
  %v1620 = vunpack.c.l.b16 %v1604
  %v1621 = vunpack.c.l.b16 %v1605
  %v1622 = vunpack.c.l.b16 %v1606
  %v1623 = vunpack.c.l.b16 %v1607
  %v1624 = vunpack.c.l.b16 %v1608
  %v1625 = vunpack.c.l.b16 %v1609
  %v1626 = vunpack.c.l.b16 %v1610
  %v1627 = vunpack.c.l.b16 %v1611
  %v1628 = vunpack.c.l.b16 %v1612
  %v1629 = vrot.slane %v1613, 7
  %v1630 = vrot.slane %v1614, 6
  %v1631 = vsel %vm105, %v1630, %v1629
  %v1632 = vrot.slane %v1615, 5
  %v1633 = vsel %vm108, %v1632, %v1631
  %v1634 = vrot.slane %v1616, 4
  %v1635 = vsel %vm111, %v1634, %v1633
  %v1636 = vrot.slane %v1617, 3
  %v1637 = vsel %vm114, %v1636, %v1635
  %v1638 = vrot.slane %v1618, 2
  %v1639 = vsel %vm117, %v1638, %v1637
  %v1640 = vrot.slane %v1619, 1
  %v1641 = vsel %vm120, %v1640, %v1639
  %v1642 = vsel %vm123, %v1620, %v1641
  %v1643 = vrot.slane %v1621, 7
  %v1644 = vrot.slane %v1622, 6
  %v1645 = vsel %vm105, %v1644, %v1643
  %v1646 = vrot.slane %v1623, 5
  %v1647 = vsel %vm108, %v1646, %v1645
  %v1648 = vrot.slane %v1624, 4
  %v1649 = vsel %vm111, %v1648, %v1647
  %v1650 = vrot.slane %v1625, 3
  %v1651 = vsel %vm114, %v1650, %v1649
  %v1652 = vrot.slane %v1626, 2
  %v1653 = vsel %vm117, %v1652, %v1651
  %v1654 = vrot.slane %v1627, 1
  %v1655 = vsel %vm120, %v1654, %v1653
  %v1656 = vsel %vm123, %v1628, %v1655
  %v1657 = vpack.c.b16 %v1656, %v1642
  %1659 = vxpose.xlu0.c.b16.start [1/8] %v1657, 128
  %1660 = vxpose.xlu0.c.b16.cont [2/8] 0, 128
  %1661 = vxpose.xlu0.c.b16.cont [3/8] 0, 128
  %1662 = vxpose.xlu0.c.b16.cont [4/8] 0, 128
  %1663 = vxpose.xlu0.c.b16.cont [5/8] 0, 128
  %1664 = vxpose.xlu0.c.b16.cont [6/8] 0, 128
  %1665 = vxpose.xlu0.c.b16.cont [7/8] 0, 128
  %1666 = vxpose.xlu0.c.b16.end [8/8] 0, 128
  %v1667 = vpop.trf.xlu0
  %v1668 = vpop.trf.xlu0
  %v1669 = vpop.trf.xlu0
  %v1670 = vpop.trf.xlu0
  %v1671 = vpop.trf.xlu0
  %v1672 = vpop.trf.xlu0
  %v1673 = vpop.trf.xlu0
  %v1674 = vpop.trf.xlu0
  %v1675 = vunpack.c.l.bf16 %v1667
  %v1676 = vld [vmem:[%s3] sm:$0x1]
  %v1677 = vld [vmem:[%s4] sm:$0x1]
  %v1678 = vsel %vm160, %v1675, 0.0
  %1679 = vadd.xlane.f32.xlu0 %v1678
  %v1680 = vpop.xlane.xlu0 %1679
  %v1681 = vmul.f32 %v1680, %v164
  %v1682 = vsub.f32 %v1675, %v1681
  %v1683 = vmul.f32 %v1682, %v1682
  %v1684 = vsel %vm160, %v1683, 0.0
  %1685 = vadd.xlane.f32.xlu0 %v1684
  %v1686 = vpop.xlane.xlu0 %1685
  %v1687 = vmul.f32 %v1686, %v164
  %v1688 = vadd.f32 %v1687, 1e-05
  %v1689 = vrsqrt.pop %v1688
  %v1690 = vmul.f32 %v1682, %v1689
  %v1692 = vlaneseq
  %v1693 = vshrl.u32 %v1692, 7
  %v1694 = vsub.s32 0, %v1693
  %v1695 = vrot.slane %v1676, %v1694
  %v1697 = vmul.f32 %v1690, %v1695
  %v1699 = vlaneseq
  %v1700 = vshrl.u32 %v1699, 7
  %v1701 = vsub.s32 0, %v1700
  %v1702 = vrot.slane %v1677, %v1701
  %v1704 = vadd.f32 %v1697, %v1702
  %v1705 = vpack.c.bf16 %v1704, %v1704
  %v1706 = vld [vmem:[%s5] sm:$0xf]
  %v1707 = vld [vmem:[%s5 + $0x4] sm:$0xf]
  %v1710 = vunpack.c.l.b16 %v1706
  %v1711 = vunpack.c.l.b16 %v1707
  %v1712 = vpack.c.b16 %v1711, %v1710
  %v1715 = vsel %vm160, %v1705, 0
  %1717 = vmatprep.subr.bf16.mxu0 0
  %1718 = vmatpush1.bf16.msra.mxu0 0
  %1719 = vmatprep.subr.bf16.mxu0 0
  %1720 = vmatpush1.bf16.msra.mxu0 0
  %1721 = vmatprep.subr.bf16.mxu0 0
  %1722 = vmatpush1.bf16.msra.mxu0 0
  %1723 = vmatprep.subr.bf16.mxu0 0
  %1724 = vmatpush1.bf16.msra.mxu0 0
  %1725 = vmatprep.subr.bf16.mxu0 0
  %1726 = vmatpush1.bf16.msra.mxu0 0
  %1727 = vmatprep.subr.bf16.mxu0 0
  %1728 = vmatpush1.bf16.msra.mxu0 0
  %1729 = vmatprep.subr.bf16.mxu0 0
  %1730 = vmatpush1.bf16.msra.mxu0 0
  %1731 = vmatprep.subr.bf16.mxu0 0
  %1732 = vmatpush1.bf16.msra.mxu0 %v1712
  %1733 = vmatprep.subr.bf16.mxu0 0
  %1734 = vmatpush2.bf16.msra.mxu0 0
  %1735 = vmatprep.subr.bf16.mxu0 0
  %1736 = vmatpush2.bf16.msra.mxu0 0
  %1737 = vmatprep.subr.bf16.mxu0 0
  %1738 = vmatpush2.bf16.msra.mxu0 0
  %1739 = vmatprep.subr.bf16.mxu0 0
  %1740 = vmatpush2.bf16.msra.mxu0 0
  %1741 = vmatprep.subr.bf16.mxu0 0
  %1742 = vmatpush2.bf16.msra.mxu0 0
  %1743 = vmatprep.subr.bf16.mxu0 0
  %1744 = vmatpush2.bf16.msra.mxu0 0
  %1745 = vmatprep.subr.bf16.mxu0 0
  %1746 = vmatpush2.bf16.msra.mxu0 0
  %1747 = vmatprep.subr.bf16.mxu0 0
  %1748 = vmatpush2.bf16.msra.mxu0 0
  %1749 = vmatprep.mubr.bf16.mxu0 0
  %1750 = vmatmul.mubr.bf16.gmra.mxu0 %v1715
  %v1751 = vpop.f32.mrf.mxu0
  %v1752 = vadd.f32 0.0, %v1751
  %v1753 = vpop.f32.mrf.mxu0
  %v1754 = vpop.f32.mrf.mxu0
  %v1755 = vpop.f32.mrf.mxu0
  %1756 = vdwg.mxu0
  %s1757 = scalar_lea.vmem %s2, 56
  %v1758 = vld [vmem:[%s1757] sm:$0xff]
  %s1759 = scalar_lea.vmem %s1, 28
  %v1760 = vld [vmem:[%s1759] sm:$0xf]
  %v1761 = vunpack.c.l.bf16 %v1760
  %v1762 = vmul.f32 %v1752, %v1761
  %v1763 = vadd.f32 %v1758, %v1762
  %s1764 = scalar_lea.vmem %s6, 56
  %1765 = vst.msk [vmem:[%s1764] sm:$0xff] %vm160, %v1763
  // Predicated region
  $region26: #{triangle_block.15} parent=0 // pred_check
    _
  $region27: #{triangle_block.15} parent=0 // pred_check_branch
    %1767 = sbr.rel (0) target = $region29
  $region28: #{triangle_block.15} parent=0 // pred_region
    _
  $region29: #{triangle_block.15} parent=0 // pred_fallthru
    _
  // Predicated region
  $region30: #{triangle_block.15} parent=0 // pred_check
    _
  $region31: #{triangle_block.15} parent=0 // pred_check_branch
    %1769 = sbr.rel (0) target = $region33
  $region32: #{triangle_block.15} parent=0 // pred_region
    _
  $region33: #{triangle_block.15} parent=0 // pred_fallthru
    _

// kernel: triangle_block.20
$region0: #{triangle_block.20}
  #allocation0 [shape = 'u32[]', space=smem, size = 0x4, offset = 0x4, fixed_abs, tag = 'smem constant byte address 0x4 - core index']
  #allocation1 [shape = 'u32[144,128]{1,0:T(1,128)}', space=vmem, size = 0x12000, scoped, tag = 'internal scratch']
  #allocation2 [shape = 'f32[8,8,1]{2,1,0:T(8,128)}', space=vmem, size = 0x8000, scoped, tag = 'scratch operand']
  #allocation3 [shape = 'f32[8,8,1]{2,1,0:T(8,128)}', space=vmem, size = 0x8000, scoped, tag = 'scratch operand']
  #allocation4 [shape = 'f32[8,8,4]{2,1,0:T(8,128)}', space=vmem, size = 0x8000, scoped, tag = 'scratch operand']
  %s0 = inlined_call_operand.vmem [shape: bf16[4,8,8,4], index: 0, kind: input, shape index: {}]
  %s1 = inlined_call_operand.vmem [shape: bf16[4,8,8,4], index: 1, kind: input, shape index: {}]
  %s2 = inlined_call_operand.vmem [shape: bf16[4,8,8,4], index: 2, kind: input, shape index: {}]
  %s3 = inlined_call_operand.vmem [shape: bf16[4,8,8], index: 3, kind: input, shape index: {}]
  %s4 = inlined_call_operand.vmem [shape: f32[8,8], index: 4, kind: input, shape index: {}]
  %s5 = inlined_call_operand.vmem [shape: bf16[4,8,8,4], index: 5, kind: input, shape index: {}]
  %s6 = inlined_call_operand.vmem [shape: bf16[4,8,8,4], index: 6, kind: output, shape index: {}]
  %s7 = sld [smem:[#allocation0]]
  $region65: #{triangle_block.20} parent=0
    _
  %s9 = ssub.s32 1, %s7
  %s10 = scalar_select 0, %s9, %s7
  loop: start=0, step=1, limit=6
  $region2: #{triangle_block.20} parent=0 // loop_pre_header
    _
  $region3: #{triangle_block.20} parent=0 // loop_header
    %s12 = sphi 0, %s16
    %p13 = scmp.ge.s32.totalorder %s12, 6
    %s19 = sphi 0, %s38
    %s20 = sphi 0, %s34
    %s21 = sphi 0, %s30
    %s22 = sphi 0, %s19
    %s23 = sphi 0, %s20
    %s24 = sphi 0, %s21
    %s25 = sphi 0, %s22
    %s26 = sphi 0, %s23
    %s27 = sphi 0, %s24
    %s43 = sphi 0, %s45
    %s46 = sphi 0, %s43
    %s47 = sphi 0, %s46
    %s63 = sphi 0, %s47
    %s73 = sphi 0, %s75
    %s76 = sphi 0, %s73
    %s77 = sphi 0, %s76
    %s93 = sphi 0, %s77
    %s103 = sphi 0, %s105
    %s106 = sphi 0, %s103
    %s107 = sphi 0, %s106
    %s123 = sphi 0, %s107
    %s131 = sphi 0, %s133
    %s134 = sphi 0, %s131
    %s135 = sphi 0, %s134
    %s151 = sphi 0, %s135
    %s159 = sphi 0, %s161
    %s162 = sphi 0, %s159
    %s163 = sphi 0, %s162
    %s179 = sphi 0, %s163
    %s187 = sphi 0, %s189
    %s190 = sphi 0, %s187
    %s191 = sphi 0, %s190
    %s207 = sphi 0, %s191
    %s215 = sphi 0, %s217
    %s218 = sphi 0, %s215
    %s219 = sphi 0, %s218
    %s235 = sphi 0, %s219
  $region4: #{triangle_block.20} parent=0 // loop_header_branch
    %15 = sbr.rel (%p13) target = $region8
  $region5: #{triangle_block.20} parent=0 // loop_body
    %s17 = ssub.s32 %s12, 1
    %s18 = ssub.s32 %s12, 2
    %s28 = sadd.s32 1, %s21
    %p29 = scmp.ge.s32.totalorder %s28, 1
    %s30 = scalar_select %p29, 0, %s28
    %s31 = sadd.s32 1, %s20
    %s32 = scalar_select %p29, %s31, %s20
    %p33 = scmp.ge.s32.totalorder %s32, 1
    %s34 = scalar_select %p33, 0, %s32
    %s35 = sadd.s32 1, %s19
    %s36 = scalar_select %p33, %s35, %s19
    %p37 = scmp.ge.s32.totalorder %s36, 4
    %s38 = scalar_select %p37, 0, %s36
    %s39 = ssub.s32 %s19, %s38
    %s40 = ssub.s32 %s20, %s34
    %s41 = sor.u32 %s39, %s40
    %p42 = scmp.eq.s32.totalorder %s41, 0
    %s44 = sadd.s32 %s43, 1
    %s45 = scalar_select %p42, %s43, %s44
    %p48 = pneg %p42
    %p49 = scmp.eq.s32.totalorder %s12, 3
    %p50 = por %p48, %p49
    %p51 = scmp.ne.s32.totalorder %s43, %s46
    %p52 = scmp.eq.s32.totalorder %s12, 0
    %p53 = por %p51, %p52
    %p54 = scmp.ne.s32.totalorder %s43, %s46
    %p55 = scmp.eq.s32.totalorder %s17, 3
    %p56 = por %p54, %p55
    %p57 = scmp.ne.s32.totalorder %s46, %s47
    %p58 = scmp.eq.s32.totalorder %s17, 0
    %p59 = por %p57, %p58
    %p60 = scmp.ne.s32.totalorder %s46, %s47
    %p61 = scmp.eq.s32.totalorder %s18, 3
    %p62 = por %p60, %p61
    %p64 = scmp.ne.s32.totalorder %s47, %s63
    %p65 = scmp.eq.s32.totalorder %s18, 0
    %p66 = por %p64, %p65
    %s67 = ssub.s32 %s19, %s38
    %s68 = ssub.s32 %s20, %s34
    %s69 = sor.u32 %s67, %s68
    %s70 = ssub.s32 %s21, %s30
    %s71 = sor.u32 %s69, %s70
    %p72 = scmp.eq.s32.totalorder %s71, 0
    %s74 = sadd.s32 %s73, 1
    %s75 = scalar_select %p72, %s73, %s74
    %p78 = pneg %p72
    %p79 = scmp.eq.s32.totalorder %s12, 3
    %p80 = por %p78, %p79
    %p81 = scmp.ne.s32.totalorder %s73, %s76
    %p82 = scmp.eq.s32.totalorder %s12, 0
    %p83 = por %p81, %p82
    %p84 = scmp.ne.s32.totalorder %s73, %s76
    %p85 = scmp.eq.s32.totalorder %s17, 3
    %p86 = por %p84, %p85
    %p87 = scmp.ne.s32.totalorder %s76, %s77
    %p88 = scmp.eq.s32.totalorder %s17, 0
    %p89 = por %p87, %p88
    %p90 = scmp.ne.s32.totalorder %s76, %s77
    %p91 = scmp.eq.s32.totalorder %s18, 3
    %p92 = por %p90, %p91
    %p94 = scmp.ne.s32.totalorder %s77, %s93
    %p95 = scmp.eq.s32.totalorder %s18, 0
    %p96 = por %p94, %p95
    %s97 = ssub.s32 %s19, %s38
    %s98 = ssub.s32 %s20, %s34
    %s99 = sor.u32 %s97, %s98
    %s100 = ssub.s32 %s21, %s30
    %s101 = sor.u32 %s99, %s100
    %p102 = scmp.eq.s32.totalorder %s101, 0
    %s104 = sadd.s32 %s103, 1
    %s105 = scalar_select %p102, %s103, %s104
    %p108 = pneg %p102
    %p109 = scmp.eq.s32.totalorder %s12, 3
    %p110 = por %p108, %p109
    %p111 = scmp.ne.s32.totalorder %s103, %s106
    %p112 = scmp.eq.s32.totalorder %s12, 0
    %p113 = por %p111, %p112
    %p114 = scmp.ne.s32.totalorder %s103, %s106
    %p115 = scmp.eq.s32.totalorder %s17, 3
    %p116 = por %p114, %p115
    %p117 = scmp.ne.s32.totalorder %s106, %s107
    %p118 = scmp.eq.s32.totalorder %s17, 0
    %p119 = por %p117, %p118
    %p120 = scmp.ne.s32.totalorder %s106, %s107
    %p121 = scmp.eq.s32.totalorder %s18, 3
    %p122 = por %p120, %p121
    %p124 = scmp.ne.s32.totalorder %s107, %s123
    %p125 = scmp.eq.s32.totalorder %s18, 0
    %p126 = por %p124, %p125
    %s127 = ssub.s32 %s19, %s38
    %s128 = ssub.s32 %s21, %s30
    %s129 = sor.u32 %s127, %s128
    %p130 = scmp.eq.s32.totalorder %s129, 0
    %s132 = sadd.s32 %s131, 1
    %s133 = scalar_select %p130, %s131, %s132
    %p136 = pneg %p130
    %p137 = scmp.eq.s32.totalorder %s12, 3
    %p138 = por %p136, %p137
    %p139 = scmp.ne.s32.totalorder %s131, %s134
    %p140 = scmp.eq.s32.totalorder %s12, 0
    %p141 = por %p139, %p140
    %p142 = scmp.ne.s32.totalorder %s131, %s134
    %p143 = scmp.eq.s32.totalorder %s17, 3
    %p144 = por %p142, %p143
    %p145 = scmp.ne.s32.totalorder %s134, %s135
    %p146 = scmp.eq.s32.totalorder %s17, 0
    %p147 = por %p145, %p146
    %p148 = scmp.ne.s32.totalorder %s134, %s135
    %p149 = scmp.eq.s32.totalorder %s18, 3
    %p150 = por %p148, %p149
    %p152 = scmp.ne.s32.totalorder %s135, %s151
    %p153 = scmp.eq.s32.totalorder %s18, 0
    %p154 = por %p152, %p153
    %s155 = ssub.s32 %s20, %s34
    %s156 = ssub.s32 %s21, %s30
    %s157 = sor.u32 %s155, %s156
    %p158 = scmp.eq.s32.totalorder %s157, 0
    %s160 = sadd.s32 %s159, 1
    %s161 = scalar_select %p158, %s159, %s160
    %p164 = pneg %p158
    %p165 = scmp.eq.s32.totalorder %s12, 3
    %p166 = por %p164, %p165
    %p167 = scmp.ne.s32.totalorder %s159, %s162
    %p168 = scmp.eq.s32.totalorder %s12, 0
    %p169 = por %p167, %p168
    %p170 = scmp.ne.s32.totalorder %s159, %s162
    %p171 = scmp.eq.s32.totalorder %s17, 3
    %p172 = por %p170, %p171
    %p173 = scmp.ne.s32.totalorder %s162, %s163
    %p174 = scmp.eq.s32.totalorder %s17, 0
    %p175 = por %p173, %p174
    %p176 = scmp.ne.s32.totalorder %s162, %s163
    %p177 = scmp.eq.s32.totalorder %s18, 3
    %p178 = por %p176, %p177
    %p180 = scmp.ne.s32.totalorder %s163, %s179
    %p181 = scmp.eq.s32.totalorder %s18, 0
    %p182 = por %p180, %p181
    %s183 = ssub.s32 %s19, %s38
    %s184 = ssub.s32 %s20, %s34
    %s185 = sor.u32 %s183, %s184
    %p186 = scmp.eq.s32.totalorder %s185, 0
    %s188 = sadd.s32 %s187, 1
    %s189 = scalar_select %p186, %s187, %s188
    %p192 = pneg %p186
    %p193 = scmp.eq.s32.totalorder %s12, 3
    %p194 = por %p192, %p193
    %p195 = scmp.ne.s32.totalorder %s187, %s190
    %p196 = scmp.eq.s32.totalorder %s12, 0
    %p197 = por %p195, %p196
    %p198 = scmp.ne.s32.totalorder %s187, %s190
    %p199 = scmp.eq.s32.totalorder %s17, 3
    %p200 = por %p198, %p199
    %p201 = scmp.ne.s32.totalorder %s190, %s191
    %p202 = scmp.eq.s32.totalorder %s17, 0
    %p203 = por %p201, %p202
    %p204 = scmp.ne.s32.totalorder %s190, %s191
    %p205 = scmp.eq.s32.totalorder %s18, 3
    %p206 = por %p204, %p205
    %p208 = scmp.ne.s32.totalorder %s191, %s207
    %p209 = scmp.eq.s32.totalorder %s18, 0
    %p210 = por %p208, %p209
    %s211 = ssub.s32 %s19, %s38
    %s212 = ssub.s32 %s20, %s34
    %s213 = sor.u32 %s211, %s212
    %p214 = scmp.eq.s32.totalorder %s213, 0
    %s216 = sadd.s32 %s215, 1
    %s217 = scalar_select %p214, %s215, %s216
    %p220 = pneg %p214
    %p221 = scmp.eq.s32.totalorder %s12, 3
    %p222 = por %p220, %p221
    %p223 = scmp.ne.s32.totalorder %s215, %s218
    %p224 = scmp.eq.s32.totalorder %s12, 0
    %p225 = por %p223, %p224
    %p226 = scmp.ne.s32.totalorder %s215, %s218
    %p227 = scmp.eq.s32.totalorder %s17, 3
    %p228 = por %p226, %p227
    %p229 = scmp.ne.s32.totalorder %s218, %s219
    %p230 = scmp.eq.s32.totalorder %s17, 0
    %p231 = por %p229, %p230
    %p232 = scmp.ne.s32.totalorder %s218, %s219
    %p233 = scmp.eq.s32.totalorder %s18, 3
    %p234 = por %p232, %p233
    %p236 = scmp.ne.s32.totalorder %s219, %s235
    %p237 = scmp.eq.s32.totalorder %s18, 0
    %p238 = por %p236, %p237
    %p239 = scmp.le.s32.totalorder 1, %s12
    %p240 = scmp.lt.s32.totalorder %s12, 5
    %p241 = pnand %p239, %p240
    %p242 = pneg %p241
    // Predicated region
    $region9: #{triangle_block.20} parent=5 // pred_check
      _
    $region10: #{triangle_block.20} parent=5 // pred_check_branch
      %244 = sbr.rel (%p241) target = $region12
    $region11: #{triangle_block.20} parent=5 // pred_region
      %s245 = ssub.s32 %s12, 1
      // Predicated region
      $region13: #{triangle_block.20} parent=11 // pred_check
        %p246 = pneg %p175
      $region14: #{triangle_block.20} parent=11 // pred_check_branch
        %248 = sbr.rel (%p246) target = $region16
      $region15: #{triangle_block.20} parent=11 // pred_region
        %p249 = scmp.lt.s32.totalorder %s23, 0
        %s250 = scalar_select %p249, %s23, 0
        %p251 = scmp.lt.s32.totalorder %s24, 0
        %s252 = scalar_select %p251, %s24, 0
        %s253 = sadd.s32 %s252, %s250
        %s254 = smul.addr %s253, 8
        %s255 = scalar_lea.vmem %s4, %s254
      $region16: #{triangle_block.20} parent=11 // pred_fallthru
        _
    $region12: #{triangle_block.20} parent=5 // pred_fallthru
      _
    %p256 = scmp.lt.s32.totalorder %s12, 4
    // Predicated region
    $region17: #{triangle_block.20} parent=5 // pred_check
      %p257 = pneg %p256
    $region18: #{triangle_block.20} parent=5 // pred_check_branch
      %259 = sbr.rel (%p257) target = $region20
    $region19: #{triangle_block.20} parent=5 // pred_region
      // Predicated region
      $region21: #{triangle_block.20} parent=19 // pred_check
        %p260 = pneg %p53
      $region22: #{triangle_block.20} parent=19 // pred_check_branch
        %262 = sbr.rel (%p260) target = $region24
      $region23: #{triangle_block.20} parent=19 // pred_region
        %s263 = smul.u32 8, %s20
        %p264 = scmp.lt.s32.totalorder %s19, 3
        %s265 = scalar_select %p264, %s19, 3
        %p266 = scmp.lt.s32.totalorder %s263, 7
        %s267 = scalar_select %p266, %s263, 7
        %s268 = smul.addr %s265, 8
        %s269 = sadd.s32 %s267, %s268
        %s270 = smul.addr %s269, 4
        %s271 = scalar_lea.vmem %s0, %s270
        %s272 = smul.u32 8, %s20
      $region24: #{triangle_block.20} parent=19 // pred_fallthru
        _
      // Predicated region
      $region25: #{triangle_block.20} parent=19 // pred_check
        %p273 = pneg %p83
      $region26: #{triangle_block.20} parent=19 // pred_check_branch
        %275 = sbr.rel (%p273) target = $region28
      $region27: #{triangle_block.20} parent=19 // pred_region
        %s276 = smul.u32 8, %s20
        %p277 = scmp.lt.s32.totalorder %s19, 3
        %s278 = scalar_select %p277, %s19, 3
        %p279 = scmp.lt.s32.totalorder %s276, 7
        %s280 = scalar_select %p279, %s276, 7
        %p281 = scmp.lt.s32.totalorder %s21, 0
        %s282 = scalar_select %p281, %s21, 0
        %s283 = sadd.s32 %s282, %s280
        %s284 = smul.addr %s278, 8
        %s285 = sadd.s32 %s283, %s284
        %s286 = smul.addr %s285, 4
        %s287 = scalar_lea.vmem %s1, %s286
        %s288 = smul.u32 8, %s20
      $region28: #{triangle_block.20} parent=19 // pred_fallthru
        _
      // Predicated region
      $region29: #{triangle_block.20} parent=19 // pred_check
        %p289 = pneg %p113
      $region30: #{triangle_block.20} parent=19 // pred_check_branch
        %291 = sbr.rel (%p289) target = $region32
      $region31: #{triangle_block.20} parent=19 // pred_region
        %s292 = smul.u32 8, %s20
        %p293 = scmp.lt.s32.totalorder %s19, 3
        %s294 = scalar_select %p293, %s19, 3
        %p295 = scmp.lt.s32.totalorder %s292, 7
        %s296 = scalar_select %p295, %s292, 7
        %p297 = scmp.lt.s32.totalorder %s21, 0
        %s298 = scalar_select %p297, %s21, 0
        %s299 = sadd.s32 %s298, %s296
        %s300 = smul.addr %s294, 8
        %s301 = sadd.s32 %s299, %s300
        %s302 = smul.addr %s301, 4
        %s303 = scalar_lea.vmem %s2, %s302
        %s304 = smul.u32 8, %s20
      $region32: #{triangle_block.20} parent=19 // pred_fallthru
        _
      // Predicated region
      $region33: #{triangle_block.20} parent=19 // pred_check
        %p305 = pneg %p141
      $region34: #{triangle_block.20} parent=19 // pred_check_branch
        %307 = sbr.rel (%p305) target = $region36
      $region35: #{triangle_block.20} parent=19 // pred_region
        %p308 = scmp.lt.s32.totalorder %s19, 3
        %s309 = scalar_select %p308, %s19, 3
        %p310 = scmp.lt.s32.totalorder %s21, 0
        %s311 = scalar_select %p310, %s21, 0
        %s312 = sadd.s32 %s311, %s309
        %s313 = smul.addr %s312, 4
        %s314 = scalar_lea.vmem %s3, %s313
      $region36: #{triangle_block.20} parent=19 // pred_fallthru
        _
      // Predicated region
      $region37: #{triangle_block.20} parent=19 // pred_check
        %p315 = pneg %p197
      $region38: #{triangle_block.20} parent=19 // pred_check_branch
        %317 = sbr.rel (%p315) target = $region40
      $region39: #{triangle_block.20} parent=19 // pred_region
        %s318 = smul.u32 8, %s20
        %p319 = scmp.lt.s32.totalorder %s19, 3
        %s320 = scalar_select %p319, %s19, 3
        %p321 = scmp.lt.s32.totalorder %s318, 7
        %s322 = scalar_select %p321, %s318, 7
        %s323 = smul.addr %s320, 8
        %s324 = sadd.s32 %s322, %s323
        %s325 = smul.addr %s324, 4
        %s326 = scalar_lea.vmem %s5, %s325
        %s327 = smul.u32 8, %s20
      $region40: #{triangle_block.20} parent=19 // pred_fallthru
        _
    $region20: #{triangle_block.20} parent=5 // pred_fallthru
      _
    %p328 = scmp.le.s32.totalorder 1, %s12
    %p329 = scmp.lt.s32.totalorder %s12, 5
    %p330 = pnand %p328, %p329
    %p331 = pneg %p330
    // Predicated region
    $region41: #{triangle_block.20} parent=5 // pred_check
      _
    $region42: #{triangle_block.20} parent=5 // pred_check_branch
      %333 = sbr.rel (%p330) target = $region44
    $region43: #{triangle_block.20} parent=5 // pred_region
      %s334 = ssub.s32 %s12, 1
      %s335 = smul.u32 8, %s23
      %p336 = scmp.lt.s32.totalorder %s22, 3
      %s337 = scalar_select %p336, %s22, 3
      %p338 = scmp.lt.s32.totalorder %s335, 7
      %s339 = scalar_select %p338, %s335, 7
      %s340 = smul.addr %s337, 8
      %s341 = sadd.s32 %s339, %s340
      %s342 = smul.addr %s341, 4
      %s343 = scalar_lea.vmem %s0, %s342
      %p344 = pneg %p59
      %p345 = pneg %p56
      %s346 = smul.u32 8, %s23
      %p347 = scmp.lt.s32.totalorder %s22, 3
      %s348 = scalar_select %p347, %s22, 3
      %p349 = scmp.lt.s32.totalorder %s346, 7
      %s350 = scalar_select %p349, %s346, 7
      %p351 = scmp.lt.s32.totalorder %s24, 0
      %s352 = scalar_select %p351, %s24, 0
      %s353 = sadd.s32 %s352, %s350
      %s354 = smul.addr %s348, 8
      %s355 = sadd.s32 %s353, %s354
      %s356 = smul.addr %s355, 4
      %s357 = scalar_lea.vmem %s1, %s356
      %p358 = pneg %p89
      %p359 = pneg %p86
      %s360 = smul.u32 8, %s23
      %p361 = scmp.lt.s32.totalorder %s22, 3
      %s362 = scalar_select %p361, %s22, 3
      %p363 = scmp.lt.s32.totalorder %s360, 7
      %s364 = scalar_select %p363, %s360, 7
      %p365 = scmp.lt.s32.totalorder %s24, 0
      %s366 = scalar_select %p365, %s24, 0
      %s367 = sadd.s32 %s366, %s364
      %s368 = smul.addr %s362, 8
      %s369 = sadd.s32 %s367, %s368
      %s370 = smul.addr %s369, 4
      %s371 = scalar_lea.vmem %s2, %s370
      %p372 = pneg %p119
      %p373 = pneg %p116
      %p374 = scmp.lt.s32.totalorder %s22, 3
      %s375 = scalar_select %p374, %s22, 3
      %p376 = scmp.lt.s32.totalorder %s24, 0
      %s377 = scalar_select %p376, %s24, 0
      %s378 = sadd.s32 %s377, %s375
      %s379 = smul.addr %s378, 4
      %s380 = scalar_lea.vmem %s3, %s379
      %p381 = pneg %p147
      %p382 = pneg %p144
      %p383 = scmp.lt.s32.totalorder %s23, 0
      %s384 = scalar_select %p383, %s23, 0
      %p385 = scmp.lt.s32.totalorder %s24, 0
      %s386 = scalar_select %p385, %s24, 0
      %s387 = sadd.s32 %s386, %s384
      %s388 = smul.addr %s387, 8
      %s389 = scalar_lea.vmem %s4, %s388
      %p390 = pneg %p175
      %p391 = pneg %p172
      %s392 = smul.u32 8, %s23
      %p393 = scmp.lt.s32.totalorder %s22, 3
      %s394 = scalar_select %p393, %s22, 3
      %p395 = scmp.lt.s32.totalorder %s392, 7
      %s396 = scalar_select %p395, %s392, 7
      %s397 = smul.addr %s394, 8
      %s398 = sadd.s32 %s396, %s397
      %s399 = smul.addr %s398, 4
      %s400 = scalar_lea.vmem %s5, %s399
      %p401 = pneg %p203
      %p402 = pneg %p200
      %p403 = pneg %p231
      %p404 = pneg %p228
      %s405 = smul.u32 8, %s23
      %p406 = scmp.lt.s32.totalorder %s22, 3
      %s407 = scalar_select %p406, %s22, 3
      %p408 = scmp.lt.s32.totalorder %s405, 7
      %s409 = scalar_select %p408, %s405, 7
      %s410 = smul.addr %s407, 8
      %s411 = sadd.s32 %s409, %s410
      %s412 = smul.addr %s411, 4
      %s413 = scalar_lea.vmem %s6, %s412
      %s414 = smul.u32 8, %s23
      %p415 = scmp.lt.s32.totalorder %s22, 3
      %s416 = scalar_select %p415, %s22, 3
      %p417 = scmp.lt.s32.totalorder %s414, 7
      %s418 = scalar_select %p417, %s414, 7
      %s419 = smul.addr %s416, 8
      %s420 = sadd.s32 %s418, %s419
      %s421 = smul.addr %s420, 4
      %s422 = scalar_lea.vmem %s0, %s421
      %s423 = smul.u32 8, %s23
      %s424 = smul.u32 8, %s23
      %p425 = scmp.lt.s32.totalorder %s22, 3
      %s426 = scalar_select %p425, %s22, 3
      %p427 = scmp.lt.s32.totalorder %s424, 7
      %s428 = scalar_select %p427, %s424, 7
      %p429 = scmp.lt.s32.totalorder %s24, 0
      %s430 = scalar_select %p429, %s24, 0
      %s431 = sadd.s32 %s430, %s428
      %s432 = smul.addr %s426, 8
      %s433 = sadd.s32 %s431, %s432
      %s434 = smul.addr %s433, 4
      %s435 = scalar_lea.vmem %s1, %s434
      %s436 = smul.u32 8, %s23
      %s437 = smul.u32 8, %s23
      %p438 = scmp.lt.s32.totalorder %s22, 3
      %s439 = scalar_select %p438, %s22, 3
      %p440 = scmp.lt.s32.totalorder %s437, 7
      %s441 = scalar_select %p440, %s437, 7
      %p442 = scmp.lt.s32.totalorder %s24, 0
      %s443 = scalar_select %p442, %s24, 0
      %s444 = sadd.s32 %s443, %s441
      %s445 = smul.addr %s439, 8
      %s446 = sadd.s32 %s444, %s445
      %s447 = smul.addr %s446, 4
      %s448 = scalar_lea.vmem %s2, %s447
      %s449 = smul.u32 8, %s23
      %p450 = scmp.lt.s32.totalorder %s22, 3
      %s451 = scalar_select %p450, %s22, 3
      %p452 = scmp.lt.s32.totalorder %s24, 0
      %s453 = scalar_select %p452, %s24, 0
      %s454 = sadd.s32 %s453, %s451
      %s455 = smul.addr %s454, 4
      %s456 = scalar_lea.vmem %s3, %s455
      %p457 = scmp.lt.s32.totalorder %s23, 0
      %s458 = scalar_select %p457, %s23, 0
      %p459 = scmp.lt.s32.totalorder %s24, 0
      %s460 = scalar_select %p459, %s24, 0
      %s461 = sadd.s32 %s460, %s458
      %s462 = smul.addr %s461, 8
      %s463 = scalar_lea.vmem %s4, %s462
      %s464 = smul.u32 8, %s23
      %p465 = scmp.lt.s32.totalorder %s22, 3
      %s466 = scalar_select %p465, %s22, 3
      %p467 = scmp.lt.s32.totalorder %s464, 7
      %s468 = scalar_select %p467, %s464, 7
      %s469 = smul.addr %s466, 8
      %s470 = sadd.s32 %s468, %s469
      %s471 = smul.addr %s470, 4
      %s472 = scalar_lea.vmem %s5, %s471
      %s473 = smul.u32 8, %s23
      %s474 = smul.u32 8, %s23
      %p475 = scmp.lt.s32.totalorder %s22, 3
      %s476 = scalar_select %p475, %s22, 3
      %p477 = scmp.lt.s32.totalorder %s474, 7
      %s478 = scalar_select %p477, %s474, 7
      %s479 = smul.addr %s476, 8
      %s480 = sadd.s32 %s478, %s479
      %s481 = smul.addr %s480, 4
      %s482 = scalar_lea.vmem %s6, %s481
      %s483 = smul.u32 8, %s23
      %p485 = scmp.eq.s32.totalorder %s24, 0
      // Predicated region
      $region45: #{triangle_block.20} parent=43 // pred_check
        %p486 = pneg %p485
      $region46: #{triangle_block.20} parent=43 // pred_check_branch
        %488 = sbr.rel (%p486) target = $region48
      $region47: #{triangle_block.20} parent=43 // pred_region
        %vm489 = vcmask 7168
        %490 = vst.msk [vmem:[#allocation2] sm:$0xff] %vm489, -1e+30
        %491 = vst.msk [vmem:[#allocation2 + $0x8] sm:$0xff] %vm489, -1e+30
        %492 = vst.msk [vmem:[#allocation2 + $0x10] sm:$0xff] %vm489, -1e+30
        %493 = vst.msk [vmem:[#allocation2 + $0x18] sm:$0xff] %vm489, -1e+30
        %494 = vst.msk [vmem:[#allocation2 + $0x20] sm:$0xff] %vm489, -1e+30
        %495 = vst.msk [vmem:[#allocation2 + $0x28] sm:$0xff] %vm489, -1e+30
        %496 = vst.msk [vmem:[#allocation2 + $0x30] sm:$0xff] %vm489, -1e+30
        %497 = vst.msk [vmem:[#allocation2 + $0x38] sm:$0xff] %vm489, -1e+30
        %498 = vst.msk [vmem:[#allocation3] sm:$0xff] %vm489, 0.0
        %499 = vst.msk [vmem:[#allocation3 + $0x8] sm:$0xff] %vm489, 0.0
        %500 = vst.msk [vmem:[#allocation3 + $0x10] sm:$0xff] %vm489, 0.0
        %501 = vst.msk [vmem:[#allocation3 + $0x18] sm:$0xff] %vm489, 0.0
        %502 = vst.msk [vmem:[#allocation3 + $0x20] sm:$0xff] %vm489, 0.0
        %503 = vst.msk [vmem:[#allocation3 + $0x28] sm:$0xff] %vm489, 0.0
        %504 = vst.msk [vmem:[#allocation3 + $0x30] sm:$0xff] %vm489, 0.0
        %505 = vst.msk [vmem:[#allocation3 + $0x38] sm:$0xff] %vm489, 0.0
        %vm506 = vcmask 31744
        %507 = vst.msk [vmem:[#allocation4] sm:$0xff] %vm506, 0.0
        %508 = vst.msk [vmem:[#allocation4 + $0x8] sm:$0xff] %vm506, 0.0
        %509 = vst.msk [vmem:[#allocation4 + $0x10] sm:$0xff] %vm506, 0.0
        %510 = vst.msk [vmem:[#allocation4 + $0x18] sm:$0xff] %vm506, 0.0
        %511 = vst.msk [vmem:[#allocation4 + $0x20] sm:$0xff] %vm506, 0.0
        %512 = vst.msk [vmem:[#allocation4 + $0x28] sm:$0xff] %vm506, 0.0
        %513 = vst.msk [vmem:[#allocation4 + $0x30] sm:$0xff] %vm506, 0.0
        %514 = vst.msk [vmem:[#allocation4 + $0x38] sm:$0xff] %vm506, 0.0
      $region48: #{triangle_block.20} parent=43 // pred_fallthru
        _
      %v515 = vld [vmem:[%s422] sm:$0xf]
      %v516 = vld [vmem:[%s422 + $0x4] sm:$0xf]
      %v517 = vld [vmem:[%s422 + $0x8] sm:$0xf]
      %v518 = vld [vmem:[%s422 + $0xc] sm:$0xf]
      %v519 = vld [vmem:[%s422 + $0x10] sm:$0xf]
      %v520 = vld [vmem:[%s422 + $0x14] sm:$0xf]
      %v521 = vld [vmem:[%s422 + $0x18] sm:$0xf]
      %v522 = vld [vmem:[%s422 + $0x1c] sm:$0xf]
      %v523 = vld [vmem:[%s435] sm:$0xf]
      %v524 = vld [vmem:[%s435 + $0x4] sm:$0xf]
      %v525 = vld [vmem:[%s435 + $0x8] sm:$0xf]
      %v526 = vld [vmem:[%s435 + $0xc] sm:$0xf]
      %v527 = vld [vmem:[%s435 + $0x10] sm:$0xf]
      %v528 = vld [vmem:[%s435 + $0x14] sm:$0xf]
      %v529 = vld [vmem:[%s435 + $0x18] sm:$0xf]
      %v530 = vld [vmem:[%s435 + $0x1c] sm:$0xf]
      %v531 = vld [vmem:[%s456] sm:$0xf]
      %v532 = vunpack.c.l.bf16 %v531
      %vm533 = vcmask 31744
      %v535 = vsel %vm533, %v515, 0
      %v538 = vsel %vm533, %v523, 0
      %540 = vmatprep.subr.bf16.mxu0 0
      %541 = vmatpush1.bf16.xpose.msra.mxu0 0
      %542 = vmatprep.subr.bf16.mxu0 0
      %543 = vmatpush1.bf16.xpose.msra.mxu0 0
      %544 = vmatprep.subr.bf16.mxu0 0
      %545 = vmatpush1.bf16.xpose.msra.mxu0 0
      %546 = vmatprep.subr.bf16.mxu0 0
      %547 = vmatpush1.bf16.xpose.msra.mxu0 0
      %548 = vmatprep.subr.bf16.mxu0 0
      %549 = vmatpush1.bf16.xpose.msra.mxu0 0
      %550 = vmatprep.subr.bf16.mxu0 0
      %551 = vmatpush1.bf16.xpose.msra.mxu0 0
      %552 = vmatprep.subr.bf16.mxu0 0
      %553 = vmatpush1.bf16.xpose.msra.mxu0 0
      %554 = vmatprep.subr.bf16.mxu0 0
      %555 = vmatpush1.bf16.xpose.msra.mxu0 %v538
      %556 = vmatprep.subr.bf16.mxu0 0
      %557 = vmatpush2.bf16.xpose.msra.mxu0 0
      %558 = vmatprep.subr.bf16.mxu0 0
      %559 = vmatpush2.bf16.xpose.msra.mxu0 0
      %560 = vmatprep.subr.bf16.mxu0 0
      %561 = vmatpush2.bf16.xpose.msra.mxu0 0
      %562 = vmatprep.subr.bf16.mxu0 0
      %563 = vmatpush2.bf16.xpose.msra.mxu0 0
      %564 = vmatprep.subr.bf16.mxu0 0
      %565 = vmatpush2.bf16.xpose.msra.mxu0 0
      %566 = vmatprep.subr.bf16.mxu0 0
      %567 = vmatpush2.bf16.xpose.msra.mxu0 0
      %568 = vmatprep.subr.bf16.mxu0 0
      %569 = vmatpush2.bf16.xpose.msra.mxu0 0
      %570 = vmatprep.subr.bf16.mxu0 0
      %571 = vmatpush2.bf16.xpose.msra.mxu0 0
      %572 = vmatprep.mubr.bf16.mxu0 0
      %573 = vmatmul.mubr.bf16.gmra.mxu0 %v535
      %v574 = vpop.f32.mrf.mxu0
      %v575 = vadd.f32 %v532, %v574
      %v576 = vpop.f32.mrf.mxu0
      %v577 = vpop.f32.mrf.mxu0
      %v578 = vpop.f32.mrf.mxu0
      %579 = vdwg.mxu0
      %v581 = vsel %vm533, %v516, 0
      %v584 = vsel %vm533, %v524, 0
      %586 = vmatprep.subr.bf16.mxu0 0
      %587 = vmatpush1.bf16.xpose.msra.mxu0 0
      %588 = vmatprep.subr.bf16.mxu0 0
      %589 = vmatpush1.bf16.xpose.msra.mxu0 0
      %590 = vmatprep.subr.bf16.mxu0 0
      %591 = vmatpush1.bf16.xpose.msra.mxu0 0
      %592 = vmatprep.subr.bf16.mxu0 0
      %593 = vmatpush1.bf16.xpose.msra.mxu0 0
      %594 = vmatprep.subr.bf16.mxu0 0
      %595 = vmatpush1.bf16.xpose.msra.mxu0 0
      %596 = vmatprep.subr.bf16.mxu0 0
      %597 = vmatpush1.bf16.xpose.msra.mxu0 0
      %598 = vmatprep.subr.bf16.mxu0 0
      %599 = vmatpush1.bf16.xpose.msra.mxu0 0
      %600 = vmatprep.subr.bf16.mxu0 0
      %601 = vmatpush1.bf16.xpose.msra.mxu0 %v584
      %602 = vmatprep.subr.bf16.mxu0 0
      %603 = vmatpush2.bf16.xpose.msra.mxu0 0
      %604 = vmatprep.subr.bf16.mxu0 0
      %605 = vmatpush2.bf16.xpose.msra.mxu0 0
      %606 = vmatprep.subr.bf16.mxu0 0
      %607 = vmatpush2.bf16.xpose.msra.mxu0 0
      %608 = vmatprep.subr.bf16.mxu0 0
      %609 = vmatpush2.bf16.xpose.msra.mxu0 0
      %610 = vmatprep.subr.bf16.mxu0 0
      %611 = vmatpush2.bf16.xpose.msra.mxu0 0
      %612 = vmatprep.subr.bf16.mxu0 0
      %613 = vmatpush2.bf16.xpose.msra.mxu0 0
      %614 = vmatprep.subr.bf16.mxu0 0
      %615 = vmatpush2.bf16.xpose.msra.mxu0 0
      %616 = vmatprep.subr.bf16.mxu0 0
      %617 = vmatpush2.bf16.xpose.msra.mxu0 0
      %618 = vmatprep.mubr.bf16.mxu0 0
      %619 = vmatmul.mubr.bf16.gmra.mxu0 %v581
      %v620 = vpop.f32.mrf.mxu0
      %v621 = vadd.f32 %v532, %v620
      %v622 = vpop.f32.mrf.mxu0
      %v623 = vpop.f32.mrf.mxu0
      %v624 = vpop.f32.mrf.mxu0
      %625 = vdwg.mxu0
      %v627 = vsel %vm533, %v517, 0
      %v630 = vsel %vm533, %v525, 0
      %632 = vmatprep.subr.bf16.mxu0 0
      %633 = vmatpush1.bf16.xpose.msra.mxu0 0
      %634 = vmatprep.subr.bf16.mxu0 0
      %635 = vmatpush1.bf16.xpose.msra.mxu0 0
      %636 = vmatprep.subr.bf16.mxu0 0
      %637 = vmatpush1.bf16.xpose.msra.mxu0 0
      %638 = vmatprep.subr.bf16.mxu0 0
      %639 = vmatpush1.bf16.xpose.msra.mxu0 0
      %640 = vmatprep.subr.bf16.mxu0 0
      %641 = vmatpush1.bf16.xpose.msra.mxu0 0
      %642 = vmatprep.subr.bf16.mxu0 0
      %643 = vmatpush1.bf16.xpose.msra.mxu0 0
      %644 = vmatprep.subr.bf16.mxu0 0
      %645 = vmatpush1.bf16.xpose.msra.mxu0 0
      %646 = vmatprep.subr.bf16.mxu0 0
      %647 = vmatpush1.bf16.xpose.msra.mxu0 %v630
      %648 = vmatprep.subr.bf16.mxu0 0
      %649 = vmatpush2.bf16.xpose.msra.mxu0 0
      %650 = vmatprep.subr.bf16.mxu0 0
      %651 = vmatpush2.bf16.xpose.msra.mxu0 0
      %652 = vmatprep.subr.bf16.mxu0 0
      %653 = vmatpush2.bf16.xpose.msra.mxu0 0
      %654 = vmatprep.subr.bf16.mxu0 0
      %655 = vmatpush2.bf16.xpose.msra.mxu0 0
      %656 = vmatprep.subr.bf16.mxu0 0
      %657 = vmatpush2.bf16.xpose.msra.mxu0 0
      %658 = vmatprep.subr.bf16.mxu0 0
      %659 = vmatpush2.bf16.xpose.msra.mxu0 0
      %660 = vmatprep.subr.bf16.mxu0 0
      %661 = vmatpush2.bf16.xpose.msra.mxu0 0
      %662 = vmatprep.subr.bf16.mxu0 0
      %663 = vmatpush2.bf16.xpose.msra.mxu0 0
      %664 = vmatprep.mubr.bf16.mxu0 0
      %665 = vmatmul.mubr.bf16.gmra.mxu0 %v627
      %v666 = vpop.f32.mrf.mxu0
      %v667 = vadd.f32 %v532, %v666
      %v668 = vpop.f32.mrf.mxu0
      %v669 = vpop.f32.mrf.mxu0
      %v670 = vpop.f32.mrf.mxu0
      %671 = vdwg.mxu0
      %v673 = vsel %vm533, %v518, 0
      %v676 = vsel %vm533, %v526, 0
      %678 = vmatprep.subr.bf16.mxu0 0
      %679 = vmatpush1.bf16.xpose.msra.mxu0 0
      %680 = vmatprep.subr.bf16.mxu0 0
      %681 = vmatpush1.bf16.xpose.msra.mxu0 0
      %682 = vmatprep.subr.bf16.mxu0 0
      %683 = vmatpush1.bf16.xpose.msra.mxu0 0
      %684 = vmatprep.subr.bf16.mxu0 0
      %685 = vmatpush1.bf16.xpose.msra.mxu0 0
      %686 = vmatprep.subr.bf16.mxu0 0
      %687 = vmatpush1.bf16.xpose.msra.mxu0 0
      %688 = vmatprep.subr.bf16.mxu0 0
      %689 = vmatpush1.bf16.xpose.msra.mxu0 0
      %690 = vmatprep.subr.bf16.mxu0 0
      %691 = vmatpush1.bf16.xpose.msra.mxu0 0
      %692 = vmatprep.subr.bf16.mxu0 0
      %693 = vmatpush1.bf16.xpose.msra.mxu0 %v676
      %694 = vmatprep.subr.bf16.mxu0 0
      %695 = vmatpush2.bf16.xpose.msra.mxu0 0
      %696 = vmatprep.subr.bf16.mxu0 0
      %697 = vmatpush2.bf16.xpose.msra.mxu0 0
      %698 = vmatprep.subr.bf16.mxu0 0
      %699 = vmatpush2.bf16.xpose.msra.mxu0 0
      %700 = vmatprep.subr.bf16.mxu0 0
      %701 = vmatpush2.bf16.xpose.msra.mxu0 0
      %702 = vmatprep.subr.bf16.mxu0 0
      %703 = vmatpush2.bf16.xpose.msra.mxu0 0
      %704 = vmatprep.subr.bf16.mxu0 0
      %705 = vmatpush2.bf16.xpose.msra.mxu0 0
      %706 = vmatprep.subr.bf16.mxu0 0
      %707 = vmatpush2.bf16.xpose.msra.mxu0 0
      %708 = vmatprep.subr.bf16.mxu0 0
      %709 = vmatpush2.bf16.xpose.msra.mxu0 0
      %710 = vmatprep.mubr.bf16.mxu0 0
      %711 = vmatmul.mubr.bf16.gmra.mxu0 %v673
      %v712 = vpop.f32.mrf.mxu0
      %v713 = vadd.f32 %v532, %v712
      %v714 = vpop.f32.mrf.mxu0
      %v715 = vpop.f32.mrf.mxu0
      %v716 = vpop.f32.mrf.mxu0
      %717 = vdwg.mxu0
      %v719 = vsel %vm533, %v519, 0
      %v722 = vsel %vm533, %v527, 0
      %724 = vmatprep.subr.bf16.mxu0 0
      %725 = vmatpush1.bf16.xpose.msra.mxu0 0
      %726 = vmatprep.subr.bf16.mxu0 0
      %727 = vmatpush1.bf16.xpose.msra.mxu0 0
      %728 = vmatprep.subr.bf16.mxu0 0
      %729 = vmatpush1.bf16.xpose.msra.mxu0 0
      %730 = vmatprep.subr.bf16.mxu0 0
      %731 = vmatpush1.bf16.xpose.msra.mxu0 0
      %732 = vmatprep.subr.bf16.mxu0 0
      %733 = vmatpush1.bf16.xpose.msra.mxu0 0
      %734 = vmatprep.subr.bf16.mxu0 0
      %735 = vmatpush1.bf16.xpose.msra.mxu0 0
      %736 = vmatprep.subr.bf16.mxu0 0
      %737 = vmatpush1.bf16.xpose.msra.mxu0 0
      %738 = vmatprep.subr.bf16.mxu0 0
      %739 = vmatpush1.bf16.xpose.msra.mxu0 %v722
      %740 = vmatprep.subr.bf16.mxu0 0
      %741 = vmatpush2.bf16.xpose.msra.mxu0 0
      %742 = vmatprep.subr.bf16.mxu0 0
      %743 = vmatpush2.bf16.xpose.msra.mxu0 0
      %744 = vmatprep.subr.bf16.mxu0 0
      %745 = vmatpush2.bf16.xpose.msra.mxu0 0
      %746 = vmatprep.subr.bf16.mxu0 0
      %747 = vmatpush2.bf16.xpose.msra.mxu0 0
      %748 = vmatprep.subr.bf16.mxu0 0
      %749 = vmatpush2.bf16.xpose.msra.mxu0 0
      %750 = vmatprep.subr.bf16.mxu0 0
      %751 = vmatpush2.bf16.xpose.msra.mxu0 0
      %752 = vmatprep.subr.bf16.mxu0 0
      %753 = vmatpush2.bf16.xpose.msra.mxu0 0
      %754 = vmatprep.subr.bf16.mxu0 0
      %755 = vmatpush2.bf16.xpose.msra.mxu0 0
      %756 = vmatprep.mubr.bf16.mxu0 0
      %757 = vmatmul.mubr.bf16.gmra.mxu0 %v719
      %v758 = vpop.f32.mrf.mxu0
      %v759 = vadd.f32 %v532, %v758
      %v760 = vpop.f32.mrf.mxu0
      %v761 = vpop.f32.mrf.mxu0
      %v762 = vpop.f32.mrf.mxu0
      %763 = vdwg.mxu0
      %v765 = vsel %vm533, %v520, 0
      %v768 = vsel %vm533, %v528, 0
      %770 = vmatprep.subr.bf16.mxu0 0
      %771 = vmatpush1.bf16.xpose.msra.mxu0 0
      %772 = vmatprep.subr.bf16.mxu0 0
      %773 = vmatpush1.bf16.xpose.msra.mxu0 0
      %774 = vmatprep.subr.bf16.mxu0 0
      %775 = vmatpush1.bf16.xpose.msra.mxu0 0
      %776 = vmatprep.subr.bf16.mxu0 0
      %777 = vmatpush1.bf16.xpose.msra.mxu0 0
      %778 = vmatprep.subr.bf16.mxu0 0
      %779 = vmatpush1.bf16.xpose.msra.mxu0 0
      %780 = vmatprep.subr.bf16.mxu0 0
      %781 = vmatpush1.bf16.xpose.msra.mxu0 0
      %782 = vmatprep.subr.bf16.mxu0 0
      %783 = vmatpush1.bf16.xpose.msra.mxu0 0
      %784 = vmatprep.subr.bf16.mxu0 0
      %785 = vmatpush1.bf16.xpose.msra.mxu0 %v768
      %786 = vmatprep.subr.bf16.mxu0 0
      %787 = vmatpush2.bf16.xpose.msra.mxu0 0
      %788 = vmatprep.subr.bf16.mxu0 0
      %789 = vmatpush2.bf16.xpose.msra.mxu0 0
      %790 = vmatprep.subr.bf16.mxu0 0
      %791 = vmatpush2.bf16.xpose.msra.mxu0 0
      %792 = vmatprep.subr.bf16.mxu0 0
      %793 = vmatpush2.bf16.xpose.msra.mxu0 0
      %794 = vmatprep.subr.bf16.mxu0 0
      %795 = vmatpush2.bf16.xpose.msra.mxu0 0
      %796 = vmatprep.subr.bf16.mxu0 0
      %797 = vmatpush2.bf16.xpose.msra.mxu0 0
      %798 = vmatprep.subr.bf16.mxu0 0
      %799 = vmatpush2.bf16.xpose.msra.mxu0 0
      %800 = vmatprep.subr.bf16.mxu0 0
      %801 = vmatpush2.bf16.xpose.msra.mxu0 0
      %802 = vmatprep.mubr.bf16.mxu0 0
      %803 = vmatmul.mubr.bf16.gmra.mxu0 %v765
      %v804 = vpop.f32.mrf.mxu0
      %v805 = vadd.f32 %v532, %v804
      %v806 = vpop.f32.mrf.mxu0
      %v807 = vpop.f32.mrf.mxu0
      %v808 = vpop.f32.mrf.mxu0
      %809 = vdwg.mxu0
      %v811 = vsel %vm533, %v521, 0
      %v814 = vsel %vm533, %v529, 0
      %816 = vmatprep.subr.bf16.mxu0 0
      %817 = vmatpush1.bf16.xpose.msra.mxu0 0
      %818 = vmatprep.subr.bf16.mxu0 0
      %819 = vmatpush1.bf16.xpose.msra.mxu0 0
      %820 = vmatprep.subr.bf16.mxu0 0
      %821 = vmatpush1.bf16.xpose.msra.mxu0 0
      %822 = vmatprep.subr.bf16.mxu0 0
      %823 = vmatpush1.bf16.xpose.msra.mxu0 0
      %824 = vmatprep.subr.bf16.mxu0 0
      %825 = vmatpush1.bf16.xpose.msra.mxu0 0
      %826 = vmatprep.subr.bf16.mxu0 0
      %827 = vmatpush1.bf16.xpose.msra.mxu0 0
      %828 = vmatprep.subr.bf16.mxu0 0
      %829 = vmatpush1.bf16.xpose.msra.mxu0 0
      %830 = vmatprep.subr.bf16.mxu0 0
      %831 = vmatpush1.bf16.xpose.msra.mxu0 %v814
      %832 = vmatprep.subr.bf16.mxu0 0
      %833 = vmatpush2.bf16.xpose.msra.mxu0 0
      %834 = vmatprep.subr.bf16.mxu0 0
      %835 = vmatpush2.bf16.xpose.msra.mxu0 0
      %836 = vmatprep.subr.bf16.mxu0 0
      %837 = vmatpush2.bf16.xpose.msra.mxu0 0
      %838 = vmatprep.subr.bf16.mxu0 0
      %839 = vmatpush2.bf16.xpose.msra.mxu0 0
      %840 = vmatprep.subr.bf16.mxu0 0
      %841 = vmatpush2.bf16.xpose.msra.mxu0 0
      %842 = vmatprep.subr.bf16.mxu0 0
      %843 = vmatpush2.bf16.xpose.msra.mxu0 0
      %844 = vmatprep.subr.bf16.mxu0 0
      %845 = vmatpush2.bf16.xpose.msra.mxu0 0
      %846 = vmatprep.subr.bf16.mxu0 0
      %847 = vmatpush2.bf16.xpose.msra.mxu0 0
      %848 = vmatprep.mubr.bf16.mxu0 0
      %849 = vmatmul.mubr.bf16.gmra.mxu0 %v811
      %v850 = vpop.f32.mrf.mxu0
      %v851 = vadd.f32 %v532, %v850
      %v852 = vpop.f32.mrf.mxu0
      %v853 = vpop.f32.mrf.mxu0
      %v854 = vpop.f32.mrf.mxu0
      %855 = vdwg.mxu0
      %v857 = vsel %vm533, %v522, 0
      %v860 = vsel %vm533, %v530, 0
      %862 = vmatprep.subr.bf16.mxu0 0
      %863 = vmatpush1.bf16.xpose.msra.mxu0 0
      %864 = vmatprep.subr.bf16.mxu0 0
      %865 = vmatpush1.bf16.xpose.msra.mxu0 0
      %866 = vmatprep.subr.bf16.mxu0 0
      %867 = vmatpush1.bf16.xpose.msra.mxu0 0
      %868 = vmatprep.subr.bf16.mxu0 0
      %869 = vmatpush1.bf16.xpose.msra.mxu0 0
      %870 = vmatprep.subr.bf16.mxu0 0
      %871 = vmatpush1.bf16.xpose.msra.mxu0 0
      %872 = vmatprep.subr.bf16.mxu0 0
      %873 = vmatpush1.bf16.xpose.msra.mxu0 0
      %874 = vmatprep.subr.bf16.mxu0 0
      %875 = vmatpush1.bf16.xpose.msra.mxu0 0
      %876 = vmatprep.subr.bf16.mxu0 0
      %877 = vmatpush1.bf16.xpose.msra.mxu0 %v860
      %878 = vmatprep.subr.bf16.mxu0 0
      %879 = vmatpush2.bf16.xpose.msra.mxu0 0
      %880 = vmatprep.subr.bf16.mxu0 0
      %881 = vmatpush2.bf16.xpose.msra.mxu0 0
      %882 = vmatprep.subr.bf16.mxu0 0
      %883 = vmatpush2.bf16.xpose.msra.mxu0 0
      %884 = vmatprep.subr.bf16.mxu0 0
      %885 = vmatpush2.bf16.xpose.msra.mxu0 0
      %886 = vmatprep.subr.bf16.mxu0 0
      %887 = vmatpush2.bf16.xpose.msra.mxu0 0
      %888 = vmatprep.subr.bf16.mxu0 0
      %889 = vmatpush2.bf16.xpose.msra.mxu0 0
      %890 = vmatprep.subr.bf16.mxu0 0
      %891 = vmatpush2.bf16.xpose.msra.mxu0 0
      %892 = vmatprep.subr.bf16.mxu0 0
      %893 = vmatpush2.bf16.xpose.msra.mxu0 0
      %894 = vmatprep.mubr.bf16.mxu0 0
      %895 = vmatmul.mubr.bf16.gmra.mxu0 %v857
      %v896 = vpop.f32.mrf.mxu0
      %v897 = vadd.f32 %v532, %v896
      %v898 = vpop.f32.mrf.mxu0
      %v899 = vpop.f32.mrf.mxu0
      %v900 = vpop.f32.mrf.mxu0
      %901 = vdwg.mxu0
      %v902 = vld [vmem:[%s463] sm:$0xff]
      %v904 = vcombine.high %v902, %v902
      %v906 = vunpack.c.l.s4 1966171168
      %v907 = vunpack.c.0.s8 %v906
      %v908 = vlaneseq
      %v909 = vshrl.u32 %v908, 7
      %v910 = vsub.s32 %v907, %v909
      %v911 = vrot.slane %v902, %v910
      %v913 = vunpack.c.l.s4 1966171168
      %v914 = vunpack.c.0.s8 %v913
      %v915 = vlaneseq
      %v916 = vshrl.u32 %v915, 7
      %v917 = vsub.s32 %v914, %v916
      %v918 = vrot.slane %v904, %v917
      %v919 = vcombine.high %v911, %v911
      %v920 = vcombine.high %v918, %v918
      %v922 = vunpack.c.l.s4 1966171168
      %v923 = vunpack.c.0.s8 %v922
      %v924 = vlaneseq
      %v925 = vshrl.u32 %v924, 7
      %v926 = vsub.s32 %v923, %v925
      %v927 = vrot.slane %v911, %v926
      %v929 = vunpack.c.l.s4 1966171168
      %v930 = vunpack.c.0.s8 %v929
      %v931 = vlaneseq
      %v932 = vshrl.u32 %v931, 7
      %v933 = vsub.s32 %v930, %v932
      %v934 = vrot.slane %v918, %v933
      %v936 = vunpack.c.l.s4 1966171168
      %v937 = vunpack.c.0.s8 %v936
      %v938 = vlaneseq
      %v939 = vshrl.u32 %v938, 7
      %v940 = vsub.s32 %v937, %v939
      %v941 = vrot.slane %v919, %v940
      %v943 = vunpack.c.l.s4 1966171168
      %v944 = vunpack.c.0.s8 %v943
      %v945 = vlaneseq
      %v946 = vshrl.u32 %v945, 7
      %v947 = vsub.s32 %v944, %v946
      %v948 = vrot.slane %v920, %v947
      %v949 = vcombine.high %v927, %v927
      %v950 = vcombine.high %v934, %v934
      %v951 = vcombine.high %v941, %v941
      %v952 = vcombine.high %v948, %v948
      %v953 = vlaneseq
      %v954 = vshrl.u32 %v953, 7
      %v955 = vsub.s32 0, %v954
      %v956 = vrot.slane %v927, %v955
      %v957 = vlaneseq
      %v958 = vshrl.u32 %v957, 7
      %v959 = vsub.s32 0, %v958
      %v960 = vrot.slane %v941, %v959
      %v961 = vlaneseq
      %v962 = vshrl.u32 %v961, 7
      %v963 = vsub.s32 0, %v962
      %v964 = vrot.slane %v949, %v963
      %v965 = vlaneseq
      %v966 = vshrl.u32 %v965, 7
      %v967 = vsub.s32 0, %v966
      %v968 = vrot.slane %v951, %v967
      %v969 = vlaneseq
      %v970 = vshrl.u32 %v969, 7
      %v971 = vsub.s32 0, %v970
      %v972 = vrot.slane %v934, %v971
      %v973 = vlaneseq
      %v974 = vshrl.u32 %v973, 7
      %v975 = vsub.s32 0, %v974
      %v976 = vrot.slane %v948, %v975
      %v977 = vlaneseq
      %v978 = vshrl.u32 %v977, 7
      %v979 = vsub.s32 0, %v978
      %v980 = vrot.slane %v950, %v979
      %v981 = vlaneseq
      %v982 = vshrl.u32 %v981, 7
      %v983 = vsub.s32 0, %v982
      %v984 = vrot.slane %v952, %v983
      %v993 = vadd.f32 %v575, %v956
      %v994 = vadd.f32 %v621, %v960
      %v995 = vadd.f32 %v667, %v964
      %v996 = vadd.f32 %v713, %v968
      %v997 = vadd.f32 %v759, %v972
      %v998 = vadd.f32 %v805, %v976
      %v999 = vadd.f32 %v851, %v980
      %v1000 = vadd.f32 %v897, %v984
      %v1001 = vld [vmem:[#allocation2] sm:$0xff]
      %v1002 = vld [vmem:[#allocation2 + $0x8] sm:$0xff]
      %v1003 = vld [vmem:[#allocation2 + $0x10] sm:$0xff]
      %v1004 = vld [vmem:[#allocation2 + $0x18] sm:$0xff]
      %v1005 = vld [vmem:[#allocation2 + $0x20] sm:$0xff]
      %v1006 = vld [vmem:[#allocation2 + $0x28] sm:$0xff]
      %v1007 = vld [vmem:[#allocation2 + $0x30] sm:$0xff]
      %v1008 = vld [vmem:[#allocation2 + $0x38] sm:$0xff]
      %vm1009 = vcmask 64512
      %v1010 = vsel %vm1009, %v993, -inf
      %1011 = vmax.xlane.f32.xlu0 %v1010
      %v1012 = vpop.xlane.xlu0 %1011
      %v1013 = vsel %vm1009, %v994, -inf
      %1014 = vmax.xlane.f32.xlu0 %v1013
      %v1015 = vpop.xlane.xlu0 %1014
      %v1016 = vsel %vm1009, %v995, -inf
      %1017 = vmax.xlane.f32.xlu0 %v1016
      %v1018 = vpop.xlane.xlu0 %1017
      %v1019 = vsel %vm1009, %v996, -inf
      %1020 = vmax.xlane.f32.xlu0 %v1019
      %v1021 = vpop.xlane.xlu0 %1020
      %v1022 = vsel %vm1009, %v997, -inf
      %1023 = vmax.xlane.f32.xlu0 %v1022
      %v1024 = vpop.xlane.xlu0 %1023
      %v1025 = vsel %vm1009, %v998, -inf
      %1026 = vmax.xlane.f32.xlu0 %v1025
      %v1027 = vpop.xlane.xlu0 %1026
      %v1028 = vsel %vm1009, %v999, -inf
      %1029 = vmax.xlane.f32.xlu0 %v1028
      %v1030 = vpop.xlane.xlu0 %1029
      %v1031 = vsel %vm1009, %v1000, -inf
      %1032 = vmax.xlane.f32.xlu0 %v1031
      %v1033 = vpop.xlane.xlu0 %1032
      %v1034 = vmax.f32 %v1001, %v1012
      %v1035 = vmax.f32 %v1002, %v1015
      %v1036 = vmax.f32 %v1003, %v1018
      %v1037 = vmax.f32 %v1004, %v1021
      %v1038 = vmax.f32 %v1005, %v1024
      %v1039 = vmax.f32 %v1006, %v1027
      %v1040 = vmax.f32 %v1007, %v1030
      %v1041 = vmax.f32 %v1008, %v1033
      %v1042 = vsub.f32 %v1001, %v1034
      %v1043 = vsub.f32 %v1002, %v1035
      %v1044 = vsub.f32 %v1003, %v1036
      %v1045 = vsub.f32 %v1004, %v1037
      %v1046 = vsub.f32 %v1005, %v1038
      %v1047 = vsub.f32 %v1006, %v1039
      %v1048 = vsub.f32 %v1007, %v1040
      %v1049 = vsub.f32 %v1008, %v1041
      %v1050 = vmul.f32 %v1042, 1.442695
      %v1051 = vpow.pop %v1050
      %v1052 = vmul.f32 %v1043, 1.442695
      %v1053 = vpow.pop %v1052
      %v1054 = vmul.f32 %v1044, 1.442695
      %v1055 = vpow.pop %v1054
      %v1056 = vmul.f32 %v1045, 1.442695
      %v1057 = vpow.pop %v1056
      %v1058 = vmul.f32 %v1046, 1.442695
      %v1059 = vpow.pop %v1058
      %v1060 = vmul.f32 %v1047, 1.442695
      %v1061 = vpow.pop %v1060
      %v1062 = vmul.f32 %v1048, 1.442695
      %v1063 = vpow.pop %v1062
      %v1064 = vmul.f32 %v1049, 1.442695
      %v1065 = vpow.pop %v1064
      %1067 = vset.pattern.permute.xlu0 0
      %1068 = vperm.xlu0 %1067, %v1034
      %v1069 = vpop.permute.xlu0 %1068
      %1072 = vset.pattern.permute.xlu0 0
      %1073 = vperm.xlu0 %1072, %v1035
      %v1074 = vpop.permute.xlu0 %1073
      %1077 = vset.pattern.permute.xlu0 0
      %1078 = vperm.xlu0 %1077, %v1036
      %v1079 = vpop.permute.xlu0 %1078
      %1082 = vset.pattern.permute.xlu0 0
      %1083 = vperm.xlu0 %1082, %v1037
      %v1084 = vpop.permute.xlu0 %1083
      %1087 = vset.pattern.permute.xlu0 0
      %1088 = vperm.xlu0 %1087, %v1038
      %v1089 = vpop.permute.xlu0 %1088
      %1092 = vset.pattern.permute.xlu0 0
      %1093 = vperm.xlu0 %1092, %v1039
      %v1094 = vpop.permute.xlu0 %1093
      %1097 = vset.pattern.permute.xlu0 0
      %1098 = vperm.xlu0 %1097, %v1040
      %v1099 = vpop.permute.xlu0 %1098
      %1102 = vset.pattern.permute.xlu0 0
      %1103 = vperm.xlu0 %1102, %v1041
      %v1104 = vpop.permute.xlu0 %1103
      %v1106 = vsub.f32 %v993, %v1069
      %v1107 = vsub.f32 %v994, %v1074
      %v1108 = vsub.f32 %v995, %v1079
      %v1109 = vsub.f32 %v996, %v1084
      %v1110 = vsub.f32 %v997, %v1089
      %v1111 = vsub.f32 %v998, %v1094
      %v1112 = vsub.f32 %v999, %v1099
      %v1113 = vsub.f32 %v1000, %v1104
      %v1114 = vmul.f32 %v1106, 1.442695
      %v1115 = vpow.pop %v1114
      %v1116 = vmul.f32 %v1107, 1.442695
      %v1117 = vpow.pop %v1116
      %v1118 = vmul.f32 %v1108, 1.442695
      %v1119 = vpow.pop %v1118
      %v1120 = vmul.f32 %v1109, 1.442695
      %v1121 = vpow.pop %v1120
      %v1122 = vmul.f32 %v1110, 1.442695
      %v1123 = vpow.pop %v1122
      %v1124 = vmul.f32 %v1111, 1.442695
      %v1125 = vpow.pop %v1124
      %v1126 = vmul.f32 %v1112, 1.442695
      %v1127 = vpow.pop %v1126
      %v1128 = vmul.f32 %v1113, 1.442695
      %v1129 = vpow.pop %v1128
      %v1130 = vld [vmem:[#allocation3] sm:$0xff]
      %v1131 = vld [vmem:[#allocation3 + $0x8] sm:$0xff]
      %v1132 = vld [vmem:[#allocation3 + $0x10] sm:$0xff]
      %v1133 = vld [vmem:[#allocation3 + $0x18] sm:$0xff]
      %v1134 = vld [vmem:[#allocation3 + $0x20] sm:$0xff]
      %v1135 = vld [vmem:[#allocation3 + $0x28] sm:$0xff]
      %v1136 = vld [vmem:[#allocation3 + $0x30] sm:$0xff]
      %v1137 = vld [vmem:[#allocation3 + $0x38] sm:$0xff]
      %v1138 = vmul.f32 %v1051, %v1130
      %v1139 = vmul.f32 %v1053, %v1131
      %v1140 = vmul.f32 %v1055, %v1132
      %v1141 = vmul.f32 %v1057, %v1133
      %v1142 = vmul.f32 %v1059, %v1134
      %v1143 = vmul.f32 %v1061, %v1135
      %v1144 = vmul.f32 %v1063, %v1136
      %v1145 = vmul.f32 %v1065, %v1137
      %v1146 = vsel %vm1009, %v1115, 0.0
      %1147 = vadd.xlane.f32.xlu0 %v1146
      %v1148 = vpop.xlane.xlu0 %1147
      %v1149 = vsel %vm1009, %v1117, 0.0
      %1150 = vadd.xlane.f32.xlu0 %v1149
      %v1151 = vpop.xlane.xlu0 %1150
      %v1152 = vsel %vm1009, %v1119, 0.0
      %1153 = vadd.xlane.f32.xlu0 %v1152
      %v1154 = vpop.xlane.xlu0 %1153
      %v1155 = vsel %vm1009, %v1121, 0.0
      %1156 = vadd.xlane.f32.xlu0 %v1155
      %v1157 = vpop.xlane.xlu0 %1156
      %v1158 = vsel %vm1009, %v1123, 0.0
      %1159 = vadd.xlane.f32.xlu0 %v1158
      %v1160 = vpop.xlane.xlu0 %1159
      %v1161 = vsel %vm1009, %v1125, 0.0
      %1162 = vadd.xlane.f32.xlu0 %v1161
      %v1163 = vpop.xlane.xlu0 %1162
      %v1164 = vsel %vm1009, %v1127, 0.0
      %1165 = vadd.xlane.f32.xlu0 %v1164
      %v1166 = vpop.xlane.xlu0 %1165
      %v1167 = vsel %vm1009, %v1129, 0.0
      %1168 = vadd.xlane.f32.xlu0 %v1167
      %v1169 = vpop.xlane.xlu0 %1168
      %v1170 = vadd.f32 %v1138, %v1148
      %v1171 = vadd.f32 %v1139, %v1151
      %v1172 = vadd.f32 %v1140, %v1154
      %v1173 = vadd.f32 %v1141, %v1157
      %v1174 = vadd.f32 %v1142, %v1160
      %v1175 = vadd.f32 %v1143, %v1163
      %v1176 = vadd.f32 %v1144, %v1166
      %v1177 = vadd.f32 %v1145, %v1169
      %vm1178 = vcmask 7168
      %1179 = vst.msk [vmem:[#allocation3] sm:$0xff] %vm1178, %v1170
      %1180 = vst.msk [vmem:[#allocation3 + $0x8] sm:$0xff] %vm1178, %v1171
      %1181 = vst.msk [vmem:[#allocation3 + $0x10] sm:$0xff] %vm1178, %v1172
      %1182 = vst.msk [vmem:[#allocation3 + $0x18] sm:$0xff] %vm1178, %v1173
      %1183 = vst.msk [vmem:[#allocation3 + $0x20] sm:$0xff] %vm1178, %v1174
      %1184 = vst.msk [vmem:[#allocation3 + $0x28] sm:$0xff] %vm1178, %v1175
      %1185 = vst.msk [vmem:[#allocation3 + $0x30] sm:$0xff] %vm1178, %v1176
      %1186 = vst.msk [vmem:[#allocation3 + $0x38] sm:$0xff] %vm1178, %v1177
      %v1187 = vld [vmem:[#allocation4] sm:$0xff]
      %v1188 = vld [vmem:[#allocation4 + $0x8] sm:$0xff]
      %v1189 = vld [vmem:[#allocation4 + $0x10] sm:$0xff]
      %v1190 = vld [vmem:[#allocation4 + $0x18] sm:$0xff]
      %v1191 = vld [vmem:[#allocation4 + $0x20] sm:$0xff]
      %v1192 = vld [vmem:[#allocation4 + $0x28] sm:$0xff]
      %v1193 = vld [vmem:[#allocation4 + $0x30] sm:$0xff]
      %v1194 = vld [vmem:[#allocation4 + $0x38] sm:$0xff]
      %1196 = vset.pattern.permute.xlu0 0
      %1197 = vperm.xlu0 %1196, %v1051
      %v1198 = vpop.permute.xlu0 %1197
      %1201 = vset.pattern.permute.xlu0 0
      %1202 = vperm.xlu0 %1201, %v1053
      %v1203 = vpop.permute.xlu0 %1202
      %1206 = vset.pattern.permute.xlu0 0
      %1207 = vperm.xlu0 %1206, %v1055
      %v1208 = vpop.permute.xlu0 %1207
      %1211 = vset.pattern.permute.xlu0 0
      %1212 = vperm.xlu0 %1211, %v1057
      %v1213 = vpop.permute.xlu0 %1212
      %1216 = vset.pattern.permute.xlu0 0
      %1217 = vperm.xlu0 %1216, %v1059
      %v1218 = vpop.permute.xlu0 %1217
      %1221 = vset.pattern.permute.xlu0 0
      %1222 = vperm.xlu0 %1221, %v1061
      %v1223 = vpop.permute.xlu0 %1222
      %1226 = vset.pattern.permute.xlu0 0
      %1227 = vperm.xlu0 %1226, %v1063
      %v1228 = vpop.permute.xlu0 %1227
      %1231 = vset.pattern.permute.xlu0 0
      %1232 = vperm.xlu0 %1231, %v1065
      %v1233 = vpop.permute.xlu0 %1232
      %v1235 = vmul.f32 %v1198, %v1187
      %v1236 = vmul.f32 %v1203, %v1188
      %v1237 = vmul.f32 %v1208, %v1189
      %v1238 = vmul.f32 %v1213, %v1190
      %v1239 = vmul.f32 %v1218, %v1191
      %v1240 = vmul.f32 %v1223, %v1192
      %v1241 = vmul.f32 %v1228, %v1193
      %v1242 = vmul.f32 %v1233, %v1194
      %v1243 = vpack.c.bf16 %v1115, %v1115
      %v1244 = vpack.c.bf16 %v1117, %v1117
      %v1245 = vpack.c.bf16 %v1119, %v1119
      %v1246 = vpack.c.bf16 %v1121, %v1121
      %v1247 = vpack.c.bf16 %v1123, %v1123
      %v1248 = vpack.c.bf16 %v1125, %v1125
      %v1249 = vpack.c.bf16 %v1127, %v1127
      %v1250 = vpack.c.bf16 %v1129, %v1129
      %v1251 = vld [vmem:[%s448] sm:$0xf]
      %v1252 = vld [vmem:[%s448 + $0x4] sm:$0xf]
      %v1253 = vld [vmem:[%s448 + $0x8] sm:$0xf]
      %v1254 = vld [vmem:[%s448 + $0xc] sm:$0xf]
      %v1255 = vld [vmem:[%s448 + $0x10] sm:$0xf]
      %v1256 = vld [vmem:[%s448 + $0x14] sm:$0xf]
      %v1257 = vld [vmem:[%s448 + $0x18] sm:$0xf]
      %v1258 = vld [vmem:[%s448 + $0x1c] sm:$0xf]
      %v1260 = vsel %vm1009, %v1243, 0
      %vm1262 = vcmask 1043456
      %v1264 = vsel %vm1262, %v1251, 0
      %1266 = vmatprep.subr.bf16.mxu0 0
      %1267 = vmatpush1.bf16.msra.mxu0 0
      %1268 = vmatprep.subr.bf16.mxu0 0
      %1269 = vmatpush1.bf16.msra.mxu0 0
      %1270 = vmatprep.subr.bf16.mxu0 0
      %1271 = vmatpush1.bf16.msra.mxu0 0
      %1272 = vmatprep.subr.bf16.mxu0 0
      %1273 = vmatpush1.bf16.msra.mxu0 0
      %1274 = vmatprep.subr.bf16.mxu0 0
      %1275 = vmatpush1.bf16.msra.mxu0 0
      %1276 = vmatprep.subr.bf16.mxu0 0
      %1277 = vmatpush1.bf16.msra.mxu0 0
      %1278 = vmatprep.subr.bf16.mxu0 0
      %1279 = vmatpush1.bf16.msra.mxu0 0
      %1280 = vmatprep.subr.bf16.mxu0 0
      %1281 = vmatpush1.bf16.msra.mxu0 %v1264
      %1282 = vmatprep.subr.bf16.mxu0 0
      %1283 = vmatpush2.bf16.msra.mxu0 0
      %1284 = vmatprep.subr.bf16.mxu0 0
      %1285 = vmatpush2.bf16.msra.mxu0 0
      %1286 = vmatprep.subr.bf16.mxu0 0
      %1287 = vmatpush2.bf16.msra.mxu0 0
      %1288 = vmatprep.subr.bf16.mxu0 0
      %1289 = vmatpush2.bf16.msra.mxu0 0
      %1290 = vmatprep.subr.bf16.mxu0 0
      %1291 = vmatpush2.bf16.msra.mxu0 0
      %1292 = vmatprep.subr.bf16.mxu0 0
      %1293 = vmatpush2.bf16.msra.mxu0 0
      %1294 = vmatprep.subr.bf16.mxu0 0
      %1295 = vmatpush2.bf16.msra.mxu0 0
      %1296 = vmatprep.subr.bf16.mxu0 0
      %1297 = vmatpush2.bf16.msra.mxu0 0
      %1298 = vmatprep.mubr.bf16.mxu0 0
      %1299 = vmatmul.mubr.bf16.gmra.mxu0 %v1260
      %v1300 = vpop.f32.mrf.mxu0
      %v1301 = vadd.f32 0.0, %v1300
      %v1302 = vpop.f32.mrf.mxu0
      %v1303 = vpop.f32.mrf.mxu0
      %v1304 = vpop.f32.mrf.mxu0
      %1305 = vdwg.mxu0
      %v1307 = vsel %vm1009, %v1244, 0
      %v1310 = vsel %vm1262, %v1252, 0
      %1312 = vmatprep.subr.bf16.mxu0 0
      %1313 = vmatpush1.bf16.msra.mxu0 0
      %1314 = vmatprep.subr.bf16.mxu0 0
      %1315 = vmatpush1.bf16.msra.mxu0 0
      %1316 = vmatprep.subr.bf16.mxu0 0
      %1317 = vmatpush1.bf16.msra.mxu0 0
      %1318 = vmatprep.subr.bf16.mxu0 0
      %1319 = vmatpush1.bf16.msra.mxu0 0
      %1320 = vmatprep.subr.bf16.mxu0 0
      %1321 = vmatpush1.bf16.msra.mxu0 0
      %1322 = vmatprep.subr.bf16.mxu0 0
      %1323 = vmatpush1.bf16.msra.mxu0 0
      %1324 = vmatprep.subr.bf16.mxu0 0
      %1325 = vmatpush1.bf16.msra.mxu0 0
      %1326 = vmatprep.subr.bf16.mxu0 0
      %1327 = vmatpush1.bf16.msra.mxu0 %v1310
      %1328 = vmatprep.subr.bf16.mxu0 0
      %1329 = vmatpush2.bf16.msra.mxu0 0
      %1330 = vmatprep.subr.bf16.mxu0 0
      %1331 = vmatpush2.bf16.msra.mxu0 0
      %1332 = vmatprep.subr.bf16.mxu0 0
      %1333 = vmatpush2.bf16.msra.mxu0 0
      %1334 = vmatprep.subr.bf16.mxu0 0
      %1335 = vmatpush2.bf16.msra.mxu0 0
      %1336 = vmatprep.subr.bf16.mxu0 0
      %1337 = vmatpush2.bf16.msra.mxu0 0
      %1338 = vmatprep.subr.bf16.mxu0 0
      %1339 = vmatpush2.bf16.msra.mxu0 0
      %1340 = vmatprep.subr.bf16.mxu0 0
      %1341 = vmatpush2.bf16.msra.mxu0 0
      %1342 = vmatprep.subr.bf16.mxu0 0
      %1343 = vmatpush2.bf16.msra.mxu0 0
      %1344 = vmatprep.mubr.bf16.mxu0 0
      %1345 = vmatmul.mubr.bf16.gmra.mxu0 %v1307
      %v1346 = vpop.f32.mrf.mxu0
      %v1347 = vadd.f32 0.0, %v1346
      %v1348 = vpop.f32.mrf.mxu0
      %v1349 = vpop.f32.mrf.mxu0
      %v1350 = vpop.f32.mrf.mxu0
      %1351 = vdwg.mxu0
      %v1353 = vsel %vm1009, %v1245, 0
      %v1356 = vsel %vm1262, %v1253, 0
      %1358 = vmatprep.subr.bf16.mxu0 0
      %1359 = vmatpush1.bf16.msra.mxu0 0
      %1360 = vmatprep.subr.bf16.mxu0 0
      %1361 = vmatpush1.bf16.msra.mxu0 0
      %1362 = vmatprep.subr.bf16.mxu0 0
      %1363 = vmatpush1.bf16.msra.mxu0 0
      %1364 = vmatprep.subr.bf16.mxu0 0
      %1365 = vmatpush1.bf16.msra.mxu0 0
      %1366 = vmatprep.subr.bf16.mxu0 0
      %1367 = vmatpush1.bf16.msra.mxu0 0
      %1368 = vmatprep.subr.bf16.mxu0 0
      %1369 = vmatpush1.bf16.msra.mxu0 0
      %1370 = vmatprep.subr.bf16.mxu0 0
      %1371 = vmatpush1.bf16.msra.mxu0 0
      %1372 = vmatprep.subr.bf16.mxu0 0
      %1373 = vmatpush1.bf16.msra.mxu0 %v1356
      %1374 = vmatprep.subr.bf16.mxu0 0
      %1375 = vmatpush2.bf16.msra.mxu0 0
      %1376 = vmatprep.subr.bf16.mxu0 0
      %1377 = vmatpush2.bf16.msra.mxu0 0
      %1378 = vmatprep.subr.bf16.mxu0 0
      %1379 = vmatpush2.bf16.msra.mxu0 0
      %1380 = vmatprep.subr.bf16.mxu0 0
      %1381 = vmatpush2.bf16.msra.mxu0 0
      %1382 = vmatprep.subr.bf16.mxu0 0
      %1383 = vmatpush2.bf16.msra.mxu0 0
      %1384 = vmatprep.subr.bf16.mxu0 0
      %1385 = vmatpush2.bf16.msra.mxu0 0
      %1386 = vmatprep.subr.bf16.mxu0 0
      %1387 = vmatpush2.bf16.msra.mxu0 0
      %1388 = vmatprep.subr.bf16.mxu0 0
      %1389 = vmatpush2.bf16.msra.mxu0 0
      %1390 = vmatprep.mubr.bf16.mxu0 0
      %1391 = vmatmul.mubr.bf16.gmra.mxu0 %v1353
      %v1392 = vpop.f32.mrf.mxu0
      %v1393 = vadd.f32 0.0, %v1392
      %v1394 = vpop.f32.mrf.mxu0
      %v1395 = vpop.f32.mrf.mxu0
      %v1396 = vpop.f32.mrf.mxu0
      %1397 = vdwg.mxu0
      %v1399 = vsel %vm1009, %v1246, 0
      %v1402 = vsel %vm1262, %v1254, 0
      %1404 = vmatprep.subr.bf16.mxu0 0
      %1405 = vmatpush1.bf16.msra.mxu0 0
      %1406 = vmatprep.subr.bf16.mxu0 0
      %1407 = vmatpush1.bf16.msra.mxu0 0
      %1408 = vmatprep.subr.bf16.mxu0 0
      %1409 = vmatpush1.bf16.msra.mxu0 0
      %1410 = vmatprep.subr.bf16.mxu0 0
      %1411 = vmatpush1.bf16.msra.mxu0 0
      %1412 = vmatprep.subr.bf16.mxu0 0
      %1413 = vmatpush1.bf16.msra.mxu0 0
      %1414 = vmatprep.subr.bf16.mxu0 0
      %1415 = vmatpush1.bf16.msra.mxu0 0
      %1416 = vmatprep.subr.bf16.mxu0 0
      %1417 = vmatpush1.bf16.msra.mxu0 0
      %1418 = vmatprep.subr.bf16.mxu0 0
      %1419 = vmatpush1.bf16.msra.mxu0 %v1402
      %1420 = vmatprep.subr.bf16.mxu0 0
      %1421 = vmatpush2.bf16.msra.mxu0 0
      %1422 = vmatprep.subr.bf16.mxu0 0
      %1423 = vmatpush2.bf16.msra.mxu0 0
      %1424 = vmatprep.subr.bf16.mxu0 0
      %1425 = vmatpush2.bf16.msra.mxu0 0
      %1426 = vmatprep.subr.bf16.mxu0 0
      %1427 = vmatpush2.bf16.msra.mxu0 0
      %1428 = vmatprep.subr.bf16.mxu0 0
      %1429 = vmatpush2.bf16.msra.mxu0 0
      %1430 = vmatprep.subr.bf16.mxu0 0
      %1431 = vmatpush2.bf16.msra.mxu0 0
      %1432 = vmatprep.subr.bf16.mxu0 0
      %1433 = vmatpush2.bf16.msra.mxu0 0
      %1434 = vmatprep.subr.bf16.mxu0 0
      %1435 = vmatpush2.bf16.msra.mxu0 0
      %1436 = vmatprep.mubr.bf16.mxu0 0
      %1437 = vmatmul.mubr.bf16.gmra.mxu0 %v1399
      %v1438 = vpop.f32.mrf.mxu0
      %v1439 = vadd.f32 0.0, %v1438
      %v1440 = vpop.f32.mrf.mxu0
      %v1441 = vpop.f32.mrf.mxu0
      %v1442 = vpop.f32.mrf.mxu0
      %1443 = vdwg.mxu0
      %v1445 = vsel %vm1009, %v1247, 0
      %v1448 = vsel %vm1262, %v1255, 0
      %1450 = vmatprep.subr.bf16.mxu0 0
      %1451 = vmatpush1.bf16.msra.mxu0 0
      %1452 = vmatprep.subr.bf16.mxu0 0
      %1453 = vmatpush1.bf16.msra.mxu0 0
      %1454 = vmatprep.subr.bf16.mxu0 0
      %1455 = vmatpush1.bf16.msra.mxu0 0
      %1456 = vmatprep.subr.bf16.mxu0 0
      %1457 = vmatpush1.bf16.msra.mxu0 0
      %1458 = vmatprep.subr.bf16.mxu0 0
      %1459 = vmatpush1.bf16.msra.mxu0 0
      %1460 = vmatprep.subr.bf16.mxu0 0
      %1461 = vmatpush1.bf16.msra.mxu0 0
      %1462 = vmatprep.subr.bf16.mxu0 0
      %1463 = vmatpush1.bf16.msra.mxu0 0
      %1464 = vmatprep.subr.bf16.mxu0 0
      %1465 = vmatpush1.bf16.msra.mxu0 %v1448
      %1466 = vmatprep.subr.bf16.mxu0 0
      %1467 = vmatpush2.bf16.msra.mxu0 0
      %1468 = vmatprep.subr.bf16.mxu0 0
      %1469 = vmatpush2.bf16.msra.mxu0 0
      %1470 = vmatprep.subr.bf16.mxu0 0
      %1471 = vmatpush2.bf16.msra.mxu0 0
      %1472 = vmatprep.subr.bf16.mxu0 0
      %1473 = vmatpush2.bf16.msra.mxu0 0
      %1474 = vmatprep.subr.bf16.mxu0 0
      %1475 = vmatpush2.bf16.msra.mxu0 0
      %1476 = vmatprep.subr.bf16.mxu0 0
      %1477 = vmatpush2.bf16.msra.mxu0 0
      %1478 = vmatprep.subr.bf16.mxu0 0
      %1479 = vmatpush2.bf16.msra.mxu0 0
      %1480 = vmatprep.subr.bf16.mxu0 0
      %1481 = vmatpush2.bf16.msra.mxu0 0
      %1482 = vmatprep.mubr.bf16.mxu0 0
      %1483 = vmatmul.mubr.bf16.gmra.mxu0 %v1445
      %v1484 = vpop.f32.mrf.mxu0
      %v1485 = vadd.f32 0.0, %v1484
      %v1486 = vpop.f32.mrf.mxu0
      %v1487 = vpop.f32.mrf.mxu0
      %v1488 = vpop.f32.mrf.mxu0
      %1489 = vdwg.mxu0
      %v1491 = vsel %vm1009, %v1248, 0
      %v1494 = vsel %vm1262, %v1256, 0
      %1496 = vmatprep.subr.bf16.mxu0 0
      %1497 = vmatpush1.bf16.msra.mxu0 0
      %1498 = vmatprep.subr.bf16.mxu0 0
      %1499 = vmatpush1.bf16.msra.mxu0 0
      %1500 = vmatprep.subr.bf16.mxu0 0
      %1501 = vmatpush1.bf16.msra.mxu0 0
      %1502 = vmatprep.subr.bf16.mxu0 0
      %1503 = vmatpush1.bf16.msra.mxu0 0
      %1504 = vmatprep.subr.bf16.mxu0 0
      %1505 = vmatpush1.bf16.msra.mxu0 0
      %1506 = vmatprep.subr.bf16.mxu0 0
      %1507 = vmatpush1.bf16.msra.mxu0 0
      %1508 = vmatprep.subr.bf16.mxu0 0
      %1509 = vmatpush1.bf16.msra.mxu0 0
      %1510 = vmatprep.subr.bf16.mxu0 0
      %1511 = vmatpush1.bf16.msra.mxu0 %v1494
      %1512 = vmatprep.subr.bf16.mxu0 0
      %1513 = vmatpush2.bf16.msra.mxu0 0
      %1514 = vmatprep.subr.bf16.mxu0 0
      %1515 = vmatpush2.bf16.msra.mxu0 0
      %1516 = vmatprep.subr.bf16.mxu0 0
      %1517 = vmatpush2.bf16.msra.mxu0 0
      %1518 = vmatprep.subr.bf16.mxu0 0
      %1519 = vmatpush2.bf16.msra.mxu0 0
      %1520 = vmatprep.subr.bf16.mxu0 0
      %1521 = vmatpush2.bf16.msra.mxu0 0
      %1522 = vmatprep.subr.bf16.mxu0 0
      %1523 = vmatpush2.bf16.msra.mxu0 0
      %1524 = vmatprep.subr.bf16.mxu0 0
      %1525 = vmatpush2.bf16.msra.mxu0 0
      %1526 = vmatprep.subr.bf16.mxu0 0
      %1527 = vmatpush2.bf16.msra.mxu0 0
      %1528 = vmatprep.mubr.bf16.mxu0 0
      %1529 = vmatmul.mubr.bf16.gmra.mxu0 %v1491
      %v1530 = vpop.f32.mrf.mxu0
      %v1531 = vadd.f32 0.0, %v1530
      %v1532 = vpop.f32.mrf.mxu0
      %v1533 = vpop.f32.mrf.mxu0
      %v1534 = vpop.f32.mrf.mxu0
      %1535 = vdwg.mxu0
      %v1537 = vsel %vm1009, %v1249, 0
      %v1540 = vsel %vm1262, %v1257, 0
      %1542 = vmatprep.subr.bf16.mxu0 0
      %1543 = vmatpush1.bf16.msra.mxu0 0
      %1544 = vmatprep.subr.bf16.mxu0 0
      %1545 = vmatpush1.bf16.msra.mxu0 0
      %1546 = vmatprep.subr.bf16.mxu0 0
      %1547 = vmatpush1.bf16.msra.mxu0 0
      %1548 = vmatprep.subr.bf16.mxu0 0
      %1549 = vmatpush1.bf16.msra.mxu0 0
      %1550 = vmatprep.subr.bf16.mxu0 0
      %1551 = vmatpush1.bf16.msra.mxu0 0
      %1552 = vmatprep.subr.bf16.mxu0 0
      %1553 = vmatpush1.bf16.msra.mxu0 0
      %1554 = vmatprep.subr.bf16.mxu0 0
      %1555 = vmatpush1.bf16.msra.mxu0 0
      %1556 = vmatprep.subr.bf16.mxu0 0
      %1557 = vmatpush1.bf16.msra.mxu0 %v1540
      %1558 = vmatprep.subr.bf16.mxu0 0
      %1559 = vmatpush2.bf16.msra.mxu0 0
      %1560 = vmatprep.subr.bf16.mxu0 0
      %1561 = vmatpush2.bf16.msra.mxu0 0
      %1562 = vmatprep.subr.bf16.mxu0 0
      %1563 = vmatpush2.bf16.msra.mxu0 0
      %1564 = vmatprep.subr.bf16.mxu0 0
      %1565 = vmatpush2.bf16.msra.mxu0 0
      %1566 = vmatprep.subr.bf16.mxu0 0
      %1567 = vmatpush2.bf16.msra.mxu0 0
      %1568 = vmatprep.subr.bf16.mxu0 0
      %1569 = vmatpush2.bf16.msra.mxu0 0
      %1570 = vmatprep.subr.bf16.mxu0 0
      %1571 = vmatpush2.bf16.msra.mxu0 0
      %1572 = vmatprep.subr.bf16.mxu0 0
      %1573 = vmatpush2.bf16.msra.mxu0 0
      %1574 = vmatprep.mubr.bf16.mxu0 0
      %1575 = vmatmul.mubr.bf16.gmra.mxu0 %v1537
      %v1576 = vpop.f32.mrf.mxu0
      %v1577 = vadd.f32 0.0, %v1576
      %v1578 = vpop.f32.mrf.mxu0
      %v1579 = vpop.f32.mrf.mxu0
      %v1580 = vpop.f32.mrf.mxu0
      %1581 = vdwg.mxu0
      %v1583 = vsel %vm1009, %v1250, 0
      %v1586 = vsel %vm1262, %v1258, 0
      %1588 = vmatprep.subr.bf16.mxu0 0
      %1589 = vmatpush1.bf16.msra.mxu0 0
      %1590 = vmatprep.subr.bf16.mxu0 0
      %1591 = vmatpush1.bf16.msra.mxu0 0
      %1592 = vmatprep.subr.bf16.mxu0 0
      %1593 = vmatpush1.bf16.msra.mxu0 0
      %1594 = vmatprep.subr.bf16.mxu0 0
      %1595 = vmatpush1.bf16.msra.mxu0 0
      %1596 = vmatprep.subr.bf16.mxu0 0
      %1597 = vmatpush1.bf16.msra.mxu0 0
      %1598 = vmatprep.subr.bf16.mxu0 0
      %1599 = vmatpush1.bf16.msra.mxu0 0
      %1600 = vmatprep.subr.bf16.mxu0 0
      %1601 = vmatpush1.bf16.msra.mxu0 0
      %1602 = vmatprep.subr.bf16.mxu0 0
      %1603 = vmatpush1.bf16.msra.mxu0 %v1586
      %1604 = vmatprep.subr.bf16.mxu0 0
      %1605 = vmatpush2.bf16.msra.mxu0 0
      %1606 = vmatprep.subr.bf16.mxu0 0
      %1607 = vmatpush2.bf16.msra.mxu0 0
      %1608 = vmatprep.subr.bf16.mxu0 0
      %1609 = vmatpush2.bf16.msra.mxu0 0
      %1610 = vmatprep.subr.bf16.mxu0 0
      %1611 = vmatpush2.bf16.msra.mxu0 0
      %1612 = vmatprep.subr.bf16.mxu0 0
      %1613 = vmatpush2.bf16.msra.mxu0 0
      %1614 = vmatprep.subr.bf16.mxu0 0
      %1615 = vmatpush2.bf16.msra.mxu0 0
      %1616 = vmatprep.subr.bf16.mxu0 0
      %1617 = vmatpush2.bf16.msra.mxu0 0
      %1618 = vmatprep.subr.bf16.mxu0 0
      %1619 = vmatpush2.bf16.msra.mxu0 0
      %1620 = vmatprep.mubr.bf16.mxu0 0
      %1621 = vmatmul.mubr.bf16.gmra.mxu0 %v1583
      %v1622 = vpop.f32.mrf.mxu0
      %v1623 = vadd.f32 0.0, %v1622
      %v1624 = vpop.f32.mrf.mxu0
      %v1625 = vpop.f32.mrf.mxu0
      %v1626 = vpop.f32.mrf.mxu0
      %1627 = vdwg.mxu0
      %v1628 = vadd.f32 %v1235, %v1301
      %v1629 = vadd.f32 %v1236, %v1347
      %v1630 = vadd.f32 %v1237, %v1393
      %v1631 = vadd.f32 %v1238, %v1439
      %v1632 = vadd.f32 %v1239, %v1485
      %v1633 = vadd.f32 %v1240, %v1531
      %v1634 = vadd.f32 %v1241, %v1577
      %v1635 = vadd.f32 %v1242, %v1623
      %1636 = vst.msk [vmem:[#allocation4] sm:$0xff] %vm533, %v1628
      %1637 = vst.msk [vmem:[#allocation4 + $0x8] sm:$0xff] %vm533, %v1629
      %1638 = vst.msk [vmem:[#allocation4 + $0x10] sm:$0xff] %vm533, %v1630
      %1639 = vst.msk [vmem:[#allocation4 + $0x18] sm:$0xff] %vm533, %v1631
      %1640 = vst.msk [vmem:[#allocation4 + $0x20] sm:$0xff] %vm533, %v1632
      %1641 = vst.msk [vmem:[#allocation4 + $0x28] sm:$0xff] %vm533, %v1633
      %1642 = vst.msk [vmem:[#allocation4 + $0x30] sm:$0xff] %vm533, %v1634
      %1643 = vst.msk [vmem:[#allocation4 + $0x38] sm:$0xff] %vm533, %v1635
      %1644 = vst.msk [vmem:[#allocation2] sm:$0xff] %vm1178, %v1034
      %1645 = vst.msk [vmem:[#allocation2 + $0x8] sm:$0xff] %vm1178, %v1035
      %1646 = vst.msk [vmem:[#allocation2 + $0x10] sm:$0xff] %vm1178, %v1036
      %1647 = vst.msk [vmem:[#allocation2 + $0x18] sm:$0xff] %vm1178, %v1037
      %1648 = vst.msk [vmem:[#allocation2 + $0x20] sm:$0xff] %vm1178, %v1038
      %1649 = vst.msk [vmem:[#allocation2 + $0x28] sm:$0xff] %vm1178, %v1039
      %1650 = vst.msk [vmem:[#allocation2 + $0x30] sm:$0xff] %vm1178, %v1040
      %1651 = vst.msk [vmem:[#allocation2 + $0x38] sm:$0xff] %vm1178, %v1041
      // Predicated region
      $region49: #{triangle_block.20} parent=43 // pred_check
        %p1652 = pneg %p485
      $region50: #{triangle_block.20} parent=43 // pred_check_branch
        %1654 = sbr.rel (%p1652) target = $region52
      $region51: #{triangle_block.20} parent=43 // pred_region
        %v1655 = vld [vmem:[#allocation3] sm:$0xff]
        %v1656 = vld [vmem:[#allocation3 + $0x8] sm:$0xff]
        %v1657 = vld [vmem:[#allocation3 + $0x10] sm:$0xff]
        %v1658 = vld [vmem:[#allocation3 + $0x18] sm:$0xff]
        %v1659 = vld [vmem:[#allocation3 + $0x20] sm:$0xff]
        %v1660 = vld [vmem:[#allocation3 + $0x28] sm:$0xff]
        %v1661 = vld [vmem:[#allocation3 + $0x30] sm:$0xff]
        %v1662 = vld [vmem:[#allocation3 + $0x38] sm:$0xff]
        %v1663 = vrcp.pop %v1655
        %v1664 = vrcp.pop %v1656
        %v1665 = vrcp.pop %v1657
        %v1666 = vrcp.pop %v1658
        %v1667 = vrcp.pop %v1659
        %v1668 = vrcp.pop %v1660
        %v1669 = vrcp.pop %v1661
        %v1670 = vrcp.pop %v1662
        %v1671 = vld [vmem:[#allocation4] sm:$0xff]
        %v1672 = vld [vmem:[#allocation4 + $0x8] sm:$0xff]
        %v1673 = vld [vmem:[#allocation4 + $0x10] sm:$0xff]
        %v1674 = vld [vmem:[#allocation4 + $0x18] sm:$0xff]
        %v1675 = vld [vmem:[#allocation4 + $0x20] sm:$0xff]
        %v1676 = vld [vmem:[#allocation4 + $0x28] sm:$0xff]
        %v1677 = vld [vmem:[#allocation4 + $0x30] sm:$0xff]
        %v1678 = vld [vmem:[#allocation4 + $0x38] sm:$0xff]
        %1680 = vset.pattern.permute.xlu0 0
        %1681 = vperm.xlu0 %1680, %v1663
        %v1682 = vpop.permute.xlu0 %1681
        %1685 = vset.pattern.permute.xlu0 0
        %1686 = vperm.xlu0 %1685, %v1664
        %v1687 = vpop.permute.xlu0 %1686
        %1690 = vset.pattern.permute.xlu0 0
        %1691 = vperm.xlu0 %1690, %v1665
        %v1692 = vpop.permute.xlu0 %1691
        %1695 = vset.pattern.permute.xlu0 0
        %1696 = vperm.xlu0 %1695, %v1666
        %v1697 = vpop.permute.xlu0 %1696
        %1700 = vset.pattern.permute.xlu0 0
        %1701 = vperm.xlu0 %1700, %v1667
        %v1702 = vpop.permute.xlu0 %1701
        %1705 = vset.pattern.permute.xlu0 0
        %1706 = vperm.xlu0 %1705, %v1668
        %v1707 = vpop.permute.xlu0 %1706
        %1710 = vset.pattern.permute.xlu0 0
        %1711 = vperm.xlu0 %1710, %v1669
        %v1712 = vpop.permute.xlu0 %1711
        %1715 = vset.pattern.permute.xlu0 0
        %1716 = vperm.xlu0 %1715, %v1670
        %v1717 = vpop.permute.xlu0 %1716
        %v1719 = vmul.f32 %v1671, %v1682
        %v1720 = vmul.f32 %v1672, %v1687
        %v1721 = vmul.f32 %v1673, %v1692
        %v1722 = vmul.f32 %v1674, %v1697
        %v1723 = vmul.f32 %v1675, %v1702
        %v1724 = vmul.f32 %v1676, %v1707
        %v1725 = vmul.f32 %v1677, %v1712
        %v1726 = vmul.f32 %v1678, %v1717
        %v1727 = vld [vmem:[%s472] sm:$0xf]
        %v1728 = vld [vmem:[%s472 + $0x4] sm:$0xf]
        %v1729 = vld [vmem:[%s472 + $0x8] sm:$0xf]
        %v1730 = vld [vmem:[%s472 + $0xc] sm:$0xf]
        %v1731 = vld [vmem:[%s472 + $0x10] sm:$0xf]
        %v1732 = vld [vmem:[%s472 + $0x14] sm:$0xf]
        %v1733 = vld [vmem:[%s472 + $0x18] sm:$0xf]
        %v1734 = vld [vmem:[%s472 + $0x1c] sm:$0xf]
        %v1735 = vunpack.c.l.bf16 %v1727
        %v1736 = vunpack.c.l.bf16 %v1728
        %v1737 = vunpack.c.l.bf16 %v1729
        %v1738 = vunpack.c.l.bf16 %v1730
        %v1739 = vunpack.c.l.bf16 %v1731
        %v1740 = vunpack.c.l.bf16 %v1732
        %v1741 = vunpack.c.l.bf16 %v1733
        %v1742 = vunpack.c.l.bf16 %v1734
        %v1743 = vmul.f32 %v1719, %v1735
        %v1744 = vmul.f32 %v1720, %v1736
        %v1745 = vmul.f32 %v1721, %v1737
        %v1746 = vmul.f32 %v1722, %v1738
        %v1747 = vmul.f32 %v1723, %v1739
        %v1748 = vmul.f32 %v1724, %v1740
        %v1749 = vmul.f32 %v1725, %v1741
        %v1750 = vmul.f32 %v1726, %v1742
        %v1751 = vpack.c.bf16 %v1743, %v1743
        %v1752 = vpack.c.bf16 %v1744, %v1744
        %v1753 = vpack.c.bf16 %v1745, %v1745
        %v1754 = vpack.c.bf16 %v1746, %v1746
        %v1755 = vpack.c.bf16 %v1747, %v1747
        %v1756 = vpack.c.bf16 %v1748, %v1748
        %v1757 = vpack.c.bf16 %v1749, %v1749
        %v1758 = vpack.c.bf16 %v1750, %v1750
        %vm1759 = vcmask 27648
        %1760 = vst.msk [vmem:[%s482] sm:$0xf] %vm1759, %v1751
        %1761 = vst.msk [vmem:[%s482 + $0x4] sm:$0xf] %vm1759, %v1752
        %1762 = vst.msk [vmem:[%s482 + $0x8] sm:$0xf] %vm1759, %v1753
        %1763 = vst.msk [vmem:[%s482 + $0xc] sm:$0xf] %vm1759, %v1754
        %1764 = vst.msk [vmem:[%s482 + $0x10] sm:$0xf] %vm1759, %v1755
        %1765 = vst.msk [vmem:[%s482 + $0x14] sm:$0xf] %vm1759, %v1756
        %1766 = vst.msk [vmem:[%s482 + $0x18] sm:$0xf] %vm1759, %v1757
        %1767 = vst.msk [vmem:[%s482 + $0x1c] sm:$0xf] %vm1759, %v1758
      $region52: #{triangle_block.20} parent=43 // pred_fallthru
        _
      %s1768 = smul.u32 8, %s23
      %p1769 = scmp.lt.s32.totalorder %s22, 3
      %s1770 = scalar_select %p1769, %s22, 3
      %p1771 = scmp.lt.s32.totalorder %s1768, 7
      %s1772 = scalar_select %p1771, %s1768, 7
      %s1773 = smul.addr %s1770, 8
      %s1774 = sadd.s32 %s1772, %s1773
      %s1775 = smul.addr %s1774, 4
      %s1776 = scalar_lea.vmem %s6, %s1775
      // Predicated region
      $region53: #{triangle_block.20} parent=43 // pred_check
        %p1777 = pneg %p228
      $region54: #{triangle_block.20} parent=43 // pred_check_branch
        %1779 = sbr.rel (%p1777) target = $region56
      $region55: #{triangle_block.20} parent=43 // pred_region
        %s1780 = smul.u32 8, %s23
      $region56: #{triangle_block.20} parent=43 // pred_fallthru
        _
    $region44: #{triangle_block.20} parent=5 // pred_fallthru
      _
    %p1781 = scmp.le.s32.totalorder 2, %s12
    // Predicated region
    $region57: #{triangle_block.20} parent=5 // pred_check
      %p1782 = pneg %p1781
    $region58: #{triangle_block.20} parent=5 // pred_check_branch
      %1784 = sbr.rel (%p1782) target = $region60
    $region59: #{triangle_block.20} parent=5 // pred_region
      %s1785 = ssub.s32 %s12, 2
      // Predicated region
      $region61: #{triangle_block.20} parent=59 // pred_check
        %p1786 = pneg %p234
      $region62: #{triangle_block.20} parent=59 // pred_check_branch
        %1788 = sbr.rel (%p1786) target = $region64
      $region63: #{triangle_block.20} parent=59 // pred_region
        %s1789 = smul.u32 8, %s26
        %p1790 = scmp.lt.s32.totalorder %s25, 3
        %s1791 = scalar_select %p1790, %s25, 3
        %p1792 = scmp.lt.s32.totalorder %s1789, 7
        %s1793 = scalar_select %p1792, %s1789, 7
        %s1794 = smul.addr %s1791, 8
        %s1795 = sadd.s32 %s1793, %s1794
        %s1796 = smul.addr %s1795, 4
        %s1797 = scalar_lea.vmem %s6, %s1796
      $region64: #{triangle_block.20} parent=59 // pred_fallthru
        _
    $region60: #{triangle_block.20} parent=5 // pred_fallthru
      _
  $region6: #{triangle_block.20} parent=0 // loop_footer
    %s16 = sadd.s32 1, %s12
  $region7: #{triangle_block.20} parent=0 // loop_footer_branch
    %11 = sbr.rel target = $region3
  $region8: #{triangle_block.20} parent=0 // loop_exit
    _

// kernel: triangle_block.19
$region0: #{triangle_block.19}
  #allocation0 [shape = 'u32[]', space=smem, size = 0x4, offset = 0x4, fixed_abs, tag = 'smem constant byte address 0x4 - core index']
  #allocation1 [shape = 'u32[144,128]{1,0:T(1,128)}', space=vmem, size = 0x12000, scoped, tag = 'internal scratch']
  %s0 = inlined_call_operand.vmem [shape: f32[64,16], index: 0, kind: input, shape index: {}]
  %s1 = inlined_call_operand.vmem [shape: f32[1,16], index: 1, kind: input, shape index: {}]
  %s2 = inlined_call_operand.vmem [shape: f32[1,16], index: 2, kind: input, shape index: {}]
  %s3 = inlined_call_operand.vmem [shape: bf16[16,68], index: 3, kind: input, shape index: {}]
  %s4 = inlined_call_operand.vmem [shape: bf16[4,64,4], index: 4, kind: output, shape index: {0}]
  %s5 = inlined_call_operand.vmem [shape: bf16[4,64,4], index: 5, kind: output, shape index: {1}]
  %s6 = inlined_call_operand.vmem [shape: bf16[4,64,4], index: 6, kind: output, shape index: {2}]
  %s7 = inlined_call_operand.vmem [shape: bf16[4,64,4], index: 7, kind: output, shape index: {3}]
  %s8 = inlined_call_operand.vmem [shape: bf16[4,64], index: 8, kind: output, shape index: {4}]
  %9 = xla_tuple %s4, %s5, %s6, %s7, %s8
  %s10 = sld [smem:[#allocation0]]
  $region58: #{triangle_block.19} parent=0
    _
  %s12 = ssub.s32 1, %s10
  %s13 = scalar_select 0, %s12, %s10
  // Predicated region
  $region2: #{triangle_block.19} parent=0 // pred_check
    _
  $region3: #{triangle_block.19} parent=0 // pred_check_branch
    %15 = sbr.rel (0) target = $region5
  $region4: #{triangle_block.19} parent=0 // pred_region
    _
  $region5: #{triangle_block.19} parent=0 // pred_fallthru
    _
  // Predicated region
  $region6: #{triangle_block.19} parent=0 // pred_check
    _
  $region7: #{triangle_block.19} parent=0 // pred_check_branch
    %17 = sbr.rel (0) target = $region9
  $region8: #{triangle_block.19} parent=0 // pred_region
    _
  $region9: #{triangle_block.19} parent=0 // pred_fallthru
    _
  // Predicated region
  $region10: #{triangle_block.19} parent=0 // pred_check
    _
  $region11: #{triangle_block.19} parent=0 // pred_check_branch
    %19 = sbr.rel (0) target = $region13
  $region12: #{triangle_block.19} parent=0 // pred_region
    _
  $region13: #{triangle_block.19} parent=0 // pred_fallthru
    _
  // Predicated region
  $region14: #{triangle_block.19} parent=0 // pred_check
    _
  $region15: #{triangle_block.19} parent=0 // pred_check_branch
    %21 = sbr.rel (0) target = $region17
  $region16: #{triangle_block.19} parent=0 // pred_region
    _
  $region17: #{triangle_block.19} parent=0 // pred_fallthru
    _
  %v23 = vld [vmem:[%s0] sm:$0xff]
  %v24 = vld [vmem:[%s0 + $0x8] sm:$0xff]
  %v25 = vld [vmem:[%s0 + $0x10] sm:$0xff]
  %v26 = vld [vmem:[%s0 + $0x18] sm:$0xff]
  %v27 = vld [vmem:[%s0 + $0x20] sm:$0xff]
  %v28 = vld [vmem:[%s0 + $0x28] sm:$0xff]
  %v29 = vld [vmem:[%s0 + $0x30] sm:$0xff]
  %v30 = vld [vmem:[%s0 + $0x38] sm:$0xff]
  %v31 = vld [vmem:[%s1] sm:$0x1]
  %v32 = vld [vmem:[%s2] sm:$0x1]
  %vm33 = vcmask 130048
  %v34 = vsel %vm33, %v23, 0.0
  %35 = vadd.xlane.f32.xlu0 %v34
  %v36 = vpop.xlane.xlu0 %35
  %v37 = vsel %vm33, %v24, 0.0
  %38 = vadd.xlane.f32.xlu0 %v37
  %v39 = vpop.xlane.xlu0 %38
  %v40 = vsel %vm33, %v25, 0.0
  %41 = vadd.xlane.f32.xlu0 %v40
  %v42 = vpop.xlane.xlu0 %41
  %v43 = vsel %vm33, %v26, 0.0
  %44 = vadd.xlane.f32.xlu0 %v43
  %v45 = vpop.xlane.xlu0 %44
  %v46 = vsel %vm33, %v27, 0.0
  %47 = vadd.xlane.f32.xlu0 %v46
  %v48 = vpop.xlane.xlu0 %47
  %v49 = vsel %vm33, %v28, 0.0
  %50 = vadd.xlane.f32.xlu0 %v49
  %v51 = vpop.xlane.xlu0 %50
  %v52 = vsel %vm33, %v29, 0.0
  %53 = vadd.xlane.f32.xlu0 %v52
  %v54 = vpop.xlane.xlu0 %53
  %v55 = vsel %vm33, %v30, 0.0
  %56 = vadd.xlane.f32.xlu0 %v55
  %v57 = vpop.xlane.xlu0 %56
  %v58 = vrcp.pop 16.0
  %v59 = vmul.f32 %v36, %v58
  %v60 = vmul.f32 %v39, %v58
  %v61 = vmul.f32 %v42, %v58
  %v62 = vmul.f32 %v45, %v58
  %v63 = vmul.f32 %v48, %v58
  %v64 = vmul.f32 %v51, %v58
  %v65 = vmul.f32 %v54, %v58
  %v66 = vmul.f32 %v57, %v58
  %v67 = vsub.f32 %v23, %v59
  %v68 = vsub.f32 %v24, %v60
  %v69 = vsub.f32 %v25, %v61
  %v70 = vsub.f32 %v26, %v62
  %v71 = vsub.f32 %v27, %v63
  %v72 = vsub.f32 %v28, %v64
  %v73 = vsub.f32 %v29, %v65
  %v74 = vsub.f32 %v30, %v66
  %v75 = vmul.f32 %v67, %v67
  %v76 = vmul.f32 %v68, %v68
  %v77 = vmul.f32 %v69, %v69
  %v78 = vmul.f32 %v70, %v70
  %v79 = vmul.f32 %v71, %v71
  %v80 = vmul.f32 %v72, %v72
  %v81 = vmul.f32 %v73, %v73
  %v82 = vmul.f32 %v74, %v74
  %v83 = vsel %vm33, %v75, 0.0
  %84 = vadd.xlane.f32.xlu0 %v83
  %v85 = vpop.xlane.xlu0 %84
  %v86 = vsel %vm33, %v76, 0.0
  %87 = vadd.xlane.f32.xlu0 %v86
  %v88 = vpop.xlane.xlu0 %87
  %v89 = vsel %vm33, %v77, 0.0
  %90 = vadd.xlane.f32.xlu0 %v89
  %v91 = vpop.xlane.xlu0 %90
  %v92 = vsel %vm33, %v78, 0.0
  %93 = vadd.xlane.f32.xlu0 %v92
  %v94 = vpop.xlane.xlu0 %93
  %v95 = vsel %vm33, %v79, 0.0
  %96 = vadd.xlane.f32.xlu0 %v95
  %v97 = vpop.xlane.xlu0 %96
  %v98 = vsel %vm33, %v80, 0.0
  %99 = vadd.xlane.f32.xlu0 %v98
  %v100 = vpop.xlane.xlu0 %99
  %v101 = vsel %vm33, %v81, 0.0
  %102 = vadd.xlane.f32.xlu0 %v101
  %v103 = vpop.xlane.xlu0 %102
  %v104 = vsel %vm33, %v82, 0.0
  %105 = vadd.xlane.f32.xlu0 %v104
  %v106 = vpop.xlane.xlu0 %105
  %v107 = vmul.f32 %v85, %v58
  %v108 = vmul.f32 %v88, %v58
  %v109 = vmul.f32 %v91, %v58
  %v110 = vmul.f32 %v94, %v58
  %v111 = vmul.f32 %v97, %v58
  %v112 = vmul.f32 %v100, %v58
  %v113 = vmul.f32 %v103, %v58
  %v114 = vmul.f32 %v106, %v58
  %v115 = vadd.f32 %v107, 1e-05
  %v116 = vadd.f32 %v108, 1e-05
  %v117 = vadd.f32 %v109, 1e-05
  %v118 = vadd.f32 %v110, 1e-05
  %v119 = vadd.f32 %v111, 1e-05
  %v120 = vadd.f32 %v112, 1e-05
  %v121 = vadd.f32 %v113, 1e-05
  %v122 = vadd.f32 %v114, 1e-05
  %v123 = vrsqrt.pop %v115
  %v124 = vrsqrt.pop %v116
  %v125 = vrsqrt.pop %v117
  %v126 = vrsqrt.pop %v118
  %v127 = vrsqrt.pop %v119
  %v128 = vrsqrt.pop %v120
  %v129 = vrsqrt.pop %v121
  %v130 = vrsqrt.pop %v122
  %v131 = vmul.f32 %v67, %v123
  %v132 = vmul.f32 %v68, %v124
  %v133 = vmul.f32 %v69, %v125
  %v134 = vmul.f32 %v70, %v126
  %v135 = vmul.f32 %v71, %v127
  %v136 = vmul.f32 %v72, %v128
  %v137 = vmul.f32 %v73, %v129
  %v138 = vmul.f32 %v74, %v130
  %v140 = vlaneseq
  %v141 = vshrl.u32 %v140, 7
  %v142 = vsub.s32 0, %v141
  %v143 = vrot.slane %v31, %v142
  %v145 = vmul.f32 %v131, %v143
  %v146 = vmul.f32 %v132, %v143
  %v147 = vmul.f32 %v133, %v143
  %v148 = vmul.f32 %v134, %v143
  %v149 = vmul.f32 %v135, %v143
  %v150 = vmul.f32 %v136, %v143
  %v151 = vmul.f32 %v137, %v143
  %v152 = vmul.f32 %v138, %v143
  %v154 = vlaneseq
  %v155 = vshrl.u32 %v154, 7
  %v156 = vsub.s32 0, %v155
  %v157 = vrot.slane %v32, %v156
  %v159 = vadd.f32 %v145, %v157
  %v160 = vadd.f32 %v146, %v157
  %v161 = vadd.f32 %v147, %v157
  %v162 = vadd.f32 %v148, %v157
  %v163 = vadd.f32 %v149, %v157
  %v164 = vadd.f32 %v150, %v157
  %v165 = vadd.f32 %v151, %v157
  %v166 = vadd.f32 %v152, %v157
  %v167 = vpack.c.bf16 %v160, %v159
  %v168 = vpack.c.bf16 %v162, %v161
  %v169 = vpack.c.bf16 %v164, %v163
  %v170 = vpack.c.bf16 %v166, %v165
  %v171 = vld [vmem:[%s3] sm:$0xf]
  %v172 = vld [vmem:[%s3 + $0x4] sm:$0xf]
  %v175 = vunpack.c.l.b16 %v171
  %v176 = vunpack.c.l.b16 %v172
  %v177 = vpack.c.b16 %v176, %v175
  %v180 = vsel %vm33, %v167, 0
  %v183 = vsel %vm33, %v168, 0
  %v186 = vsel %vm33, %v169, 0
  %v189 = vsel %vm33, %v170, 0
  %191 = vmatprep.subr.bf16.mxu0 0
  %192 = vmatpush1.bf16.msra.mxu0 0
  %193 = vmatprep.subr.bf16.mxu0 0
  %194 = vmatpush1.bf16.msra.mxu0 0
  %195 = vmatprep.subr.bf16.mxu0 0
  %196 = vmatpush1.bf16.msra.mxu0 0
  %197 = vmatprep.subr.bf16.mxu0 0
  %198 = vmatpush1.bf16.msra.mxu0 0
  %199 = vmatprep.subr.bf16.mxu0 0
  %200 = vmatpush1.bf16.msra.mxu0 0
  %201 = vmatprep.subr.bf16.mxu0 0
  %202 = vmatpush1.bf16.msra.mxu0 0
  %203 = vmatprep.subr.bf16.mxu0 0
  %204 = vmatpush1.bf16.msra.mxu0 0
  %205 = vmatprep.subr.bf16.mxu0 0
  %206 = vmatpush1.bf16.msra.mxu0 %v177
  %207 = vmatprep.subr.bf16.mxu0 0
  %208 = vmatpush2.bf16.msra.mxu0 0
  %209 = vmatprep.subr.bf16.mxu0 0
  %210 = vmatpush2.bf16.msra.mxu0 0
  %211 = vmatprep.subr.bf16.mxu0 0
  %212 = vmatpush2.bf16.msra.mxu0 0
  %213 = vmatprep.subr.bf16.mxu0 0
  %214 = vmatpush2.bf16.msra.mxu0 0
  %215 = vmatprep.subr.bf16.mxu0 0
  %216 = vmatpush2.bf16.msra.mxu0 0
  %217 = vmatprep.subr.bf16.mxu0 0
  %218 = vmatpush2.bf16.msra.mxu0 0
  %219 = vmatprep.subr.bf16.mxu0 0
  %220 = vmatpush2.bf16.msra.mxu0 0
  %221 = vmatprep.subr.bf16.mxu0 0
  %222 = vmatpush2.bf16.msra.mxu0 0
  %223 = vmatprep.mubr.bf16.mxu0 0
  %224 = vmatmul.mubr.bf16.gmra.mxu0 %v180
  %v225 = vpop.f32.mrf.mxu0
  %v226 = vadd.f32 0.0, %v225
  %v227 = vpop.f32.mrf.mxu0
  %v228 = vpop.f32.mrf.mxu0
  %v229 = vadd.f32 0.0, %v228
  %v230 = vpop.f32.mrf.mxu0
  %231 = vmatprep.mubr.bf16.mxu0 0
  %232 = vmatmul.mubr.bf16.gmra.mxu0 %v183
  %v233 = vpop.f32.mrf.mxu0
  %v234 = vadd.f32 0.0, %v233
  %v235 = vpop.f32.mrf.mxu0
  %v236 = vpop.f32.mrf.mxu0
  %v237 = vadd.f32 0.0, %v236
  %v238 = vpop.f32.mrf.mxu0
  %239 = vmatprep.mubr.bf16.mxu0 0
  %240 = vmatmul.mubr.bf16.gmra.mxu0 %v186
  %v241 = vpop.f32.mrf.mxu0
  %v242 = vadd.f32 0.0, %v241
  %v243 = vpop.f32.mrf.mxu0
  %v244 = vpop.f32.mrf.mxu0
  %v245 = vadd.f32 0.0, %v244
  %v246 = vpop.f32.mrf.mxu0
  %247 = vmatprep.mubr.bf16.mxu0 0
  %248 = vmatmul.mubr.bf16.gmra.mxu0 %v189
  %v249 = vpop.f32.mrf.mxu0
  %v250 = vadd.f32 0.0, %v249
  %v251 = vpop.f32.mrf.mxu0
  %v252 = vpop.f32.mrf.mxu0
  %v253 = vadd.f32 0.0, %v252
  %v254 = vpop.f32.mrf.mxu0
  %255 = vdwg.mxu0
  %v256 = vpack.c.bf16 %v229, %v226
  %v257 = vpack.c.bf16 %v237, %v234
  %v258 = vpack.c.bf16 %v245, %v242
  %v259 = vpack.c.bf16 %v253, %v250
  %v264 = vunpack.c.l.b16 %v256
  %v265 = vunpack.c.h.b16 %v256
  %v266 = vunpack.c.l.b16 %v257
  %v267 = vunpack.c.h.b16 %v257
  %v268 = vunpack.c.l.b16 %v258
  %v269 = vunpack.c.h.b16 %v258
  %v270 = vunpack.c.l.b16 %v259
  %v271 = vunpack.c.h.b16 %v259
  %v272 = vpack.c.b16 %v264, %v264
  %v273 = vpack.c.b16 %v265, %v265
  %v274 = vpack.c.b16 %v266, %v266
  %v275 = vpack.c.b16 %v267, %v267
  %v276 = vpack.c.b16 %v268, %v268
  %v277 = vpack.c.b16 %v269, %v269
  %v278 = vpack.c.b16 %v270, %v270
  %v279 = vpack.c.b16 %v271, %v271
  %vm288 = vcmask 27648
  %289 = vst.msk [vmem:[%s4] sm:$0xf] %vm288, %v272
  %290 = vst.msk [vmem:[%s4 + $0x4] sm:$0xf] %vm288, %v273
  %291 = vst.msk [vmem:[%s4 + $0x8] sm:$0xf] %vm288, %v274
  %292 = vst.msk [vmem:[%s4 + $0xc] sm:$0xf] %vm288, %v275
  %293 = vst.msk [vmem:[%s4 + $0x10] sm:$0xf] %vm288, %v276
  %294 = vst.msk [vmem:[%s4 + $0x14] sm:$0xf] %vm288, %v277
  %295 = vst.msk [vmem:[%s4 + $0x18] sm:$0xf] %vm288, %v278
  %296 = vst.msk [vmem:[%s4 + $0x1c] sm:$0xf] %vm288, %v279
  %297 = vrot.lane.b32.xlu0 %v272, 112
  %v298 = vpop.permute.xlu0 %297
  %299 = vrot.lane.b32.xlu0 %v273, 112
  %v300 = vpop.permute.xlu0 %299
  %301 = vrot.lane.b32.xlu0 %v274, 112
  %v302 = vpop.permute.xlu0 %301
  %303 = vrot.lane.b32.xlu0 %v275, 112
  %v304 = vpop.permute.xlu0 %303
  %305 = vrot.lane.b32.xlu0 %v276, 112
  %v306 = vpop.permute.xlu0 %305
  %307 = vrot.lane.b32.xlu0 %v277, 112
  %v308 = vpop.permute.xlu0 %307
  %309 = vrot.lane.b32.xlu0 %v278, 112
  %v310 = vpop.permute.xlu0 %309
  %311 = vrot.lane.b32.xlu0 %v279, 112
  %v312 = vpop.permute.xlu0 %311
  %321 = vst.msk [vmem:[%s5] sm:$0xf] %vm288, %v298
  %322 = vst.msk [vmem:[%s5 + $0x4] sm:$0xf] %vm288, %v300
  %323 = vst.msk [vmem:[%s5 + $0x8] sm:$0xf] %vm288, %v302
  %324 = vst.msk [vmem:[%s5 + $0xc] sm:$0xf] %vm288, %v304
  %325 = vst.msk [vmem:[%s5 + $0x10] sm:$0xf] %vm288, %v306
  %326 = vst.msk [vmem:[%s5 + $0x14] sm:$0xf] %vm288, %v308
  %327 = vst.msk [vmem:[%s5 + $0x18] sm:$0xf] %vm288, %v310
  %328 = vst.msk [vmem:[%s5 + $0x1c] sm:$0xf] %vm288, %v312
  %329 = vrot.lane.b32.xlu0 %v272, 96
  %v330 = vpop.permute.xlu0 %329
  %331 = vrot.lane.b32.xlu0 %v273, 96
  %v332 = vpop.permute.xlu0 %331
  %333 = vrot.lane.b32.xlu0 %v274, 96
  %v334 = vpop.permute.xlu0 %333
  %335 = vrot.lane.b32.xlu0 %v275, 96
  %v336 = vpop.permute.xlu0 %335
  %337 = vrot.lane.b32.xlu0 %v276, 96
  %v338 = vpop.permute.xlu0 %337
  %339 = vrot.lane.b32.xlu0 %v277, 96
  %v340 = vpop.permute.xlu0 %339
  %341 = vrot.lane.b32.xlu0 %v278, 96
  %v342 = vpop.permute.xlu0 %341
  %343 = vrot.lane.b32.xlu0 %v279, 96
  %v344 = vpop.permute.xlu0 %343
  %353 = vst.msk [vmem:[%s6] sm:$0xf] %vm288, %v330
  %354 = vst.msk [vmem:[%s6 + $0x4] sm:$0xf] %vm288, %v332
  %355 = vst.msk [vmem:[%s6 + $0x8] sm:$0xf] %vm288, %v334
  %356 = vst.msk [vmem:[%s6 + $0xc] sm:$0xf] %vm288, %v336
  %357 = vst.msk [vmem:[%s6 + $0x10] sm:$0xf] %vm288, %v338
  %358 = vst.msk [vmem:[%s6 + $0x14] sm:$0xf] %vm288, %v340
  %359 = vst.msk [vmem:[%s6 + $0x18] sm:$0xf] %vm288, %v342
  %360 = vst.msk [vmem:[%s6 + $0x1c] sm:$0xf] %vm288, %v344
  %v361 = vxor.u32 %v226, 2147483648
  %v362 = vxor.u32 %v229, 2147483648
  %v363 = vxor.u32 %v234, 2147483648
  %v364 = vxor.u32 %v237, 2147483648
  %v365 = vxor.u32 %v242, 2147483648
  %v366 = vxor.u32 %v245, 2147483648
  %v367 = vxor.u32 %v250, 2147483648
  %v368 = vxor.u32 %v253, 2147483648
  %v369 = vmul.f32 %v361, 1.442695
  %v370 = vpow.pop %v369
  %v371 = vmul.f32 %v362, 1.442695
  %v372 = vpow.pop %v371
  %v373 = vmul.f32 %v363, 1.442695
  %v374 = vpow.pop %v373
  %v375 = vmul.f32 %v364, 1.442695
  %v376 = vpow.pop %v375
  %v377 = vmul.f32 %v365, 1.442695
  %v378 = vpow.pop %v377
  %v379 = vmul.f32 %v366, 1.442695
  %v380 = vpow.pop %v379
  %v381 = vmul.f32 %v367, 1.442695
  %v382 = vpow.pop %v381
  %v383 = vmul.f32 %v368, 1.442695
  %v384 = vpow.pop %v383
  %v385 = vadd.f32 %v370, 1.0
  %v386 = vadd.f32 %v372, 1.0
  %v387 = vadd.f32 %v374, 1.0
  %v388 = vadd.f32 %v376, 1.0
  %v389 = vadd.f32 %v378, 1.0
  %v390 = vadd.f32 %v380, 1.0
  %v391 = vadd.f32 %v382, 1.0
  %v392 = vadd.f32 %v384, 1.0
  %v393 = vrcp.pop %v385
  %v394 = vmul.f32 1.0, %v393
  %v395 = vrcp.pop %v386
  %v396 = vmul.f32 1.0, %v395
  %v397 = vrcp.pop %v387
  %v398 = vmul.f32 1.0, %v397
  %v399 = vrcp.pop %v388
  %v400 = vmul.f32 1.0, %v399
  %v401 = vrcp.pop %v389
  %v402 = vmul.f32 1.0, %v401
  %v403 = vrcp.pop %v390
  %v404 = vmul.f32 1.0, %v403
  %v405 = vrcp.pop %v391
  %v406 = vmul.f32 1.0, %v405
  %v407 = vrcp.pop %v392
  %v408 = vmul.f32 1.0, %v407
  %v409 = vpack.c.bf16 %v396, %v394
  %v410 = vpack.c.bf16 %v400, %v398
  %v411 = vpack.c.bf16 %v404, %v402
  %v412 = vpack.c.bf16 %v408, %v406
  %v417 = vunpack.c.l.b16 %v409
  %v418 = vunpack.c.h.b16 %v409
  %v419 = vunpack.c.l.b16 %v410
  %v420 = vunpack.c.h.b16 %v410
  %v421 = vunpack.c.l.b16 %v411
  %v422 = vunpack.c.h.b16 %v411
  %v423 = vunpack.c.l.b16 %v412
  %v424 = vunpack.c.h.b16 %v412
  %v425 = vpack.c.b16 %v417, %v417
  %v426 = vpack.c.b16 %v418, %v418
  %v427 = vpack.c.b16 %v419, %v419
  %v428 = vpack.c.b16 %v420, %v420
  %v429 = vpack.c.b16 %v421, %v421
  %v430 = vpack.c.b16 %v422, %v422
  %v431 = vpack.c.b16 %v423, %v423
  %v432 = vpack.c.b16 %v424, %v424
  %433 = vrot.lane.b32.xlu0 %v425, 80
  %v434 = vpop.permute.xlu0 %433
  %435 = vrot.lane.b32.xlu0 %v426, 80
  %v436 = vpop.permute.xlu0 %435
  %437 = vrot.lane.b32.xlu0 %v427, 80
  %v438 = vpop.permute.xlu0 %437
  %439 = vrot.lane.b32.xlu0 %v428, 80
  %v440 = vpop.permute.xlu0 %439
  %441 = vrot.lane.b32.xlu0 %v429, 80
  %v442 = vpop.permute.xlu0 %441
  %443 = vrot.lane.b32.xlu0 %v430, 80
  %v444 = vpop.permute.xlu0 %443
  %445 = vrot.lane.b32.xlu0 %v431, 80
  %v446 = vpop.permute.xlu0 %445
  %447 = vrot.lane.b32.xlu0 %v432, 80
  %v448 = vpop.permute.xlu0 %447
  %457 = vst.msk [vmem:[%s7] sm:$0xf] %vm288, %v434
  %458 = vst.msk [vmem:[%s7 + $0x4] sm:$0xf] %vm288, %v436
  %459 = vst.msk [vmem:[%s7 + $0x8] sm:$0xf] %vm288, %v438
  %460 = vst.msk [vmem:[%s7 + $0xc] sm:$0xf] %vm288, %v440
  %461 = vst.msk [vmem:[%s7 + $0x10] sm:$0xf] %vm288, %v442
  %462 = vst.msk [vmem:[%s7 + $0x14] sm:$0xf] %vm288, %v444
  %463 = vst.msk [vmem:[%s7 + $0x18] sm:$0xf] %vm288, %v446
  %464 = vst.msk [vmem:[%s7 + $0x1c] sm:$0xf] %vm288, %v448
  %465 = vrot.lane.b32.xlu0 %v272, 124
  %v466 = vpop.permute.xlu0 %465
  %467 = vrot.lane.b32.xlu0 %v273, 124
  %v468 = vpop.permute.xlu0 %467
  %469 = vrot.lane.b32.xlu0 %v274, 124
  %v470 = vpop.permute.xlu0 %469
  %471 = vrot.lane.b32.xlu0 %v275, 124
  %v472 = vpop.permute.xlu0 %471
  %473 = vrot.lane.b32.xlu0 %v276, 124
  %v474 = vpop.permute.xlu0 %473
  %475 = vrot.lane.b32.xlu0 %v277, 124
  %v476 = vpop.permute.xlu0 %475
  %477 = vrot.lane.b32.xlu0 %v278, 124
  %v478 = vpop.permute.xlu0 %477
  %479 = vrot.lane.b32.xlu0 %v279, 124
  %v480 = vpop.permute.xlu0 %479
  %s489 = scalar_lea.vmem %s4, 32
  %490 = vst.msk [vmem:[%s489] sm:$0xf] %vm288, %v466
  %491 = vst.msk [vmem:[%s489 + $0x4] sm:$0xf] %vm288, %v468
  %492 = vst.msk [vmem:[%s489 + $0x8] sm:$0xf] %vm288, %v470
  %493 = vst.msk [vmem:[%s489 + $0xc] sm:$0xf] %vm288, %v472
  %494 = vst.msk [vmem:[%s489 + $0x10] sm:$0xf] %vm288, %v474
  %495 = vst.msk [vmem:[%s489 + $0x14] sm:$0xf] %vm288, %v476
  %496 = vst.msk [vmem:[%s489 + $0x18] sm:$0xf] %vm288, %v478
  %497 = vst.msk [vmem:[%s489 + $0x1c] sm:$0xf] %vm288, %v480
  %498 = vrot.lane.b32.xlu0 %v272, 108
  %v499 = vpop.permute.xlu0 %498
  %500 = vrot.lane.b32.xlu0 %v273, 108
  %v501 = vpop.permute.xlu0 %500
  %502 = vrot.lane.b32.xlu0 %v274, 108
  %v503 = vpop.permute.xlu0 %502
  %504 = vrot.lane.b32.xlu0 %v275, 108
  %v505 = vpop.permute.xlu0 %504
  %506 = vrot.lane.b32.xlu0 %v276, 108
  %v507 = vpop.permute.xlu0 %506
  %508 = vrot.lane.b32.xlu0 %v277, 108
  %v509 = vpop.permute.xlu0 %508
  %510 = vrot.lane.b32.xlu0 %v278, 108
  %v511 = vpop.permute.xlu0 %510
  %512 = vrot.lane.b32.xlu0 %v279, 108
  %v513 = vpop.permute.xlu0 %512
  %s522 = scalar_lea.vmem %s5, 32
  %523 = vst.msk [vmem:[%s522] sm:$0xf] %vm288, %v499
  %524 = vst.msk [vmem:[%s522 + $0x4] sm:$0xf] %vm288, %v501
  %525 = vst.msk [vmem:[%s522 + $0x8] sm:$0xf] %vm288, %v503
  %526 = vst.msk [vmem:[%s522 + $0xc] sm:$0xf] %vm288, %v505
  %527 = vst.msk [vmem:[%s522 + $0x10] sm:$0xf] %vm288, %v507
  %528 = vst.msk [vmem:[%s522 + $0x14] sm:$0xf] %vm288, %v509
  %529 = vst.msk [vmem:[%s522 + $0x18] sm:$0xf] %vm288, %v511
  %530 = vst.msk [vmem:[%s522 + $0x1c] sm:$0xf] %vm288, %v513
  %531 = vrot.lane.b32.xlu0 %v272, 92
  %v532 = vpop.permute.xlu0 %531
  %533 = vrot.lane.b32.xlu0 %v273, 92
  %v534 = vpop.permute.xlu0 %533
  %535 = vrot.lane.b32.xlu0 %v274, 92
  %v536 = vpop.permute.xlu0 %535
  %537 = vrot.lane.b32.xlu0 %v275, 92
  %v538 = vpop.permute.xlu0 %537
  %539 = vrot.lane.b32.xlu0 %v276, 92
  %v540 = vpop.permute.xlu0 %539
  %541 = vrot.lane.b32.xlu0 %v277, 92
  %v542 = vpop.permute.xlu0 %541
  %543 = vrot.lane.b32.xlu0 %v278, 92
  %v544 = vpop.permute.xlu0 %543
  %545 = vrot.lane.b32.xlu0 %v279, 92
  %v546 = vpop.permute.xlu0 %545
  %s555 = scalar_lea.vmem %s6, 32
  %556 = vst.msk [vmem:[%s555] sm:$0xf] %vm288, %v532
  %557 = vst.msk [vmem:[%s555 + $0x4] sm:$0xf] %vm288, %v534
  %558 = vst.msk [vmem:[%s555 + $0x8] sm:$0xf] %vm288, %v536
  %559 = vst.msk [vmem:[%s555 + $0xc] sm:$0xf] %vm288, %v538
  %560 = vst.msk [vmem:[%s555 + $0x10] sm:$0xf] %vm288, %v540
  %561 = vst.msk [vmem:[%s555 + $0x14] sm:$0xf] %vm288, %v542
  %562 = vst.msk [vmem:[%s555 + $0x18] sm:$0xf] %vm288, %v544
  %563 = vst.msk [vmem:[%s555 + $0x1c] sm:$0xf] %vm288, %v546
  %564 = vrot.lane.b32.xlu0 %v425, 76
  %v565 = vpop.permute.xlu0 %564
  %566 = vrot.lane.b32.xlu0 %v426, 76
  %v567 = vpop.permute.xlu0 %566
  %568 = vrot.lane.b32.xlu0 %v427, 76
  %v569 = vpop.permute.xlu0 %568
  %570 = vrot.lane.b32.xlu0 %v428, 76
  %v571 = vpop.permute.xlu0 %570
  %572 = vrot.lane.b32.xlu0 %v429, 76
  %v573 = vpop.permute.xlu0 %572
  %574 = vrot.lane.b32.xlu0 %v430, 76
  %v575 = vpop.permute.xlu0 %574
  %576 = vrot.lane.b32.xlu0 %v431, 76
  %v577 = vpop.permute.xlu0 %576
  %578 = vrot.lane.b32.xlu0 %v432, 76
  %v579 = vpop.permute.xlu0 %578
  %s588 = scalar_lea.vmem %s7, 32
  %589 = vst.msk [vmem:[%s588] sm:$0xf] %vm288, %v565
  %590 = vst.msk [vmem:[%s588 + $0x4] sm:$0xf] %vm288, %v567
  %591 = vst.msk [vmem:[%s588 + $0x8] sm:$0xf] %vm288, %v569
  %592 = vst.msk [vmem:[%s588 + $0xc] sm:$0xf] %vm288, %v571
  %593 = vst.msk [vmem:[%s588 + $0x10] sm:$0xf] %vm288, %v573
  %594 = vst.msk [vmem:[%s588 + $0x14] sm:$0xf] %vm288, %v575
  %595 = vst.msk [vmem:[%s588 + $0x18] sm:$0xf] %vm288, %v577
  %596 = vst.msk [vmem:[%s588 + $0x1c] sm:$0xf] %vm288, %v579
  %597 = vrot.lane.b32.xlu0 %v272, 120
  %v598 = vpop.permute.xlu0 %597
  %599 = vrot.lane.b32.xlu0 %v273, 120
  %v600 = vpop.permute.xlu0 %599
  %601 = vrot.lane.b32.xlu0 %v274, 120
  %v602 = vpop.permute.xlu0 %601
  %603 = vrot.lane.b32.xlu0 %v275, 120
  %v604 = vpop.permute.xlu0 %603
  %605 = vrot.lane.b32.xlu0 %v276, 120
  %v606 = vpop.permute.xlu0 %605
  %607 = vrot.lane.b32.xlu0 %v277, 120
  %v608 = vpop.permute.xlu0 %607
  %609 = vrot.lane.b32.xlu0 %v278, 120
  %v610 = vpop.permute.xlu0 %609
  %611 = vrot.lane.b32.xlu0 %v279, 120
  %v612 = vpop.permute.xlu0 %611
  %s621 = scalar_lea.vmem %s4, 64
  %622 = vst.msk [vmem:[%s621] sm:$0xf] %vm288, %v598
  %623 = vst.msk [vmem:[%s621 + $0x4] sm:$0xf] %vm288, %v600
  %624 = vst.msk [vmem:[%s621 + $0x8] sm:$0xf] %vm288, %v602
  %625 = vst.msk [vmem:[%s621 + $0xc] sm:$0xf] %vm288, %v604
  %626 = vst.msk [vmem:[%s621 + $0x10] sm:$0xf] %vm288, %v606
  %627 = vst.msk [vmem:[%s621 + $0x14] sm:$0xf] %vm288, %v608
  %628 = vst.msk [vmem:[%s621 + $0x18] sm:$0xf] %vm288, %v610
  %629 = vst.msk [vmem:[%s621 + $0x1c] sm:$0xf] %vm288, %v612
  %630 = vrot.lane.b32.xlu0 %v272, 104
  %v631 = vpop.permute.xlu0 %630
  %632 = vrot.lane.b32.xlu0 %v273, 104
  %v633 = vpop.permute.xlu0 %632
  %634 = vrot.lane.b32.xlu0 %v274, 104
  %v635 = vpop.permute.xlu0 %634
  %636 = vrot.lane.b32.xlu0 %v275, 104
  %v637 = vpop.permute.xlu0 %636
  %638 = vrot.lane.b32.xlu0 %v276, 104
  %v639 = vpop.permute.xlu0 %638
  %640 = vrot.lane.b32.xlu0 %v277, 104
  %v641 = vpop.permute.xlu0 %640
  %642 = vrot.lane.b32.xlu0 %v278, 104
  %v643 = vpop.permute.xlu0 %642
  %644 = vrot.lane.b32.xlu0 %v279, 104
  %v645 = vpop.permute.xlu0 %644
  %s654 = scalar_lea.vmem %s5, 64
  %655 = vst.msk [vmem:[%s654] sm:$0xf] %vm288, %v631
  %656 = vst.msk [vmem:[%s654 + $0x4] sm:$0xf] %vm288, %v633
  %657 = vst.msk [vmem:[%s654 + $0x8] sm:$0xf] %vm288, %v635
  %658 = vst.msk [vmem:[%s654 + $0xc] sm:$0xf] %vm288, %v637
  %659 = vst.msk [vmem:[%s654 + $0x10] sm:$0xf] %vm288, %v639
  %660 = vst.msk [vmem:[%s654 + $0x14] sm:$0xf] %vm288, %v641
  %661 = vst.msk [vmem:[%s654 + $0x18] sm:$0xf] %vm288, %v643
  %662 = vst.msk [vmem:[%s654 + $0x1c] sm:$0xf] %vm288, %v645
  %663 = vrot.lane.b32.xlu0 %v272, 88
  %v664 = vpop.permute.xlu0 %663
  %665 = vrot.lane.b32.xlu0 %v273, 88
  %v666 = vpop.permute.xlu0 %665
  %667 = vrot.lane.b32.xlu0 %v274, 88
  %v668 = vpop.permute.xlu0 %667
  %669 = vrot.lane.b32.xlu0 %v275, 88
  %v670 = vpop.permute.xlu0 %669
  %671 = vrot.lane.b32.xlu0 %v276, 88
  %v672 = vpop.permute.xlu0 %671
  %673 = vrot.lane.b32.xlu0 %v277, 88
  %v674 = vpop.permute.xlu0 %673
  %675 = vrot.lane.b32.xlu0 %v278, 88
  %v676 = vpop.permute.xlu0 %675
  %677 = vrot.lane.b32.xlu0 %v279, 88
  %v678 = vpop.permute.xlu0 %677
  %s687 = scalar_lea.vmem %s6, 64
  %688 = vst.msk [vmem:[%s687] sm:$0xf] %vm288, %v664
  %689 = vst.msk [vmem:[%s687 + $0x4] sm:$0xf] %vm288, %v666
  %690 = vst.msk [vmem:[%s687 + $0x8] sm:$0xf] %vm288, %v668
  %691 = vst.msk [vmem:[%s687 + $0xc] sm:$0xf] %vm288, %v670
  %692 = vst.msk [vmem:[%s687 + $0x10] sm:$0xf] %vm288, %v672
  %693 = vst.msk [vmem:[%s687 + $0x14] sm:$0xf] %vm288, %v674
  %694 = vst.msk [vmem:[%s687 + $0x18] sm:$0xf] %vm288, %v676
  %695 = vst.msk [vmem:[%s687 + $0x1c] sm:$0xf] %vm288, %v678
  %696 = vrot.lane.b32.xlu0 %v425, 72
  %v697 = vpop.permute.xlu0 %696
  %698 = vrot.lane.b32.xlu0 %v426, 72
  %v699 = vpop.permute.xlu0 %698
  %700 = vrot.lane.b32.xlu0 %v427, 72
  %v701 = vpop.permute.xlu0 %700
  %702 = vrot.lane.b32.xlu0 %v428, 72
  %v703 = vpop.permute.xlu0 %702
  %704 = vrot.lane.b32.xlu0 %v429, 72
  %v705 = vpop.permute.xlu0 %704
  %706 = vrot.lane.b32.xlu0 %v430, 72
  %v707 = vpop.permute.xlu0 %706
  %708 = vrot.lane.b32.xlu0 %v431, 72
  %v709 = vpop.permute.xlu0 %708
  %710 = vrot.lane.b32.xlu0 %v432, 72
  %v711 = vpop.permute.xlu0 %710
  %s720 = scalar_lea.vmem %s7, 64
  %721 = vst.msk [vmem:[%s720] sm:$0xf] %vm288, %v697
  %722 = vst.msk [vmem:[%s720 + $0x4] sm:$0xf] %vm288, %v699
  %723 = vst.msk [vmem:[%s720 + $0x8] sm:$0xf] %vm288, %v701
  %724 = vst.msk [vmem:[%s720 + $0xc] sm:$0xf] %vm288, %v703
  %725 = vst.msk [vmem:[%s720 + $0x10] sm:$0xf] %vm288, %v705
  %726 = vst.msk [vmem:[%s720 + $0x14] sm:$0xf] %vm288, %v707
  %727 = vst.msk [vmem:[%s720 + $0x18] sm:$0xf] %vm288, %v709
  %728 = vst.msk [vmem:[%s720 + $0x1c] sm:$0xf] %vm288, %v711
  %729 = vrot.lane.b32.xlu0 %v272, 116
  %v730 = vpop.permute.xlu0 %729
  %731 = vrot.lane.b32.xlu0 %v273, 116
  %v732 = vpop.permute.xlu0 %731
  %733 = vrot.lane.b32.xlu0 %v274, 116
  %v734 = vpop.permute.xlu0 %733
  %735 = vrot.lane.b32.xlu0 %v275, 116
  %v736 = vpop.permute.xlu0 %735
  %737 = vrot.lane.b32.xlu0 %v276, 116
  %v738 = vpop.permute.xlu0 %737
  %739 = vrot.lane.b32.xlu0 %v277, 116
  %v740 = vpop.permute.xlu0 %739
  %741 = vrot.lane.b32.xlu0 %v278, 116
  %v742 = vpop.permute.xlu0 %741
  %743 = vrot.lane.b32.xlu0 %v279, 116
  %v744 = vpop.permute.xlu0 %743
  %s753 = scalar_lea.vmem %s4, 96
  %754 = vst.msk [vmem:[%s753] sm:$0xf] %vm288, %v730
  %755 = vst.msk [vmem:[%s753 + $0x4] sm:$0xf] %vm288, %v732
  %756 = vst.msk [vmem:[%s753 + $0x8] sm:$0xf] %vm288, %v734
  %757 = vst.msk [vmem:[%s753 + $0xc] sm:$0xf] %vm288, %v736
  %758 = vst.msk [vmem:[%s753 + $0x10] sm:$0xf] %vm288, %v738
  %759 = vst.msk [vmem:[%s753 + $0x14] sm:$0xf] %vm288, %v740
  %760 = vst.msk [vmem:[%s753 + $0x18] sm:$0xf] %vm288, %v742
  %761 = vst.msk [vmem:[%s753 + $0x1c] sm:$0xf] %vm288, %v744
  %762 = vrot.lane.b32.xlu0 %v272, 100
  %v763 = vpop.permute.xlu0 %762
  %764 = vrot.lane.b32.xlu0 %v273, 100
  %v765 = vpop.permute.xlu0 %764
  %766 = vrot.lane.b32.xlu0 %v274, 100
  %v767 = vpop.permute.xlu0 %766
  %768 = vrot.lane.b32.xlu0 %v275, 100
  %v769 = vpop.permute.xlu0 %768
  %770 = vrot.lane.b32.xlu0 %v276, 100
  %v771 = vpop.permute.xlu0 %770
  %772 = vrot.lane.b32.xlu0 %v277, 100
  %v773 = vpop.permute.xlu0 %772
  %774 = vrot.lane.b32.xlu0 %v278, 100
  %v775 = vpop.permute.xlu0 %774
  %776 = vrot.lane.b32.xlu0 %v279, 100
  %v777 = vpop.permute.xlu0 %776
  %s786 = scalar_lea.vmem %s5, 96
  %787 = vst.msk [vmem:[%s786] sm:$0xf] %vm288, %v763
  %788 = vst.msk [vmem:[%s786 + $0x4] sm:$0xf] %vm288, %v765
  %789 = vst.msk [vmem:[%s786 + $0x8] sm:$0xf] %vm288, %v767
  %790 = vst.msk [vmem:[%s786 + $0xc] sm:$0xf] %vm288, %v769
  %791 = vst.msk [vmem:[%s786 + $0x10] sm:$0xf] %vm288, %v771
  %792 = vst.msk [vmem:[%s786 + $0x14] sm:$0xf] %vm288, %v773
  %793 = vst.msk [vmem:[%s786 + $0x18] sm:$0xf] %vm288, %v775
  %794 = vst.msk [vmem:[%s786 + $0x1c] sm:$0xf] %vm288, %v777
  %795 = vrot.lane.b32.xlu0 %v272, 84
  %v796 = vpop.permute.xlu0 %795
  %797 = vrot.lane.b32.xlu0 %v273, 84
  %v798 = vpop.permute.xlu0 %797
  %799 = vrot.lane.b32.xlu0 %v274, 84
  %v800 = vpop.permute.xlu0 %799
  %801 = vrot.lane.b32.xlu0 %v275, 84
  %v802 = vpop.permute.xlu0 %801
  %803 = vrot.lane.b32.xlu0 %v276, 84
  %v804 = vpop.permute.xlu0 %803
  %805 = vrot.lane.b32.xlu0 %v277, 84
  %v806 = vpop.permute.xlu0 %805
  %807 = vrot.lane.b32.xlu0 %v278, 84
  %v808 = vpop.permute.xlu0 %807
  %809 = vrot.lane.b32.xlu0 %v279, 84
  %v810 = vpop.permute.xlu0 %809
  %s819 = scalar_lea.vmem %s6, 96
  %820 = vst.msk [vmem:[%s819] sm:$0xf] %vm288, %v796
  %821 = vst.msk [vmem:[%s819 + $0x4] sm:$0xf] %vm288, %v798
  %822 = vst.msk [vmem:[%s819 + $0x8] sm:$0xf] %vm288, %v800
  %823 = vst.msk [vmem:[%s819 + $0xc] sm:$0xf] %vm288, %v802
  %824 = vst.msk [vmem:[%s819 + $0x10] sm:$0xf] %vm288, %v804
  %825 = vst.msk [vmem:[%s819 + $0x14] sm:$0xf] %vm288, %v806
  %826 = vst.msk [vmem:[%s819 + $0x18] sm:$0xf] %vm288, %v808
  %827 = vst.msk [vmem:[%s819 + $0x1c] sm:$0xf] %vm288, %v810
  %828 = vrot.lane.b32.xlu0 %v425, 68
  %v829 = vpop.permute.xlu0 %828
  %830 = vrot.lane.b32.xlu0 %v426, 68
  %v831 = vpop.permute.xlu0 %830
  %832 = vrot.lane.b32.xlu0 %v427, 68
  %v833 = vpop.permute.xlu0 %832
  %834 = vrot.lane.b32.xlu0 %v428, 68
  %v835 = vpop.permute.xlu0 %834
  %836 = vrot.lane.b32.xlu0 %v429, 68
  %v837 = vpop.permute.xlu0 %836
  %838 = vrot.lane.b32.xlu0 %v430, 68
  %v839 = vpop.permute.xlu0 %838
  %840 = vrot.lane.b32.xlu0 %v431, 68
  %v841 = vpop.permute.xlu0 %840
  %842 = vrot.lane.b32.xlu0 %v432, 68
  %v843 = vpop.permute.xlu0 %842
  %s852 = scalar_lea.vmem %s7, 96
  %853 = vst.msk [vmem:[%s852] sm:$0xf] %vm288, %v829
  %854 = vst.msk [vmem:[%s852 + $0x4] sm:$0xf] %vm288, %v831
  %855 = vst.msk [vmem:[%s852 + $0x8] sm:$0xf] %vm288, %v833
  %856 = vst.msk [vmem:[%s852 + $0xc] sm:$0xf] %vm288, %v835
  %857 = vst.msk [vmem:[%s852 + $0x10] sm:$0xf] %vm288, %v837
  %858 = vst.msk [vmem:[%s852 + $0x14] sm:$0xf] %vm288, %v839
  %859 = vst.msk [vmem:[%s852 + $0x18] sm:$0xf] %vm288, %v841
  %860 = vst.msk [vmem:[%s852 + $0x1c] sm:$0xf] %vm288, %v843
  %869 = vrot.lane.b32.xlu0 %v226, 64
  %v870 = vpop.permute.xlu0 %869
  %871 = vrot.lane.b32.xlu0 %v229, 64
  %v872 = vpop.permute.xlu0 %871
  %873 = vrot.lane.b32.xlu0 %v234, 64
  %v874 = vpop.permute.xlu0 %873
  %875 = vrot.lane.b32.xlu0 %v237, 64
  %v876 = vpop.permute.xlu0 %875
  %877 = vrot.lane.b32.xlu0 %v242, 64
  %v878 = vpop.permute.xlu0 %877
  %879 = vrot.lane.b32.xlu0 %v245, 64
  %v880 = vpop.permute.xlu0 %879
  %881 = vrot.lane.b32.xlu0 %v250, 64
  %v882 = vpop.permute.xlu0 %881
  %883 = vrot.lane.b32.xlu0 %v253, 64
  %v884 = vpop.permute.xlu0 %883
  %893 = vxpose.xlu0.b32.start [1/16] %v870, 128
  %894 = vxpose.xlu0.b32.cont [2/16] %v872, 128
  %895 = vxpose.xlu0.b32.cont [3/16] %v874, 128
  %896 = vxpose.xlu0.b32.cont [4/16] %v876, 128
  %897 = vxpose.xlu0.b32.cont [5/16] %v878, 128
  %898 = vxpose.xlu0.b32.cont [6/16] %v880, 128
  %899 = vxpose.xlu0.b32.cont [7/16] %v882, 128
  %900 = vxpose.xlu0.b32.cont [8/16] %v884, 128
  %901 = vxpose.xlu0.b32.cont [9/16] 0.0, 128
  %902 = vxpose.xlu0.b32.cont [10/16] 0.0, 128
  %903 = vxpose.xlu0.b32.cont [11/16] 0.0, 128
  %904 = vxpose.xlu0.b32.cont [12/16] 0.0, 128
  %905 = vxpose.xlu0.b32.cont [13/16] 0.0, 128
  %906 = vxpose.xlu0.b32.cont [14/16] 0.0, 128
  %907 = vxpose.xlu0.b32.cont [15/16] 0.0, 128
  %908 = vxpose.xlu0.b32.end [16/16] 0.0, 128
  %v909 = vpop.trf.xlu0
  %v910 = vpop.trf.xlu0
  %v911 = vpop.trf.xlu0
  %v912 = vpop.trf.xlu0
  %v913 = vpop.trf.xlu0
  %v914 = vpop.trf.xlu0
  %v915 = vpop.trf.xlu0
  %v916 = vpop.trf.xlu0
  %v917 = vpop.trf.xlu0
  %v918 = vpop.trf.xlu0
  %v919 = vpop.trf.xlu0
  %v920 = vpop.trf.xlu0
  %v921 = vpop.trf.xlu0
  %v922 = vpop.trf.xlu0
  %v923 = vpop.trf.xlu0
  %v924 = vpop.trf.xlu0
  %v925 = vpack.c.bf16 %v909, %v909
  %vm926 = vcmask 517120
  %927 = vst.msk [vmem:[%s8] sm:$0x3] %vm926, %v925
  // Predicated region
  $region18: #{triangle_block.19} parent=0 // pred_check
    _
  $region19: #{triangle_block.19} parent=0 // pred_check_branch
    %929 = sbr.rel (0) target = $region21
  $region20: #{triangle_block.19} parent=0 // pred_region
    _
  $region21: #{triangle_block.19} parent=0 // pred_fallthru
    _
  // Predicated region
  $region22: #{triangle_block.19} parent=0 // pred_check
    _
  $region23: #{triangle_block.19} parent=0 // pred_check_branch
    %931 = sbr.rel (0) target = $region25
  $region24: #{triangle_block.19} parent=0 // pred_region
    _
  $region25: #{triangle_block.19} parent=0 // pred_fallthru
    _
  // Predicated region
  $region26: #{triangle_block.19} parent=0 // pred_check
    _
  $region27: #{triangle_block.19} parent=0 // pred_check_branch
    %933 = sbr.rel (0) target = $region29
  $region28: #{triangle_block.19} parent=0 // pred_region
    _
  $region29: #{triangle_block.19} parent=0 // pred_fallthru
    _
  // Predicated region
  $region30: #{triangle_block.19} parent=0 // pred_check
    _
  $region31: #{triangle_block.19} parent=0 // pred_check_branch
    %935 = sbr.rel (0) target = $region33
  $region32: #{triangle_block.19} parent=0 // pred_region
    _
  $region33: #{triangle_block.19} parent=0 // pred_fallthru
    _
  // Predicated region
  $region34: #{triangle_block.19} parent=0 // pred_check
    _
  $region35: #{triangle_block.19} parent=0 // pred_check_branch
    %937 = sbr.rel (0) target = $region37
  $region36: #{triangle_block.19} parent=0 // pred_region
    _
  $region37: #{triangle_block.19} parent=0 // pred_fallthru
    _
  // Predicated region
  $region38: #{triangle_block.19} parent=0 // pred_check
    _
  $region39: #{triangle_block.19} parent=0 // pred_check_branch
    %939 = sbr.rel (0) target = $region41
  $region40: #{triangle_block.19} parent=0 // pred_region
    _
  $region41: #{triangle_block.19} parent=0 // pred_fallthru
    _
  // Predicated region
  $region42: #{triangle_block.19} parent=0 // pred_check
    _
  $region43: #{triangle_block.19} parent=0 // pred_check_branch
    %941 = sbr.rel (0) target = $region45
  $region44: #{triangle_block.19} parent=0 // pred_region
    _
  $region45: #{triangle_block.19} parent=0 // pred_fallthru
    _
  // Predicated region
  $region46: #{triangle_block.19} parent=0 // pred_check
    _
  $region47: #{triangle_block.19} parent=0 // pred_check_branch
    %943 = sbr.rel (0) target = $region49
  $region48: #{triangle_block.19} parent=0 // pred_region
    _
  $region49: #{triangle_block.19} parent=0 // pred_fallthru
    _
  // Predicated region
  $region50: #{triangle_block.19} parent=0 // pred_check
    _
  $region51: #{triangle_block.19} parent=0 // pred_check_branch
    %945 = sbr.rel (0) target = $region53
  $region52: #{triangle_block.19} parent=0 // pred_region
    _
  $region53: #{triangle_block.19} parent=0 // pred_fallthru
    _
  // Predicated region
  $region54: #{triangle_block.19} parent=0 // pred_check
    _
  $region55: #{triangle_block.19} parent=0 // pred_check_branch
    %947 = sbr.rel (0) target = $region57
  $region56: #{triangle_block.19} parent=0 // pred_region
    _
  $region57: #{triangle_block.19} parent=0 // pred_fallthru
    _

// kernel: triangle_block.25
$region0: #{triangle_block.25}
  #allocation0 [shape = 'u32[]', space=smem, size = 0x4, offset = 0x4, fixed_abs, tag = 'smem constant byte address 0x4 - core index']
  #allocation1 [shape = 'u32[144,128]{1,0:T(1,128)}', space=vmem, size = 0x12000, scoped, tag = 'internal scratch']
  %s0 = inlined_call_operand.vmem [shape: f32[64,16], index: 0, kind: input, shape index: {}]
  %s1 = inlined_call_operand.vmem [shape: f32[1,16], index: 1, kind: input, shape index: {}]
  %s2 = inlined_call_operand.vmem [shape: f32[1,16], index: 2, kind: input, shape index: {}]
  %s3 = inlined_call_operand.vmem [shape: bf16[16,128], index: 3, kind: input, shape index: {}]
  %s4 = inlined_call_operand.vmem [shape: bf16[64,16], index: 4, kind: input, shape index: {}]
  %s5 = inlined_call_operand.hbm [shape: f32[64,16], index: 5, kind: output, shape index: {}]
  %s6 = sld [smem:[#allocation0]]
  $region30: #{triangle_block.25} parent=0
    _
  %s8 = ssub.s32 1, %s6
  %s9 = scalar_select 0, %s8, %s6
  $region1: #{triangle_block.25} parent=0
    #allocation2 [shape = 'u8[32768]{0}', space=vmem, size = 0x8000, scoped, tag = 'output window, operand 0, single buffered']
    #allocation3 [shape = 's32[1]{0}', space=sflag, size = 0x4, scoped, tag = 'scoped memory for triangle_block.25']
    %10 = vsyncpa [#allocation3], 0
    // Predicated region
    $region2: #{triangle_block.25} parent=1 // pred_check
      _
    $region3: #{triangle_block.25} parent=1 // pred_check_branch
      %12 = sbr.rel (0) target = $region5
    $region4: #{triangle_block.25} parent=1 // pred_region
      _
    $region5: #{triangle_block.25} parent=1 // pred_fallthru
      _
    // Predicated region
    $region6: #{triangle_block.25} parent=1 // pred_check
      _
    $region7: #{triangle_block.25} parent=1 // pred_check_branch
      %14 = sbr.rel (0) target = $region9
    $region8: #{triangle_block.25} parent=1 // pred_region
      _
    $region9: #{triangle_block.25} parent=1 // pred_fallthru
      _
    // Predicated region
    $region10: #{triangle_block.25} parent=1 // pred_check
      _
    $region11: #{triangle_block.25} parent=1 // pred_check_branch
      %16 = sbr.rel (0) target = $region13
    $region12: #{triangle_block.25} parent=1 // pred_region
      _
    $region13: #{triangle_block.25} parent=1 // pred_fallthru
      _
    // Predicated region
    $region14: #{triangle_block.25} parent=1 // pred_check
      _
    $region15: #{triangle_block.25} parent=1 // pred_check_branch
      %18 = sbr.rel (0) target = $region17
    $region16: #{triangle_block.25} parent=1 // pred_region
      _
    $region17: #{triangle_block.25} parent=1 // pred_fallthru
      _
    // Predicated region
    $region18: #{triangle_block.25} parent=1 // pred_check
      _
    $region19: #{triangle_block.25} parent=1 // pred_check_branch
      %20 = sbr.rel (0) target = $region21
    $region20: #{triangle_block.25} parent=1 // pred_region
      _
    $region21: #{triangle_block.25} parent=1 // pred_fallthru
      _
    %v22 = vld [vmem:[%s0] sm:$0xff]
    %v23 = vld [vmem:[%s0 + $0x8] sm:$0xff]
    %v24 = vld [vmem:[%s0 + $0x10] sm:$0xff]
    %v25 = vld [vmem:[%s0 + $0x18] sm:$0xff]
    %v26 = vld [vmem:[%s0 + $0x20] sm:$0xff]
    %v27 = vld [vmem:[%s0 + $0x28] sm:$0xff]
    %v28 = vld [vmem:[%s0 + $0x30] sm:$0xff]
    %v29 = vld [vmem:[%s0 + $0x38] sm:$0xff]
    %v30 = vld [vmem:[%s1] sm:$0x1]
    %v31 = vld [vmem:[%s2] sm:$0x1]
    %vm32 = vcmask 130048
    %v33 = vsel %vm32, %v22, 0.0
    %34 = vadd.xlane.f32.xlu0 %v33
    %v35 = vpop.xlane.xlu0 %34
    %v36 = vsel %vm32, %v23, 0.0
    %37 = vadd.xlane.f32.xlu0 %v36
    %v38 = vpop.xlane.xlu0 %37
    %v39 = vsel %vm32, %v24, 0.0
    %40 = vadd.xlane.f32.xlu0 %v39
    %v41 = vpop.xlane.xlu0 %40
    %v42 = vsel %vm32, %v25, 0.0
    %43 = vadd.xlane.f32.xlu0 %v42
    %v44 = vpop.xlane.xlu0 %43
    %v45 = vsel %vm32, %v26, 0.0
    %46 = vadd.xlane.f32.xlu0 %v45
    %v47 = vpop.xlane.xlu0 %46
    %v48 = vsel %vm32, %v27, 0.0
    %49 = vadd.xlane.f32.xlu0 %v48
    %v50 = vpop.xlane.xlu0 %49
    %v51 = vsel %vm32, %v28, 0.0
    %52 = vadd.xlane.f32.xlu0 %v51
    %v53 = vpop.xlane.xlu0 %52
    %v54 = vsel %vm32, %v29, 0.0
    %55 = vadd.xlane.f32.xlu0 %v54
    %v56 = vpop.xlane.xlu0 %55
    %v57 = vrcp.pop 16.0
    %v58 = vmul.f32 %v35, %v57
    %v59 = vmul.f32 %v38, %v57
    %v60 = vmul.f32 %v41, %v57
    %v61 = vmul.f32 %v44, %v57
    %v62 = vmul.f32 %v47, %v57
    %v63 = vmul.f32 %v50, %v57
    %v64 = vmul.f32 %v53, %v57
    %v65 = vmul.f32 %v56, %v57
    %v66 = vsub.f32 %v22, %v58
    %v67 = vsub.f32 %v23, %v59
    %v68 = vsub.f32 %v24, %v60
    %v69 = vsub.f32 %v25, %v61
    %v70 = vsub.f32 %v26, %v62
    %v71 = vsub.f32 %v27, %v63
    %v72 = vsub.f32 %v28, %v64
    %v73 = vsub.f32 %v29, %v65
    %v74 = vmul.f32 %v66, %v66
    %v75 = vmul.f32 %v67, %v67
    %v76 = vmul.f32 %v68, %v68
    %v77 = vmul.f32 %v69, %v69
    %v78 = vmul.f32 %v70, %v70
    %v79 = vmul.f32 %v71, %v71
    %v80 = vmul.f32 %v72, %v72
    %v81 = vmul.f32 %v73, %v73
    %v82 = vsel %vm32, %v74, 0.0
    %83 = vadd.xlane.f32.xlu0 %v82
    %v84 = vpop.xlane.xlu0 %83
    %v85 = vsel %vm32, %v75, 0.0
    %86 = vadd.xlane.f32.xlu0 %v85
    %v87 = vpop.xlane.xlu0 %86
    %v88 = vsel %vm32, %v76, 0.0
    %89 = vadd.xlane.f32.xlu0 %v88
    %v90 = vpop.xlane.xlu0 %89
    %v91 = vsel %vm32, %v77, 0.0
    %92 = vadd.xlane.f32.xlu0 %v91
    %v93 = vpop.xlane.xlu0 %92
    %v94 = vsel %vm32, %v78, 0.0
    %95 = vadd.xlane.f32.xlu0 %v94
    %v96 = vpop.xlane.xlu0 %95
    %v97 = vsel %vm32, %v79, 0.0
    %98 = vadd.xlane.f32.xlu0 %v97
    %v99 = vpop.xlane.xlu0 %98
    %v100 = vsel %vm32, %v80, 0.0
    %101 = vadd.xlane.f32.xlu0 %v100
    %v102 = vpop.xlane.xlu0 %101
    %v103 = vsel %vm32, %v81, 0.0
    %104 = vadd.xlane.f32.xlu0 %v103
    %v105 = vpop.xlane.xlu0 %104
    %v106 = vmul.f32 %v84, %v57
    %v107 = vmul.f32 %v87, %v57
    %v108 = vmul.f32 %v90, %v57
    %v109 = vmul.f32 %v93, %v57
    %v110 = vmul.f32 %v96, %v57
    %v111 = vmul.f32 %v99, %v57
    %v112 = vmul.f32 %v102, %v57
    %v113 = vmul.f32 %v105, %v57
    %v114 = vadd.f32 %v106, 1e-05
    %v115 = vadd.f32 %v107, 1e-05
    %v116 = vadd.f32 %v108, 1e-05
    %v117 = vadd.f32 %v109, 1e-05
    %v118 = vadd.f32 %v110, 1e-05
    %v119 = vadd.f32 %v111, 1e-05
    %v120 = vadd.f32 %v112, 1e-05
    %v121 = vadd.f32 %v113, 1e-05
    %v122 = vrsqrt.pop %v114
    %v123 = vrsqrt.pop %v115
    %v124 = vrsqrt.pop %v116
    %v125 = vrsqrt.pop %v117
    %v126 = vrsqrt.pop %v118
    %v127 = vrsqrt.pop %v119
    %v128 = vrsqrt.pop %v120
    %v129 = vrsqrt.pop %v121
    %v130 = vmul.f32 %v66, %v122
    %v131 = vmul.f32 %v67, %v123
    %v132 = vmul.f32 %v68, %v124
    %v133 = vmul.f32 %v69, %v125
    %v134 = vmul.f32 %v70, %v126
    %v135 = vmul.f32 %v71, %v127
    %v136 = vmul.f32 %v72, %v128
    %v137 = vmul.f32 %v73, %v129
    %v139 = vlaneseq
    %v140 = vshrl.u32 %v139, 7
    %v141 = vsub.s32 0, %v140
    %v142 = vrot.slane %v30, %v141
    %v144 = vmul.f32 %v130, %v142
    %v145 = vmul.f32 %v131, %v142
    %v146 = vmul.f32 %v132, %v142
    %v147 = vmul.f32 %v133, %v142
    %v148 = vmul.f32 %v134, %v142
    %v149 = vmul.f32 %v135, %v142
    %v150 = vmul.f32 %v136, %v142
    %v151 = vmul.f32 %v137, %v142
    %v153 = vlaneseq
    %v154 = vshrl.u32 %v153, 7
    %v155 = vsub.s32 0, %v154
    %v156 = vrot.slane %v31, %v155
    %v158 = vadd.f32 %v144, %v156
    %v159 = vadd.f32 %v145, %v156
    %v160 = vadd.f32 %v146, %v156
    %v161 = vadd.f32 %v147, %v156
    %v162 = vadd.f32 %v148, %v156
    %v163 = vadd.f32 %v149, %v156
    %v164 = vadd.f32 %v150, %v156
    %v165 = vadd.f32 %v151, %v156
    %v166 = vpack.c.bf16 %v159, %v158
    %v167 = vpack.c.bf16 %v161, %v160
    %v168 = vpack.c.bf16 %v163, %v162
    %v169 = vpack.c.bf16 %v165, %v164
    %v170 = vld [vmem:[%s3] sm:$0xf]
    %v171 = vld [vmem:[%s3 + $0x4] sm:$0xf]
    %v174 = vunpack.c.l.b16 %v170
    %v175 = vunpack.c.l.b16 %v171
    %v176 = vpack.c.b16 %v175, %v174
    %v179 = vsel %vm32, %v166, 0
    %v182 = vsel %vm32, %v167, 0
    %v185 = vsel %vm32, %v168, 0
    %v188 = vsel %vm32, %v169, 0
    %190 = vmatprep.subr.bf16.mxu0 0
    %191 = vmatpush1.bf16.msra.mxu0 0
    %192 = vmatprep.subr.bf16.mxu0 0
    %193 = vmatpush1.bf16.msra.mxu0 0
    %194 = vmatprep.subr.bf16.mxu0 0
    %195 = vmatpush1.bf16.msra.mxu0 0
    %196 = vmatprep.subr.bf16.mxu0 0
    %197 = vmatpush1.bf16.msra.mxu0 0
    %198 = vmatprep.subr.bf16.mxu0 0
    %199 = vmatpush1.bf16.msra.mxu0 0
    %200 = vmatprep.subr.bf16.mxu0 0
    %201 = vmatpush1.bf16.msra.mxu0 0
    %202 = vmatprep.subr.bf16.mxu0 0
    %203 = vmatpush1.bf16.msra.mxu0 0
    %204 = vmatprep.subr.bf16.mxu0 0
    %205 = vmatpush1.bf16.msra.mxu0 %v176
    %206 = vmatprep.subr.bf16.mxu0 0
    %207 = vmatpush2.bf16.msra.mxu0 0
    %208 = vmatprep.subr.bf16.mxu0 0
    %209 = vmatpush2.bf16.msra.mxu0 0
    %210 = vmatprep.subr.bf16.mxu0 0
    %211 = vmatpush2.bf16.msra.mxu0 0
    %212 = vmatprep.subr.bf16.mxu0 0
    %213 = vmatpush2.bf16.msra.mxu0 0
    %214 = vmatprep.subr.bf16.mxu0 0
    %215 = vmatpush2.bf16.msra.mxu0 0
    %216 = vmatprep.subr.bf16.mxu0 0
    %217 = vmatpush2.bf16.msra.mxu0 0
    %218 = vmatprep.subr.bf16.mxu0 0
    %219 = vmatpush2.bf16.msra.mxu0 0
    %220 = vmatprep.subr.bf16.mxu0 0
    %221 = vmatpush2.bf16.msra.mxu0 0
    %222 = vmatprep.mubr.bf16.mxu0 0
    %223 = vmatmul.mubr.bf16.gmra.mxu0 %v179
    %v224 = vpop.f32.mrf.mxu0
    %v225 = vadd.f32 0.0, %v224
    %v226 = vpop.f32.mrf.mxu0
    %v227 = vpop.f32.mrf.mxu0
    %v228 = vadd.f32 0.0, %v227
    %v229 = vpop.f32.mrf.mxu0
    %230 = vmatprep.mubr.bf16.mxu0 0
    %231 = vmatmul.mubr.bf16.gmra.mxu0 %v182
    %v232 = vpop.f32.mrf.mxu0
    %v233 = vadd.f32 0.0, %v232
    %v234 = vpop.f32.mrf.mxu0
    %v235 = vpop.f32.mrf.mxu0
    %v236 = vadd.f32 0.0, %v235
    %v237 = vpop.f32.mrf.mxu0
    %238 = vmatprep.mubr.bf16.mxu0 0
    %239 = vmatmul.mubr.bf16.gmra.mxu0 %v185
    %v240 = vpop.f32.mrf.mxu0
    %v241 = vadd.f32 0.0, %v240
    %v242 = vpop.f32.mrf.mxu0
    %v243 = vpop.f32.mrf.mxu0
    %v244 = vadd.f32 0.0, %v243
    %v245 = vpop.f32.mrf.mxu0
    %246 = vmatprep.mubr.bf16.mxu0 0
    %247 = vmatmul.mubr.bf16.gmra.mxu0 %v188
    %v248 = vpop.f32.mrf.mxu0
    %v249 = vadd.f32 0.0, %v248
    %v250 = vpop.f32.mrf.mxu0
    %v251 = vpop.f32.mrf.mxu0
    %v252 = vadd.f32 0.0, %v251
    %v253 = vpop.f32.mrf.mxu0
    %254 = vdwg.mxu0
    %v255 = vxor.u32 %v225, 2147483648
    %v256 = vxor.u32 %v228, 2147483648
    %v257 = vxor.u32 %v233, 2147483648
    %v258 = vxor.u32 %v236, 2147483648
    %v259 = vxor.u32 %v241, 2147483648
    %v260 = vxor.u32 %v244, 2147483648
    %v261 = vxor.u32 %v249, 2147483648
    %v262 = vxor.u32 %v252, 2147483648
    %v263 = vmul.f32 %v255, 1.442695
    %v264 = vpow.pop %v263
    %v265 = vmul.f32 %v256, 1.442695
    %v266 = vpow.pop %v265
    %v267 = vmul.f32 %v257, 1.442695
    %v268 = vpow.pop %v267
    %v269 = vmul.f32 %v258, 1.442695
    %v270 = vpow.pop %v269
    %v271 = vmul.f32 %v259, 1.442695
    %v272 = vpow.pop %v271
    %v273 = vmul.f32 %v260, 1.442695
    %v274 = vpow.pop %v273
    %v275 = vmul.f32 %v261, 1.442695
    %v276 = vpow.pop %v275
    %v277 = vmul.f32 %v262, 1.442695
    %v278 = vpow.pop %v277
    %v279 = vadd.f32 %v264, 1.0
    %v280 = vadd.f32 %v266, 1.0
    %v281 = vadd.f32 %v268, 1.0
    %v282 = vadd.f32 %v270, 1.0
    %v283 = vadd.f32 %v272, 1.0
    %v284 = vadd.f32 %v274, 1.0
    %v285 = vadd.f32 %v276, 1.0
    %v286 = vadd.f32 %v278, 1.0
    %v287 = vrcp.pop %v279
    %v288 = vmul.f32 1.0, %v287
    %v289 = vrcp.pop %v280
    %v290 = vmul.f32 1.0, %v289
    %v291 = vrcp.pop %v281
    %v292 = vmul.f32 1.0, %v291
    %v293 = vrcp.pop %v282
    %v294 = vmul.f32 1.0, %v293
    %v295 = vrcp.pop %v283
    %v296 = vmul.f32 1.0, %v295
    %v297 = vrcp.pop %v284
    %v298 = vmul.f32 1.0, %v297
    %v299 = vrcp.pop %v285
    %v300 = vmul.f32 1.0, %v299
    %v301 = vrcp.pop %v286
    %v302 = vmul.f32 1.0, %v301
    %v303 = vmul.f32 %v225, %v288
    %v304 = vmul.f32 %v228, %v290
    %v305 = vmul.f32 %v233, %v292
    %v306 = vmul.f32 %v236, %v294
    %v307 = vmul.f32 %v241, %v296
    %v308 = vmul.f32 %v244, %v298
    %v309 = vmul.f32 %v249, %v300
    %v310 = vmul.f32 %v252, %v302
    %319 = vrot.lane.b32.xlu0 %v225, 64
    %v320 = vpop.permute.xlu0 %319
    %321 = vrot.lane.b32.xlu0 %v228, 64
    %v322 = vpop.permute.xlu0 %321
    %323 = vrot.lane.b32.xlu0 %v233, 64
    %v324 = vpop.permute.xlu0 %323
    %325 = vrot.lane.b32.xlu0 %v236, 64
    %v326 = vpop.permute.xlu0 %325
    %327 = vrot.lane.b32.xlu0 %v241, 64
    %v328 = vpop.permute.xlu0 %327
    %329 = vrot.lane.b32.xlu0 %v244, 64
    %v330 = vpop.permute.xlu0 %329
    %331 = vrot.lane.b32.xlu0 %v249, 64
    %v332 = vpop.permute.xlu0 %331
    %333 = vrot.lane.b32.xlu0 %v252, 64
    %v334 = vpop.permute.xlu0 %333
    %v343 = vmul.f32 %v303, %v320
    %v344 = vmul.f32 %v304, %v322
    %v345 = vmul.f32 %v305, %v324
    %v346 = vmul.f32 %v306, %v326
    %v347 = vmul.f32 %v307, %v328
    %v348 = vmul.f32 %v308, %v330
    %v349 = vmul.f32 %v309, %v332
    %v350 = vmul.f32 %v310, %v334
    %v351 = vpack.c.bf16 %v344, %v343
    %v352 = vpack.c.bf16 %v346, %v345
    %v353 = vpack.c.bf16 %v348, %v347
    %v354 = vpack.c.bf16 %v350, %v349
    %v355 = vld [vmem:[%s4] sm:$0xf]
    %v356 = vld [vmem:[%s4 + $0x4] sm:$0xf]
    %v357 = vld [vmem:[%s4 + $0x8] sm:$0xf]
    %v358 = vld [vmem:[%s4 + $0xc] sm:$0xf]
    %v359 = vld [vmem:[%s4 + $0x10] sm:$0xf]
    %v360 = vld [vmem:[%s4 + $0x14] sm:$0xf]
    %v361 = vld [vmem:[%s4 + $0x18] sm:$0xf]
    %v362 = vld [vmem:[%s4 + $0x1c] sm:$0xf]
    %v371 = vunpack.c.l.b16 %v355
    %v372 = vunpack.c.l.b16 %v356
    %v373 = vunpack.c.l.b16 %v357
    %v374 = vunpack.c.l.b16 %v358
    %v375 = vunpack.c.l.b16 %v359
    %v376 = vunpack.c.l.b16 %v360
    %v377 = vunpack.c.l.b16 %v361
    %v378 = vunpack.c.l.b16 %v362
    %v379 = vpack.c.b16 %v372, %v371
    %v380 = vpack.c.b16 %v374, %v373
    %v381 = vpack.c.b16 %v376, %v375
    %v382 = vpack.c.b16 %v378, %v377
    %vm387 = vcmask 523264
    %v389 = vsel %vm387, %v351, 0
    %v392 = vsel %vm387, %v352, 0
    %v395 = vsel %vm387, %v353, 0
    %v398 = vsel %vm387, %v354, 0
    %400 = vmatprep.subr.bf16.mxu0 0
    %401 = vmatpush1.bf16.msra.mxu0 0
    %402 = vmatprep.subr.bf16.mxu0 0
    %403 = vmatpush1.bf16.msra.mxu0 0
    %404 = vmatprep.subr.bf16.mxu0 0
    %405 = vmatpush1.bf16.msra.mxu0 0
    %406 = vmatprep.subr.bf16.mxu0 0
    %407 = vmatpush1.bf16.msra.mxu0 0
    %408 = vmatprep.subr.bf16.mxu0 0
    %409 = vmatpush1.bf16.msra.mxu0 %v382
    %410 = vmatprep.subr.bf16.mxu0 0
    %411 = vmatpush1.bf16.msra.mxu0 %v381
    %412 = vmatprep.subr.bf16.mxu0 0
    %413 = vmatpush1.bf16.msra.mxu0 %v380
    %414 = vmatprep.subr.bf16.mxu0 0
    %415 = vmatpush1.bf16.msra.mxu0 %v379
    %416 = vmatprep.subr.bf16.mxu0 0
    %417 = vmatpush2.bf16.msra.mxu0 0
    %418 = vmatprep.subr.bf16.mxu0 0
    %419 = vmatpush2.bf16.msra.mxu0 0
    %420 = vmatprep.subr.bf16.mxu0 0
    %421 = vmatpush2.bf16.msra.mxu0 0
    %422 = vmatprep.subr.bf16.mxu0 0
    %423 = vmatpush2.bf16.msra.mxu0 0
    %424 = vmatprep.subr.bf16.mxu0 0
    %425 = vmatpush2.bf16.msra.mxu0 0
    %426 = vmatprep.subr.bf16.mxu0 0
    %427 = vmatpush2.bf16.msra.mxu0 0
    %428 = vmatprep.subr.bf16.mxu0 0
    %429 = vmatpush2.bf16.msra.mxu0 0
    %430 = vmatprep.subr.bf16.mxu0 0
    %431 = vmatpush2.bf16.msra.mxu0 0
    %432 = vmatprep.mubr.bf16.mxu0 0
    %433 = vmatmul.mubr.bf16.gmra.mxu0 %v389
    %v434 = vpop.f32.mrf.mxu0
    %v435 = vadd.f32 0.0, %v434
    %v436 = vpop.f32.mrf.mxu0
    %v437 = vpop.f32.mrf.mxu0
    %v438 = vadd.f32 0.0, %v437
    %v439 = vpop.f32.mrf.mxu0
    %440 = vmatprep.mubr.bf16.mxu0 0
    %441 = vmatmul.mubr.bf16.gmra.mxu0 %v392
    %v442 = vpop.f32.mrf.mxu0
    %v443 = vadd.f32 0.0, %v442
    %v444 = vpop.f32.mrf.mxu0
    %v445 = vpop.f32.mrf.mxu0
    %v446 = vadd.f32 0.0, %v445
    %v447 = vpop.f32.mrf.mxu0
    %448 = vmatprep.mubr.bf16.mxu0 0
    %449 = vmatmul.mubr.bf16.gmra.mxu0 %v395
    %v450 = vpop.f32.mrf.mxu0
    %v451 = vadd.f32 0.0, %v450
    %v452 = vpop.f32.mrf.mxu0
    %v453 = vpop.f32.mrf.mxu0
    %v454 = vadd.f32 0.0, %v453
    %v455 = vpop.f32.mrf.mxu0
    %456 = vmatprep.mubr.bf16.mxu0 0
    %457 = vmatmul.mubr.bf16.gmra.mxu0 %v398
    %v458 = vpop.f32.mrf.mxu0
    %v459 = vadd.f32 0.0, %v458
    %v460 = vpop.f32.mrf.mxu0
    %v461 = vpop.f32.mrf.mxu0
    %v462 = vadd.f32 0.0, %v461
    %v463 = vpop.f32.mrf.mxu0
    %464 = vdwg.mxu0
    %v465 = vadd.f32 %v22, %v435
    %v466 = vadd.f32 %v23, %v438
    %v467 = vadd.f32 %v24, %v443
    %v468 = vadd.f32 %v25, %v446
    %v469 = vadd.f32 %v26, %v451
    %v470 = vadd.f32 %v27, %v454
    %v471 = vadd.f32 %v28, %v459
    %v472 = vadd.f32 %v29, %v462
    %473 = vst.msk [vmem:[#allocation2] sm:$0xff] %vm32, %v465
    %474 = vst.msk [vmem:[#allocation2 + $0x8] sm:$0xff] %vm32, %v466
    %475 = vst.msk [vmem:[#allocation2 + $0x10] sm:$0xff] %vm32, %v467
    %476 = vst.msk [vmem:[#allocation2 + $0x18] sm:$0xff] %vm32, %v468
    %477 = vst.msk [vmem:[#allocation2 + $0x20] sm:$0xff] %vm32, %v469
    %478 = vst.msk [vmem:[#allocation2 + $0x28] sm:$0xff] %vm32, %v470
    %479 = vst.msk [vmem:[#allocation2 + $0x30] sm:$0xff] %vm32, %v471
    %480 = vst.msk [vmem:[#allocation2 + $0x38] sm:$0xff] %vm32, %v472
    // Predicated region
    $region22: #{triangle_block.25} parent=1 // pred_check
      _
    $region23: #{triangle_block.25} parent=1 // pred_check_branch
      %482 = sbr.rel (0) target = $region25
    $region24: #{triangle_block.25} parent=1 // pred_region
      %s484 = ssub.s32 1024, 1024
      %485 = vsyncadd [#allocation3], %s484
      %s486 = sshll.u32 [#allocation2], 4
      %s487 = int_to_ptr.vmem [resolvable:$true] %s486
      %492 = dma.vmem_to_hbm [thread:$0]  %s487, 1024, %s5, [#allocation3], 128, 128, 8
    $region25: #{triangle_block.25} parent=1 // pred_fallthru
      _
    // Predicated region
    $region26: #{triangle_block.25} parent=1 // pred_check
      _
    $region27: #{triangle_block.25} parent=1 // pred_check_branch
      %494 = sbr.rel (0) target = $region29
    $region28: #{triangle_block.25} parent=1 // pred_region
      %495 = dma.done [#allocation3], 1024
    $region29: #{triangle_block.25} parent=1 // pred_fallthru
      _
    %496 = vsyncpa [#allocation3], 1

</llo_original>
